<compile_context>
chip_gen: v7x
topology: tpu7x:2x2x1
jax: 0.10.0
libtpu: 0.0.40
codegen_flags: <defaults>
</compile_context>

<pallas_src>
import functools

import jax
import jax.numpy as jnp
import numpy as np
from jax.experimental import pallas as pl
from jax.experimental.pallas import tpu as pltpu

CP = 128     # output-channel lane padding (lane-dense matmul N / stores)
K1 = 32      # conv1 im2col taps (25 real) padded to 32
K2 = 40      # conv2 input channels (35 real) padded to 40
K3 = 24      # conv3 input channels (20 real) padded to 24
C_OUT = 16   # conv3 real output channels (= upscale**2)


def _geom(H, W):
    """Unified flat padded-slab geometry shared by all three layers."""
    Wp, Hp = W + 4, H + 4
    L = Hp * Wp                   # slab rows (flat padded image)
    N = (H - 1) * Wp + W          # rows computed / stored per layer
    S = 2 * Wp + 2                # flat offset of image pixel (0,0)
    return Hp, Wp, L, N, S


# ----------------------------------------------------------------------------
# Fused kernel: conv1(matmul)+tanh -> conv2+tanh -> conv3+sigmoid
# ----------------------------------------------------------------------------
def _make_fused_kernel(H, W):
    Hp, Wp, L, N, S = _geom(H, W)

    def conv3x3(src_ref, w_ref, b_ref, kin):
        # 3x3 conv over the flat slab: tap (kh,kw) is the contiguous row-slice
        # starting at (kh+1)*Wp + (kw+1).  Loop-carried f32 accumulation; the
        # bias is added once at the end.
        acc = None
        for kh in range(3):
            for kw in range(3):
                start = (kh + 1) * Wp + (kw + 1)
                lhs = src_ref[pl.ds(start, N), :kin].astype(jnp.bfloat16)
                d = jnp.dot(lhs, w_ref[kh * 3 + kw],
                            preferred_element_type=jnp.float32)
                acc = d if acc is None else acc + d
        return acc + b_ref[...]

    def kernel(p1_ref, mask_ref, w1_ref, w2_ref, w3_ref,
               b1_ref, b2_ref, b3_ref, o_ref, a1_ref, a2_ref):
        # p1_ref : (N, 32)       bf16  conv1 25-tap im2col slab (slab geometry)
        # mask   : (N, 1)        f32   1 for real pixels, 0 for wrap columns
        # w1     : (32, 128)     bf16  conv1 weight (shuffle1 folded on Cout)
        # w2     : (9, 40, 128)  bf16  conv2 block-diag dense (shuffle2 folded)
        # w3     : (9, 24, 128)  bf16  conv3 block-diag dense
        # b*     : (1, 128)      f32   biases (padding lanes zero)
        # o_ref  : (H*Wp, 16)    bf16  conv3 sigmoid output (real channels only)
        # a1/a2  : (L, 128)      f32   flat zero-halo activation slabs (scratch)

        # Zero the slabs once: the halo is never written afterwards, and the
        # interior (plus masked garbage columns) is overwritten every step.
        @pl.when(pl.program_id(0) == 0)
        def _():
            a1_ref[...] = jnp.zeros(a1_ref.shape, a1_ref.dtype)
            a2_ref[...] = jnp.zeros(a2_ref.shape, a2_ref.dtype)

        mask = mask_ref[...]                                      # (N, 1) f32

        # ---- conv1: single MXU matmul over the 25-tap slab, tanh ------------
        y1 = jnp.dot(p1_ref[...], w1_ref[...],
                     preferred_element_type=jnp.float32)
        y1 = jnp.tanh(y1 + b1_ref[...]) * mask
        a1_ref[pl.ds(S, N), :] = y1

        # ---- conv2 (groups=5 folded to block-diag dense), tanh --------------
        y2 = jnp.tanh(conv3x3(a1_ref, w2_ref, b2_ref, K2)) * mask
        a2_ref[pl.ds(S, N), :] = y2

        # ---- conv3 (groups=4 folded), sigmoid; store only the 16 real lanes -
        y3 = jax.nn.sigmoid(conv3x3(a2_ref, w3_ref, b3_ref, K3))
        o_ref[:N, :] = y3[:, :C_OUT].astype(o_ref.dtype)

    return kernel


def fused_forward_pallas(packed, p1, mask, B, H, W):
    Hp, Wp, L, N, S = _geom(H, W)
    kernel = _make_fused_kernel(H, W)
    return pl.pallas_call(
        kernel,
        out_shape=jax.ShapeDtypeStruct((B, H * Wp, C_OUT), jnp.bfloat16),
        grid=(B,),
        in_specs=[
            pl.BlockSpec((None, N, K1), lambda b: (b, 0, 0)),   # p1 (per batch)
            pl.BlockSpec((N, 1), lambda b: (0, 0)),             # halo mask
            pl.BlockSpec((K1, CP), lambda b: (0, 0)),           # w1
            pl.BlockSpec((9, K2, CP), lambda b: (0, 0, 0)),     # w2
            pl.BlockSpec((9, K3, CP), lambda b: (0, 0, 0)),     # w3
            pl.BlockSpec((1, CP), lambda b: (0, 0)),            # b1
            pl.BlockSpec((1, CP), lambda b: (0, 0)),            # b2
            pl.BlockSpec((1, CP), lambda b: (0, 0)),            # b3
        ],
        out_specs=pl.BlockSpec((None, H * Wp, C_OUT), lambda b: (b, 0, 0)),
        scratch_shapes=[
            pltpu.VMEM((L, CP), jnp.float32),   # a1 flat padded activation slab
            pltpu.VMEM((L, CP), jnp.float32),   # a2 flat padded activation slab
        ],
        compiler_params=pltpu.CompilerParams(
            dimension_semantics=("parallel",),   # batch across cores
            # vmem_limit_bytes left at the per-generation scoped default.
        ),
    )(p1, mask, packed["w1"], packed["w2"], packed["w3"],
      packed["b1"], packed["b2"], packed["b3"])


# ----------------------------------------------------------------------------
# One-time weight packing (hoisted out of the jitted forward)
# ----------------------------------------------------------------------------
def _shuffle_perm(C, groups):
    # channel_shuffle: y[:, a*groups+g] = x[:, g*cpg+a]
    return np.arange(C).reshape(groups, C // groups).T.reshape(-1)


def grouped_to_dense(w_oihw, groups):
    """(Cout, Cin/groups, KH, KW) PyTorch weight -> dense (KH, KW, Cin, Cout)."""
    w = np.asarray(w_oihw)
    Cout, Cin_pg, KH, KW = w.shape
    out_pg = Cout // groups
    Cin = Cin_pg * groups
    dense = np.zeros((KH, KW, Cin, Cout), np.float32)
    for g in range(groups):
        blk = w[g * out_pg:(g + 1) * out_pg]          # (out_pg, Cin_pg, KH, KW)
        dense[:, :, g * Cin_pg:(g + 1) * Cin_pg,
              g * out_pg:(g + 1) * out_pg] = np.transpose(blk, (2, 3, 1, 0))
    return dense


def pack_params(params):
    perm1 = _shuffle_perm(35, 5)   # folded into conv1 output channels
    perm2 = _shuffle_perm(20, 4)   # folded into conv2 output channels

    # conv1 -> im2col weight (25 taps, row t = kh*5+kw), shuffle1 folded,
    # K padded to 32, Cout lane-padded to 128.
    w1 = np.asarray(params["w1"], np.float32)[:, 0]               # (35, 5, 5)
    w1 = np.transpose(w1, (1, 2, 0)).reshape(25, 35)[:, perm1]
    w1p = np.zeros((K1, CP), np.float32); w1p[:25, :35] = w1
    b1p = np.zeros((1, CP), np.float32)
    b1p[0, :35] = np.asarray(params["b1"])[perm1]

    # conv2 grouped -> dense block-diagonal, shuffle2 folded, K padded to 40
    w2d = grouped_to_dense(params["w2"], 5)[..., perm2]           # (3,3,35,20)
    w2p = np.zeros((9, K2, CP), np.float32)
    w2p[:, :35, :20] = w2d.reshape(9, 35, 20)
    b2p = np.zeros((1, CP), np.float32)
    b2p[0, :20] = np.asarray(params["b2"])[perm2]

    # conv3 grouped -> dense block-diagonal, K padded to 24
    w3d = grouped_to_dense(params["w3"], 4)                       # (3,3,20,16)
    w3p = np.zeros((9, K3, CP), np.float32)
    w3p[:, :20, :16] = w3d.reshape(9, 20, 16)
    b3p = np.zeros((1, CP), np.float32)
    b3p[0, :16] = np.asarray(params["b3"])

    return {
        "w1": jnp.asarray(w1p, jnp.bfloat16),
        "w2": jnp.asarray(w2p, jnp.bfloat16),
        "w3": jnp.asarray(w3p, jnp.bfloat16),
        "b1": jnp.asarray(b1p), "b2": jnp.asarray(b2p), "b3": jnp.asarray(b3p),
    }


# ----------------------------------------------------------------------------
# Public forward (NCHW in, NCHW out — matches the PyTorch module)
# ----------------------------------------------------------------------------
def pixel_shuffle_nhwc_to_nchw(x, r):
    # x: (B, H, W, r*r) with channel c = i*r + j (PyTorch convention)
    B, H, W, _ = x.shape
    x = x.reshape(B, H, W, r, r)
    x = jnp.transpose(x, (0, 1, 3, 2, 4))        # (B, H, r, W, r)
    x = x.reshape(B, H * r, W * r)
    return x[:, None, :, :]                       # (B, 1, rH, rW)


def optimized_net_forward(packed, x_nchw, upscale=4):
    B, Cin, H, W = x_nchw.shape
    assert Cin == 1 and upscale == 4
    Hp, Wp, L, N, S = _geom(H, W)

    # Conv1 im2col directly in the flat slab geometry (stride Wp): tap
    # t = kh*5+kw for slab row r is the zero-padded image at flat r+kh*Wp+kw.
    xp = jnp.pad(x_nchw[:, 0], ((0, 0), (2, 2), (2, 2))).reshape(B, L)
    cols = [xp[:, kh * Wp + kw: kh * Wp + kw + N]
            for kh in range(5) for kw in range(5)]
    p1 = jnp.stack(cols, axis=-1)                                  # (B, N, 25)
    p1 = jnp.pad(p1, ((0, 0), (0, 0), (0, K1 - 25))).astype(jnp.bfloat16)

    # Halo mask: zero the 4 wrap-around columns each slab row picks up so the
    # next layer reads exact zero padding at the image boundary.
    mask = jnp.asarray(((np.arange(N) % Wp) < W)
                       .astype(np.float32)[:, None])               # (N, 1)

    y = fused_forward_pallas(packed, p1, mask, B, H, W)   # (B, H*Wp, 16) bf16
    y = y.reshape(B, H, Wp, C_OUT)[:, :, :W, :].astype(jnp.float32)
    return pixel_shuffle_nhwc_to_nchw(y, upscale)          # (B, 1, 4H, 4W)


# ----------------------------------------------------------------------------
# Pure-JAX (XLA) reference mirroring the PyTorch NCHW forward, for validation
# ----------------------------------------------------------------------------
def _ref_conv(x, w, b, groups):
    kh, kw = w.shape[2], w.shape[3]
    y = jax.lax.conv_general_dilated(
        x, w, window_strides=(1, 1),
        padding=((kh // 2, kh // 2), (kw // 2, kw // 2)),
        dimension_numbers=("NCHW", "OIHW", "NCHW"),
        feature_group_count=groups)
    return y + b[None, :, None, None]


def _ref_channel_shuffle(x, groups):
    B, C, H, W = x.shape
    cpg = C // groups
    x = x.reshape(B, groups, cpg, H, W)
    x = jnp.transpose(x, (0, 2, 1, 3, 4))
    return x.reshape(B, C, H, W)


def _ref_pixel_shuffle(x, r):
    B, C, H, W = x.shape
    x = x.reshape(B, 1, r, r, H, W)
    x = jnp.transpose(x, (0, 1, 4, 2, 5, 3))
    return x.reshape(B, 1, H * r, W * r)


def reference_forward(params, x_nchw, upscale=4):
    x = jnp.tanh(_ref_conv(x_nchw, params["w1"], params["b1"], 1))
    x = _ref_channel_shuffle(x, 5)
    x = jnp.tanh(_ref_conv(x, params["w2"], params["b2"], 5))
    x = _ref_channel_shuffle(x, 4)
    x = jax.nn.sigmoid(_ref_conv(x, params["w3"], params["b3"], 4))
    return _ref_pixel_shuffle(x, upscale)


# ----------------------------------------------------------------------------
# Deterministic parameter init (shapes from the module __init__, upscale=4)
# ----------------------------------------------------------------------------
def init_params(key):
    ks = jax.random.split(key, 6)
    return {
        "w1": 0.1 * jax.random.normal(ks[0], (35, 1, 5, 5), jnp.float32),
        "b1": 0.1 * jax.random.normal(ks[1], (35,), jnp.float32),
        "w2": 0.1 * jax.random.normal(ks[2], (20, 7, 3, 3), jnp.float32),
        "b2": 0.1 * jax.random.normal(ks[3], (20,), jnp.float32),
        "w3": 0.1 * jax.random.normal(ks[4], (16, 5, 3, 3), jnp.float32),
        "b3": 0.1 * jax.random.normal(ks[5], (16,), jnp.float32),
    }


if __name__ == "__main__":
    key = jax.random.PRNGKey(0)
    pkey, xkey = jax.random.split(key)
    params = init_params(pkey)

    B, H, W = 2, 16, 16
    x = jax.random.normal(xkey, (B, 1, H, W), jnp.float32)   # NCHW like PyTorch

    packed = pack_params(params)                              # one-time packing
    fwd = jax.jit(functools.partial(optimized_net_forward, upscale=4))
    out = jax.block_until_ready(fwd(packed, x))
    assert out.shape == (B, 1, 4 * H, 4 * W), out.shape

    ref = jax.block_until_ready(reference_forward(params, x, upscale=4))
    np.testing.assert_allclose(np.asarray(out), np.asarray(ref),
                               atol=2e-2, rtol=2e-2)          # bf16 MXU path

    print("KERNEL_OK")
</pallas_src>

<mosaic_0001>
module attributes {stable_mosaic.version = 11 : i64} {
  func.func @kernel(%arg0: i32, %arg1: memref<1x316x32xbf16, #tpu.memory_space<vmem>>, %arg2: memref<316x1xf32, #tpu.memory_space<vmem>>, %arg3: memref<32x128xbf16, #tpu.memory_space<vmem>>, %arg4: memref<9x40x128xbf16, #tpu.memory_space<vmem>>, %arg5: memref<9x24x128xbf16, #tpu.memory_space<vmem>>, %arg6: memref<1x128xf32, #tpu.memory_space<vmem>>, %arg7: memref<1x128xf32, #tpu.memory_space<vmem>>, %arg8: memref<1x128xf32, #tpu.memory_space<vmem>>, %arg9: memref<1x320x16xbf16, #tpu.memory_space<vmem>>, %arg10: memref<400x128xf32, #tpu.memory_space<vmem>>, %arg11: memref<400x128xf32, #tpu.memory_space<vmem>>) attributes {dimension_semantics = [#tpu.dimension_semantics<parallel>], iteration_bounds = array<i64: 2>, scalar_prefetch = 0 : i64, scratch_operands = 2 : i64, tpu.core_type = #tpu.core_type<tc>, window_params = [{transform_indices = @transform_0, window_bounds = array<i64: 1, 316, 32>}, {pipeline_mode = #tpu.pipeline_mode<synchronous>, transform_indices = @transform_1, window_bounds = array<i64: 316, 1>}, {pipeline_mode = #tpu.pipeline_mode<synchronous>, transform_indices = @transform_2, window_bounds = array<i64: 32, 128>}, {pipeline_mode = #tpu.pipeline_mode<synchronous>, transform_indices = @transform_3, window_bounds = array<i64: 9, 40, 128>}, {pipeline_mode = #tpu.pipeline_mode<synchronous>, transform_indices = @transform_4, window_bounds = array<i64: 9, 24, 128>}, {pipeline_mode = #tpu.pipeline_mode<synchronous>, transform_indices = @transform_5, window_bounds = array<i64: 1, 128>}, {pipeline_mode = #tpu.pipeline_mode<synchronous>, transform_indices = @transform_6, window_bounds = array<i64: 1, 128>}, {pipeline_mode = #tpu.pipeline_mode<synchronous>, transform_indices = @transform_7, window_bounds = array<i64: 1, 128>}, {transform_indices = @transform_8, window_bounds = array<i64: 1, 320, 16>}]} {
    %c0_i32 = arith.constant 0 : i32
    %0 = arith.cmpi eq, %arg0, %c0_i32 : i32
    %1 = arith.extui %0 : i1 to i32
    %c0_i32_0 = arith.constant 0 : i32
    %2 = arith.cmpi ne, %1, %c0_i32_0 : i32
    scf.if %2 {
      %cst_112 = arith.constant 0.000000e+00 : f32
      %141 = vector.broadcast %cst_112 : f32 to vector<400x128xf32>
      %c0_113 = arith.constant 0 : index
      %c0_114 = arith.constant 0 : index
      %142 = vector.load %arg10[%c0_113, %c0_114] : memref<400x128xf32, #tpu.memory_space<vmem>>, vector<400x128xf32>
      tpu.vector_store %arg10[%c0_113, %c0_114], %141 {strides = array<i32>} : memref<400x128xf32, #tpu.memory_space<vmem>>, vector<400x128xf32>,
      %cst_115 = arith.constant 0.000000e+00 : f32
      %143 = vector.broadcast %cst_115 : f32 to vector<400x128xf32>
      %c0_116 = arith.constant 0 : index
      %c0_117 = arith.constant 0 : index
      %144 = vector.load %arg11[%c0_116, %c0_117] : memref<400x128xf32, #tpu.memory_space<vmem>>, vector<400x128xf32>
      tpu.vector_store %arg11[%c0_116, %c0_117], %143 {strides = array<i32>} : memref<400x128xf32, #tpu.memory_space<vmem>>, vector<400x128xf32>,
    } else {
    }
    %c0 = arith.constant 0 : index
    %c0_1 = arith.constant 0 : index
    %3 = vector.load %arg2[%c0, %c0_1] : memref<316x1xf32, #tpu.memory_space<vmem>>, vector<316x1xf32>
    %c0_2 = arith.constant 0 : index
    %c0_3 = arith.constant 0 : index
    %c0_4 = arith.constant 0 : index
    %4 = vector.load %arg1[%c0_2, %c0_3, %c0_4] : memref<1x316x32xbf16, #tpu.memory_space<vmem>>, vector<1x316x32xbf16>
    %5 = vector.shape_cast %4 : vector<1x316x32xbf16> to vector<316x32xbf16>
    %c0_5 = arith.constant 0 : index
    %c0_6 = arith.constant 0 : index
    %6 = vector.load %arg3[%c0_5, %c0_6] : memref<32x128xbf16, #tpu.memory_space<vmem>>, vector<32x128xbf16>
    %cst = arith.constant dense<0.000000e+00> : vector<316x128xf32>
    %7 = tpu.matmul %5, %6, %cst {dimension_numbers = #tpu.dot_dimension_numbers<[1], [0], [0], [1], [0, 0, 1, 1], [], []>} : vector<316x32xbf16>, vector<32x128xbf16>, vector<316x128xf32> -> vector<316x128xf32>
    %c0_7 = arith.constant 0 : index
    %c0_8 = arith.constant 0 : index
    %8 = vector.load %arg6[%c0_7, %c0_8] : memref<1x128xf32, #tpu.memory_space<vmem>>, vector<1x128xf32>
    %9 = vector.broadcast %8 : vector<1x128xf32> to vector<316x128xf32>
    %10 = arith.addf %7, %9 : vector<316x128xf32>
    %11 = math.tanh %10 : vector<316x128xf32>
    %12 = vector.broadcast %3 : vector<316x1xf32> to vector<316x128xf32>
    %13 = arith.mulf %11, %12 : vector<316x128xf32>
    %c42 = arith.constant 42 : index
    %c0_9 = arith.constant 0 : index
    %14 = vector.load %arg10[%c42, %c0_9] : memref<400x128xf32, #tpu.memory_space<vmem>>, vector<316x128xf32>
    tpu.vector_store %arg10[%c42, %c0_9], %13 {strides = array<i32>} : memref<400x128xf32, #tpu.memory_space<vmem>>, vector<316x128xf32>,
    %c21 = arith.constant 21 : index
    %c0_10 = arith.constant 0 : index
    %15 = vector.load %arg10[%c21, %c0_10] : memref<400x128xf32, #tpu.memory_space<vmem>>, vector<316x40xf32>
    %16 = arith.truncf %15 : vector<316x40xf32> to vector<316x40xbf16>
    %c0_11 = arith.constant 0 : index
    %c0_12 = arith.constant 0 : index
    %c0_13 = arith.constant 0 : index
    %17 = vector.load %arg4[%c0_11, %c0_12, %c0_13] : memref<9x40x128xbf16, #tpu.memory_space<vmem>>, vector<1x40x128xbf16>
    %18 = vector.shape_cast %17 : vector<1x40x128xbf16> to vector<40x128xbf16>
    %cst_14 = arith.constant dense<0.000000e+00> : vector<316x128xf32>
    %19 = tpu.matmul %16, %18, %cst_14 {dimension_numbers = #tpu.dot_dimension_numbers<[1], [0], [0], [1], [0, 0, 1, 1], [], []>} : vector<316x40xbf16>, vector<40x128xbf16>, vector<316x128xf32> -> vector<316x128xf32>
    %c22 = arith.constant 22 : index
    %c0_15 = arith.constant 0 : index
    %20 = vector.load %arg10[%c22, %c0_15] : memref<400x128xf32, #tpu.memory_space<vmem>>, vector<316x40xf32>
    %21 = arith.truncf %20 : vector<316x40xf32> to vector<316x40xbf16>
    %c1 = arith.constant 1 : index
    %c0_16 = arith.constant 0 : index
    %c0_17 = arith.constant 0 : index
    %22 = vector.load %arg4[%c1, %c0_16, %c0_17] : memref<9x40x128xbf16, #tpu.memory_space<vmem>>, vector<1x40x128xbf16>
    %23 = vector.shape_cast %22 : vector<1x40x128xbf16> to vector<40x128xbf16>
    %cst_18 = arith.constant dense<0.000000e+00> : vector<316x128xf32>
    %24 = tpu.matmul %21, %23, %cst_18 {dimension_numbers = #tpu.dot_dimension_numbers<[1], [0], [0], [1], [0, 0, 1, 1], [], []>} : vector<316x40xbf16>, vector<40x128xbf16>, vector<316x128xf32> -> vector<316x128xf32>
    %25 = arith.addf %19, %24 : vector<316x128xf32>
    %c23 = arith.constant 23 : index
    %c0_19 = arith.constant 0 : index
    %26 = vector.load %arg10[%c23, %c0_19] : memref<400x128xf32, #tpu.memory_space<vmem>>, vector<316x40xf32>
    %27 = arith.truncf %26 : vector<316x40xf32> to vector<316x40xbf16>
    %c2 = arith.constant 2 : index
    %c0_20 = arith.constant 0 : index
    %c0_21 = arith.constant 0 : index
    %28 = vector.load %arg4[%c2, %c0_20, %c0_21] : memref<9x40x128xbf16, #tpu.memory_space<vmem>>, vector<1x40x128xbf16>
    %29 = vector.shape_cast %28 : vector<1x40x128xbf16> to vector<40x128xbf16>
    %cst_22 = arith.constant dense<0.000000e+00> : vector<316x128xf32>
    %30 = tpu.matmul %27, %29, %cst_22 {dimension_numbers = #tpu.dot_dimension_numbers<[1], [0], [0], [1], [0, 0, 1, 1], [], []>} : vector<316x40xbf16>, vector<40x128xbf16>, vector<316x128xf32> -> vector<316x128xf32>
    %31 = arith.addf %25, %30 : vector<316x128xf32>
    %c41 = arith.constant 41 : index
    %c0_23 = arith.constant 0 : index
    %32 = vector.load %arg10[%c41, %c0_23] : memref<400x128xf32, #tpu.memory_space<vmem>>, vector<316x40xf32>
    %33 = arith.truncf %32 : vector<316x40xf32> to vector<316x40xbf16>
    %c3 = arith.constant 3 : index
    %c0_24 = arith.constant 0 : index
    %c0_25 = arith.constant 0 : index
    %34 = vector.load %arg4[%c3, %c0_24, %c0_25] : memref<9x40x128xbf16, #tpu.memory_space<vmem>>, vector<1x40x128xbf16>
    %35 = vector.shape_cast %34 : vector<1x40x128xbf16> to vector<40x128xbf16>
    %cst_26 = arith.constant dense<0.000000e+00> : vector<316x128xf32>
    %36 = tpu.matmul %33, %35, %cst_26 {dimension_numbers = #tpu.dot_dimension_numbers<[1], [0], [0], [1], [0, 0, 1, 1], [], []>} : vector<316x40xbf16>, vector<40x128xbf16>, vector<316x128xf32> -> vector<316x128xf32>
    %37 = arith.addf %31, %36 : vector<316x128xf32>
    %c42_27 = arith.constant 42 : index
    %c0_28 = arith.constant 0 : index
    %38 = vector.load %arg10[%c42_27, %c0_28] : memref<400x128xf32, #tpu.memory_space<vmem>>, vector<316x40xf32>
    %39 = arith.truncf %38 : vector<316x40xf32> to vector<316x40xbf16>
    %c4 = arith.constant 4 : index
    %c0_29 = arith.constant 0 : index
    %c0_30 = arith.constant 0 : index
    %40 = vector.load %arg4[%c4, %c0_29, %c0_30] : memref<9x40x128xbf16, #tpu.memory_space<vmem>>, vector<1x40x128xbf16>
    %41 = vector.shape_cast %40 : vector<1x40x128xbf16> to vector<40x128xbf16>
    %cst_31 = arith.constant dense<0.000000e+00> : vector<316x128xf32>
    %42 = tpu.matmul %39, %41, %cst_31 {dimension_numbers = #tpu.dot_dimension_numbers<[1], [0], [0], [1], [0, 0, 1, 1], [], []>} : vector<316x40xbf16>, vector<40x128xbf16>, vector<316x128xf32> -> vector<316x128xf32>
    %43 = arith.addf %37, %42 : vector<316x128xf32>
    %c43 = arith.constant 43 : index
    %c0_32 = arith.constant 0 : index
    %44 = vector.load %arg10[%c43, %c0_32] : memref<400x128xf32, #tpu.memory_space<vmem>>, vector<316x40xf32>
    %45 = arith.truncf %44 : vector<316x40xf32> to vector<316x40xbf16>
    %c5 = arith.constant 5 : index
    %c0_33 = arith.constant 0 : index
    %c0_34 = arith.constant 0 : index
    %46 = vector.load %arg4[%c5, %c0_33, %c0_34] : memref<9x40x128xbf16, #tpu.memory_space<vmem>>, vector<1x40x128xbf16>
    %47 = vector.shape_cast %46 : vector<1x40x128xbf16> to vector<40x128xbf16>
    %cst_35 = arith.constant dense<0.000000e+00> : vector<316x128xf32>
    %48 = tpu.matmul %45, %47, %cst_35 {dimension_numbers = #tpu.dot_dimension_numbers<[1], [0], [0], [1], [0, 0, 1, 1], [], []>} : vector<316x40xbf16>, vector<40x128xbf16>, vector<316x128xf32> -> vector<316x128xf32>
    %49 = arith.addf %43, %48 : vector<316x128xf32>
    %c61 = arith.constant 61 : index
    %c0_36 = arith.constant 0 : index
    %50 = vector.load %arg10[%c61, %c0_36] : memref<400x128xf32, #tpu.memory_space<vmem>>, vector<316x40xf32>
    %51 = arith.truncf %50 : vector<316x40xf32> to vector<316x40xbf16>
    %c6 = arith.constant 6 : index
    %c0_37 = arith.constant 0 : index
    %c0_38 = arith.constant 0 : index
    %52 = vector.load %arg4[%c6, %c0_37, %c0_38] : memref<9x40x128xbf16, #tpu.memory_space<vmem>>, vector<1x40x128xbf16>
    %53 = vector.shape_cast %52 : vector<1x40x128xbf16> to vector<40x128xbf16>
    %cst_39 = arith.constant dense<0.000000e+00> : vector<316x128xf32>
    %54 = tpu.matmul %51, %53, %cst_39 {dimension_numbers = #tpu.dot_dimension_numbers<[1], [0], [0], [1], [0, 0, 1, 1], [], []>} : vector<316x40xbf16>, vector<40x128xbf16>, vector<316x128xf32> -> vector<316x128xf32>
    %55 = arith.addf %49, %54 : vector<316x128xf32>
    %c62 = arith.constant 62 : index
    %c0_40 = arith.constant 0 : index
    %56 = vector.load %arg10[%c62, %c0_40] : memref<400x128xf32, #tpu.memory_space<vmem>>, vector<316x40xf32>
    %57 = arith.truncf %56 : vector<316x40xf32> to vector<316x40xbf16>
    %c7 = arith.constant 7 : index
    %c0_41 = arith.constant 0 : index
    %c0_42 = arith.constant 0 : index
    %58 = vector.load %arg4[%c7, %c0_41, %c0_42] : memref<9x40x128xbf16, #tpu.memory_space<vmem>>, vector<1x40x128xbf16>
    %59 = vector.shape_cast %58 : vector<1x40x128xbf16> to vector<40x128xbf16>
    %cst_43 = arith.constant dense<0.000000e+00> : vector<316x128xf32>
    %60 = tpu.matmul %57, %59, %cst_43 {dimension_numbers = #tpu.dot_dimension_numbers<[1], [0], [0], [1], [0, 0, 1, 1], [], []>} : vector<316x40xbf16>, vector<40x128xbf16>, vector<316x128xf32> -> vector<316x128xf32>
    %61 = arith.addf %55, %60 : vector<316x128xf32>
    %c63 = arith.constant 63 : index
    %c0_44 = arith.constant 0 : index
    %62 = vector.load %arg10[%c63, %c0_44] : memref<400x128xf32, #tpu.memory_space<vmem>>, vector<316x40xf32>
    %63 = arith.truncf %62 : vector<316x40xf32> to vector<316x40xbf16>
    %c8 = arith.constant 8 : index
    %c0_45 = arith.constant 0 : index
    %c0_46 = arith.constant 0 : index
    %64 = vector.load %arg4[%c8, %c0_45, %c0_46] : memref<9x40x128xbf16, #tpu.memory_space<vmem>>, vector<1x40x128xbf16>
    %65 = vector.shape_cast %64 : vector<1x40x128xbf16> to vector<40x128xbf16>
    %cst_47 = arith.constant dense<0.000000e+00> : vector<316x128xf32>
    %66 = tpu.matmul %63, %65, %cst_47 {dimension_numbers = #tpu.dot_dimension_numbers<[1], [0], [0], [1], [0, 0, 1, 1], [], []>} : vector<316x40xbf16>, vector<40x128xbf16>, vector<316x128xf32> -> vector<316x128xf32>
    %67 = arith.addf %61, %66 : vector<316x128xf32>
    %c0_48 = arith.constant 0 : index
    %c0_49 = arith.constant 0 : index
    %68 = vector.load %arg7[%c0_48, %c0_49] : memref<1x128xf32, #tpu.memory_space<vmem>>, vector<1x128xf32>
    %69 = vector.broadcast %68 : vector<1x128xf32> to vector<316x128xf32>
    %70 = arith.addf %67, %69 : vector<316x128xf32>
    %71 = math.tanh %70 : vector<316x128xf32>
    %72 = vector.broadcast %3 : vector<316x1xf32> to vector<316x128xf32>
    %73 = arith.mulf %71, %72 : vector<316x128xf32>
    %c42_50 = arith.constant 42 : index
    %c0_51 = arith.constant 0 : index
    %74 = vector.load %arg11[%c42_50, %c0_51] : memref<400x128xf32, #tpu.memory_space<vmem>>, vector<316x128xf32>
    tpu.vector_store %arg11[%c42_50, %c0_51], %73 {strides = array<i32>} : memref<400x128xf32, #tpu.memory_space<vmem>>, vector<316x128xf32>,
    %c21_52 = arith.constant 21 : index
    %c0_53 = arith.constant 0 : index
    %75 = vector.load %arg11[%c21_52, %c0_53] : memref<400x128xf32, #tpu.memory_space<vmem>>, vector<316x24xf32>
    %76 = arith.truncf %75 : vector<316x24xf32> to vector<316x24xbf16>
    %c0_54 = arith.constant 0 : index
    %c0_55 = arith.constant 0 : index
    %c0_56 = arith.constant 0 : index
    %77 = vector.load %arg5[%c0_54, %c0_55, %c0_56] : memref<9x24x128xbf16, #tpu.memory_space<vmem>>, vector<1x24x128xbf16>
    %78 = vector.shape_cast %77 : vector<1x24x128xbf16> to vector<24x128xbf16>
    %cst_57 = arith.constant dense<0.000000e+00> : vector<316x128xf32>
    %79 = tpu.matmul %76, %78, %cst_57 {dimension_numbers = #tpu.dot_dimension_numbers<[1], [0], [0], [1], [0, 0, 1, 1], [], []>} : vector<316x24xbf16>, vector<24x128xbf16>, vector<316x128xf32> -> vector<316x128xf32>
    %c22_58 = arith.constant 22 : index
    %c0_59 = arith.constant 0 : index
    %80 = vector.load %arg11[%c22_58, %c0_59] : memref<400x128xf32, #tpu.memory_space<vmem>>, vector<316x24xf32>
    %81 = arith.truncf %80 : vector<316x24xf32> to vector<316x24xbf16>
    %c1_60 = arith.constant 1 : index
    %c0_61 = arith.constant 0 : index
    %c0_62 = arith.constant 0 : index
    %82 = vector.load %arg5[%c1_60, %c0_61, %c0_62] : memref<9x24x128xbf16, #tpu.memory_space<vmem>>, vector<1x24x128xbf16>
    %83 = vector.shape_cast %82 : vector<1x24x128xbf16> to vector<24x128xbf16>
    %cst_63 = arith.constant dense<0.000000e+00> : vector<316x128xf32>
    %84 = tpu.matmul %81, %83, %cst_63 {dimension_numbers = #tpu.dot_dimension_numbers<[1], [0], [0], [1], [0, 0, 1, 1], [], []>} : vector<316x24xbf16>, vector<24x128xbf16>, vector<316x128xf32> -> vector<316x128xf32>
    %85 = arith.addf %79, %84 : vector<316x128xf32>
    %c23_64 = arith.constant 23 : index
    %c0_65 = arith.constant 0 : index
    %86 = vector.load %arg11[%c23_64, %c0_65] : memref<400x128xf32, #tpu.memory_space<vmem>>, vector<316x24xf32>
    %87 = arith.truncf %86 : vector<316x24xf32> to vector<316x24xbf16>
    %c2_66 = arith.constant 2 : index
    %c0_67 = arith.constant 0 : index
    %c0_68 = arith.constant 0 : index
    %88 = vector.load %arg5[%c2_66, %c0_67, %c0_68] : memref<9x24x128xbf16, #tpu.memory_space<vmem>>, vector<1x24x128xbf16>
    %89 = vector.shape_cast %88 : vector<1x24x128xbf16> to vector<24x128xbf16>
    %cst_69 = arith.constant dense<0.000000e+00> : vector<316x128xf32>
    %90 = tpu.matmul %87, %89, %cst_69 {dimension_numbers = #tpu.dot_dimension_numbers<[1], [0], [0], [1], [0, 0, 1, 1], [], []>} : vector<316x24xbf16>, vector<24x128xbf16>, vector<316x128xf32> -> vector<316x128xf32>
    %91 = arith.addf %85, %90 : vector<316x128xf32>
    %c41_70 = arith.constant 41 : index
    %c0_71 = arith.constant 0 : index
    %92 = vector.load %arg11[%c41_70, %c0_71] : memref<400x128xf32, #tpu.memory_space<vmem>>, vector<316x24xf32>
    %93 = arith.truncf %92 : vector<316x24xf32> to vector<316x24xbf16>
    %c3_72 = arith.constant 3 : index
    %c0_73 = arith.constant 0 : index
    %c0_74 = arith.constant 0 : index
    %94 = vector.load %arg5[%c3_72, %c0_73, %c0_74] : memref<9x24x128xbf16, #tpu.memory_space<vmem>>, vector<1x24x128xbf16>
    %95 = vector.shape_cast %94 : vector<1x24x128xbf16> to vector<24x128xbf16>
    %cst_75 = arith.constant dense<0.000000e+00> : vector<316x128xf32>
    %96 = tpu.matmul %93, %95, %cst_75 {dimension_numbers = #tpu.dot_dimension_numbers<[1], [0], [0], [1], [0, 0, 1, 1], [], []>} : vector<316x24xbf16>, vector<24x128xbf16>, vector<316x128xf32> -> vector<316x128xf32>
    %97 = arith.addf %91, %96 : vector<316x128xf32>
    %c42_76 = arith.constant 42 : index
    %c0_77 = arith.constant 0 : index
    %98 = vector.load %arg11[%c42_76, %c0_77] : memref<400x128xf32, #tpu.memory_space<vmem>>, vector<316x24xf32>
    %99 = arith.truncf %98 : vector<316x24xf32> to vector<316x24xbf16>
    %c4_78 = arith.constant 4 : index
    %c0_79 = arith.constant 0 : index
    %c0_80 = arith.constant 0 : index
    %100 = vector.load %arg5[%c4_78, %c0_79, %c0_80] : memref<9x24x128xbf16, #tpu.memory_space<vmem>>, vector<1x24x128xbf16>
    %101 = vector.shape_cast %100 : vector<1x24x128xbf16> to vector<24x128xbf16>
    %cst_81 = arith.constant dense<0.000000e+00> : vector<316x128xf32>
    %102 = tpu.matmul %99, %101, %cst_81 {dimension_numbers = #tpu.dot_dimension_numbers<[1], [0], [0], [1], [0, 0, 1, 1], [], []>} : vector<316x24xbf16>, vector<24x128xbf16>, vector<316x128xf32> -> vector<316x128xf32>
    %103 = arith.addf %97, %102 : vector<316x128xf32>
    %c43_82 = arith.constant 43 : index
    %c0_83 = arith.constant 0 : index
    %104 = vector.load %arg11[%c43_82, %c0_83] : memref<400x128xf32, #tpu.memory_space<vmem>>, vector<316x24xf32>
    %105 = arith.truncf %104 : vector<316x24xf32> to vector<316x24xbf16>
    %c5_84 = arith.constant 5 : index
    %c0_85 = arith.constant 0 : index
    %c0_86 = arith.constant 0 : index
    %106 = vector.load %arg5[%c5_84, %c0_85, %c0_86] : memref<9x24x128xbf16, #tpu.memory_space<vmem>>, vector<1x24x128xbf16>
    %107 = vector.shape_cast %106 : vector<1x24x128xbf16> to vector<24x128xbf16>
    %cst_87 = arith.constant dense<0.000000e+00> : vector<316x128xf32>
    %108 = tpu.matmul %105, %107, %cst_87 {dimension_numbers = #tpu.dot_dimension_numbers<[1], [0], [0], [1], [0, 0, 1, 1], [], []>} : vector<316x24xbf16>, vector<24x128xbf16>, vector<316x128xf32> -> vector<316x128xf32>
    %109 = arith.addf %103, %108 : vector<316x128xf32>
    %c61_88 = arith.constant 61 : index
    %c0_89 = arith.constant 0 : index
    %110 = vector.load %arg11[%c61_88, %c0_89] : memref<400x128xf32, #tpu.memory_space<vmem>>, vector<316x24xf32>
    %111 = arith.truncf %110 : vector<316x24xf32> to vector<316x24xbf16>
    %c6_90 = arith.constant 6 : index
    %c0_91 = arith.constant 0 : index
    %c0_92 = arith.constant 0 : index
    %112 = vector.load %arg5[%c6_90, %c0_91, %c0_92] : memref<9x24x128xbf16, #tpu.memory_space<vmem>>, vector<1x24x128xbf16>
    %113 = vector.shape_cast %112 : vector<1x24x128xbf16> to vector<24x128xbf16>
    %cst_93 = arith.constant dense<0.000000e+00> : vector<316x128xf32>
    %114 = tpu.matmul %111, %113, %cst_93 {dimension_numbers = #tpu.dot_dimension_numbers<[1], [0], [0], [1], [0, 0, 1, 1], [], []>} : vector<316x24xbf16>, vector<24x128xbf16>, vector<316x128xf32> -> vector<316x128xf32>
    %115 = arith.addf %109, %114 : vector<316x128xf32>
    %c62_94 = arith.constant 62 : index
    %c0_95 = arith.constant 0 : index
    %116 = vector.load %arg11[%c62_94, %c0_95] : memref<400x128xf32, #tpu.memory_space<vmem>>, vector<316x24xf32>
    %117 = arith.truncf %116 : vector<316x24xf32> to vector<316x24xbf16>
    %c7_96 = arith.constant 7 : index
    %c0_97 = arith.constant 0 : index
    %c0_98 = arith.constant 0 : index
    %118 = vector.load %arg5[%c7_96, %c0_97, %c0_98] : memref<9x24x128xbf16, #tpu.memory_space<vmem>>, vector<1x24x128xbf16>
    %119 = vector.shape_cast %118 : vector<1x24x128xbf16> to vector<24x128xbf16>
    %cst_99 = arith.constant dense<0.000000e+00> : vector<316x128xf32>
    %120 = tpu.matmul %117, %119, %cst_99 {dimension_numbers = #tpu.dot_dimension_numbers<[1], [0], [0], [1], [0, 0, 1, 1], [], []>} : vector<316x24xbf16>, vector<24x128xbf16>, vector<316x128xf32> -> vector<316x128xf32>
    %121 = arith.addf %115, %120 : vector<316x128xf32>
    %c63_100 = arith.constant 63 : index
    %c0_101 = arith.constant 0 : index
    %122 = vector.load %arg11[%c63_100, %c0_101] : memref<400x128xf32, #tpu.memory_space<vmem>>, vector<316x24xf32>
    %123 = arith.truncf %122 : vector<316x24xf32> to vector<316x24xbf16>
    %c8_102 = arith.constant 8 : index
    %c0_103 = arith.constant 0 : index
    %c0_104 = arith.constant 0 : index
    %124 = vector.load %arg5[%c8_102, %c0_103, %c0_104] : memref<9x24x128xbf16, #tpu.memory_space<vmem>>, vector<1x24x128xbf16>
    %125 = vector.shape_cast %124 : vector<1x24x128xbf16> to vector<24x128xbf16>
    %cst_105 = arith.constant dense<0.000000e+00> : vector<316x128xf32>
    %126 = tpu.matmul %123, %125, %cst_105 {dimension_numbers = #tpu.dot_dimension_numbers<[1], [0], [0], [1], [0, 0, 1, 1], [], []>} : vector<316x24xbf16>, vector<24x128xbf16>, vector<316x128xf32> -> vector<316x128xf32>
    %127 = arith.addf %121, %126 : vector<316x128xf32>
    %c0_106 = arith.constant 0 : index
    %c0_107 = arith.constant 0 : index
    %128 = vector.load %arg8[%c0_106, %c0_107] : memref<1x128xf32, #tpu.memory_space<vmem>>, vector<1x128xf32>
    %129 = vector.broadcast %128 : vector<1x128xf32> to vector<316x128xf32>
    %130 = arith.addf %127, %129 : vector<316x128xf32>
    %131 = arith.negf %130 : vector<316x128xf32>
    %132 = math.exp %131 : vector<316x128xf32>
    %cst_108 = arith.constant 1.000000e+00 : f32
    %133 = vector.broadcast %cst_108 : f32 to vector<316x128xf32>
    %134 = arith.addf %133, %132 : vector<316x128xf32>
    %135 = arith.divf %133, %134 : vector<316x128xf32>
    %136 = vector.extract_strided_slice %135 {offsets = [0, 0], sizes = [316, 16], strides = [1, 1]} : vector<316x128xf32> to vector<316x16xf32>
    %137 = arith.truncf %136 : vector<316x16xf32> to vector<316x16xbf16>
    %c0_109 = arith.constant 0 : index
    %c0_110 = arith.constant 0 : index
    %c0_111 = arith.constant 0 : index
    %138 = vector.load %arg9[%c0_109, %c0_110, %c0_111] : memref<1x320x16xbf16, #tpu.memory_space<vmem>>, vector<1x316x16xbf16>
    %139 = vector.shape_cast %138 : vector<1x316x16xbf16> to vector<316x16xbf16>
    %140 = vector.shape_cast %137 : vector<316x16xbf16> to vector<1x316x16xbf16>
    tpu.vector_store %arg9[%c0_109, %c0_110, %c0_111], %140 {strides = array<i32>} : memref<1x320x16xbf16, #tpu.memory_space<vmem>>, vector<1x316x16xbf16>,
    return
  }
  func.func @transform_0(%arg0: i32) -> (i32, i32, i32) {
    %c0_i32 = arith.constant 0 : i32
    %c0_i32_0 = arith.constant 0 : i32
    %c0_i32_1 = arith.constant 0 : i32
    return %arg0, %c0_i32, %c0_i32_0 : i32, i32, i32
  }
  func.func @transform_1(%arg0: i32) -> (i32, i32) {
    %c0_i32 = arith.constant 0 : i32
    %c0_i32_0 = arith.constant 0 : i32
    %c0_i32_1 = arith.constant 0 : i32
    return %c0_i32, %c0_i32_0 : i32, i32
  }
  func.func @transform_2(%arg0: i32) -> (i32, i32) {
    %c0_i32 = arith.constant 0 : i32
    %c0_i32_0 = arith.constant 0 : i32
    %c0_i32_1 = arith.constant 0 : i32
    return %c0_i32, %c0_i32_0 : i32, i32
  }
  func.func @transform_3(%arg0: i32) -> (i32, i32, i32) {
    %c0_i32 = arith.constant 0 : i32
    %c0_i32_0 = arith.constant 0 : i32
    %c0_i32_1 = arith.constant 0 : i32
    %c0_i32_2 = arith.constant 0 : i32
    return %c0_i32, %c0_i32_0, %c0_i32_1 : i32, i32, i32
  }
  func.func @transform_4(%arg0: i32) -> (i32, i32, i32) {
    %c0_i32 = arith.constant 0 : i32
    %c0_i32_0 = arith.constant 0 : i32
    %c0_i32_1 = arith.constant 0 : i32
    %c0_i32_2 = arith.constant 0 : i32
    return %c0_i32, %c0_i32_0, %c0_i32_1 : i32, i32, i32
  }
  func.func @transform_5(%arg0: i32) -> (i32, i32) {
    %c0_i32 = arith.constant 0 : i32
    %c0_i32_0 = arith.constant 0 : i32
    %c0_i32_1 = arith.constant 0 : i32
    return %c0_i32, %c0_i32_0 : i32, i32
  }
  func.func @transform_6(%arg0: i32) -> (i32, i32) {
    %c0_i32 = arith.constant 0 : i32
    %c0_i32_0 = arith.constant 0 : i32
    %c0_i32_1 = arith.constant 0 : i32
    return %c0_i32, %c0_i32_0 : i32, i32
  }
  func.func @transform_7(%arg0: i32) -> (i32, i32) {
    %c0_i32 = arith.constant 0 : i32
    %c0_i32_0 = arith.constant 0 : i32
    %c0_i32_1 = arith.constant 0 : i32
    return %c0_i32, %c0_i32_0 : i32, i32
  }
  func.func @transform_8(%arg0: i32) -> (i32, i32, i32) {
    %c0_i32 = arith.constant 0 : i32
    %c0_i32_0 = arith.constant 0 : i32
    %c0_i32_1 = arith.constant 0 : i32
    return %arg0, %c0_i32, %c0_i32_0 : i32, i32, i32
  }
}

</mosaic_0001>

<llo_original>
// kernel: optimized_net_forward.1
$region0: #{optimized_net_forward.1}
  #allocation0 [shape = 'u32[]', space=smem, size = 0x4, offset = 0x4, fixed_abs, tag = 'smem constant byte address 0x4 - core index']
  #allocation1 [shape = 'u32[144,128]{1,0:T(1,128)}', space=vmem, size = 0x12000, scoped, tag = 'internal scratch']
  #allocation2 [shape = 'f32[400,128]{1,0:T(8,128)}', space=vmem, size = 0x32000, scoped, tag = 'scratch operand']
  #allocation3 [shape = 'f32[400,128]{1,0:T(8,128)}', space=vmem, size = 0x32000, scoped, tag = 'scratch operand']
  %s0 = inlined_call_operand.vmem [shape: bf16[2,316,32], index: 0, kind: input, shape index: {}]
  %s1 = inlined_call_operand.vmem [shape: f32[316,1], index: 1, kind: input, shape index: {}]
  %s2 = inlined_call_operand.vmem [shape: bf16[32,128], index: 2, kind: input, shape index: {}]
  %s3 = inlined_call_operand.vmem [shape: bf16[9,40,128], index: 3, kind: input, shape index: {}]
  %s4 = inlined_call_operand.vmem [shape: bf16[9,24,128], index: 4, kind: input, shape index: {}]
  %s5 = inlined_call_operand.vmem [shape: f32[1,128], index: 5, kind: input, shape index: {}]
  %s6 = inlined_call_operand.vmem [shape: f32[1,128], index: 6, kind: input, shape index: {}]
  %s7 = inlined_call_operand.vmem [shape: f32[1,128], index: 7, kind: input, shape index: {}]
  %s8 = inlined_call_operand.vmem [shape: bf16[2,320,16], index: 8, kind: output, shape index: {}]
  %s9 = sld [smem:[#allocation0]]
  $region69: #{optimized_net_forward.1} parent=0
    _
  %s11 = ssub.s32 1, %s9
  %s12 = scalar_select 0, %s11, %s9
  loop: start=0, step=1, limit=4
  $region2: #{optimized_net_forward.1} parent=0 // loop_pre_header
    _
  $region3: #{optimized_net_forward.1} parent=0 // loop_header
    %s14 = sphi 0, %s18
    %p15 = scmp.ge.s32.totalorder %s14, 4
    %s24 = sphi 0, %s26
    %s27 = sphi 0, %s24
    %s28 = sphi 0, %s27
    %s44 = sphi 0, %s28
    %s48 = sphi 0, %s48
    %s50 = sphi 0, %s48
    %s51 = sphi 0, %s50
    %s65 = sphi 0, %s51
    %s69 = sphi 0, %s69
    %s71 = sphi 0, %s69
    %s72 = sphi 0, %s71
    %s86 = sphi 0, %s72
    %s90 = sphi 0, %s90
    %s92 = sphi 0, %s90
    %s93 = sphi 0, %s92
    %s107 = sphi 0, %s93
    %s111 = sphi 0, %s111
    %s113 = sphi 0, %s111
    %s114 = sphi 0, %s113
    %s128 = sphi 0, %s114
    %s132 = sphi 0, %s132
    %s134 = sphi 0, %s132
    %s135 = sphi 0, %s134
    %s149 = sphi 0, %s135
    %s153 = sphi 0, %s153
    %s155 = sphi 0, %s153
    %s156 = sphi 0, %s155
    %s170 = sphi 0, %s156
    %s174 = sphi 0, %s174
    %s176 = sphi 0, %s174
    %s177 = sphi 0, %s176
    %s191 = sphi 0, %s177
    %s197 = sphi 0, %s199
    %s200 = sphi 0, %s197
    %s201 = sphi 0, %s200
    %s217 = sphi 0, %s201
  $region4: #{optimized_net_forward.1} parent=0 // loop_header_branch
    %17 = sbr.rel (%p15) target = $region8
  $region5: #{optimized_net_forward.1} parent=0 // loop_body
    %s19 = ssub.s32 %s14, 1
    %s20 = ssub.s32 %s14, 2
    %s21 = sadd.s32 %s14, 1
    %s22 = ssub.s32 %s14, %s21
    %p23 = scmp.eq.s32.totalorder %s22, 0
    %s25 = sadd.s32 %s24, 1
    %s26 = scalar_select %p23, %s24, %s25
    %p29 = pneg %p23
    %p30 = scmp.eq.s32.totalorder %s14, 1
    %p31 = por %p29, %p30
    %p32 = scmp.ne.s32.totalorder %s24, %s27
    %p33 = scmp.eq.s32.totalorder %s14, 0
    %p34 = por %p32, %p33
    %p35 = scmp.ne.s32.totalorder %s24, %s27
    %p36 = scmp.eq.s32.totalorder %s19, 1
    %p37 = por %p35, %p36
    %p38 = scmp.ne.s32.totalorder %s27, %s28
    %p39 = scmp.eq.s32.totalorder %s19, 0
    %p40 = por %p38, %p39
    %p41 = scmp.ne.s32.totalorder %s27, %s28
    %p42 = scmp.eq.s32.totalorder %s20, 1
    %p43 = por %p41, %p42
    %p45 = scmp.ne.s32.totalorder %s28, %s44
    %p46 = scmp.eq.s32.totalorder %s20, 0
    %p47 = por %p45, %p46
    %s49 = sadd.s32 %s48, 1
    %p52 = scmp.eq.s32.totalorder %s14, 1
    %p53 = scmp.ne.s32.totalorder %s48, %s50
    %p54 = scmp.eq.s32.totalorder %s14, 0
    %p55 = por %p53, %p54
    %p56 = scmp.ne.s32.totalorder %s48, %s50
    %p57 = scmp.eq.s32.totalorder %s19, 1
    %p58 = por %p56, %p57
    %p59 = scmp.ne.s32.totalorder %s50, %s51
    %p60 = scmp.eq.s32.totalorder %s19, 0
    %p61 = por %p59, %p60
    %p62 = scmp.ne.s32.totalorder %s50, %s51
    %p63 = scmp.eq.s32.totalorder %s20, 1
    %p64 = por %p62, %p63
    %p66 = scmp.ne.s32.totalorder %s51, %s65
    %p67 = scmp.eq.s32.totalorder %s20, 0
    %p68 = por %p66, %p67
    %s70 = sadd.s32 %s69, 1
    %p73 = scmp.eq.s32.totalorder %s14, 1
    %p74 = scmp.ne.s32.totalorder %s69, %s71
    %p75 = scmp.eq.s32.totalorder %s14, 0
    %p76 = por %p74, %p75
    %p77 = scmp.ne.s32.totalorder %s69, %s71
    %p78 = scmp.eq.s32.totalorder %s19, 1
    %p79 = por %p77, %p78
    %p80 = scmp.ne.s32.totalorder %s71, %s72
    %p81 = scmp.eq.s32.totalorder %s19, 0
    %p82 = por %p80, %p81
    %p83 = scmp.ne.s32.totalorder %s71, %s72
    %p84 = scmp.eq.s32.totalorder %s20, 1
    %p85 = por %p83, %p84
    %p87 = scmp.ne.s32.totalorder %s72, %s86
    %p88 = scmp.eq.s32.totalorder %s20, 0
    %p89 = por %p87, %p88
    %s91 = sadd.s32 %s90, 1
    %p94 = scmp.eq.s32.totalorder %s14, 1
    %p95 = scmp.ne.s32.totalorder %s90, %s92
    %p96 = scmp.eq.s32.totalorder %s14, 0
    %p97 = por %p95, %p96
    %p98 = scmp.ne.s32.totalorder %s90, %s92
    %p99 = scmp.eq.s32.totalorder %s19, 1
    %p100 = por %p98, %p99
    %p101 = scmp.ne.s32.totalorder %s92, %s93
    %p102 = scmp.eq.s32.totalorder %s19, 0
    %p103 = por %p101, %p102
    %p104 = scmp.ne.s32.totalorder %s92, %s93
    %p105 = scmp.eq.s32.totalorder %s20, 1
    %p106 = por %p104, %p105
    %p108 = scmp.ne.s32.totalorder %s93, %s107
    %p109 = scmp.eq.s32.totalorder %s20, 0
    %p110 = por %p108, %p109
    %s112 = sadd.s32 %s111, 1
    %p115 = scmp.eq.s32.totalorder %s14, 1
    %p116 = scmp.ne.s32.totalorder %s111, %s113
    %p117 = scmp.eq.s32.totalorder %s14, 0
    %p118 = por %p116, %p117
    %p119 = scmp.ne.s32.totalorder %s111, %s113
    %p120 = scmp.eq.s32.totalorder %s19, 1
    %p121 = por %p119, %p120
    %p122 = scmp.ne.s32.totalorder %s113, %s114
    %p123 = scmp.eq.s32.totalorder %s19, 0
    %p124 = por %p122, %p123
    %p125 = scmp.ne.s32.totalorder %s113, %s114
    %p126 = scmp.eq.s32.totalorder %s20, 1
    %p127 = por %p125, %p126
    %p129 = scmp.ne.s32.totalorder %s114, %s128
    %p130 = scmp.eq.s32.totalorder %s20, 0
    %p131 = por %p129, %p130
    %s133 = sadd.s32 %s132, 1
    %p136 = scmp.eq.s32.totalorder %s14, 1
    %p137 = scmp.ne.s32.totalorder %s132, %s134
    %p138 = scmp.eq.s32.totalorder %s14, 0
    %p139 = por %p137, %p138
    %p140 = scmp.ne.s32.totalorder %s132, %s134
    %p141 = scmp.eq.s32.totalorder %s19, 1
    %p142 = por %p140, %p141
    %p143 = scmp.ne.s32.totalorder %s134, %s135
    %p144 = scmp.eq.s32.totalorder %s19, 0
    %p145 = por %p143, %p144
    %p146 = scmp.ne.s32.totalorder %s134, %s135
    %p147 = scmp.eq.s32.totalorder %s20, 1
    %p148 = por %p146, %p147
    %p150 = scmp.ne.s32.totalorder %s135, %s149
    %p151 = scmp.eq.s32.totalorder %s20, 0
    %p152 = por %p150, %p151
    %s154 = sadd.s32 %s153, 1
    %p157 = scmp.eq.s32.totalorder %s14, 1
    %p158 = scmp.ne.s32.totalorder %s153, %s155
    %p159 = scmp.eq.s32.totalorder %s14, 0
    %p160 = por %p158, %p159
    %p161 = scmp.ne.s32.totalorder %s153, %s155
    %p162 = scmp.eq.s32.totalorder %s19, 1
    %p163 = por %p161, %p162
    %p164 = scmp.ne.s32.totalorder %s155, %s156
    %p165 = scmp.eq.s32.totalorder %s19, 0
    %p166 = por %p164, %p165
    %p167 = scmp.ne.s32.totalorder %s155, %s156
    %p168 = scmp.eq.s32.totalorder %s20, 1
    %p169 = por %p167, %p168
    %p171 = scmp.ne.s32.totalorder %s156, %s170
    %p172 = scmp.eq.s32.totalorder %s20, 0
    %p173 = por %p171, %p172
    %s175 = sadd.s32 %s174, 1
    %p178 = scmp.eq.s32.totalorder %s14, 1
    %p179 = scmp.ne.s32.totalorder %s174, %s176
    %p180 = scmp.eq.s32.totalorder %s14, 0
    %p181 = por %p179, %p180
    %p182 = scmp.ne.s32.totalorder %s174, %s176
    %p183 = scmp.eq.s32.totalorder %s19, 1
    %p184 = por %p182, %p183
    %p185 = scmp.ne.s32.totalorder %s176, %s177
    %p186 = scmp.eq.s32.totalorder %s19, 0
    %p187 = por %p185, %p186
    %p188 = scmp.ne.s32.totalorder %s176, %s177
    %p189 = scmp.eq.s32.totalorder %s20, 1
    %p190 = por %p188, %p189
    %p192 = scmp.ne.s32.totalorder %s177, %s191
    %p193 = scmp.eq.s32.totalorder %s20, 0
    %p194 = por %p192, %p193
    %s195 = ssub.s32 %s14, %s21
    %p196 = scmp.eq.s32.totalorder %s195, 0
    %s198 = sadd.s32 %s197, 1
    %s199 = scalar_select %p196, %s197, %s198
    %p202 = pneg %p196
    %p203 = scmp.eq.s32.totalorder %s14, 1
    %p204 = por %p202, %p203
    %p205 = scmp.ne.s32.totalorder %s197, %s200
    %p206 = scmp.eq.s32.totalorder %s14, 0
    %p207 = por %p205, %p206
    %p208 = scmp.ne.s32.totalorder %s197, %s200
    %p209 = scmp.eq.s32.totalorder %s19, 1
    %p210 = por %p208, %p209
    %p211 = scmp.ne.s32.totalorder %s200, %s201
    %p212 = scmp.eq.s32.totalorder %s19, 0
    %p213 = por %p211, %p212
    %p214 = scmp.ne.s32.totalorder %s200, %s201
    %p215 = scmp.eq.s32.totalorder %s20, 1
    %p216 = por %p214, %p215
    %p218 = scmp.ne.s32.totalorder %s201, %s217
    %p219 = scmp.eq.s32.totalorder %s20, 0
    %p220 = por %p218, %p219
    %p221 = scmp.le.s32.totalorder 1, %s14
    %p222 = scmp.lt.s32.totalorder %s14, 3
    %p223 = pnand %p221, %p222
    %p224 = pneg %p223
    // Predicated region
    $region9: #{optimized_net_forward.1} parent=5 // pred_check
      _
    $region10: #{optimized_net_forward.1} parent=5 // pred_check_branch
      %226 = sbr.rel (%p223) target = $region12
    $region11: #{optimized_net_forward.1} parent=5 // pred_region
      %s227 = ssub.s32 %s14, 1
      // Predicated region
      $region13: #{optimized_net_forward.1} parent=11 // pred_check
        %p228 = pneg %p61
      $region14: #{optimized_net_forward.1} parent=11 // pred_check_branch
        %230 = sbr.rel (%p228) target = $region16
      $region15: #{optimized_net_forward.1} parent=11 // pred_region
        _
      $region16: #{optimized_net_forward.1} parent=11 // pred_fallthru
        _
      // Predicated region
      $region17: #{optimized_net_forward.1} parent=11 // pred_check
        %p231 = pneg %p82
      $region18: #{optimized_net_forward.1} parent=11 // pred_check_branch
        %233 = sbr.rel (%p231) target = $region20
      $region19: #{optimized_net_forward.1} parent=11 // pred_region
        _
      $region20: #{optimized_net_forward.1} parent=11 // pred_fallthru
        _
      // Predicated region
      $region21: #{optimized_net_forward.1} parent=11 // pred_check
        %p234 = pneg %p103
      $region22: #{optimized_net_forward.1} parent=11 // pred_check_branch
        %236 = sbr.rel (%p234) target = $region24
      $region23: #{optimized_net_forward.1} parent=11 // pred_region
        _
      $region24: #{optimized_net_forward.1} parent=11 // pred_fallthru
        _
      // Predicated region
      $region25: #{optimized_net_forward.1} parent=11 // pred_check
        %p237 = pneg %p124
      $region26: #{optimized_net_forward.1} parent=11 // pred_check_branch
        %239 = sbr.rel (%p237) target = $region28
      $region27: #{optimized_net_forward.1} parent=11 // pred_region
        _
      $region28: #{optimized_net_forward.1} parent=11 // pred_fallthru
        _
      // Predicated region
      $region29: #{optimized_net_forward.1} parent=11 // pred_check
        %p240 = pneg %p145
      $region30: #{optimized_net_forward.1} parent=11 // pred_check_branch
        %242 = sbr.rel (%p240) target = $region32
      $region31: #{optimized_net_forward.1} parent=11 // pred_region
        _
      $region32: #{optimized_net_forward.1} parent=11 // pred_fallthru
        _
      // Predicated region
      $region33: #{optimized_net_forward.1} parent=11 // pred_check
        %p243 = pneg %p166
      $region34: #{optimized_net_forward.1} parent=11 // pred_check_branch
        %245 = sbr.rel (%p243) target = $region36
      $region35: #{optimized_net_forward.1} parent=11 // pred_region
        _
      $region36: #{optimized_net_forward.1} parent=11 // pred_fallthru
        _
      // Predicated region
      $region37: #{optimized_net_forward.1} parent=11 // pred_check
        %p246 = pneg %p187
      $region38: #{optimized_net_forward.1} parent=11 // pred_check_branch
        %248 = sbr.rel (%p246) target = $region40
      $region39: #{optimized_net_forward.1} parent=11 // pred_region
        _
      $region40: #{optimized_net_forward.1} parent=11 // pred_fallthru
        _
    $region12: #{optimized_net_forward.1} parent=5 // pred_fallthru
      _
    %p249 = scmp.lt.s32.totalorder %s14, 2
    // Predicated region
    $region41: #{optimized_net_forward.1} parent=5 // pred_check
      %p250 = pneg %p249
    $region42: #{optimized_net_forward.1} parent=5 // pred_check_branch
      %252 = sbr.rel (%p250) target = $region44
    $region43: #{optimized_net_forward.1} parent=5 // pred_region
      // Predicated region
      $region45: #{optimized_net_forward.1} parent=43 // pred_check
        %p253 = pneg %p34
      $region46: #{optimized_net_forward.1} parent=43 // pred_check_branch
        %255 = sbr.rel (%p253) target = $region48
      $region47: #{optimized_net_forward.1} parent=43 // pred_region
        %p256 = scmp.lt.s32.totalorder %s14, 1
        %s257 = scalar_select %p256, %s14, 1
        %s258 = smul.addr %s257, 40
        %s259 = smul.addr %s258, 4
        %s260 = scalar_lea.vmem %s0, %s259
      $region48: #{optimized_net_forward.1} parent=43 // pred_fallthru
        _
    $region44: #{optimized_net_forward.1} parent=5 // pred_fallthru
      _
    %p261 = scmp.le.s32.totalorder 1, %s14
    %p262 = scmp.lt.s32.totalorder %s14, 3
    %p263 = pnand %p261, %p262
    %p264 = pneg %p263
    // Predicated region
    $region49: #{optimized_net_forward.1} parent=5 // pred_check
      _
    $region50: #{optimized_net_forward.1} parent=5 // pred_check_branch
      %266 = sbr.rel (%p263) target = $region52
    $region51: #{optimized_net_forward.1} parent=5 // pred_region
      %s267 = ssub.s32 %s14, 1
      %p268 = scmp.lt.s32.totalorder %s19, 1
      %s269 = scalar_select %p268, %s19, 1
      %s270 = smul.addr %s269, 40
      %s271 = smul.addr %s270, 4
      %s272 = scalar_lea.vmem %s0, %s271
      %p273 = pneg %p40
      %p274 = pneg %p37
      %p275 = pneg %p61
      %p276 = pneg %p58
      %p277 = pneg %p82
      %p278 = pneg %p79
      %p279 = pneg %p103
      %p280 = pneg %p100
      %p281 = pneg %p124
      %p282 = pneg %p121
      %p283 = pneg %p145
      %p284 = pneg %p142
      %p285 = pneg %p166
      %p286 = pneg %p163
      %p287 = pneg %p187
      %p288 = pneg %p184
      %p289 = pneg %p213
      %p290 = pneg %p210
      %p291 = scmp.lt.s32.totalorder %s19, 1
      %s292 = scalar_select %p291, %s19, 1
      %s293 = smul.addr %s292, 40
      %s294 = smul.addr %s293, 4
      %s295 = scalar_lea.vmem %s8, %s294
      %p296 = scmp.lt.s32.totalorder %s19, 1
      %s297 = scalar_select %p296, %s19, 1
      %s298 = smul.addr %s297, 40
      %s299 = smul.addr %s298, 4
      %s300 = scalar_lea.vmem %s0, %s299
      %p301 = scmp.lt.s32.totalorder %s19, 1
      %s302 = scalar_select %p301, %s19, 1
      %s303 = smul.addr %s302, 40
      %s304 = smul.addr %s303, 4
      %s305 = scalar_lea.vmem %s8, %s304
      %p307 = scmp.eq.s32.totalorder %s19, 0
      // Predicated region
      $region53: #{optimized_net_forward.1} parent=51 // pred_check
        %p308 = pneg %p307
      $region54: #{optimized_net_forward.1} parent=51 // pred_check_branch
        %310 = sbr.rel (%p308) target = $region56
      $region55: #{optimized_net_forward.1} parent=51 // pred_region
        %311 = vst [vmem:[#allocation2] sm:$0xff] 0.0
        %312 = vst [vmem:[#allocation2 + $0x8] sm:$0xff] 0.0
        %313 = vst [vmem:[#allocation2 + $0x10] sm:$0xff] 0.0
        %314 = vst [vmem:[#allocation2 + $0x18] sm:$0xff] 0.0
        %315 = vst [vmem:[#allocation2 + $0x20] sm:$0xff] 0.0
        %316 = vst [vmem:[#allocation2 + $0x28] sm:$0xff] 0.0
        %317 = vst [vmem:[#allocation2 + $0x30] sm:$0xff] 0.0
        %318 = vst [vmem:[#allocation2 + $0x38] sm:$0xff] 0.0
        %319 = vst [vmem:[#allocation2 + $0x40] sm:$0xff] 0.0
        %320 = vst [vmem:[#allocation2 + $0x48] sm:$0xff] 0.0
        %321 = vst [vmem:[#allocation2 + $0x50] sm:$0xff] 0.0
        %322 = vst [vmem:[#allocation2 + $0x58] sm:$0xff] 0.0
        %323 = vst [vmem:[#allocation2 + $0x60] sm:$0xff] 0.0
        %324 = vst [vmem:[#allocation2 + $0x68] sm:$0xff] 0.0
        %325 = vst [vmem:[#allocation2 + $0x70] sm:$0xff] 0.0
        %326 = vst [vmem:[#allocation2 + $0x78] sm:$0xff] 0.0
        %327 = vst [vmem:[#allocation2 + $0x80] sm:$0xff] 0.0
        %328 = vst [vmem:[#allocation2 + $0x88] sm:$0xff] 0.0
        %329 = vst [vmem:[#allocation2 + $0x90] sm:$0xff] 0.0
        %330 = vst [vmem:[#allocation2 + $0x98] sm:$0xff] 0.0
        %331 = vst [vmem:[#allocation2 + $0xa0] sm:$0xff] 0.0
        %332 = vst [vmem:[#allocation2 + $0xa8] sm:$0xff] 0.0
        %333 = vst [vmem:[#allocation2 + $0xb0] sm:$0xff] 0.0
        %334 = vst [vmem:[#allocation2 + $0xb8] sm:$0xff] 0.0
        %335 = vst [vmem:[#allocation2 + $0xc0] sm:$0xff] 0.0
        %336 = vst [vmem:[#allocation2 + $0xc8] sm:$0xff] 0.0
        %337 = vst [vmem:[#allocation2 + $0xd0] sm:$0xff] 0.0
        %338 = vst [vmem:[#allocation2 + $0xd8] sm:$0xff] 0.0
        %339 = vst [vmem:[#allocation2 + $0xe0] sm:$0xff] 0.0
        %340 = vst [vmem:[#allocation2 + $0xe8] sm:$0xff] 0.0
        %341 = vst [vmem:[#allocation2 + $0xf0] sm:$0xff] 0.0
        %342 = vst [vmem:[#allocation2 + $0xf8] sm:$0xff] 0.0
        %343 = vst [vmem:[#allocation2 + $0x100] sm:$0xff] 0.0
        %344 = vst [vmem:[#allocation2 + $0x108] sm:$0xff] 0.0
        %345 = vst [vmem:[#allocation2 + $0x110] sm:$0xff] 0.0
        %346 = vst [vmem:[#allocation2 + $0x118] sm:$0xff] 0.0
        %347 = vst [vmem:[#allocation2 + $0x120] sm:$0xff] 0.0
        %348 = vst [vmem:[#allocation2 + $0x128] sm:$0xff] 0.0
        %349 = vst [vmem:[#allocation2 + $0x130] sm:$0xff] 0.0
        %350 = vst [vmem:[#allocation2 + $0x138] sm:$0xff] 0.0
        %351 = vst [vmem:[#allocation2 + $0x140] sm:$0xff] 0.0
        %352 = vst [vmem:[#allocation2 + $0x148] sm:$0xff] 0.0
        %353 = vst [vmem:[#allocation2 + $0x150] sm:$0xff] 0.0
        %354 = vst [vmem:[#allocation2 + $0x158] sm:$0xff] 0.0
        %355 = vst [vmem:[#allocation2 + $0x160] sm:$0xff] 0.0
        %356 = vst [vmem:[#allocation2 + $0x168] sm:$0xff] 0.0
        %357 = vst [vmem:[#allocation2 + $0x170] sm:$0xff] 0.0
        %358 = vst [vmem:[#allocation2 + $0x178] sm:$0xff] 0.0
        %359 = vst [vmem:[#allocation2 + $0x180] sm:$0xff] 0.0
        %360 = vst [vmem:[#allocation2 + $0x188] sm:$0xff] 0.0
        %361 = vst [vmem:[#allocation3] sm:$0xff] 0.0
        %362 = vst [vmem:[#allocation3 + $0x8] sm:$0xff] 0.0
        %363 = vst [vmem:[#allocation3 + $0x10] sm:$0xff] 0.0
        %364 = vst [vmem:[#allocation3 + $0x18] sm:$0xff] 0.0
        %365 = vst [vmem:[#allocation3 + $0x20] sm:$0xff] 0.0
        %366 = vst [vmem:[#allocation3 + $0x28] sm:$0xff] 0.0
        %367 = vst [vmem:[#allocation3 + $0x30] sm:$0xff] 0.0
        %368 = vst [vmem:[#allocation3 + $0x38] sm:$0xff] 0.0
        %369 = vst [vmem:[#allocation3 + $0x40] sm:$0xff] 0.0
        %370 = vst [vmem:[#allocation3 + $0x48] sm:$0xff] 0.0
        %371 = vst [vmem:[#allocation3 + $0x50] sm:$0xff] 0.0
        %372 = vst [vmem:[#allocation3 + $0x58] sm:$0xff] 0.0
        %373 = vst [vmem:[#allocation3 + $0x60] sm:$0xff] 0.0
        %374 = vst [vmem:[#allocation3 + $0x68] sm:$0xff] 0.0
        %375 = vst [vmem:[#allocation3 + $0x70] sm:$0xff] 0.0
        %376 = vst [vmem:[#allocation3 + $0x78] sm:$0xff] 0.0
        %377 = vst [vmem:[#allocation3 + $0x80] sm:$0xff] 0.0
        %378 = vst [vmem:[#allocation3 + $0x88] sm:$0xff] 0.0
        %379 = vst [vmem:[#allocation3 + $0x90] sm:$0xff] 0.0
        %380 = vst [vmem:[#allocation3 + $0x98] sm:$0xff] 0.0
        %381 = vst [vmem:[#allocation3 + $0xa0] sm:$0xff] 0.0
        %382 = vst [vmem:[#allocation3 + $0xa8] sm:$0xff] 0.0
        %383 = vst [vmem:[#allocation3 + $0xb0] sm:$0xff] 0.0
        %384 = vst [vmem:[#allocation3 + $0xb8] sm:$0xff] 0.0
        %385 = vst [vmem:[#allocation3 + $0xc0] sm:$0xff] 0.0
        %386 = vst [vmem:[#allocation3 + $0xc8] sm:$0xff] 0.0
        %387 = vst [vmem:[#allocation3 + $0xd0] sm:$0xff] 0.0
        %388 = vst [vmem:[#allocation3 + $0xd8] sm:$0xff] 0.0
        %389 = vst [vmem:[#allocation3 + $0xe0] sm:$0xff] 0.0
        %390 = vst [vmem:[#allocation3 + $0xe8] sm:$0xff] 0.0
        %391 = vst [vmem:[#allocation3 + $0xf0] sm:$0xff] 0.0
        %392 = vst [vmem:[#allocation3 + $0xf8] sm:$0xff] 0.0
        %393 = vst [vmem:[#allocation3 + $0x100] sm:$0xff] 0.0
        %394 = vst [vmem:[#allocation3 + $0x108] sm:$0xff] 0.0
        %395 = vst [vmem:[#allocation3 + $0x110] sm:$0xff] 0.0
        %396 = vst [vmem:[#allocation3 + $0x118] sm:$0xff] 0.0
        %397 = vst [vmem:[#allocation3 + $0x120] sm:$0xff] 0.0
        %398 = vst [vmem:[#allocation3 + $0x128] sm:$0xff] 0.0
        %399 = vst [vmem:[#allocation3 + $0x130] sm:$0xff] 0.0
        %400 = vst [vmem:[#allocation3 + $0x138] sm:$0xff] 0.0
        %401 = vst [vmem:[#allocation3 + $0x140] sm:$0xff] 0.0
        %402 = vst [vmem:[#allocation3 + $0x148] sm:$0xff] 0.0
        %403 = vst [vmem:[#allocation3 + $0x150] sm:$0xff] 0.0
        %404 = vst [vmem:[#allocation3 + $0x158] sm:$0xff] 0.0
        %405 = vst [vmem:[#allocation3 + $0x160] sm:$0xff] 0.0
        %406 = vst [vmem:[#allocation3 + $0x168] sm:$0xff] 0.0
        %407 = vst [vmem:[#allocation3 + $0x170] sm:$0xff] 0.0
        %408 = vst [vmem:[#allocation3 + $0x178] sm:$0xff] 0.0
        %409 = vst [vmem:[#allocation3 + $0x180] sm:$0xff] 0.0
        %410 = vst [vmem:[#allocation3 + $0x188] sm:$0xff] 0.0
      $region56: #{optimized_net_forward.1} parent=51 // pred_fallthru
        _
      %v411 = vld [vmem:[%s1] sm:$0xff]
      %v412 = vld [vmem:[%s1 + $0x8] sm:$0xff]
      %v413 = vld [vmem:[%s1 + $0x10] sm:$0xff]
      %v414 = vld [vmem:[%s1 + $0x18] sm:$0xff]
      %v415 = vld [vmem:[%s1 + $0x20] sm:$0xff]
      %v416 = vld [vmem:[%s1 + $0x28] sm:$0xff]
      %v417 = vld [vmem:[%s1 + $0x30] sm:$0xff]
      %v418 = vld [vmem:[%s1 + $0x38] sm:$0xff]
      %v419 = vld [vmem:[%s1 + $0x40] sm:$0xff]
      %v420 = vld [vmem:[%s1 + $0x48] sm:$0xff]
      %v421 = vld [vmem:[%s1 + $0x50] sm:$0xff]
      %v422 = vld [vmem:[%s1 + $0x58] sm:$0xff]
      %v423 = vld [vmem:[%s1 + $0x60] sm:$0xff]
      %v424 = vld [vmem:[%s1 + $0x68] sm:$0xff]
      %v425 = vld [vmem:[%s1 + $0x70] sm:$0xff]
      %v426 = vld [vmem:[%s1 + $0x78] sm:$0xff]
      %v427 = vld [vmem:[%s1 + $0x80] sm:$0xff]
      %v428 = vld [vmem:[%s1 + $0x88] sm:$0xff]
      %v429 = vld [vmem:[%s1 + $0x90] sm:$0xff]
      %v430 = vld [vmem:[%s1 + $0x98] sm:$0xff]
      %v431 = vld [vmem:[%s1 + $0xa0] sm:$0xff]
      %v432 = vld [vmem:[%s1 + $0xa8] sm:$0xff]
      %v433 = vld [vmem:[%s1 + $0xb0] sm:$0xff]
      %v434 = vld [vmem:[%s1 + $0xb8] sm:$0xff]
      %v435 = vld [vmem:[%s1 + $0xc0] sm:$0xff]
      %v436 = vld [vmem:[%s1 + $0xc8] sm:$0xff]
      %v437 = vld [vmem:[%s1 + $0xd0] sm:$0xff]
      %v438 = vld [vmem:[%s1 + $0xd8] sm:$0xff]
      %v439 = vld [vmem:[%s1 + $0xe0] sm:$0xff]
      %v440 = vld [vmem:[%s1 + $0xe8] sm:$0xff]
      %v441 = vld [vmem:[%s1 + $0xf0] sm:$0xff]
      %v442 = vld [vmem:[%s1 + $0xf8] sm:$0xff]
      %v443 = vld [vmem:[%s1 + $0x100] sm:$0xff]
      %v444 = vld [vmem:[%s1 + $0x108] sm:$0xff]
      %v445 = vld [vmem:[%s1 + $0x110] sm:$0xff]
      %v446 = vld [vmem:[%s1 + $0x118] sm:$0xff]
      %v447 = vld [vmem:[%s1 + $0x120] sm:$0xff]
      %v448 = vld [vmem:[%s1 + $0x128] sm:$0xff]
      %v449 = vld [vmem:[%s1 + $0x130] sm:$0xff]
      %v450 = vld [vmem:[%s1 + $0x138] sm:$0xf]
      %v451 = vld [vmem:[%s300] sm:$0xf]
      %v452 = vld [vmem:[%s300 + $0x4] sm:$0xf]
      %v453 = vld [vmem:[%s300 + $0x8] sm:$0xf]
      %v454 = vld [vmem:[%s300 + $0xc] sm:$0xf]
      %v455 = vld [vmem:[%s300 + $0x10] sm:$0xf]
      %v456 = vld [vmem:[%s300 + $0x14] sm:$0xf]
      %v457 = vld [vmem:[%s300 + $0x18] sm:$0xf]
      %v458 = vld [vmem:[%s300 + $0x1c] sm:$0xf]
      %v459 = vld [vmem:[%s300 + $0x20] sm:$0xf]
      %v460 = vld [vmem:[%s300 + $0x24] sm:$0xf]
      %v461 = vld [vmem:[%s300 + $0x28] sm:$0xf]
      %v462 = vld [vmem:[%s300 + $0x2c] sm:$0xf]
      %v463 = vld [vmem:[%s300 + $0x30] sm:$0xf]
      %v464 = vld [vmem:[%s300 + $0x34] sm:$0xf]
      %v465 = vld [vmem:[%s300 + $0x38] sm:$0xf]
      %v466 = vld [vmem:[%s300 + $0x3c] sm:$0xf]
      %v467 = vld [vmem:[%s300 + $0x40] sm:$0xf]
      %v468 = vld [vmem:[%s300 + $0x44] sm:$0xf]
      %v469 = vld [vmem:[%s300 + $0x48] sm:$0xf]
      %v470 = vld [vmem:[%s300 + $0x4c] sm:$0xf]
      %v471 = vld [vmem:[%s300 + $0x50] sm:$0xf]
      %v472 = vld [vmem:[%s300 + $0x54] sm:$0xf]
      %v473 = vld [vmem:[%s300 + $0x58] sm:$0xf]
      %v474 = vld [vmem:[%s300 + $0x5c] sm:$0xf]
      %v475 = vld [vmem:[%s300 + $0x60] sm:$0xf]
      %v476 = vld [vmem:[%s300 + $0x64] sm:$0xf]
      %v477 = vld [vmem:[%s300 + $0x68] sm:$0xf]
      %v478 = vld [vmem:[%s300 + $0x6c] sm:$0xf]
      %v479 = vld [vmem:[%s300 + $0x70] sm:$0xf]
      %v480 = vld [vmem:[%s300 + $0x74] sm:$0xf]
      %v481 = vld [vmem:[%s300 + $0x78] sm:$0xf]
      %v482 = vld [vmem:[%s300 + $0x7c] sm:$0xf]
      %v483 = vld [vmem:[%s300 + $0x80] sm:$0xf]
      %v484 = vld [vmem:[%s300 + $0x84] sm:$0xf]
      %v485 = vld [vmem:[%s300 + $0x88] sm:$0xf]
      %v486 = vld [vmem:[%s300 + $0x8c] sm:$0xf]
      %v487 = vld [vmem:[%s300 + $0x90] sm:$0xf]
      %v488 = vld [vmem:[%s300 + $0x94] sm:$0xf]
      %v489 = vld [vmem:[%s300 + $0x98] sm:$0xf]
      %v490 = vld [vmem:[%s300 + $0x9c] sm:$0x3]
      %v491 = vld [vmem:[%s2] sm:$0xf]
      %v492 = vld [vmem:[%s2 + $0x4] sm:$0xf]
      %v493 = vld [vmem:[%s2 + $0x8] sm:$0xf]
      %v494 = vld [vmem:[%s2 + $0xc] sm:$0xf]
      %v495 = vld [vmem:[%s5] sm:$0x1]
      %v497 = vlaneseq
      %v498 = vshrl.u32 %v497, 7
      %v499 = vsub.s32 0, %v498
      %v500 = vrot.slane %v495, %v499
      %v542 = vunpack.c.l.b16 %v451
      %v543 = vunpack.c.l.b16 %v452
      %v544 = vunpack.c.l.b16 %v453
      %v545 = vunpack.c.l.b16 %v454
      %v546 = vunpack.c.l.b16 %v455
      %v547 = vunpack.c.l.b16 %v456
      %v548 = vunpack.c.l.b16 %v457
      %v549 = vunpack.c.l.b16 %v458
      %v550 = vunpack.c.l.b16 %v459
      %v551 = vunpack.c.l.b16 %v460
      %v552 = vunpack.c.l.b16 %v461
      %v553 = vunpack.c.l.b16 %v462
      %v554 = vunpack.c.l.b16 %v463
      %v555 = vunpack.c.l.b16 %v464
      %v556 = vunpack.c.l.b16 %v465
      %v557 = vunpack.c.l.b16 %v466
      %v558 = vunpack.c.l.b16 %v467
      %v559 = vunpack.c.l.b16 %v468
      %v560 = vunpack.c.l.b16 %v469
      %v561 = vunpack.c.l.b16 %v470
      %v562 = vunpack.c.l.b16 %v471
      %v563 = vunpack.c.l.b16 %v472
      %v564 = vunpack.c.l.b16 %v473
      %v565 = vunpack.c.l.b16 %v474
      %v566 = vunpack.c.l.b16 %v475
      %v567 = vunpack.c.l.b16 %v476
      %v568 = vunpack.c.l.b16 %v477
      %v569 = vunpack.c.l.b16 %v478
      %v570 = vunpack.c.l.b16 %v479
      %v571 = vunpack.c.l.b16 %v480
      %v572 = vunpack.c.l.b16 %v481
      %v573 = vunpack.c.l.b16 %v482
      %v574 = vunpack.c.l.b16 %v483
      %v575 = vunpack.c.l.b16 %v484
      %v576 = vunpack.c.l.b16 %v485
      %v577 = vunpack.c.l.b16 %v486
      %v578 = vunpack.c.l.b16 %v487
      %v579 = vunpack.c.l.b16 %v488
      %v580 = vunpack.c.l.b16 %v489
      %v581 = vunpack.c.l.b16 %v490
      %v582 = vpack.c.b16 %v543, %v542
      %v583 = vpack.c.b16 %v545, %v544
      %v584 = vpack.c.b16 %v547, %v546
      %v585 = vpack.c.b16 %v549, %v548
      %v586 = vpack.c.b16 %v551, %v550
      %v587 = vpack.c.b16 %v553, %v552
      %v588 = vpack.c.b16 %v555, %v554
      %v589 = vpack.c.b16 %v557, %v556
      %v590 = vpack.c.b16 %v559, %v558
      %v591 = vpack.c.b16 %v561, %v560
      %v592 = vpack.c.b16 %v563, %v562
      %v593 = vpack.c.b16 %v565, %v564
      %v594 = vpack.c.b16 %v567, %v566
      %v595 = vpack.c.b16 %v569, %v568
      %v596 = vpack.c.b16 %v571, %v570
      %v597 = vpack.c.b16 %v573, %v572
      %v598 = vpack.c.b16 %v575, %v574
      %v599 = vpack.c.b16 %v577, %v576
      %v600 = vpack.c.b16 %v579, %v578
      %v601 = vpack.c.b16 %v581, %v580
      %v606 = vunpack.c.l.b16 %v491
      %v607 = vunpack.c.l.b16 %v492
      %v608 = vunpack.c.l.b16 %v493
      %v609 = vunpack.c.l.b16 %v494
      %v610 = vpack.c.b16 %v607, %v606
      %v611 = vpack.c.b16 %v609, %v608
      %vm614 = vcmask 261120
      %v616 = vsel %vm614, %v582, 0
      %v619 = vsel %vm614, %v583, 0
      %v622 = vsel %vm614, %v584, 0
      %v625 = vsel %vm614, %v585, 0
      %v628 = vsel %vm614, %v586, 0
      %v631 = vsel %vm614, %v587, 0
      %v634 = vsel %vm614, %v588, 0
      %v637 = vsel %vm614, %v589, 0
      %v640 = vsel %vm614, %v590, 0
      %v643 = vsel %vm614, %v591, 0
      %v646 = vsel %vm614, %v592, 0
      %v649 = vsel %vm614, %v593, 0
      %v652 = vsel %vm614, %v594, 0
      %v655 = vsel %vm614, %v595, 0
      %v658 = vsel %vm614, %v596, 0
      %v661 = vsel %vm614, %v597, 0
      %v664 = vsel %vm614, %v598, 0
      %v667 = vsel %vm614, %v599, 0
      %v670 = vsel %vm614, %v600, 0
      %v673 = vsel %vm614, %v601, 0
      %675 = vmatprep.subr.bf16.mxu0 0
      %676 = vmatpush1.bf16.msra.mxu0 %v610
      %677 = vmatprep.subr.bf16.mxu0 0
      %678 = vmatpush1.bf16.msra.mxu0 %v611
      %679 = vmatprep.subr.bf16.mxu0 0
      %680 = vmatpush1.bf16.msra.mxu0 0
      %681 = vmatprep.subr.bf16.mxu0 0
      %682 = vmatpush1.bf16.msra.mxu0 0
      %683 = vmatprep.subr.bf16.mxu0 0
      %684 = vmatpush1.bf16.msra.mxu0 0
      %685 = vmatprep.subr.bf16.mxu0 0
      %686 = vmatpush1.bf16.msra.mxu0 0
      %687 = vmatprep.subr.bf16.mxu0 0
      %688 = vmatpush1.bf16.msra.mxu0 0
      %689 = vmatprep.subr.bf16.mxu0 0
      %690 = vmatpush1.bf16.msra.mxu0 0
      %691 = vmatprep.subr.bf16.mxu0 0
      %692 = vmatpush1.bf16.msra.mxu0 0
      %693 = vmatprep.subr.bf16.mxu0 0
      %694 = vmatpush1.bf16.msra.mxu0 0
      %695 = vmatprep.subr.bf16.mxu0 0
      %696 = vmatpush1.bf16.msra.mxu0 0
      %697 = vmatprep.subr.bf16.mxu0 0
      %698 = vmatpush1.bf16.msra.mxu0 0
      %699 = vmatprep.subr.bf16.mxu0 0
      %700 = vmatpush1.bf16.msra.mxu0 0
      %701 = vmatprep.subr.bf16.mxu0 0
      %702 = vmatpush1.bf16.msra.mxu0 0
      %703 = vmatprep.subr.bf16.mxu0 0
      %704 = vmatpush1.bf16.msra.mxu0 0
      %705 = vmatprep.subr.bf16.mxu0 0
      %706 = vmatpush1.bf16.msra.mxu0 0
      %707 = vmatprep.mubr.bf16.mxu0 0
      %708 = vmatmul.mubr.bf16.gmra.mrb[0].mxu0 %v616
      %v709 = vpop.f32.mrb[0].mxu0
      %v710 = vadd.f32 %v500, %v709
      %v711 = vpop.f32.mrb[0].mxu0
      %v712 = vpop.f32.mrb[0].mxu0
      %v713 = vadd.f32 %v500, %v712
      %v714 = vpop.f32.mrb[0].mxu0
      %715 = vmatprep.mubr.bf16.mxu0 0
      %716 = vmatmul.mubr.bf16.gmra.mrb[0].mxu0 %v619
      %v717 = vpop.f32.mrb[0].mxu0
      %v718 = vadd.f32 %v500, %v717
      %v719 = vpop.f32.mrb[0].mxu0
      %v720 = vpop.f32.mrb[0].mxu0
      %v721 = vadd.f32 %v500, %v720
      %v722 = vpop.f32.mrb[0].mxu0
      %723 = vmatprep.mubr.bf16.mxu0 0
      %724 = vmatmul.mubr.bf16.gmra.mrb[0].mxu0 %v622
      %v725 = vpop.f32.mrb[0].mxu0
      %v726 = vadd.f32 %v500, %v725
      %v727 = vpop.f32.mrb[0].mxu0
      %v728 = vpop.f32.mrb[0].mxu0
      %v729 = vadd.f32 %v500, %v728
      %v730 = vpop.f32.mrb[0].mxu0
      %731 = vmatprep.mubr.bf16.mxu0 0
      %732 = vmatmul.mubr.bf16.gmra.mrb[0].mxu0 %v625
      %v733 = vpop.f32.mrb[0].mxu0
      %v734 = vadd.f32 %v500, %v733
      %v735 = vpop.f32.mrb[0].mxu0
      %v736 = vpop.f32.mrb[0].mxu0
      %v737 = vadd.f32 %v500, %v736
      %v738 = vpop.f32.mrb[0].mxu0
      %739 = vmatprep.mubr.bf16.mxu0 0
      %740 = vmatmul.mubr.bf16.gmra.mrb[0].mxu0 %v628
      %v741 = vpop.f32.mrb[0].mxu0
      %v742 = vadd.f32 %v500, %v741
      %v743 = vpop.f32.mrb[0].mxu0
      %v744 = vpop.f32.mrb[0].mxu0
      %v745 = vadd.f32 %v500, %v744
      %v746 = vpop.f32.mrb[0].mxu0
      %747 = vmatprep.mubr.bf16.mxu0 0
      %748 = vmatmul.mubr.bf16.gmra.mrb[0].mxu0 %v631
      %v749 = vpop.f32.mrb[0].mxu0
      %v750 = vadd.f32 %v500, %v749
      %v751 = vpop.f32.mrb[0].mxu0
      %v752 = vpop.f32.mrb[0].mxu0
      %v753 = vadd.f32 %v500, %v752
      %v754 = vpop.f32.mrb[0].mxu0
      %755 = vmatprep.mubr.bf16.mxu0 0
      %756 = vmatmul.mubr.bf16.gmra.mrb[0].mxu0 %v634
      %v757 = vpop.f32.mrb[0].mxu0
      %v758 = vadd.f32 %v500, %v757
      %v759 = vpop.f32.mrb[0].mxu0
      %v760 = vpop.f32.mrb[0].mxu0
      %v761 = vadd.f32 %v500, %v760
      %v762 = vpop.f32.mrb[0].mxu0
      %763 = vmatprep.mubr.bf16.mxu0 0
      %764 = vmatmul.mubr.bf16.gmra.mrb[0].mxu0 %v637
      %v765 = vpop.f32.mrb[0].mxu0
      %v766 = vadd.f32 %v500, %v765
      %v767 = vpop.f32.mrb[0].mxu0
      %v768 = vpop.f32.mrb[0].mxu0
      %v769 = vadd.f32 %v500, %v768
      %v770 = vpop.f32.mrb[0].mxu0
      %771 = vmatprep.mubr.bf16.mxu0 0
      %772 = vmatmul.mubr.bf16.gmra.mrb[0].mxu0 %v640
      %v773 = vpop.f32.mrb[0].mxu0
      %v774 = vadd.f32 %v500, %v773
      %v775 = vpop.f32.mrb[0].mxu0
      %v776 = vpop.f32.mrb[0].mxu0
      %v777 = vadd.f32 %v500, %v776
      %v778 = vpop.f32.mrb[0].mxu0
      %779 = vmatprep.mubr.bf16.mxu0 0
      %780 = vmatmul.mubr.bf16.gmra.mrb[0].mxu0 %v643
      %v781 = vpop.f32.mrb[0].mxu0
      %v782 = vadd.f32 %v500, %v781
      %v783 = vpop.f32.mrb[0].mxu0
      %v784 = vpop.f32.mrb[0].mxu0
      %v785 = vadd.f32 %v500, %v784
      %v786 = vpop.f32.mrb[0].mxu0
      %787 = vmatprep.mubr.bf16.mxu0 0
      %788 = vmatmul.mubr.bf16.gmra.mrb[0].mxu0 %v646
      %v789 = vpop.f32.mrb[0].mxu0
      %v790 = vadd.f32 %v500, %v789
      %v791 = vpop.f32.mrb[0].mxu0
      %v792 = vpop.f32.mrb[0].mxu0
      %v793 = vadd.f32 %v500, %v792
      %v794 = vpop.f32.mrb[0].mxu0
      %795 = vmatprep.mubr.bf16.mxu0 0
      %796 = vmatmul.mubr.bf16.gmra.mrb[0].mxu0 %v649
      %v797 = vpop.f32.mrb[0].mxu0
      %v798 = vadd.f32 %v500, %v797
      %v799 = vpop.f32.mrb[0].mxu0
      %v800 = vpop.f32.mrb[0].mxu0
      %v801 = vadd.f32 %v500, %v800
      %v802 = vpop.f32.mrb[0].mxu0
      %803 = vmatprep.mubr.bf16.mxu0 0
      %804 = vmatmul.mubr.bf16.gmra.mrb[0].mxu0 %v652
      %v805 = vpop.f32.mrb[0].mxu0
      %v806 = vadd.f32 %v500, %v805
      %v807 = vpop.f32.mrb[0].mxu0
      %v808 = vpop.f32.mrb[0].mxu0
      %v809 = vadd.f32 %v500, %v808
      %v810 = vpop.f32.mrb[0].mxu0
      %811 = vmatprep.mubr.bf16.mxu0 0
      %812 = vmatmul.mubr.bf16.gmra.mrb[0].mxu0 %v655
      %v813 = vpop.f32.mrb[0].mxu0
      %v814 = vadd.f32 %v500, %v813
      %v815 = vpop.f32.mrb[0].mxu0
      %v816 = vpop.f32.mrb[0].mxu0
      %v817 = vadd.f32 %v500, %v816
      %v818 = vpop.f32.mrb[0].mxu0
      %819 = vmatprep.mubr.bf16.mxu0 0
      %820 = vmatmul.mubr.bf16.gmra.mrb[0].mxu0 %v658
      %v821 = vpop.f32.mrb[0].mxu0
      %v822 = vadd.f32 %v500, %v821
      %v823 = vpop.f32.mrb[0].mxu0
      %v824 = vpop.f32.mrb[0].mxu0
      %v825 = vadd.f32 %v500, %v824
      %v826 = vpop.f32.mrb[0].mxu0
      %827 = vmatprep.mubr.bf16.mxu0 0
      %828 = vmatmul.mubr.bf16.gmra.mrb[0].mxu0 %v661
      %v829 = vpop.f32.mrb[0].mxu0
      %v830 = vadd.f32 %v500, %v829
      %v831 = vpop.f32.mrb[0].mxu0
      %v832 = vpop.f32.mrb[0].mxu0
      %v833 = vadd.f32 %v500, %v832
      %v834 = vpop.f32.mrb[0].mxu0
      %835 = vmatprep.mubr.bf16.mxu0 0
      %836 = vmatmul.mubr.bf16.gmra.mrb[0].mxu0 %v664
      %v837 = vpop.f32.mrb[0].mxu0
      %v838 = vadd.f32 %v500, %v837
      %v839 = vpop.f32.mrb[0].mxu0
      %v840 = vpop.f32.mrb[0].mxu0
      %v841 = vadd.f32 %v500, %v840
      %v842 = vpop.f32.mrb[0].mxu0
      %843 = vmatprep.mubr.bf16.mxu0 0
      %844 = vmatmul.mubr.bf16.gmra.mrb[0].mxu0 %v667
      %v845 = vpop.f32.mrb[0].mxu0
      %v846 = vadd.f32 %v500, %v845
      %v847 = vpop.f32.mrb[0].mxu0
      %v848 = vpop.f32.mrb[0].mxu0
      %v849 = vadd.f32 %v500, %v848
      %v850 = vpop.f32.mrb[0].mxu0
      %851 = vmatprep.mubr.bf16.mxu0 0
      %852 = vmatmul.mubr.bf16.gmra.mrb[0].mxu0 %v670
      %v853 = vpop.f32.mrb[0].mxu0
      %v854 = vadd.f32 %v500, %v853
      %v855 = vpop.f32.mrb[0].mxu0
      %v856 = vpop.f32.mrb[0].mxu0
      %v857 = vadd.f32 %v500, %v856
      %v858 = vpop.f32.mrb[0].mxu0
      %859 = vmatprep.mubr.bf16.mxu0 0
      %860 = vmatmul.mubr.bf16.gmra.mrb[0].mxu0 %v673
      %v861 = vpop.f32.mrb[0].mxu0
      %v862 = vadd.f32 %v500, %v861
      %v863 = vpop.f32.mrb[0].mxu0
      %v864 = vpop.f32.mrb[0].mxu0
      %v865 = vadd.f32 %v500, %v864
      %v866 = vpop.f32.mrb[0].mxu0
      %867 = vdwg.mxu0
      %v868 = vtanh.pop %v710
      %v869 = vtanh.pop %v713
      %v870 = vtanh.pop %v718
      %v871 = vtanh.pop %v721
      %v872 = vtanh.pop %v726
      %v873 = vtanh.pop %v729
      %v874 = vtanh.pop %v734
      %v875 = vtanh.pop %v737
      %v876 = vtanh.pop %v742
      %v877 = vtanh.pop %v745
      %v878 = vtanh.pop %v750
      %v879 = vtanh.pop %v753
      %v880 = vtanh.pop %v758
      %v881 = vtanh.pop %v761
      %v882 = vtanh.pop %v766
      %v883 = vtanh.pop %v769
      %v884 = vtanh.pop %v774
      %v885 = vtanh.pop %v777
      %v886 = vtanh.pop %v782
      %v887 = vtanh.pop %v785
      %v888 = vtanh.pop %v790
      %v889 = vtanh.pop %v793
      %v890 = vtanh.pop %v798
      %v891 = vtanh.pop %v801
      %v892 = vtanh.pop %v806
      %v893 = vtanh.pop %v809
      %v894 = vtanh.pop %v814
      %v895 = vtanh.pop %v817
      %v896 = vtanh.pop %v822
      %v897 = vtanh.pop %v825
      %v898 = vtanh.pop %v830
      %v899 = vtanh.pop %v833
      %v900 = vtanh.pop %v838
      %v901 = vtanh.pop %v841
      %v902 = vtanh.pop %v846
      %v903 = vtanh.pop %v849
      %v904 = vtanh.pop %v854
      %v905 = vtanh.pop %v857
      %v906 = vtanh.pop %v862
      %v907 = vtanh.pop %v865
      %909 = vset.pattern.permute.xlu0 0
      %910 = vperm.xlu0 %909, %v411
      %v911 = vpop.permute.xlu0 %910
      %914 = vset.pattern.permute.xlu0 0
      %915 = vperm.xlu0 %914, %v412
      %v916 = vpop.permute.xlu0 %915
      %919 = vset.pattern.permute.xlu0 0
      %920 = vperm.xlu0 %919, %v413
      %v921 = vpop.permute.xlu0 %920
      %924 = vset.pattern.permute.xlu0 0
      %925 = vperm.xlu0 %924, %v414
      %v926 = vpop.permute.xlu0 %925
      %929 = vset.pattern.permute.xlu0 0
      %930 = vperm.xlu0 %929, %v415
      %v931 = vpop.permute.xlu0 %930
      %934 = vset.pattern.permute.xlu0 0
      %935 = vperm.xlu0 %934, %v416
      %v936 = vpop.permute.xlu0 %935
      %939 = vset.pattern.permute.xlu0 0
      %940 = vperm.xlu0 %939, %v417
      %v941 = vpop.permute.xlu0 %940
      %944 = vset.pattern.permute.xlu0 0
      %945 = vperm.xlu0 %944, %v418
      %v946 = vpop.permute.xlu0 %945
      %949 = vset.pattern.permute.xlu0 0
      %950 = vperm.xlu0 %949, %v419
      %v951 = vpop.permute.xlu0 %950
      %954 = vset.pattern.permute.xlu0 0
      %955 = vperm.xlu0 %954, %v420
      %v956 = vpop.permute.xlu0 %955
      %959 = vset.pattern.permute.xlu0 0
      %960 = vperm.xlu0 %959, %v421
      %v961 = vpop.permute.xlu0 %960
      %964 = vset.pattern.permute.xlu0 0
      %965 = vperm.xlu0 %964, %v422
      %v966 = vpop.permute.xlu0 %965
      %969 = vset.pattern.permute.xlu0 0
      %970 = vperm.xlu0 %969, %v423
      %v971 = vpop.permute.xlu0 %970
      %974 = vset.pattern.permute.xlu0 0
      %975 = vperm.xlu0 %974, %v424
      %v976 = vpop.permute.xlu0 %975
      %979 = vset.pattern.permute.xlu0 0
      %980 = vperm.xlu0 %979, %v425
      %v981 = vpop.permute.xlu0 %980
      %984 = vset.pattern.permute.xlu0 0
      %985 = vperm.xlu0 %984, %v426
      %v986 = vpop.permute.xlu0 %985
      %989 = vset.pattern.permute.xlu0 0
      %990 = vperm.xlu0 %989, %v427
      %v991 = vpop.permute.xlu0 %990
      %994 = vset.pattern.permute.xlu0 0
      %995 = vperm.xlu0 %994, %v428
      %v996 = vpop.permute.xlu0 %995
      %999 = vset.pattern.permute.xlu0 0
      %1000 = vperm.xlu0 %999, %v429
      %v1001 = vpop.permute.xlu0 %1000
      %1004 = vset.pattern.permute.xlu0 0
      %1005 = vperm.xlu0 %1004, %v430
      %v1006 = vpop.permute.xlu0 %1005
      %1009 = vset.pattern.permute.xlu0 0
      %1010 = vperm.xlu0 %1009, %v431
      %v1011 = vpop.permute.xlu0 %1010
      %1014 = vset.pattern.permute.xlu0 0
      %1015 = vperm.xlu0 %1014, %v432
      %v1016 = vpop.permute.xlu0 %1015
      %1019 = vset.pattern.permute.xlu0 0
      %1020 = vperm.xlu0 %1019, %v433
      %v1021 = vpop.permute.xlu0 %1020
      %1024 = vset.pattern.permute.xlu0 0
      %1025 = vperm.xlu0 %1024, %v434
      %v1026 = vpop.permute.xlu0 %1025
      %1029 = vset.pattern.permute.xlu0 0
      %1030 = vperm.xlu0 %1029, %v435
      %v1031 = vpop.permute.xlu0 %1030
      %1034 = vset.pattern.permute.xlu0 0
      %1035 = vperm.xlu0 %1034, %v436
      %v1036 = vpop.permute.xlu0 %1035
      %1039 = vset.pattern.permute.xlu0 0
      %1040 = vperm.xlu0 %1039, %v437
      %v1041 = vpop.permute.xlu0 %1040
      %1044 = vset.pattern.permute.xlu0 0
      %1045 = vperm.xlu0 %1044, %v438
      %v1046 = vpop.permute.xlu0 %1045
      %1049 = vset.pattern.permute.xlu0 0
      %1050 = vperm.xlu0 %1049, %v439
      %v1051 = vpop.permute.xlu0 %1050
      %1054 = vset.pattern.permute.xlu0 0
      %1055 = vperm.xlu0 %1054, %v440
      %v1056 = vpop.permute.xlu0 %1055
      %1059 = vset.pattern.permute.xlu0 0
      %1060 = vperm.xlu0 %1059, %v441
      %v1061 = vpop.permute.xlu0 %1060
      %1064 = vset.pattern.permute.xlu0 0
      %1065 = vperm.xlu0 %1064, %v442
      %v1066 = vpop.permute.xlu0 %1065
      %1069 = vset.pattern.permute.xlu0 0
      %1070 = vperm.xlu0 %1069, %v443
      %v1071 = vpop.permute.xlu0 %1070
      %1074 = vset.pattern.permute.xlu0 0
      %1075 = vperm.xlu0 %1074, %v444
      %v1076 = vpop.permute.xlu0 %1075
      %1079 = vset.pattern.permute.xlu0 0
      %1080 = vperm.xlu0 %1079, %v445
      %v1081 = vpop.permute.xlu0 %1080
      %1084 = vset.pattern.permute.xlu0 0
      %1085 = vperm.xlu0 %1084, %v446
      %v1086 = vpop.permute.xlu0 %1085
      %1089 = vset.pattern.permute.xlu0 0
      %1090 = vperm.xlu0 %1089, %v447
      %v1091 = vpop.permute.xlu0 %1090
      %1094 = vset.pattern.permute.xlu0 0
      %1095 = vperm.xlu0 %1094, %v448
      %v1096 = vpop.permute.xlu0 %1095
      %1099 = vset.pattern.permute.xlu0 0
      %1100 = vperm.xlu0 %1099, %v449
      %v1101 = vpop.permute.xlu0 %1100
      %1104 = vset.pattern.permute.xlu0 0
      %1105 = vperm.xlu0 %1104, %v450
      %v1106 = vpop.permute.xlu0 %1105
      %v1108 = vmul.f32 %v868, %v911
      %v1109 = vmul.f32 %v869, %v916
      %v1110 = vmul.f32 %v870, %v921
      %v1111 = vmul.f32 %v871, %v926
      %v1112 = vmul.f32 %v872, %v931
      %v1113 = vmul.f32 %v873, %v936
      %v1114 = vmul.f32 %v874, %v941
      %v1115 = vmul.f32 %v875, %v946
      %v1116 = vmul.f32 %v876, %v951
      %v1117 = vmul.f32 %v877, %v956
      %v1118 = vmul.f32 %v878, %v961
      %v1119 = vmul.f32 %v879, %v966
      %v1120 = vmul.f32 %v880, %v971
      %v1121 = vmul.f32 %v881, %v976
      %v1122 = vmul.f32 %v882, %v981
      %v1123 = vmul.f32 %v883, %v986
      %v1124 = vmul.f32 %v884, %v991
      %v1125 = vmul.f32 %v885, %v996
      %v1126 = vmul.f32 %v886, %v1001
      %v1127 = vmul.f32 %v887, %v1006
      %v1128 = vmul.f32 %v888, %v1011
      %v1129 = vmul.f32 %v889, %v1016
      %v1130 = vmul.f32 %v890, %v1021
      %v1131 = vmul.f32 %v891, %v1026
      %v1132 = vmul.f32 %v892, %v1031
      %v1133 = vmul.f32 %v893, %v1036
      %v1134 = vmul.f32 %v894, %v1041
      %v1135 = vmul.f32 %v895, %v1046
      %v1136 = vmul.f32 %v896, %v1051
      %v1137 = vmul.f32 %v897, %v1056
      %v1138 = vmul.f32 %v898, %v1061
      %v1139 = vmul.f32 %v899, %v1066
      %v1140 = vmul.f32 %v900, %v1071
      %v1141 = vmul.f32 %v901, %v1076
      %v1142 = vmul.f32 %v902, %v1081
      %v1143 = vmul.f32 %v903, %v1086
      %v1144 = vmul.f32 %v904, %v1091
      %v1145 = vmul.f32 %v905, %v1096
      %v1146 = vmul.f32 %v906, %v1101
      %v1147 = vmul.f32 %v907, %v1106
      %1148 = vst [vmem:[#allocation2 + $0x2a] sm:$0xff] %v1108
      %1149 = vst [vmem:[#allocation2 + $0x32] sm:$0xff] %v1109
      %1150 = vst [vmem:[#allocation2 + $0x3a] sm:$0xff] %v1110
      %1151 = vst [vmem:[#allocation2 + $0x42] sm:$0xff] %v1111
      %1152 = vst [vmem:[#allocation2 + $0x4a] sm:$0xff] %v1112
      %1153 = vst [vmem:[#allocation2 + $0x52] sm:$0xff] %v1113
      %1154 = vst [vmem:[#allocation2 + $0x5a] sm:$0xff] %v1114
      %1155 = vst [vmem:[#allocation2 + $0x62] sm:$0xff] %v1115
      %1156 = vst [vmem:[#allocation2 + $0x6a] sm:$0xff] %v1116
      %1157 = vst [vmem:[#allocation2 + $0x72] sm:$0xff] %v1117
      %1158 = vst [vmem:[#allocation2 + $0x7a] sm:$0xff] %v1118
      %1159 = vst [vmem:[#allocation2 + $0x82] sm:$0xff] %v1119
      %1160 = vst [vmem:[#allocation2 + $0x8a] sm:$0xff] %v1120
      %1161 = vst [vmem:[#allocation2 + $0x92] sm:$0xff] %v1121
      %1162 = vst [vmem:[#allocation2 + $0x9a] sm:$0xff] %v1122
      %1163 = vst [vmem:[#allocation2 + $0xa2] sm:$0xff] %v1123
      %1164 = vst [vmem:[#allocation2 + $0xaa] sm:$0xff] %v1124
      %1165 = vst [vmem:[#allocation2 + $0xb2] sm:$0xff] %v1125
      %1166 = vst [vmem:[#allocation2 + $0xba] sm:$0xff] %v1126
      %1167 = vst [vmem:[#allocation2 + $0xc2] sm:$0xff] %v1127
      %1168 = vst [vmem:[#allocation2 + $0xca] sm:$0xff] %v1128
      %1169 = vst [vmem:[#allocation2 + $0xd2] sm:$0xff] %v1129
      %1170 = vst [vmem:[#allocation2 + $0xda] sm:$0xff] %v1130
      %1171 = vst [vmem:[#allocation2 + $0xe2] sm:$0xff] %v1131
      %1172 = vst [vmem:[#allocation2 + $0xea] sm:$0xff] %v1132
      %1173 = vst [vmem:[#allocation2 + $0xf2] sm:$0xff] %v1133
      %1174 = vst [vmem:[#allocation2 + $0xfa] sm:$0xff] %v1134
      %1175 = vst [vmem:[#allocation2 + $0x102] sm:$0xff] %v1135
      %1176 = vst [vmem:[#allocation2 + $0x10a] sm:$0xff] %v1136
      %1177 = vst [vmem:[#allocation2 + $0x112] sm:$0xff] %v1137
      %1178 = vst [vmem:[#allocation2 + $0x11a] sm:$0xff] %v1138
      %1179 = vst [vmem:[#allocation2 + $0x122] sm:$0xff] %v1139
      %1180 = vst [vmem:[#allocation2 + $0x12a] sm:$0xff] %v1140
      %1181 = vst [vmem:[#allocation2 + $0x132] sm:$0xff] %v1141
      %1182 = vst [vmem:[#allocation2 + $0x13a] sm:$0xff] %v1142
      %1183 = vst [vmem:[#allocation2 + $0x142] sm:$0xff] %v1143
      %1184 = vst [vmem:[#allocation2 + $0x14a] sm:$0xff] %v1144
      %1185 = vst [vmem:[#allocation2 + $0x152] sm:$0xff] %v1145
      %1186 = vst [vmem:[#allocation2 + $0x15a] sm:$0xff] %v1146
      %1187 = vst [vmem:[#allocation2 + $0x162] sm:$0xf] %v1147
      %v1188 = vld [vmem:[#allocation2 + $0x15] sm:$0xff]
      %v1189 = vld [vmem:[#allocation2 + $0x1d] sm:$0xff]
      %v1190 = vld [vmem:[#allocation2 + $0x25] sm:$0xff]
      %v1191 = vld [vmem:[#allocation2 + $0x2d] sm:$0xff]
      %v1192 = vld [vmem:[#allocation2 + $0x35] sm:$0xff]
      %v1193 = vld [vmem:[#allocation2 + $0x3d] sm:$0xff]
      %v1194 = vld [vmem:[#allocation2 + $0x45] sm:$0xff]
      %v1195 = vld [vmem:[#allocation2 + $0x4d] sm:$0xff]
      %v1196 = vld [vmem:[#allocation2 + $0x55] sm:$0xff]
      %v1197 = vld [vmem:[#allocation2 + $0x5d] sm:$0xff]
      %v1198 = vld [vmem:[#allocation2 + $0x65] sm:$0xff]
      %v1199 = vld [vmem:[#allocation2 + $0x6d] sm:$0xff]
      %v1200 = vld [vmem:[#allocation2 + $0x75] sm:$0xff]
      %v1201 = vld [vmem:[#allocation2 + $0x7d] sm:$0xff]
      %v1202 = vld [vmem:[#allocation2 + $0x85] sm:$0xff]
      %v1203 = vld [vmem:[#allocation2 + $0x8d] sm:$0xff]
      %v1204 = vld [vmem:[#allocation2 + $0x95] sm:$0xff]
      %v1205 = vld [vmem:[#allocation2 + $0x9d] sm:$0xff]
      %v1206 = vld [vmem:[#allocation2 + $0xa5] sm:$0xff]
      %v1207 = vld [vmem:[#allocation2 + $0xad] sm:$0xff]
      %v1208 = vld [vmem:[#allocation2 + $0xb5] sm:$0xff]
      %v1209 = vld [vmem:[#allocation2 + $0xbd] sm:$0xff]
      %v1210 = vld [vmem:[#allocation2 + $0xc5] sm:$0xff]
      %v1211 = vld [vmem:[#allocation2 + $0xcd] sm:$0xff]
      %v1212 = vld [vmem:[#allocation2 + $0xd5] sm:$0xff]
      %v1213 = vld [vmem:[#allocation2 + $0xdd] sm:$0xff]
      %v1214 = vld [vmem:[#allocation2 + $0xe5] sm:$0xff]
      %v1215 = vld [vmem:[#allocation2 + $0xed] sm:$0xff]
      %v1216 = vld [vmem:[#allocation2 + $0xf5] sm:$0xff]
      %v1217 = vld [vmem:[#allocation2 + $0xfd] sm:$0xff]
      %v1218 = vld [vmem:[#allocation2 + $0x105] sm:$0xff]
      %v1219 = vld [vmem:[#allocation2 + $0x10d] sm:$0xff]
      %v1220 = vld [vmem:[#allocation2 + $0x115] sm:$0xff]
      %v1221 = vld [vmem:[#allocation2 + $0x11d] sm:$0xff]
      %v1222 = vld [vmem:[#allocation2 + $0x125] sm:$0xff]
      %v1223 = vld [vmem:[#allocation2 + $0x12d] sm:$0xff]
      %v1224 = vld [vmem:[#allocation2 + $0x135] sm:$0xff]
      %v1225 = vld [vmem:[#allocation2 + $0x13d] sm:$0xff]
      %v1226 = vld [vmem:[#allocation2 + $0x145] sm:$0xff]
      %v1227 = vld [vmem:[#allocation2 + $0x14d] sm:$0xf]
      %v1228 = vpack.c.bf16 %v1189, %v1188
      %v1229 = vpack.c.bf16 %v1191, %v1190
      %v1230 = vpack.c.bf16 %v1193, %v1192
      %v1231 = vpack.c.bf16 %v1195, %v1194
      %v1232 = vpack.c.bf16 %v1197, %v1196
      %v1233 = vpack.c.bf16 %v1199, %v1198
      %v1234 = vpack.c.bf16 %v1201, %v1200
      %v1235 = vpack.c.bf16 %v1203, %v1202
      %v1236 = vpack.c.bf16 %v1205, %v1204
      %v1237 = vpack.c.bf16 %v1207, %v1206
      %v1238 = vpack.c.bf16 %v1209, %v1208
      %v1239 = vpack.c.bf16 %v1211, %v1210
      %v1240 = vpack.c.bf16 %v1213, %v1212
      %v1241 = vpack.c.bf16 %v1215, %v1214
      %v1242 = vpack.c.bf16 %v1217, %v1216
      %v1243 = vpack.c.bf16 %v1219, %v1218
      %v1244 = vpack.c.bf16 %v1221, %v1220
      %v1245 = vpack.c.bf16 %v1223, %v1222
      %v1246 = vpack.c.bf16 %v1225, %v1224
      %v1247 = vpack.c.bf16 %v1227, %v1226
      %v1248 = vld [vmem:[%s3] sm:$0xf]
      %v1249 = vld [vmem:[%s3 + $0x4] sm:$0xf]
      %v1250 = vld [vmem:[%s3 + $0x8] sm:$0xf]
      %v1251 = vld [vmem:[%s3 + $0xc] sm:$0xf]
      %v1252 = vld [vmem:[%s3 + $0x10] sm:$0xf]
      %v1253 = vld [vmem:[#allocation2 + $0x16] sm:$0xff]
      %v1254 = vld [vmem:[#allocation2 + $0x1e] sm:$0xff]
      %v1255 = vld [vmem:[#allocation2 + $0x26] sm:$0xff]
      %v1256 = vld [vmem:[#allocation2 + $0x2e] sm:$0xff]
      %v1257 = vld [vmem:[#allocation2 + $0x36] sm:$0xff]
      %v1258 = vld [vmem:[#allocation2 + $0x3e] sm:$0xff]
      %v1259 = vld [vmem:[#allocation2 + $0x46] sm:$0xff]
      %v1260 = vld [vmem:[#allocation2 + $0x4e] sm:$0xff]
      %v1261 = vld [vmem:[#allocation2 + $0x56] sm:$0xff]
      %v1262 = vld [vmem:[#allocation2 + $0x5e] sm:$0xff]
      %v1263 = vld [vmem:[#allocation2 + $0x66] sm:$0xff]
      %v1264 = vld [vmem:[#allocation2 + $0x6e] sm:$0xff]
      %v1265 = vld [vmem:[#allocation2 + $0x76] sm:$0xff]
      %v1266 = vld [vmem:[#allocation2 + $0x7e] sm:$0xff]
      %v1267 = vld [vmem:[#allocation2 + $0x86] sm:$0xff]
      %v1268 = vld [vmem:[#allocation2 + $0x8e] sm:$0xff]
      %v1269 = vld [vmem:[#allocation2 + $0x96] sm:$0xff]
      %v1270 = vld [vmem:[#allocation2 + $0x9e] sm:$0xff]
      %v1271 = vld [vmem:[#allocation2 + $0xa6] sm:$0xff]
      %v1272 = vld [vmem:[#allocation2 + $0xae] sm:$0xff]
      %v1273 = vld [vmem:[#allocation2 + $0xb6] sm:$0xff]
      %v1274 = vld [vmem:[#allocation2 + $0xbe] sm:$0xff]
      %v1275 = vld [vmem:[#allocation2 + $0xc6] sm:$0xff]
      %v1276 = vld [vmem:[#allocation2 + $0xce] sm:$0xff]
      %v1277 = vld [vmem:[#allocation2 + $0xd6] sm:$0xff]
      %v1278 = vld [vmem:[#allocation2 + $0xde] sm:$0xff]
      %v1279 = vld [vmem:[#allocation2 + $0xe6] sm:$0xff]
      %v1280 = vld [vmem:[#allocation2 + $0xee] sm:$0xff]
      %v1281 = vld [vmem:[#allocation2 + $0xf6] sm:$0xff]
      %v1282 = vld [vmem:[#allocation2 + $0xfe] sm:$0xff]
      %v1283 = vld [vmem:[#allocation2 + $0x106] sm:$0xff]
      %v1284 = vld [vmem:[#allocation2 + $0x10e] sm:$0xff]
      %v1285 = vld [vmem:[#allocation2 + $0x116] sm:$0xff]
      %v1286 = vld [vmem:[#allocation2 + $0x11e] sm:$0xff]
      %v1287 = vld [vmem:[#allocation2 + $0x126] sm:$0xff]
      %v1288 = vld [vmem:[#allocation2 + $0x12e] sm:$0xff]
      %v1289 = vld [vmem:[#allocation2 + $0x136] sm:$0xff]
      %v1290 = vld [vmem:[#allocation2 + $0x13e] sm:$0xff]
      %v1291 = vld [vmem:[#allocation2 + $0x146] sm:$0xff]
      %v1292 = vld [vmem:[#allocation2 + $0x14e] sm:$0xf]
      %v1293 = vpack.c.bf16 %v1254, %v1253
      %v1294 = vpack.c.bf16 %v1256, %v1255
      %v1295 = vpack.c.bf16 %v1258, %v1257
      %v1296 = vpack.c.bf16 %v1260, %v1259
      %v1297 = vpack.c.bf16 %v1262, %v1261
      %v1298 = vpack.c.bf16 %v1264, %v1263
      %v1299 = vpack.c.bf16 %v1266, %v1265
      %v1300 = vpack.c.bf16 %v1268, %v1267
      %v1301 = vpack.c.bf16 %v1270, %v1269
      %v1302 = vpack.c.bf16 %v1272, %v1271
      %v1303 = vpack.c.bf16 %v1274, %v1273
      %v1304 = vpack.c.bf16 %v1276, %v1275
      %v1305 = vpack.c.bf16 %v1278, %v1277
      %v1306 = vpack.c.bf16 %v1280, %v1279
      %v1307 = vpack.c.bf16 %v1282, %v1281
      %v1308 = vpack.c.bf16 %v1284, %v1283
      %v1309 = vpack.c.bf16 %v1286, %v1285
      %v1310 = vpack.c.bf16 %v1288, %v1287
      %v1311 = vpack.c.bf16 %v1290, %v1289
      %v1312 = vpack.c.bf16 %v1292, %v1291
      %s1313 = scalar_lea.vmem %s3, 20
      %v1314 = vld [vmem:[%s1313] sm:$0xf]
      %v1315 = vld [vmem:[%s1313 + $0x4] sm:$0xf]
      %v1316 = vld [vmem:[%s1313 + $0x8] sm:$0xf]
      %v1317 = vld [vmem:[%s1313 + $0xc] sm:$0xf]
      %v1318 = vld [vmem:[%s1313 + $0x10] sm:$0xf]
      %v1324 = vunpack.c.l.b16 %v1314
      %v1325 = vunpack.c.l.b16 %v1315
      %v1326 = vunpack.c.l.b16 %v1316
      %v1327 = vunpack.c.l.b16 %v1317
      %v1328 = vunpack.c.l.b16 %v1318
      %v1329 = vpack.c.b16 %v1325, %v1324
      %v1330 = vpack.c.b16 %v1327, %v1326
      %v1331 = vpack.c.b16 %v1328, %v1328
      %vm1334 = vcmask 326656
      %v1336 = vsel %vm1334, %v1293, 0
      %v1339 = vsel %vm1334, %v1294, 0
      %v1342 = vsel %vm1334, %v1295, 0
      %v1345 = vsel %vm1334, %v1296, 0
      %v1348 = vsel %vm1334, %v1297, 0
      %v1351 = vsel %vm1334, %v1298, 0
      %v1354 = vsel %vm1334, %v1299, 0
      %v1357 = vsel %vm1334, %v1300, 0
      %v1360 = vsel %vm1334, %v1301, 0
      %v1363 = vsel %vm1334, %v1302, 0
      %v1366 = vsel %vm1334, %v1303, 0
      %v1369 = vsel %vm1334, %v1304, 0
      %v1372 = vsel %vm1334, %v1305, 0
      %v1375 = vsel %vm1334, %v1306, 0
      %v1378 = vsel %vm1334, %v1307, 0
      %v1381 = vsel %vm1334, %v1308, 0
      %v1384 = vsel %vm1334, %v1309, 0
      %v1387 = vsel %vm1334, %v1310, 0
      %v1390 = vsel %vm1334, %v1311, 0
      %v1393 = vsel %vm1334, %v1312, 0
      %vm1395 = vcmask 1043456
      %v1397 = vsel %vm1395, %v1331, 0
      %1399 = vmatprep.subr.bf16.mxu0 0
      %1400 = vmatpush1.bf16.msra.mxu0 %v1329
      %1401 = vmatprep.subr.bf16.mxu0 0
      %1402 = vmatpush1.bf16.msra.mxu0 %v1330
      %1403 = vmatprep.subr.bf16.mxu0 0
      %1404 = vmatpush1.bf16.msra.mxu0 %v1397
      %1405 = vmatprep.subr.bf16.mxu0 0
      %1406 = vmatpush1.bf16.msra.mxu0 0
      %1407 = vmatprep.subr.bf16.mxu0 0
      %1408 = vmatpush1.bf16.msra.mxu0 0
      %1409 = vmatprep.subr.bf16.mxu0 0
      %1410 = vmatpush1.bf16.msra.mxu0 0
      %1411 = vmatprep.subr.bf16.mxu0 0
      %1412 = vmatpush1.bf16.msra.mxu0 0
      %1413 = vmatprep.subr.bf16.mxu0 0
      %1414 = vmatpush1.bf16.msra.mxu0 0
      %1415 = vmatprep.subr.bf16.mxu0 0
      %1416 = vmatpush1.bf16.msra.mxu0 0
      %1417 = vmatprep.subr.bf16.mxu0 0
      %1418 = vmatpush1.bf16.msra.mxu0 0
      %1419 = vmatprep.subr.bf16.mxu0 0
      %1420 = vmatpush1.bf16.msra.mxu0 0
      %1421 = vmatprep.subr.bf16.mxu0 0
      %1422 = vmatpush1.bf16.msra.mxu0 0
      %1423 = vmatprep.subr.bf16.mxu0 0
      %1424 = vmatpush1.bf16.msra.mxu0 0
      %1425 = vmatprep.subr.bf16.mxu0 0
      %1426 = vmatpush1.bf16.msra.mxu0 0
      %1427 = vmatprep.subr.bf16.mxu0 0
      %1428 = vmatpush1.bf16.msra.mxu0 0
      %1429 = vmatprep.subr.bf16.mxu0 0
      %1430 = vmatpush1.bf16.msra.mxu0 0
      %1431 = vmatprep.mubr.bf16.mxu0 0
      %1432 = vmatmul.mubr.bf16.gmra.mrb[0].mxu0 %v1336
      %v1433 = vpop.f32.mrb[0].mxu0
      %v1434 = vadd.f32 0.0, %v1433
      %v1435 = vpop.f32.mrb[0].mxu0
      %v1436 = vpop.f32.mrb[0].mxu0
      %v1437 = vadd.f32 0.0, %v1436
      %v1438 = vpop.f32.mrb[0].mxu0
      %1439 = vmatprep.mubr.bf16.mxu0 0
      %1440 = vmatmul.mubr.bf16.gmra.mrb[0].mxu0 %v1339
      %v1441 = vpop.f32.mrb[0].mxu0
      %v1442 = vadd.f32 0.0, %v1441
      %v1443 = vpop.f32.mrb[0].mxu0
      %v1444 = vpop.f32.mrb[0].mxu0
      %v1445 = vadd.f32 0.0, %v1444
      %v1446 = vpop.f32.mrb[0].mxu0
      %1447 = vmatprep.mubr.bf16.mxu0 0
      %1448 = vmatmul.mubr.bf16.gmra.mrb[0].mxu0 %v1342
      %v1449 = vpop.f32.mrb[0].mxu0
      %v1450 = vadd.f32 0.0, %v1449
      %v1451 = vpop.f32.mrb[0].mxu0
      %v1452 = vpop.f32.mrb[0].mxu0
      %v1453 = vadd.f32 0.0, %v1452
      %v1454 = vpop.f32.mrb[0].mxu0
      %1455 = vmatprep.mubr.bf16.mxu0 0
      %1456 = vmatmul.mubr.bf16.gmra.mrb[0].mxu0 %v1345
      %v1457 = vpop.f32.mrb[0].mxu0
      %v1458 = vadd.f32 0.0, %v1457
      %v1459 = vpop.f32.mrb[0].mxu0
      %v1460 = vpop.f32.mrb[0].mxu0
      %v1461 = vadd.f32 0.0, %v1460
      %v1462 = vpop.f32.mrb[0].mxu0
      %1463 = vmatprep.mubr.bf16.mxu0 0
      %1464 = vmatmul.mubr.bf16.gmra.mrb[0].mxu0 %v1348
      %v1465 = vpop.f32.mrb[0].mxu0
      %v1466 = vadd.f32 0.0, %v1465
      %v1467 = vpop.f32.mrb[0].mxu0
      %v1468 = vpop.f32.mrb[0].mxu0
      %v1469 = vadd.f32 0.0, %v1468
      %v1470 = vpop.f32.mrb[0].mxu0
      %1471 = vmatprep.mubr.bf16.mxu0 0
      %1472 = vmatmul.mubr.bf16.gmra.mrb[0].mxu0 %v1351
      %v1473 = vpop.f32.mrb[0].mxu0
      %v1474 = vadd.f32 0.0, %v1473
      %v1475 = vpop.f32.mrb[0].mxu0
      %v1476 = vpop.f32.mrb[0].mxu0
      %v1477 = vadd.f32 0.0, %v1476
      %v1478 = vpop.f32.mrb[0].mxu0
      %1479 = vmatprep.mubr.bf16.mxu0 0
      %1480 = vmatmul.mubr.bf16.gmra.mrb[0].mxu0 %v1354
      %v1481 = vpop.f32.mrb[0].mxu0
      %v1482 = vadd.f32 0.0, %v1481
      %v1483 = vpop.f32.mrb[0].mxu0
      %v1484 = vpop.f32.mrb[0].mxu0
      %v1485 = vadd.f32 0.0, %v1484
      %v1486 = vpop.f32.mrb[0].mxu0
      %1487 = vmatprep.mubr.bf16.mxu0 0
      %1488 = vmatmul.mubr.bf16.gmra.mrb[0].mxu0 %v1357
      %v1489 = vpop.f32.mrb[0].mxu0
      %v1490 = vadd.f32 0.0, %v1489
      %v1491 = vpop.f32.mrb[0].mxu0
      %v1492 = vpop.f32.mrb[0].mxu0
      %v1493 = vadd.f32 0.0, %v1492
      %v1494 = vpop.f32.mrb[0].mxu0
      %1495 = vmatprep.mubr.bf16.mxu0 0
      %1496 = vmatmul.mubr.bf16.gmra.mrb[0].mxu0 %v1360
      %v1497 = vpop.f32.mrb[0].mxu0
      %v1498 = vadd.f32 0.0, %v1497
      %v1499 = vpop.f32.mrb[0].mxu0
      %v1500 = vpop.f32.mrb[0].mxu0
      %v1501 = vadd.f32 0.0, %v1500
      %v1502 = vpop.f32.mrb[0].mxu0
      %1503 = vmatprep.mubr.bf16.mxu0 0
      %1504 = vmatmul.mubr.bf16.gmra.mrb[0].mxu0 %v1363
      %v1505 = vpop.f32.mrb[0].mxu0
      %v1506 = vadd.f32 0.0, %v1505
      %v1507 = vpop.f32.mrb[0].mxu0
      %v1508 = vpop.f32.mrb[0].mxu0
      %v1509 = vadd.f32 0.0, %v1508
      %v1510 = vpop.f32.mrb[0].mxu0
      %1511 = vmatprep.mubr.bf16.mxu0 0
      %1512 = vmatmul.mubr.bf16.gmra.mrb[0].mxu0 %v1366
      %v1513 = vpop.f32.mrb[0].mxu0
      %v1514 = vadd.f32 0.0, %v1513
      %v1515 = vpop.f32.mrb[0].mxu0
      %v1516 = vpop.f32.mrb[0].mxu0
      %v1517 = vadd.f32 0.0, %v1516
      %v1518 = vpop.f32.mrb[0].mxu0
      %1519 = vmatprep.mubr.bf16.mxu0 0
      %1520 = vmatmul.mubr.bf16.gmra.mrb[0].mxu0 %v1369
      %v1521 = vpop.f32.mrb[0].mxu0
      %v1522 = vadd.f32 0.0, %v1521
      %v1523 = vpop.f32.mrb[0].mxu0
      %v1524 = vpop.f32.mrb[0].mxu0
      %v1525 = vadd.f32 0.0, %v1524
      %v1526 = vpop.f32.mrb[0].mxu0
      %1527 = vmatprep.mubr.bf16.mxu0 0
      %1528 = vmatmul.mubr.bf16.gmra.mrb[0].mxu0 %v1372
      %v1529 = vpop.f32.mrb[0].mxu0
      %v1530 = vadd.f32 0.0, %v1529
      %v1531 = vpop.f32.mrb[0].mxu0
      %v1532 = vpop.f32.mrb[0].mxu0
      %v1533 = vadd.f32 0.0, %v1532
      %v1534 = vpop.f32.mrb[0].mxu0
      %1535 = vmatprep.mubr.bf16.mxu0 0
      %1536 = vmatmul.mubr.bf16.gmra.mrb[0].mxu0 %v1375
      %v1537 = vpop.f32.mrb[0].mxu0
      %v1538 = vadd.f32 0.0, %v1537
      %v1539 = vpop.f32.mrb[0].mxu0
      %v1540 = vpop.f32.mrb[0].mxu0
      %v1541 = vadd.f32 0.0, %v1540
      %v1542 = vpop.f32.mrb[0].mxu0
      %1543 = vmatprep.mubr.bf16.mxu0 0
      %1544 = vmatmul.mubr.bf16.gmra.mrb[0].mxu0 %v1378
      %v1545 = vpop.f32.mrb[0].mxu0
      %v1546 = vadd.f32 0.0, %v1545
      %v1547 = vpop.f32.mrb[0].mxu0
      %v1548 = vpop.f32.mrb[0].mxu0
      %v1549 = vadd.f32 0.0, %v1548
      %v1550 = vpop.f32.mrb[0].mxu0
      %1551 = vmatprep.mubr.bf16.mxu0 0
      %1552 = vmatmul.mubr.bf16.gmra.mrb[0].mxu0 %v1381
      %v1553 = vpop.f32.mrb[0].mxu0
      %v1554 = vadd.f32 0.0, %v1553
      %v1555 = vpop.f32.mrb[0].mxu0
      %v1556 = vpop.f32.mrb[0].mxu0
      %v1557 = vadd.f32 0.0, %v1556
      %v1558 = vpop.f32.mrb[0].mxu0
      %1559 = vmatprep.mubr.bf16.mxu0 0
      %1560 = vmatmul.mubr.bf16.gmra.mrb[0].mxu0 %v1384
      %v1561 = vpop.f32.mrb[0].mxu0
      %v1562 = vadd.f32 0.0, %v1561
      %v1563 = vpop.f32.mrb[0].mxu0
      %v1564 = vpop.f32.mrb[0].mxu0
      %v1565 = vadd.f32 0.0, %v1564
      %v1566 = vpop.f32.mrb[0].mxu0
      %1567 = vmatprep.mubr.bf16.mxu0 0
      %1568 = vmatmul.mubr.bf16.gmra.mrb[0].mxu0 %v1387
      %v1569 = vpop.f32.mrb[0].mxu0
      %v1570 = vadd.f32 0.0, %v1569
      %v1571 = vpop.f32.mrb[0].mxu0
      %v1572 = vpop.f32.mrb[0].mxu0
      %v1573 = vadd.f32 0.0, %v1572
      %v1574 = vpop.f32.mrb[0].mxu0
      %1575 = vmatprep.mubr.bf16.mxu0 0
      %1576 = vmatmul.mubr.bf16.gmra.mrb[0].mxu0 %v1390
      %v1577 = vpop.f32.mrb[0].mxu0
      %v1578 = vadd.f32 0.0, %v1577
      %v1579 = vpop.f32.mrb[0].mxu0
      %v1580 = vpop.f32.mrb[0].mxu0
      %v1581 = vadd.f32 0.0, %v1580
      %v1582 = vpop.f32.mrb[0].mxu0
      %1583 = vmatprep.mubr.bf16.mxu0 0
      %1584 = vmatmul.mubr.bf16.gmra.mrb[0].mxu0 %v1393
      %v1585 = vpop.f32.mrb[0].mxu0
      %v1586 = vadd.f32 0.0, %v1585
      %v1587 = vpop.f32.mrb[0].mxu0
      %v1588 = vpop.f32.mrb[0].mxu0
      %v1589 = vadd.f32 0.0, %v1588
      %v1590 = vpop.f32.mrb[0].mxu0
      %1591 = vdwg.mxu0
      %v1597 = vunpack.c.l.b16 %v1248
      %v1598 = vunpack.c.l.b16 %v1249
      %v1599 = vunpack.c.l.b16 %v1250
      %v1600 = vunpack.c.l.b16 %v1251
      %v1601 = vunpack.c.l.b16 %v1252
      %v1602 = vpack.c.b16 %v1598, %v1597
      %v1603 = vpack.c.b16 %v1600, %v1599
      %v1604 = vpack.c.b16 %v1601, %v1601
      %v1608 = vsel %vm1334, %v1228, 0
      %v1611 = vsel %vm1334, %v1229, 0
      %v1614 = vsel %vm1334, %v1230, 0
      %v1617 = vsel %vm1334, %v1231, 0
      %v1620 = vsel %vm1334, %v1232, 0
      %v1623 = vsel %vm1334, %v1233, 0
      %v1626 = vsel %vm1334, %v1234, 0
      %v1629 = vsel %vm1334, %v1235, 0
      %v1632 = vsel %vm1334, %v1236, 0
      %v1635 = vsel %vm1334, %v1237, 0
      %v1638 = vsel %vm1334, %v1238, 0
      %v1641 = vsel %vm1334, %v1239, 0
      %v1644 = vsel %vm1334, %v1240, 0
      %v1647 = vsel %vm1334, %v1241, 0
      %v1650 = vsel %vm1334, %v1242, 0
      %v1653 = vsel %vm1334, %v1243, 0
      %v1656 = vsel %vm1334, %v1244, 0
      %v1659 = vsel %vm1334, %v1245, 0
      %v1662 = vsel %vm1334, %v1246, 0
      %v1665 = vsel %vm1334, %v1247, 0
      %v1668 = vsel %vm1395, %v1604, 0
      %1670 = vmatprep.subr.bf16.mxu0 0
      %1671 = vmatpush1.bf16.msra.mxu0 %v1602
      %1672 = vmatprep.subr.bf16.mxu0 0
      %1673 = vmatpush1.bf16.msra.mxu0 %v1603
      %1674 = vmatprep.subr.bf16.mxu0 0
      %1675 = vmatpush1.bf16.msra.mxu0 %v1668
      %1676 = vmatprep.subr.bf16.mxu0 0
      %1677 = vmatpush1.bf16.msra.mxu0 0
      %1678 = vmatprep.subr.bf16.mxu0 0
      %1679 = vmatpush1.bf16.msra.mxu0 0
      %1680 = vmatprep.subr.bf16.mxu0 0
      %1681 = vmatpush1.bf16.msra.mxu0 0
      %1682 = vmatprep.subr.bf16.mxu0 0
      %1683 = vmatpush1.bf16.msra.mxu0 0
      %1684 = vmatprep.subr.bf16.mxu0 0
      %1685 = vmatpush1.bf16.msra.mxu0 0
      %1686 = vmatprep.subr.bf16.mxu0 0
      %1687 = vmatpush1.bf16.msra.mxu0 0
      %1688 = vmatprep.subr.bf16.mxu0 0
      %1689 = vmatpush1.bf16.msra.mxu0 0
      %1690 = vmatprep.subr.bf16.mxu0 0
      %1691 = vmatpush1.bf16.msra.mxu0 0
      %1692 = vmatprep.subr.bf16.mxu0 0
      %1693 = vmatpush1.bf16.msra.mxu0 0
      %1694 = vmatprep.subr.bf16.mxu0 0
      %1695 = vmatpush1.bf16.msra.mxu0 0
      %1696 = vmatprep.subr.bf16.mxu0 0
      %1697 = vmatpush1.bf16.msra.mxu0 0
      %1698 = vmatprep.subr.bf16.mxu0 0
      %1699 = vmatpush1.bf16.msra.mxu0 0
      %1700 = vmatprep.subr.bf16.mxu0 0
      %1701 = vmatpush1.bf16.msra.mxu0 0
      %1702 = vmatprep.mubr.bf16.mxu0 0
      %1703 = vmatmul.mubr.bf16.gmra.mrb[0].mxu0 %v1608
      %v1704 = vpop.f32.mrb[0].mxu0
      %v1705 = vadd.f32 %v1434, %v1704
      %v1706 = vpop.f32.mrb[0].mxu0
      %v1707 = vpop.f32.mrb[0].mxu0
      %v1708 = vadd.f32 %v1437, %v1707
      %v1709 = vpop.f32.mrb[0].mxu0
      %1710 = vmatprep.mubr.bf16.mxu0 0
      %1711 = vmatmul.mubr.bf16.gmra.mrb[0].mxu0 %v1611
      %v1712 = vpop.f32.mrb[0].mxu0
      %v1713 = vadd.f32 %v1442, %v1712
      %v1714 = vpop.f32.mrb[0].mxu0
      %v1715 = vpop.f32.mrb[0].mxu0
      %v1716 = vadd.f32 %v1445, %v1715
      %v1717 = vpop.f32.mrb[0].mxu0
      %1718 = vmatprep.mubr.bf16.mxu0 0
      %1719 = vmatmul.mubr.bf16.gmra.mrb[0].mxu0 %v1614
      %v1720 = vpop.f32.mrb[0].mxu0
      %v1721 = vadd.f32 %v1450, %v1720
      %v1722 = vpop.f32.mrb[0].mxu0
      %v1723 = vpop.f32.mrb[0].mxu0
      %v1724 = vadd.f32 %v1453, %v1723
      %v1725 = vpop.f32.mrb[0].mxu0
      %1726 = vmatprep.mubr.bf16.mxu0 0
      %1727 = vmatmul.mubr.bf16.gmra.mrb[0].mxu0 %v1617
      %v1728 = vpop.f32.mrb[0].mxu0
      %v1729 = vadd.f32 %v1458, %v1728
      %v1730 = vpop.f32.mrb[0].mxu0
      %v1731 = vpop.f32.mrb[0].mxu0
      %v1732 = vadd.f32 %v1461, %v1731
      %v1733 = vpop.f32.mrb[0].mxu0
      %1734 = vmatprep.mubr.bf16.mxu0 0
      %1735 = vmatmul.mubr.bf16.gmra.mrb[0].mxu0 %v1620
      %v1736 = vpop.f32.mrb[0].mxu0
      %v1737 = vadd.f32 %v1466, %v1736
      %v1738 = vpop.f32.mrb[0].mxu0
      %v1739 = vpop.f32.mrb[0].mxu0
      %v1740 = vadd.f32 %v1469, %v1739
      %v1741 = vpop.f32.mrb[0].mxu0
      %1742 = vmatprep.mubr.bf16.mxu0 0
      %1743 = vmatmul.mubr.bf16.gmra.mrb[0].mxu0 %v1623
      %v1744 = vpop.f32.mrb[0].mxu0
      %v1745 = vadd.f32 %v1474, %v1744
      %v1746 = vpop.f32.mrb[0].mxu0
      %v1747 = vpop.f32.mrb[0].mxu0
      %v1748 = vadd.f32 %v1477, %v1747
      %v1749 = vpop.f32.mrb[0].mxu0
      %1750 = vmatprep.mubr.bf16.mxu0 0
      %1751 = vmatmul.mubr.bf16.gmra.mrb[0].mxu0 %v1626
      %v1752 = vpop.f32.mrb[0].mxu0
      %v1753 = vadd.f32 %v1482, %v1752
      %v1754 = vpop.f32.mrb[0].mxu0
      %v1755 = vpop.f32.mrb[0].mxu0
      %v1756 = vadd.f32 %v1485, %v1755
      %v1757 = vpop.f32.mrb[0].mxu0
      %1758 = vmatprep.mubr.bf16.mxu0 0
      %1759 = vmatmul.mubr.bf16.gmra.mrb[0].mxu0 %v1629
      %v1760 = vpop.f32.mrb[0].mxu0
      %v1761 = vadd.f32 %v1490, %v1760
      %v1762 = vpop.f32.mrb[0].mxu0
      %v1763 = vpop.f32.mrb[0].mxu0
      %v1764 = vadd.f32 %v1493, %v1763
      %v1765 = vpop.f32.mrb[0].mxu0
      %1766 = vmatprep.mubr.bf16.mxu0 0
      %1767 = vmatmul.mubr.bf16.gmra.mrb[0].mxu0 %v1632
      %v1768 = vpop.f32.mrb[0].mxu0
      %v1769 = vadd.f32 %v1498, %v1768
      %v1770 = vpop.f32.mrb[0].mxu0
      %v1771 = vpop.f32.mrb[0].mxu0
      %v1772 = vadd.f32 %v1501, %v1771
      %v1773 = vpop.f32.mrb[0].mxu0
      %1774 = vmatprep.mubr.bf16.mxu0 0
      %1775 = vmatmul.mubr.bf16.gmra.mrb[0].mxu0 %v1635
      %v1776 = vpop.f32.mrb[0].mxu0
      %v1777 = vadd.f32 %v1506, %v1776
      %v1778 = vpop.f32.mrb[0].mxu0
      %v1779 = vpop.f32.mrb[0].mxu0
      %v1780 = vadd.f32 %v1509, %v1779
      %v1781 = vpop.f32.mrb[0].mxu0
      %1782 = vmatprep.mubr.bf16.mxu0 0
      %1783 = vmatmul.mubr.bf16.gmra.mrb[0].mxu0 %v1638
      %v1784 = vpop.f32.mrb[0].mxu0
      %v1785 = vadd.f32 %v1514, %v1784
      %v1786 = vpop.f32.mrb[0].mxu0
      %v1787 = vpop.f32.mrb[0].mxu0
      %v1788 = vadd.f32 %v1517, %v1787
      %v1789 = vpop.f32.mrb[0].mxu0
      %1790 = vmatprep.mubr.bf16.mxu0 0
      %1791 = vmatmul.mubr.bf16.gmra.mrb[0].mxu0 %v1641
      %v1792 = vpop.f32.mrb[0].mxu0
      %v1793 = vadd.f32 %v1522, %v1792
      %v1794 = vpop.f32.mrb[0].mxu0
      %v1795 = vpop.f32.mrb[0].mxu0
      %v1796 = vadd.f32 %v1525, %v1795
      %v1797 = vpop.f32.mrb[0].mxu0
      %1798 = vmatprep.mubr.bf16.mxu0 0
      %1799 = vmatmul.mubr.bf16.gmra.mrb[0].mxu0 %v1644
      %v1800 = vpop.f32.mrb[0].mxu0
      %v1801 = vadd.f32 %v1530, %v1800
      %v1802 = vpop.f32.mrb[0].mxu0
      %v1803 = vpop.f32.mrb[0].mxu0
      %v1804 = vadd.f32 %v1533, %v1803
      %v1805 = vpop.f32.mrb[0].mxu0
      %1806 = vmatprep.mubr.bf16.mxu0 0
      %1807 = vmatmul.mubr.bf16.gmra.mrb[0].mxu0 %v1647
      %v1808 = vpop.f32.mrb[0].mxu0
      %v1809 = vadd.f32 %v1538, %v1808
      %v1810 = vpop.f32.mrb[0].mxu0
      %v1811 = vpop.f32.mrb[0].mxu0
      %v1812 = vadd.f32 %v1541, %v1811
      %v1813 = vpop.f32.mrb[0].mxu0
      %1814 = vmatprep.mubr.bf16.mxu0 0
      %1815 = vmatmul.mubr.bf16.gmra.mrb[0].mxu0 %v1650
      %v1816 = vpop.f32.mrb[0].mxu0
      %v1817 = vadd.f32 %v1546, %v1816
      %v1818 = vpop.f32.mrb[0].mxu0
      %v1819 = vpop.f32.mrb[0].mxu0
      %v1820 = vadd.f32 %v1549, %v1819
      %v1821 = vpop.f32.mrb[0].mxu0
      %1822 = vmatprep.mubr.bf16.mxu0 0
      %1823 = vmatmul.mubr.bf16.gmra.mrb[0].mxu0 %v1653
      %v1824 = vpop.f32.mrb[0].mxu0
      %v1825 = vadd.f32 %v1554, %v1824
      %v1826 = vpop.f32.mrb[0].mxu0
      %v1827 = vpop.f32.mrb[0].mxu0
      %v1828 = vadd.f32 %v1557, %v1827
      %v1829 = vpop.f32.mrb[0].mxu0
      %1830 = vmatprep.mubr.bf16.mxu0 0
      %1831 = vmatmul.mubr.bf16.gmra.mrb[0].mxu0 %v1656
      %v1832 = vpop.f32.mrb[0].mxu0
      %v1833 = vadd.f32 %v1562, %v1832
      %v1834 = vpop.f32.mrb[0].mxu0
      %v1835 = vpop.f32.mrb[0].mxu0
      %v1836 = vadd.f32 %v1565, %v1835
      %v1837 = vpop.f32.mrb[0].mxu0
      %1838 = vmatprep.mubr.bf16.mxu0 0
      %1839 = vmatmul.mubr.bf16.gmra.mrb[0].mxu0 %v1659
      %v1840 = vpop.f32.mrb[0].mxu0
      %v1841 = vadd.f32 %v1570, %v1840
      %v1842 = vpop.f32.mrb[0].mxu0
      %v1843 = vpop.f32.mrb[0].mxu0
      %v1844 = vadd.f32 %v1573, %v1843
      %v1845 = vpop.f32.mrb[0].mxu0
      %1846 = vmatprep.mubr.bf16.mxu0 0
      %1847 = vmatmul.mubr.bf16.gmra.mrb[0].mxu0 %v1662
      %v1848 = vpop.f32.mrb[0].mxu0
      %v1849 = vadd.f32 %v1578, %v1848
      %v1850 = vpop.f32.mrb[0].mxu0
      %v1851 = vpop.f32.mrb[0].mxu0
      %v1852 = vadd.f32 %v1581, %v1851
      %v1853 = vpop.f32.mrb[0].mxu0
      %1854 = vmatprep.mubr.bf16.mxu0 0
      %1855 = vmatmul.mubr.bf16.gmra.mrb[0].mxu0 %v1665
      %v1856 = vpop.f32.mrb[0].mxu0
      %v1857 = vadd.f32 %v1586, %v1856
      %v1858 = vpop.f32.mrb[0].mxu0
      %v1859 = vpop.f32.mrb[0].mxu0
      %v1860 = vadd.f32 %v1589, %v1859
      %v1861 = vpop.f32.mrb[0].mxu0
      %1862 = vdwg.mxu0
      %v1863 = vld [vmem:[#allocation2 + $0x17] sm:$0xff]
      %v1864 = vld [vmem:[#allocation2 + $0x1f] sm:$0xff]
      %v1865 = vld [vmem:[#allocation2 + $0x27] sm:$0xff]
      %v1866 = vld [vmem:[#allocation2 + $0x2f] sm:$0xff]
      %v1867 = vld [vmem:[#allocation2 + $0x37] sm:$0xff]
      %v1868 = vld [vmem:[#allocation2 + $0x3f] sm:$0xff]
      %v1869 = vld [vmem:[#allocation2 + $0x47] sm:$0xff]
      %v1870 = vld [vmem:[#allocation2 + $0x4f] sm:$0xff]
      %v1871 = vld [vmem:[#allocation2 + $0x57] sm:$0xff]
      %v1872 = vld [vmem:[#allocation2 + $0x5f] sm:$0xff]
      %v1873 = vld [vmem:[#allocation2 + $0x67] sm:$0xff]
      %v1874 = vld [vmem:[#allocation2 + $0x6f] sm:$0xff]
      %v1875 = vld [vmem:[#allocation2 + $0x77] sm:$0xff]
      %v1876 = vld [vmem:[#allocation2 + $0x7f] sm:$0xff]
      %v1877 = vld [vmem:[#allocation2 + $0x87] sm:$0xff]
      %v1878 = vld [vmem:[#allocation2 + $0x8f] sm:$0xff]
      %v1879 = vld [vmem:[#allocation2 + $0x97] sm:$0xff]
      %v1880 = vld [vmem:[#allocation2 + $0x9f] sm:$0xff]
      %v1881 = vld [vmem:[#allocation2 + $0xa7] sm:$0xff]
      %v1882 = vld [vmem:[#allocation2 + $0xaf] sm:$0xff]
      %v1883 = vld [vmem:[#allocation2 + $0xb7] sm:$0xff]
      %v1884 = vld [vmem:[#allocation2 + $0xbf] sm:$0xff]
      %v1885 = vld [vmem:[#allocation2 + $0xc7] sm:$0xff]
      %v1886 = vld [vmem:[#allocation2 + $0xcf] sm:$0xff]
      %v1887 = vld [vmem:[#allocation2 + $0xd7] sm:$0xff]
      %v1888 = vld [vmem:[#allocation2 + $0xdf] sm:$0xff]
      %v1889 = vld [vmem:[#allocation2 + $0xe7] sm:$0xff]
      %v1890 = vld [vmem:[#allocation2 + $0xef] sm:$0xff]
      %v1891 = vld [vmem:[#allocation2 + $0xf7] sm:$0xff]
      %v1892 = vld [vmem:[#allocation2 + $0xff] sm:$0xff]
      %v1893 = vld [vmem:[#allocation2 + $0x107] sm:$0xff]
      %v1894 = vld [vmem:[#allocation2 + $0x10f] sm:$0xff]
      %v1895 = vld [vmem:[#allocation2 + $0x117] sm:$0xff]
      %v1896 = vld [vmem:[#allocation2 + $0x11f] sm:$0xff]
      %v1897 = vld [vmem:[#allocation2 + $0x127] sm:$0xff]
      %v1898 = vld [vmem:[#allocation2 + $0x12f] sm:$0xff]
      %v1899 = vld [vmem:[#allocation2 + $0x137] sm:$0xff]
      %v1900 = vld [vmem:[#allocation2 + $0x13f] sm:$0xff]
      %v1901 = vld [vmem:[#allocation2 + $0x147] sm:$0xff]
      %v1902 = vld [vmem:[#allocation2 + $0x14f] sm:$0xf]
      %v1903 = vpack.c.bf16 %v1864, %v1863
      %v1904 = vpack.c.bf16 %v1866, %v1865
      %v1905 = vpack.c.bf16 %v1868, %v1867
      %v1906 = vpack.c.bf16 %v1870, %v1869
      %v1907 = vpack.c.bf16 %v1872, %v1871
      %v1908 = vpack.c.bf16 %v1874, %v1873
      %v1909 = vpack.c.bf16 %v1876, %v1875
      %v1910 = vpack.c.bf16 %v1878, %v1877
      %v1911 = vpack.c.bf16 %v1880, %v1879
      %v1912 = vpack.c.bf16 %v1882, %v1881
      %v1913 = vpack.c.bf16 %v1884, %v1883
      %v1914 = vpack.c.bf16 %v1886, %v1885
      %v1915 = vpack.c.bf16 %v1888, %v1887
      %v1916 = vpack.c.bf16 %v1890, %v1889
      %v1917 = vpack.c.bf16 %v1892, %v1891
      %v1918 = vpack.c.bf16 %v1894, %v1893
      %v1919 = vpack.c.bf16 %v1896, %v1895
      %v1920 = vpack.c.bf16 %v1898, %v1897
      %v1921 = vpack.c.bf16 %v1900, %v1899
      %v1922 = vpack.c.bf16 %v1902, %v1901
      %s1923 = scalar_lea.vmem %s3, 40
      %v1924 = vld [vmem:[%s1923] sm:$0xf]
      %v1925 = vld [vmem:[%s1923 + $0x4] sm:$0xf]
      %v1926 = vld [vmem:[%s1923 + $0x8] sm:$0xf]
      %v1927 = vld [vmem:[%s1923 + $0xc] sm:$0xf]
      %v1928 = vld [vmem:[%s1923 + $0x10] sm:$0xf]
      %v1934 = vunpack.c.l.b16 %v1924
      %v1935 = vunpack.c.l.b16 %v1925
      %v1936 = vunpack.c.l.b16 %v1926
      %v1937 = vunpack.c.l.b16 %v1927
      %v1938 = vunpack.c.l.b16 %v1928
      %v1939 = vpack.c.b16 %v1935, %v1934
      %v1940 = vpack.c.b16 %v1937, %v1936
      %v1941 = vpack.c.b16 %v1938, %v1938
      %v1945 = vsel %vm1334, %v1903, 0
      %v1948 = vsel %vm1334, %v1904, 0
      %v1951 = vsel %vm1334, %v1905, 0
      %v1954 = vsel %vm1334, %v1906, 0
      %v1957 = vsel %vm1334, %v1907, 0
      %v1960 = vsel %vm1334, %v1908, 0
      %v1963 = vsel %vm1334, %v1909, 0
      %v1966 = vsel %vm1334, %v1910, 0
      %v1969 = vsel %vm1334, %v1911, 0
      %v1972 = vsel %vm1334, %v1912, 0
      %v1975 = vsel %vm1334, %v1913, 0
      %v1978 = vsel %vm1334, %v1914, 0
      %v1981 = vsel %vm1334, %v1915, 0
      %v1984 = vsel %vm1334, %v1916, 0
      %v1987 = vsel %vm1334, %v1917, 0
      %v1990 = vsel %vm1334, %v1918, 0
      %v1993 = vsel %vm1334, %v1919, 0
      %v1996 = vsel %vm1334, %v1920, 0
      %v1999 = vsel %vm1334, %v1921, 0
      %v2002 = vsel %vm1334, %v1922, 0
      %v2005 = vsel %vm1395, %v1941, 0
      %2007 = vmatprep.subr.bf16.mxu0 0
      %2008 = vmatpush1.bf16.msra.mxu0 %v1939
      %2009 = vmatprep.subr.bf16.mxu0 0
      %2010 = vmatpush1.bf16.msra.mxu0 %v1940
      %2011 = vmatprep.subr.bf16.mxu0 0
      %2012 = vmatpush1.bf16.msra.mxu0 %v2005
      %2013 = vmatprep.subr.bf16.mxu0 0
      %2014 = vmatpush1.bf16.msra.mxu0 0
      %2015 = vmatprep.subr.bf16.mxu0 0
      %2016 = vmatpush1.bf16.msra.mxu0 0
      %2017 = vmatprep.subr.bf16.mxu0 0
      %2018 = vmatpush1.bf16.msra.mxu0 0
      %2019 = vmatprep.subr.bf16.mxu0 0
      %2020 = vmatpush1.bf16.msra.mxu0 0
      %2021 = vmatprep.subr.bf16.mxu0 0
      %2022 = vmatpush1.bf16.msra.mxu0 0
      %2023 = vmatprep.subr.bf16.mxu0 0
      %2024 = vmatpush1.bf16.msra.mxu0 0
      %2025 = vmatprep.subr.bf16.mxu0 0
      %2026 = vmatpush1.bf16.msra.mxu0 0
      %2027 = vmatprep.subr.bf16.mxu0 0
      %2028 = vmatpush1.bf16.msra.mxu0 0
      %2029 = vmatprep.subr.bf16.mxu0 0
      %2030 = vmatpush1.bf16.msra.mxu0 0
      %2031 = vmatprep.subr.bf16.mxu0 0
      %2032 = vmatpush1.bf16.msra.mxu0 0
      %2033 = vmatprep.subr.bf16.mxu0 0
      %2034 = vmatpush1.bf16.msra.mxu0 0
      %2035 = vmatprep.subr.bf16.mxu0 0
      %2036 = vmatpush1.bf16.msra.mxu0 0
      %2037 = vmatprep.subr.bf16.mxu0 0
      %2038 = vmatpush1.bf16.msra.mxu0 0
      %2039 = vmatprep.mubr.bf16.mxu0 0
      %2040 = vmatmul.mubr.bf16.gmra.mrb[0].mxu0 %v1945
      %v2041 = vpop.f32.mrb[0].mxu0
      %v2042 = vadd.f32 0.0, %v2041
      %v2043 = vpop.f32.mrb[0].mxu0
      %v2044 = vpop.f32.mrb[0].mxu0
      %v2045 = vadd.f32 0.0, %v2044
      %v2046 = vpop.f32.mrb[0].mxu0
      %2047 = vmatprep.mubr.bf16.mxu0 0
      %2048 = vmatmul.mubr.bf16.gmra.mrb[0].mxu0 %v1948
      %v2049 = vpop.f32.mrb[0].mxu0
      %v2050 = vadd.f32 0.0, %v2049
      %v2051 = vpop.f32.mrb[0].mxu0
      %v2052 = vpop.f32.mrb[0].mxu0
      %v2053 = vadd.f32 0.0, %v2052
      %v2054 = vpop.f32.mrb[0].mxu0
      %2055 = vmatprep.mubr.bf16.mxu0 0
      %2056 = vmatmul.mubr.bf16.gmra.mrb[0].mxu0 %v1951
      %v2057 = vpop.f32.mrb[0].mxu0
      %v2058 = vadd.f32 0.0, %v2057
      %v2059 = vpop.f32.mrb[0].mxu0
      %v2060 = vpop.f32.mrb[0].mxu0
      %v2061 = vadd.f32 0.0, %v2060
      %v2062 = vpop.f32.mrb[0].mxu0
      %2063 = vmatprep.mubr.bf16.mxu0 0
      %2064 = vmatmul.mubr.bf16.gmra.mrb[0].mxu0 %v1954
      %v2065 = vpop.f32.mrb[0].mxu0
      %v2066 = vadd.f32 0.0, %v2065
      %v2067 = vpop.f32.mrb[0].mxu0
      %v2068 = vpop.f32.mrb[0].mxu0
      %v2069 = vadd.f32 0.0, %v2068
      %v2070 = vpop.f32.mrb[0].mxu0
      %2071 = vmatprep.mubr.bf16.mxu0 0
      %2072 = vmatmul.mubr.bf16.gmra.mrb[0].mxu0 %v1957
      %v2073 = vpop.f32.mrb[0].mxu0
      %v2074 = vadd.f32 0.0, %v2073
      %v2075 = vpop.f32.mrb[0].mxu0
      %v2076 = vpop.f32.mrb[0].mxu0
      %v2077 = vadd.f32 0.0, %v2076
      %v2078 = vpop.f32.mrb[0].mxu0
      %2079 = vmatprep.mubr.bf16.mxu0 0
      %2080 = vmatmul.mubr.bf16.gmra.mrb[0].mxu0 %v1960
      %v2081 = vpop.f32.mrb[0].mxu0
      %v2082 = vadd.f32 0.0, %v2081
      %v2083 = vpop.f32.mrb[0].mxu0
      %v2084 = vpop.f32.mrb[0].mxu0
      %v2085 = vadd.f32 0.0, %v2084
      %v2086 = vpop.f32.mrb[0].mxu0
      %2087 = vmatprep.mubr.bf16.mxu0 0
      %2088 = vmatmul.mubr.bf16.gmra.mrb[0].mxu0 %v1963
      %v2089 = vpop.f32.mrb[0].mxu0
      %v2090 = vadd.f32 0.0, %v2089
      %v2091 = vpop.f32.mrb[0].mxu0
      %v2092 = vpop.f32.mrb[0].mxu0
      %v2093 = vadd.f32 0.0, %v2092
      %v2094 = vpop.f32.mrb[0].mxu0
      %2095 = vmatprep.mubr.bf16.mxu0 0
      %2096 = vmatmul.mubr.bf16.gmra.mrb[0].mxu0 %v1966
      %v2097 = vpop.f32.mrb[0].mxu0
      %v2098 = vadd.f32 0.0, %v2097
      %v2099 = vpop.f32.mrb[0].mxu0
      %v2100 = vpop.f32.mrb[0].mxu0
      %v2101 = vadd.f32 0.0, %v2100
      %v2102 = vpop.f32.mrb[0].mxu0
      %2103 = vmatprep.mubr.bf16.mxu0 0
      %2104 = vmatmul.mubr.bf16.gmra.mrb[0].mxu0 %v1969
      %v2105 = vpop.f32.mrb[0].mxu0
      %v2106 = vadd.f32 0.0, %v2105
      %v2107 = vpop.f32.mrb[0].mxu0
      %v2108 = vpop.f32.mrb[0].mxu0
      %v2109 = vadd.f32 0.0, %v2108
      %v2110 = vpop.f32.mrb[0].mxu0
      %2111 = vmatprep.mubr.bf16.mxu0 0
      %2112 = vmatmul.mubr.bf16.gmra.mrb[0].mxu0 %v1972
      %v2113 = vpop.f32.mrb[0].mxu0
      %v2114 = vadd.f32 0.0, %v2113
      %v2115 = vpop.f32.mrb[0].mxu0
      %v2116 = vpop.f32.mrb[0].mxu0
      %v2117 = vadd.f32 0.0, %v2116
      %v2118 = vpop.f32.mrb[0].mxu0
      %2119 = vmatprep.mubr.bf16.mxu0 0
      %2120 = vmatmul.mubr.bf16.gmra.mrb[0].mxu0 %v1975
      %v2121 = vpop.f32.mrb[0].mxu0
      %v2122 = vadd.f32 0.0, %v2121
      %v2123 = vpop.f32.mrb[0].mxu0
      %v2124 = vpop.f32.mrb[0].mxu0
      %v2125 = vadd.f32 0.0, %v2124
      %v2126 = vpop.f32.mrb[0].mxu0
      %2127 = vmatprep.mubr.bf16.mxu0 0
      %2128 = vmatmul.mubr.bf16.gmra.mrb[0].mxu0 %v1978
      %v2129 = vpop.f32.mrb[0].mxu0
      %v2130 = vadd.f32 0.0, %v2129
      %v2131 = vpop.f32.mrb[0].mxu0
      %v2132 = vpop.f32.mrb[0].mxu0
      %v2133 = vadd.f32 0.0, %v2132
      %v2134 = vpop.f32.mrb[0].mxu0
      %2135 = vmatprep.mubr.bf16.mxu0 0
      %2136 = vmatmul.mubr.bf16.gmra.mrb[0].mxu0 %v1981
      %v2137 = vpop.f32.mrb[0].mxu0
      %v2138 = vadd.f32 0.0, %v2137
      %v2139 = vpop.f32.mrb[0].mxu0
      %v2140 = vpop.f32.mrb[0].mxu0
      %v2141 = vadd.f32 0.0, %v2140
      %v2142 = vpop.f32.mrb[0].mxu0
      %2143 = vmatprep.mubr.bf16.mxu0 0
      %2144 = vmatmul.mubr.bf16.gmra.mrb[0].mxu0 %v1984
      %v2145 = vpop.f32.mrb[0].mxu0
      %v2146 = vadd.f32 0.0, %v2145
      %v2147 = vpop.f32.mrb[0].mxu0
      %v2148 = vpop.f32.mrb[0].mxu0
      %v2149 = vadd.f32 0.0, %v2148
      %v2150 = vpop.f32.mrb[0].mxu0
      %2151 = vmatprep.mubr.bf16.mxu0 0
      %2152 = vmatmul.mubr.bf16.gmra.mrb[0].mxu0 %v1987
      %v2153 = vpop.f32.mrb[0].mxu0
      %v2154 = vadd.f32 0.0, %v2153
      %v2155 = vpop.f32.mrb[0].mxu0
      %v2156 = vpop.f32.mrb[0].mxu0
      %v2157 = vadd.f32 0.0, %v2156
      %v2158 = vpop.f32.mrb[0].mxu0
      %2159 = vmatprep.mubr.bf16.mxu0 0
      %2160 = vmatmul.mubr.bf16.gmra.mrb[0].mxu0 %v1990
      %v2161 = vpop.f32.mrb[0].mxu0
      %v2162 = vadd.f32 0.0, %v2161
      %v2163 = vpop.f32.mrb[0].mxu0
      %v2164 = vpop.f32.mrb[0].mxu0
      %v2165 = vadd.f32 0.0, %v2164
      %v2166 = vpop.f32.mrb[0].mxu0
      %2167 = vmatprep.mubr.bf16.mxu0 0
      %2168 = vmatmul.mubr.bf16.gmra.mrb[0].mxu0 %v1993
      %v2169 = vpop.f32.mrb[0].mxu0
      %v2170 = vadd.f32 0.0, %v2169
      %v2171 = vpop.f32.mrb[0].mxu0
      %v2172 = vpop.f32.mrb[0].mxu0
      %v2173 = vadd.f32 0.0, %v2172
      %v2174 = vpop.f32.mrb[0].mxu0
      %2175 = vmatprep.mubr.bf16.mxu0 0
      %2176 = vmatmul.mubr.bf16.gmra.mrb[0].mxu0 %v1996
      %v2177 = vpop.f32.mrb[0].mxu0
      %v2178 = vadd.f32 0.0, %v2177
      %v2179 = vpop.f32.mrb[0].mxu0
      %v2180 = vpop.f32.mrb[0].mxu0
      %v2181 = vadd.f32 0.0, %v2180
      %v2182 = vpop.f32.mrb[0].mxu0
      %2183 = vmatprep.mubr.bf16.mxu0 0
      %2184 = vmatmul.mubr.bf16.gmra.mrb[0].mxu0 %v1999
      %v2185 = vpop.f32.mrb[0].mxu0
      %v2186 = vadd.f32 0.0, %v2185
      %v2187 = vpop.f32.mrb[0].mxu0
      %v2188 = vpop.f32.mrb[0].mxu0
      %v2189 = vadd.f32 0.0, %v2188
      %v2190 = vpop.f32.mrb[0].mxu0
      %2191 = vmatprep.mubr.bf16.mxu0 0
      %2192 = vmatmul.mubr.bf16.gmra.mrb[0].mxu0 %v2002
      %v2193 = vpop.f32.mrb[0].mxu0
      %v2194 = vadd.f32 0.0, %v2193
      %v2195 = vpop.f32.mrb[0].mxu0
      %v2196 = vpop.f32.mrb[0].mxu0
      %v2197 = vadd.f32 0.0, %v2196
      %v2198 = vpop.f32.mrb[0].mxu0
      %2199 = vdwg.mxu0
      %v2200 = vadd.f32 %v1705, %v2042
      %v2201 = vadd.f32 %v1708, %v2045
      %v2202 = vadd.f32 %v1713, %v2050
      %v2203 = vadd.f32 %v1716, %v2053
      %v2204 = vadd.f32 %v1721, %v2058
      %v2205 = vadd.f32 %v1724, %v2061
      %v2206 = vadd.f32 %v1729, %v2066
      %v2207 = vadd.f32 %v1732, %v2069
      %v2208 = vadd.f32 %v1737, %v2074
      %v2209 = vadd.f32 %v1740, %v2077
      %v2210 = vadd.f32 %v1745, %v2082
      %v2211 = vadd.f32 %v1748, %v2085
      %v2212 = vadd.f32 %v1753, %v2090
      %v2213 = vadd.f32 %v1756, %v2093
      %v2214 = vadd.f32 %v1761, %v2098
      %v2215 = vadd.f32 %v1764, %v2101
      %v2216 = vadd.f32 %v1769, %v2106
      %v2217 = vadd.f32 %v1772, %v2109
      %v2218 = vadd.f32 %v1777, %v2114
      %v2219 = vadd.f32 %v1780, %v2117
      %v2220 = vadd.f32 %v1785, %v2122
      %v2221 = vadd.f32 %v1788, %v2125
      %v2222 = vadd.f32 %v1793, %v2130
      %v2223 = vadd.f32 %v1796, %v2133
      %v2224 = vadd.f32 %v1801, %v2138
      %v2225 = vadd.f32 %v1804, %v2141
      %v2226 = vadd.f32 %v1809, %v2146
      %v2227 = vadd.f32 %v1812, %v2149
      %v2228 = vadd.f32 %v1817, %v2154
      %v2229 = vadd.f32 %v1820, %v2157
      %v2230 = vadd.f32 %v1825, %v2162
      %v2231 = vadd.f32 %v1828, %v2165
      %v2232 = vadd.f32 %v1833, %v2170
      %v2233 = vadd.f32 %v1836, %v2173
      %v2234 = vadd.f32 %v1841, %v2178
      %v2235 = vadd.f32 %v1844, %v2181
      %v2236 = vadd.f32 %v1849, %v2186
      %v2237 = vadd.f32 %v1852, %v2189
      %v2238 = vadd.f32 %v1857, %v2194
      %v2239 = vadd.f32 %v1860, %v2197
      %v2240 = vld [vmem:[#allocation2 + $0x29] sm:$0xff]
      %v2241 = vld [vmem:[#allocation2 + $0x31] sm:$0xff]
      %v2242 = vld [vmem:[#allocation2 + $0x39] sm:$0xff]
      %v2243 = vld [vmem:[#allocation2 + $0x41] sm:$0xff]
      %v2244 = vld [vmem:[#allocation2 + $0x49] sm:$0xff]
      %v2245 = vld [vmem:[#allocation2 + $0x51] sm:$0xff]
      %v2246 = vld [vmem:[#allocation2 + $0x59] sm:$0xff]
      %v2247 = vld [vmem:[#allocation2 + $0x61] sm:$0xff]
      %v2248 = vld [vmem:[#allocation2 + $0x69] sm:$0xff]
      %v2249 = vld [vmem:[#allocation2 + $0x71] sm:$0xff]
      %v2250 = vld [vmem:[#allocation2 + $0x79] sm:$0xff]
      %v2251 = vld [vmem:[#allocation2 + $0x81] sm:$0xff]
      %v2252 = vld [vmem:[#allocation2 + $0x89] sm:$0xff]
      %v2253 = vld [vmem:[#allocation2 + $0x91] sm:$0xff]
      %v2254 = vld [vmem:[#allocation2 + $0x99] sm:$0xff]
      %v2255 = vld [vmem:[#allocation2 + $0xa1] sm:$0xff]
      %v2256 = vld [vmem:[#allocation2 + $0xa9] sm:$0xff]
      %v2257 = vld [vmem:[#allocation2 + $0xb1] sm:$0xff]
      %v2258 = vld [vmem:[#allocation2 + $0xb9] sm:$0xff]
      %v2259 = vld [vmem:[#allocation2 + $0xc1] sm:$0xff]
      %v2260 = vld [vmem:[#allocation2 + $0xc9] sm:$0xff]
      %v2261 = vld [vmem:[#allocation2 + $0xd1] sm:$0xff]
      %v2262 = vld [vmem:[#allocation2 + $0xd9] sm:$0xff]
      %v2263 = vld [vmem:[#allocation2 + $0xe1] sm:$0xff]
      %v2264 = vld [vmem:[#allocation2 + $0xe9] sm:$0xff]
      %v2265 = vld [vmem:[#allocation2 + $0xf1] sm:$0xff]
      %v2266 = vld [vmem:[#allocation2 + $0xf9] sm:$0xff]
      %v2267 = vld [vmem:[#allocation2 + $0x101] sm:$0xff]
      %v2268 = vld [vmem:[#allocation2 + $0x109] sm:$0xff]
      %v2269 = vld [vmem:[#allocation2 + $0x111] sm:$0xff]
      %v2270 = vld [vmem:[#allocation2 + $0x119] sm:$0xff]
      %v2271 = vld [vmem:[#allocation2 + $0x121] sm:$0xff]
      %v2272 = vld [vmem:[#allocation2 + $0x129] sm:$0xff]
      %v2273 = vld [vmem:[#allocation2 + $0x131] sm:$0xff]
      %v2274 = vld [vmem:[#allocation2 + $0x139] sm:$0xff]
      %v2275 = vld [vmem:[#allocation2 + $0x141] sm:$0xff]
      %v2276 = vld [vmem:[#allocation2 + $0x149] sm:$0xff]
      %v2277 = vld [vmem:[#allocation2 + $0x151] sm:$0xff]
      %v2278 = vld [vmem:[#allocation2 + $0x159] sm:$0xff]
      %v2279 = vld [vmem:[#allocation2 + $0x161] sm:$0xf]
      %v2280 = vpack.c.bf16 %v2241, %v2240
      %v2281 = vpack.c.bf16 %v2243, %v2242
      %v2282 = vpack.c.bf16 %v2245, %v2244
      %v2283 = vpack.c.bf16 %v2247, %v2246
      %v2284 = vpack.c.bf16 %v2249, %v2248
      %v2285 = vpack.c.bf16 %v2251, %v2250
      %v2286 = vpack.c.bf16 %v2253, %v2252
      %v2287 = vpack.c.bf16 %v2255, %v2254
      %v2288 = vpack.c.bf16 %v2257, %v2256
      %v2289 = vpack.c.bf16 %v2259, %v2258
      %v2290 = vpack.c.bf16 %v2261, %v2260
      %v2291 = vpack.c.bf16 %v2263, %v2262
      %v2292 = vpack.c.bf16 %v2265, %v2264
      %v2293 = vpack.c.bf16 %v2267, %v2266
      %v2294 = vpack.c.bf16 %v2269, %v2268
      %v2295 = vpack.c.bf16 %v2271, %v2270
      %v2296 = vpack.c.bf16 %v2273, %v2272
      %v2297 = vpack.c.bf16 %v2275, %v2274
      %v2298 = vpack.c.bf16 %v2277, %v2276
      %v2299 = vpack.c.bf16 %v2279, %v2278
      %s2300 = scalar_lea.vmem %s3, 60
      %v2301 = vld [vmem:[%s2300] sm:$0xf]
      %v2302 = vld [vmem:[%s2300 + $0x4] sm:$0xf]
      %v2303 = vld [vmem:[%s2300 + $0x8] sm:$0xf]
      %v2304 = vld [vmem:[%s2300 + $0xc] sm:$0xf]
      %v2305 = vld [vmem:[%s2300 + $0x10] sm:$0xf]
      %v2311 = vunpack.c.l.b16 %v2301
      %v2312 = vunpack.c.l.b16 %v2302
      %v2313 = vunpack.c.l.b16 %v2303
      %v2314 = vunpack.c.l.b16 %v2304
      %v2315 = vunpack.c.l.b16 %v2305
      %v2316 = vpack.c.b16 %v2312, %v2311
      %v2317 = vpack.c.b16 %v2314, %v2313
      %v2318 = vpack.c.b16 %v2315, %v2315
      %v2322 = vsel %vm1334, %v2280, 0
      %v2325 = vsel %vm1334, %v2281, 0
      %v2328 = vsel %vm1334, %v2282, 0
      %v2331 = vsel %vm1334, %v2283, 0
      %v2334 = vsel %vm1334, %v2284, 0
      %v2337 = vsel %vm1334, %v2285, 0
      %v2340 = vsel %vm1334, %v2286, 0
      %v2343 = vsel %vm1334, %v2287, 0
      %v2346 = vsel %vm1334, %v2288, 0
      %v2349 = vsel %vm1334, %v2289, 0
      %v2352 = vsel %vm1334, %v2290, 0
      %v2355 = vsel %vm1334, %v2291, 0
      %v2358 = vsel %vm1334, %v2292, 0
      %v2361 = vsel %vm1334, %v2293, 0
      %v2364 = vsel %vm1334, %v2294, 0
      %v2367 = vsel %vm1334, %v2295, 0
      %v2370 = vsel %vm1334, %v2296, 0
      %v2373 = vsel %vm1334, %v2297, 0
      %v2376 = vsel %vm1334, %v2298, 0
      %v2379 = vsel %vm1334, %v2299, 0
      %v2382 = vsel %vm1395, %v2318, 0
      %2384 = vmatprep.subr.bf16.mxu0 0
      %2385 = vmatpush1.bf16.msra.mxu0 %v2316
      %2386 = vmatprep.subr.bf16.mxu0 0
      %2387 = vmatpush1.bf16.msra.mxu0 %v2317
      %2388 = vmatprep.subr.bf16.mxu0 0
      %2389 = vmatpush1.bf16.msra.mxu0 %v2382
      %2390 = vmatprep.subr.bf16.mxu0 0
      %2391 = vmatpush1.bf16.msra.mxu0 0
      %2392 = vmatprep.subr.bf16.mxu0 0
      %2393 = vmatpush1.bf16.msra.mxu0 0
      %2394 = vmatprep.subr.bf16.mxu0 0
      %2395 = vmatpush1.bf16.msra.mxu0 0
      %2396 = vmatprep.subr.bf16.mxu0 0
      %2397 = vmatpush1.bf16.msra.mxu0 0
      %2398 = vmatprep.subr.bf16.mxu0 0
      %2399 = vmatpush1.bf16.msra.mxu0 0
      %2400 = vmatprep.subr.bf16.mxu0 0
      %2401 = vmatpush1.bf16.msra.mxu0 0
      %2402 = vmatprep.subr.bf16.mxu0 0
      %2403 = vmatpush1.bf16.msra.mxu0 0
      %2404 = vmatprep.subr.bf16.mxu0 0
      %2405 = vmatpush1.bf16.msra.mxu0 0
      %2406 = vmatprep.subr.bf16.mxu0 0
      %2407 = vmatpush1.bf16.msra.mxu0 0
      %2408 = vmatprep.subr.bf16.mxu0 0
      %2409 = vmatpush1.bf16.msra.mxu0 0
      %2410 = vmatprep.subr.bf16.mxu0 0
      %2411 = vmatpush1.bf16.msra.mxu0 0
      %2412 = vmatprep.subr.bf16.mxu0 0
      %2413 = vmatpush1.bf16.msra.mxu0 0
      %2414 = vmatprep.subr.bf16.mxu0 0
      %2415 = vmatpush1.bf16.msra.mxu0 0
      %2416 = vmatprep.mubr.bf16.mxu0 0
      %2417 = vmatmul.mubr.bf16.gmra.mrb[0].mxu0 %v2322
      %v2418 = vpop.f32.mrb[0].mxu0
      %v2419 = vadd.f32 0.0, %v2418
      %v2420 = vpop.f32.mrb[0].mxu0
      %v2421 = vpop.f32.mrb[0].mxu0
      %v2422 = vadd.f32 0.0, %v2421
      %v2423 = vpop.f32.mrb[0].mxu0
      %2424 = vmatprep.mubr.bf16.mxu0 0
      %2425 = vmatmul.mubr.bf16.gmra.mrb[0].mxu0 %v2325
      %v2426 = vpop.f32.mrb[0].mxu0
      %v2427 = vadd.f32 0.0, %v2426
      %v2428 = vpop.f32.mrb[0].mxu0
      %v2429 = vpop.f32.mrb[0].mxu0
      %v2430 = vadd.f32 0.0, %v2429
      %v2431 = vpop.f32.mrb[0].mxu0
      %2432 = vmatprep.mubr.bf16.mxu0 0
      %2433 = vmatmul.mubr.bf16.gmra.mrb[0].mxu0 %v2328
      %v2434 = vpop.f32.mrb[0].mxu0
      %v2435 = vadd.f32 0.0, %v2434
      %v2436 = vpop.f32.mrb[0].mxu0
      %v2437 = vpop.f32.mrb[0].mxu0
      %v2438 = vadd.f32 0.0, %v2437
      %v2439 = vpop.f32.mrb[0].mxu0
      %2440 = vmatprep.mubr.bf16.mxu0 0
      %2441 = vmatmul.mubr.bf16.gmra.mrb[0].mxu0 %v2331
      %v2442 = vpop.f32.mrb[0].mxu0
      %v2443 = vadd.f32 0.0, %v2442
      %v2444 = vpop.f32.mrb[0].mxu0
      %v2445 = vpop.f32.mrb[0].mxu0
      %v2446 = vadd.f32 0.0, %v2445
      %v2447 = vpop.f32.mrb[0].mxu0
      %2448 = vmatprep.mubr.bf16.mxu0 0
      %2449 = vmatmul.mubr.bf16.gmra.mrb[0].mxu0 %v2334
      %v2450 = vpop.f32.mrb[0].mxu0
      %v2451 = vadd.f32 0.0, %v2450
      %v2452 = vpop.f32.mrb[0].mxu0
      %v2453 = vpop.f32.mrb[0].mxu0
      %v2454 = vadd.f32 0.0, %v2453
      %v2455 = vpop.f32.mrb[0].mxu0
      %2456 = vmatprep.mubr.bf16.mxu0 0
      %2457 = vmatmul.mubr.bf16.gmra.mrb[0].mxu0 %v2337
      %v2458 = vpop.f32.mrb[0].mxu0
      %v2459 = vadd.f32 0.0, %v2458
      %v2460 = vpop.f32.mrb[0].mxu0
      %v2461 = vpop.f32.mrb[0].mxu0
      %v2462 = vadd.f32 0.0, %v2461
      %v2463 = vpop.f32.mrb[0].mxu0
      %2464 = vmatprep.mubr.bf16.mxu0 0
      %2465 = vmatmul.mubr.bf16.gmra.mrb[0].mxu0 %v2340
      %v2466 = vpop.f32.mrb[0].mxu0
      %v2467 = vadd.f32 0.0, %v2466
      %v2468 = vpop.f32.mrb[0].mxu0
      %v2469 = vpop.f32.mrb[0].mxu0
      %v2470 = vadd.f32 0.0, %v2469
      %v2471 = vpop.f32.mrb[0].mxu0
      %2472 = vmatprep.mubr.bf16.mxu0 0
      %2473 = vmatmul.mubr.bf16.gmra.mrb[0].mxu0 %v2343
      %v2474 = vpop.f32.mrb[0].mxu0
      %v2475 = vadd.f32 0.0, %v2474
      %v2476 = vpop.f32.mrb[0].mxu0
      %v2477 = vpop.f32.mrb[0].mxu0
      %v2478 = vadd.f32 0.0, %v2477
      %v2479 = vpop.f32.mrb[0].mxu0
      %2480 = vmatprep.mubr.bf16.mxu0 0
      %2481 = vmatmul.mubr.bf16.gmra.mrb[0].mxu0 %v2346
      %v2482 = vpop.f32.mrb[0].mxu0
      %v2483 = vadd.f32 0.0, %v2482
      %v2484 = vpop.f32.mrb[0].mxu0
      %v2485 = vpop.f32.mrb[0].mxu0
      %v2486 = vadd.f32 0.0, %v2485
      %v2487 = vpop.f32.mrb[0].mxu0
      %2488 = vmatprep.mubr.bf16.mxu0 0
      %2489 = vmatmul.mubr.bf16.gmra.mrb[0].mxu0 %v2349
      %v2490 = vpop.f32.mrb[0].mxu0
      %v2491 = vadd.f32 0.0, %v2490
      %v2492 = vpop.f32.mrb[0].mxu0
      %v2493 = vpop.f32.mrb[0].mxu0
      %v2494 = vadd.f32 0.0, %v2493
      %v2495 = vpop.f32.mrb[0].mxu0
      %2496 = vmatprep.mubr.bf16.mxu0 0
      %2497 = vmatmul.mubr.bf16.gmra.mrb[0].mxu0 %v2352
      %v2498 = vpop.f32.mrb[0].mxu0
      %v2499 = vadd.f32 0.0, %v2498
      %v2500 = vpop.f32.mrb[0].mxu0
      %v2501 = vpop.f32.mrb[0].mxu0
      %v2502 = vadd.f32 0.0, %v2501
      %v2503 = vpop.f32.mrb[0].mxu0
      %2504 = vmatprep.mubr.bf16.mxu0 0
      %2505 = vmatmul.mubr.bf16.gmra.mrb[0].mxu0 %v2355
      %v2506 = vpop.f32.mrb[0].mxu0
      %v2507 = vadd.f32 0.0, %v2506
      %v2508 = vpop.f32.mrb[0].mxu0
      %v2509 = vpop.f32.mrb[0].mxu0
      %v2510 = vadd.f32 0.0, %v2509
      %v2511 = vpop.f32.mrb[0].mxu0
      %2512 = vmatprep.mubr.bf16.mxu0 0
      %2513 = vmatmul.mubr.bf16.gmra.mrb[0].mxu0 %v2358
      %v2514 = vpop.f32.mrb[0].mxu0
      %v2515 = vadd.f32 0.0, %v2514
      %v2516 = vpop.f32.mrb[0].mxu0
      %v2517 = vpop.f32.mrb[0].mxu0
      %v2518 = vadd.f32 0.0, %v2517
      %v2519 = vpop.f32.mrb[0].mxu0
      %2520 = vmatprep.mubr.bf16.mxu0 0
      %2521 = vmatmul.mubr.bf16.gmra.mrb[0].mxu0 %v2361
      %v2522 = vpop.f32.mrb[0].mxu0
      %v2523 = vadd.f32 0.0, %v2522
      %v2524 = vpop.f32.mrb[0].mxu0
      %v2525 = vpop.f32.mrb[0].mxu0
      %v2526 = vadd.f32 0.0, %v2525
      %v2527 = vpop.f32.mrb[0].mxu0
      %2528 = vmatprep.mubr.bf16.mxu0 0
      %2529 = vmatmul.mubr.bf16.gmra.mrb[0].mxu0 %v2364
      %v2530 = vpop.f32.mrb[0].mxu0
      %v2531 = vadd.f32 0.0, %v2530
      %v2532 = vpop.f32.mrb[0].mxu0
      %v2533 = vpop.f32.mrb[0].mxu0
      %v2534 = vadd.f32 0.0, %v2533
      %v2535 = vpop.f32.mrb[0].mxu0
      %2536 = vmatprep.mubr.bf16.mxu0 0
      %2537 = vmatmul.mubr.bf16.gmra.mrb[0].mxu0 %v2367
      %v2538 = vpop.f32.mrb[0].mxu0
      %v2539 = vadd.f32 0.0, %v2538
      %v2540 = vpop.f32.mrb[0].mxu0
      %v2541 = vpop.f32.mrb[0].mxu0
      %v2542 = vadd.f32 0.0, %v2541
      %v2543 = vpop.f32.mrb[0].mxu0
      %2544 = vmatprep.mubr.bf16.mxu0 0
      %2545 = vmatmul.mubr.bf16.gmra.mrb[0].mxu0 %v2370
      %v2546 = vpop.f32.mrb[0].mxu0
      %v2547 = vadd.f32 0.0, %v2546
      %v2548 = vpop.f32.mrb[0].mxu0
      %v2549 = vpop.f32.mrb[0].mxu0
      %v2550 = vadd.f32 0.0, %v2549
      %v2551 = vpop.f32.mrb[0].mxu0
      %2552 = vmatprep.mubr.bf16.mxu0 0
      %2553 = vmatmul.mubr.bf16.gmra.mrb[0].mxu0 %v2373
      %v2554 = vpop.f32.mrb[0].mxu0
      %v2555 = vadd.f32 0.0, %v2554
      %v2556 = vpop.f32.mrb[0].mxu0
      %v2557 = vpop.f32.mrb[0].mxu0
      %v2558 = vadd.f32 0.0, %v2557
      %v2559 = vpop.f32.mrb[0].mxu0
      %2560 = vmatprep.mubr.bf16.mxu0 0
      %2561 = vmatmul.mubr.bf16.gmra.mrb[0].mxu0 %v2376
      %v2562 = vpop.f32.mrb[0].mxu0
      %v2563 = vadd.f32 0.0, %v2562
      %v2564 = vpop.f32.mrb[0].mxu0
      %v2565 = vpop.f32.mrb[0].mxu0
      %v2566 = vadd.f32 0.0, %v2565
      %v2567 = vpop.f32.mrb[0].mxu0
      %2568 = vmatprep.mubr.bf16.mxu0 0
      %2569 = vmatmul.mubr.bf16.gmra.mrb[0].mxu0 %v2379
      %v2570 = vpop.f32.mrb[0].mxu0
      %v2571 = vadd.f32 0.0, %v2570
      %v2572 = vpop.f32.mrb[0].mxu0
      %v2573 = vpop.f32.mrb[0].mxu0
      %v2574 = vadd.f32 0.0, %v2573
      %v2575 = vpop.f32.mrb[0].mxu0
      %2576 = vdwg.mxu0
      %v2577 = vadd.f32 %v2200, %v2419
      %v2578 = vadd.f32 %v2201, %v2422
      %v2579 = vadd.f32 %v2202, %v2427
      %v2580 = vadd.f32 %v2203, %v2430
      %v2581 = vadd.f32 %v2204, %v2435
      %v2582 = vadd.f32 %v2205, %v2438
      %v2583 = vadd.f32 %v2206, %v2443
      %v2584 = vadd.f32 %v2207, %v2446
      %v2585 = vadd.f32 %v2208, %v2451
      %v2586 = vadd.f32 %v2209, %v2454
      %v2587 = vadd.f32 %v2210, %v2459
      %v2588 = vadd.f32 %v2211, %v2462
      %v2589 = vadd.f32 %v2212, %v2467
      %v2590 = vadd.f32 %v2213, %v2470
      %v2591 = vadd.f32 %v2214, %v2475
      %v2592 = vadd.f32 %v2215, %v2478
      %v2593 = vadd.f32 %v2216, %v2483
      %v2594 = vadd.f32 %v2217, %v2486
      %v2595 = vadd.f32 %v2218, %v2491
      %v2596 = vadd.f32 %v2219, %v2494
      %v2597 = vadd.f32 %v2220, %v2499
      %v2598 = vadd.f32 %v2221, %v2502
      %v2599 = vadd.f32 %v2222, %v2507
      %v2600 = vadd.f32 %v2223, %v2510
      %v2601 = vadd.f32 %v2224, %v2515
      %v2602 = vadd.f32 %v2225, %v2518
      %v2603 = vadd.f32 %v2226, %v2523
      %v2604 = vadd.f32 %v2227, %v2526
      %v2605 = vadd.f32 %v2228, %v2531
      %v2606 = vadd.f32 %v2229, %v2534
      %v2607 = vadd.f32 %v2230, %v2539
      %v2608 = vadd.f32 %v2231, %v2542
      %v2609 = vadd.f32 %v2232, %v2547
      %v2610 = vadd.f32 %v2233, %v2550
      %v2611 = vadd.f32 %v2234, %v2555
      %v2612 = vadd.f32 %v2235, %v2558
      %v2613 = vadd.f32 %v2236, %v2563
      %v2614 = vadd.f32 %v2237, %v2566
      %v2615 = vadd.f32 %v2238, %v2571
      %v2616 = vadd.f32 %v2239, %v2574
      %v2617 = vld [vmem:[#allocation2 + $0x2a] sm:$0xff]
      %v2618 = vld [vmem:[#allocation2 + $0x32] sm:$0xff]
      %v2619 = vld [vmem:[#allocation2 + $0x3a] sm:$0xff]
      %v2620 = vld [vmem:[#allocation2 + $0x42] sm:$0xff]
      %v2621 = vld [vmem:[#allocation2 + $0x4a] sm:$0xff]
      %v2622 = vld [vmem:[#allocation2 + $0x52] sm:$0xff]
      %v2623 = vld [vmem:[#allocation2 + $0x5a] sm:$0xff]
      %v2624 = vld [vmem:[#allocation2 + $0x62] sm:$0xff]
      %v2625 = vld [vmem:[#allocation2 + $0x6a] sm:$0xff]
      %v2626 = vld [vmem:[#allocation2 + $0x72] sm:$0xff]
      %v2627 = vld [vmem:[#allocation2 + $0x7a] sm:$0xff]
      %v2628 = vld [vmem:[#allocation2 + $0x82] sm:$0xff]
      %v2629 = vld [vmem:[#allocation2 + $0x8a] sm:$0xff]
      %v2630 = vld [vmem:[#allocation2 + $0x92] sm:$0xff]
      %v2631 = vld [vmem:[#allocation2 + $0x9a] sm:$0xff]
      %v2632 = vld [vmem:[#allocation2 + $0xa2] sm:$0xff]
      %v2633 = vld [vmem:[#allocation2 + $0xaa] sm:$0xff]
      %v2634 = vld [vmem:[#allocation2 + $0xb2] sm:$0xff]
      %v2635 = vld [vmem:[#allocation2 + $0xba] sm:$0xff]
      %v2636 = vld [vmem:[#allocation2 + $0xc2] sm:$0xff]
      %v2637 = vld [vmem:[#allocation2 + $0xca] sm:$0xff]
      %v2638 = vld [vmem:[#allocation2 + $0xd2] sm:$0xff]
      %v2639 = vld [vmem:[#allocation2 + $0xda] sm:$0xff]
      %v2640 = vld [vmem:[#allocation2 + $0xe2] sm:$0xff]
      %v2641 = vld [vmem:[#allocation2 + $0xea] sm:$0xff]
      %v2642 = vld [vmem:[#allocation2 + $0xf2] sm:$0xff]
      %v2643 = vld [vmem:[#allocation2 + $0xfa] sm:$0xff]
      %v2644 = vld [vmem:[#allocation2 + $0x102] sm:$0xff]
      %v2645 = vld [vmem:[#allocation2 + $0x10a] sm:$0xff]
      %v2646 = vld [vmem:[#allocation2 + $0x112] sm:$0xff]
      %v2647 = vld [vmem:[#allocation2 + $0x11a] sm:$0xff]
      %v2648 = vld [vmem:[#allocation2 + $0x122] sm:$0xff]
      %v2649 = vld [vmem:[#allocation2 + $0x12a] sm:$0xff]
      %v2650 = vld [vmem:[#allocation2 + $0x132] sm:$0xff]
      %v2651 = vld [vmem:[#allocation2 + $0x13a] sm:$0xff]
      %v2652 = vld [vmem:[#allocation2 + $0x142] sm:$0xff]
      %v2653 = vld [vmem:[#allocation2 + $0x14a] sm:$0xff]
      %v2654 = vld [vmem:[#allocation2 + $0x152] sm:$0xff]
      %v2655 = vld [vmem:[#allocation2 + $0x15a] sm:$0xff]
      %v2656 = vld [vmem:[#allocation2 + $0x162] sm:$0xf]
      %v2657 = vpack.c.bf16 %v2618, %v2617
      %v2658 = vpack.c.bf16 %v2620, %v2619
      %v2659 = vpack.c.bf16 %v2622, %v2621
      %v2660 = vpack.c.bf16 %v2624, %v2623
      %v2661 = vpack.c.bf16 %v2626, %v2625
      %v2662 = vpack.c.bf16 %v2628, %v2627
      %v2663 = vpack.c.bf16 %v2630, %v2629
      %v2664 = vpack.c.bf16 %v2632, %v2631
      %v2665 = vpack.c.bf16 %v2634, %v2633
      %v2666 = vpack.c.bf16 %v2636, %v2635
      %v2667 = vpack.c.bf16 %v2638, %v2637
      %v2668 = vpack.c.bf16 %v2640, %v2639
      %v2669 = vpack.c.bf16 %v2642, %v2641
      %v2670 = vpack.c.bf16 %v2644, %v2643
      %v2671 = vpack.c.bf16 %v2646, %v2645
      %v2672 = vpack.c.bf16 %v2648, %v2647
      %v2673 = vpack.c.bf16 %v2650, %v2649
      %v2674 = vpack.c.bf16 %v2652, %v2651
      %v2675 = vpack.c.bf16 %v2654, %v2653
      %v2676 = vpack.c.bf16 %v2656, %v2655
      %s2677 = scalar_lea.vmem %s3, 80
      %v2678 = vld [vmem:[%s2677] sm:$0xf]
      %v2679 = vld [vmem:[%s2677 + $0x4] sm:$0xf]
      %v2680 = vld [vmem:[%s2677 + $0x8] sm:$0xf]
      %v2681 = vld [vmem:[%s2677 + $0xc] sm:$0xf]
      %v2682 = vld [vmem:[%s2677 + $0x10] sm:$0xf]
      %v2688 = vunpack.c.l.b16 %v2678
      %v2689 = vunpack.c.l.b16 %v2679
      %v2690 = vunpack.c.l.b16 %v2680
      %v2691 = vunpack.c.l.b16 %v2681
      %v2692 = vunpack.c.l.b16 %v2682
      %v2693 = vpack.c.b16 %v2689, %v2688
      %v2694 = vpack.c.b16 %v2691, %v2690
      %v2695 = vpack.c.b16 %v2692, %v2692
      %v2699 = vsel %vm1334, %v2657, 0
      %v2702 = vsel %vm1334, %v2658, 0
      %v2705 = vsel %vm1334, %v2659, 0
      %v2708 = vsel %vm1334, %v2660, 0
      %v2711 = vsel %vm1334, %v2661, 0
      %v2714 = vsel %vm1334, %v2662, 0
      %v2717 = vsel %vm1334, %v2663, 0
      %v2720 = vsel %vm1334, %v2664, 0
      %v2723 = vsel %vm1334, %v2665, 0
      %v2726 = vsel %vm1334, %v2666, 0
      %v2729 = vsel %vm1334, %v2667, 0
      %v2732 = vsel %vm1334, %v2668, 0
      %v2735 = vsel %vm1334, %v2669, 0
      %v2738 = vsel %vm1334, %v2670, 0
      %v2741 = vsel %vm1334, %v2671, 0
      %v2744 = vsel %vm1334, %v2672, 0
      %v2747 = vsel %vm1334, %v2673, 0
      %v2750 = vsel %vm1334, %v2674, 0
      %v2753 = vsel %vm1334, %v2675, 0
      %v2756 = vsel %vm1334, %v2676, 0
      %v2759 = vsel %vm1395, %v2695, 0
      %2761 = vmatprep.subr.bf16.mxu0 0
      %2762 = vmatpush1.bf16.msra.mxu0 %v2693
      %2763 = vmatprep.subr.bf16.mxu0 0
      %2764 = vmatpush1.bf16.msra.mxu0 %v2694
      %2765 = vmatprep.subr.bf16.mxu0 0
      %2766 = vmatpush1.bf16.msra.mxu0 %v2759
      %2767 = vmatprep.subr.bf16.mxu0 0
      %2768 = vmatpush1.bf16.msra.mxu0 0
      %2769 = vmatprep.subr.bf16.mxu0 0
      %2770 = vmatpush1.bf16.msra.mxu0 0
      %2771 = vmatprep.subr.bf16.mxu0 0
      %2772 = vmatpush1.bf16.msra.mxu0 0
      %2773 = vmatprep.subr.bf16.mxu0 0
      %2774 = vmatpush1.bf16.msra.mxu0 0
      %2775 = vmatprep.subr.bf16.mxu0 0
      %2776 = vmatpush1.bf16.msra.mxu0 0
      %2777 = vmatprep.subr.bf16.mxu0 0
      %2778 = vmatpush1.bf16.msra.mxu0 0
      %2779 = vmatprep.subr.bf16.mxu0 0
      %2780 = vmatpush1.bf16.msra.mxu0 0
      %2781 = vmatprep.subr.bf16.mxu0 0
      %2782 = vmatpush1.bf16.msra.mxu0 0
      %2783 = vmatprep.subr.bf16.mxu0 0
      %2784 = vmatpush1.bf16.msra.mxu0 0
      %2785 = vmatprep.subr.bf16.mxu0 0
      %2786 = vmatpush1.bf16.msra.mxu0 0
      %2787 = vmatprep.subr.bf16.mxu0 0
      %2788 = vmatpush1.bf16.msra.mxu0 0
      %2789 = vmatprep.subr.bf16.mxu0 0
      %2790 = vmatpush1.bf16.msra.mxu0 0
      %2791 = vmatprep.subr.bf16.mxu0 0
      %2792 = vmatpush1.bf16.msra.mxu0 0
      %2793 = vmatprep.mubr.bf16.mxu0 0
      %2794 = vmatmul.mubr.bf16.gmra.mrb[0].mxu0 %v2699
      %v2795 = vpop.f32.mrb[0].mxu0
      %v2796 = vadd.f32 0.0, %v2795
      %v2797 = vpop.f32.mrb[0].mxu0
      %v2798 = vpop.f32.mrb[0].mxu0
      %v2799 = vadd.f32 0.0, %v2798
      %v2800 = vpop.f32.mrb[0].mxu0
      %2801 = vmatprep.mubr.bf16.mxu0 0
      %2802 = vmatmul.mubr.bf16.gmra.mrb[0].mxu0 %v2702
      %v2803 = vpop.f32.mrb[0].mxu0
      %v2804 = vadd.f32 0.0, %v2803
      %v2805 = vpop.f32.mrb[0].mxu0
      %v2806 = vpop.f32.mrb[0].mxu0
      %v2807 = vadd.f32 0.0, %v2806
      %v2808 = vpop.f32.mrb[0].mxu0
      %2809 = vmatprep.mubr.bf16.mxu0 0
      %2810 = vmatmul.mubr.bf16.gmra.mrb[0].mxu0 %v2705
      %v2811 = vpop.f32.mrb[0].mxu0
      %v2812 = vadd.f32 0.0, %v2811
      %v2813 = vpop.f32.mrb[0].mxu0
      %v2814 = vpop.f32.mrb[0].mxu0
      %v2815 = vadd.f32 0.0, %v2814
      %v2816 = vpop.f32.mrb[0].mxu0
      %2817 = vmatprep.mubr.bf16.mxu0 0
      %2818 = vmatmul.mubr.bf16.gmra.mrb[0].mxu0 %v2708
      %v2819 = vpop.f32.mrb[0].mxu0
      %v2820 = vadd.f32 0.0, %v2819
      %v2821 = vpop.f32.mrb[0].mxu0
      %v2822 = vpop.f32.mrb[0].mxu0
      %v2823 = vadd.f32 0.0, %v2822
      %v2824 = vpop.f32.mrb[0].mxu0
      %2825 = vmatprep.mubr.bf16.mxu0 0
      %2826 = vmatmul.mubr.bf16.gmra.mrb[0].mxu0 %v2711
      %v2827 = vpop.f32.mrb[0].mxu0
      %v2828 = vadd.f32 0.0, %v2827
      %v2829 = vpop.f32.mrb[0].mxu0
      %v2830 = vpop.f32.mrb[0].mxu0
      %v2831 = vadd.f32 0.0, %v2830
      %v2832 = vpop.f32.mrb[0].mxu0
      %2833 = vmatprep.mubr.bf16.mxu0 0
      %2834 = vmatmul.mubr.bf16.gmra.mrb[0].mxu0 %v2714
      %v2835 = vpop.f32.mrb[0].mxu0
      %v2836 = vadd.f32 0.0, %v2835
      %v2837 = vpop.f32.mrb[0].mxu0
      %v2838 = vpop.f32.mrb[0].mxu0
      %v2839 = vadd.f32 0.0, %v2838
      %v2840 = vpop.f32.mrb[0].mxu0
      %2841 = vmatprep.mubr.bf16.mxu0 0
      %2842 = vmatmul.mubr.bf16.gmra.mrb[0].mxu0 %v2717
      %v2843 = vpop.f32.mrb[0].mxu0
      %v2844 = vadd.f32 0.0, %v2843
      %v2845 = vpop.f32.mrb[0].mxu0
      %v2846 = vpop.f32.mrb[0].mxu0
      %v2847 = vadd.f32 0.0, %v2846
      %v2848 = vpop.f32.mrb[0].mxu0
      %2849 = vmatprep.mubr.bf16.mxu0 0
      %2850 = vmatmul.mubr.bf16.gmra.mrb[0].mxu0 %v2720
      %v2851 = vpop.f32.mrb[0].mxu0
      %v2852 = vadd.f32 0.0, %v2851
      %v2853 = vpop.f32.mrb[0].mxu0
      %v2854 = vpop.f32.mrb[0].mxu0
      %v2855 = vadd.f32 0.0, %v2854
      %v2856 = vpop.f32.mrb[0].mxu0
      %2857 = vmatprep.mubr.bf16.mxu0 0
      %2858 = vmatmul.mubr.bf16.gmra.mrb[0].mxu0 %v2723
      %v2859 = vpop.f32.mrb[0].mxu0
      %v2860 = vadd.f32 0.0, %v2859
      %v2861 = vpop.f32.mrb[0].mxu0
      %v2862 = vpop.f32.mrb[0].mxu0
      %v2863 = vadd.f32 0.0, %v2862
      %v2864 = vpop.f32.mrb[0].mxu0
      %2865 = vmatprep.mubr.bf16.mxu0 0
      %2866 = vmatmul.mubr.bf16.gmra.mrb[0].mxu0 %v2726
      %v2867 = vpop.f32.mrb[0].mxu0
      %v2868 = vadd.f32 0.0, %v2867
      %v2869 = vpop.f32.mrb[0].mxu0
      %v2870 = vpop.f32.mrb[0].mxu0
      %v2871 = vadd.f32 0.0, %v2870
      %v2872 = vpop.f32.mrb[0].mxu0
      %2873 = vmatprep.mubr.bf16.mxu0 0
      %2874 = vmatmul.mubr.bf16.gmra.mrb[0].mxu0 %v2729
      %v2875 = vpop.f32.mrb[0].mxu0
      %v2876 = vadd.f32 0.0, %v2875
      %v2877 = vpop.f32.mrb[0].mxu0
      %v2878 = vpop.f32.mrb[0].mxu0
      %v2879 = vadd.f32 0.0, %v2878
      %v2880 = vpop.f32.mrb[0].mxu0
      %2881 = vmatprep.mubr.bf16.mxu0 0
      %2882 = vmatmul.mubr.bf16.gmra.mrb[0].mxu0 %v2732
      %v2883 = vpop.f32.mrb[0].mxu0
      %v2884 = vadd.f32 0.0, %v2883
      %v2885 = vpop.f32.mrb[0].mxu0
      %v2886 = vpop.f32.mrb[0].mxu0
      %v2887 = vadd.f32 0.0, %v2886
      %v2888 = vpop.f32.mrb[0].mxu0
      %2889 = vmatprep.mubr.bf16.mxu0 0
      %2890 = vmatmul.mubr.bf16.gmra.mrb[0].mxu0 %v2735
      %v2891 = vpop.f32.mrb[0].mxu0
      %v2892 = vadd.f32 0.0, %v2891
      %v2893 = vpop.f32.mrb[0].mxu0
      %v2894 = vpop.f32.mrb[0].mxu0
      %v2895 = vadd.f32 0.0, %v2894
      %v2896 = vpop.f32.mrb[0].mxu0
      %2897 = vmatprep.mubr.bf16.mxu0 0
      %2898 = vmatmul.mubr.bf16.gmra.mrb[0].mxu0 %v2738
      %v2899 = vpop.f32.mrb[0].mxu0
      %v2900 = vadd.f32 0.0, %v2899
      %v2901 = vpop.f32.mrb[0].mxu0
      %v2902 = vpop.f32.mrb[0].mxu0
      %v2903 = vadd.f32 0.0, %v2902
      %v2904 = vpop.f32.mrb[0].mxu0
      %2905 = vmatprep.mubr.bf16.mxu0 0
      %2906 = vmatmul.mubr.bf16.gmra.mrb[0].mxu0 %v2741
      %v2907 = vpop.f32.mrb[0].mxu0
      %v2908 = vadd.f32 0.0, %v2907
      %v2909 = vpop.f32.mrb[0].mxu0
      %v2910 = vpop.f32.mrb[0].mxu0
      %v2911 = vadd.f32 0.0, %v2910
      %v2912 = vpop.f32.mrb[0].mxu0
      %2913 = vmatprep.mubr.bf16.mxu0 0
      %2914 = vmatmul.mubr.bf16.gmra.mrb[0].mxu0 %v2744
      %v2915 = vpop.f32.mrb[0].mxu0
      %v2916 = vadd.f32 0.0, %v2915
      %v2917 = vpop.f32.mrb[0].mxu0
      %v2918 = vpop.f32.mrb[0].mxu0
      %v2919 = vadd.f32 0.0, %v2918
      %v2920 = vpop.f32.mrb[0].mxu0
      %2921 = vmatprep.mubr.bf16.mxu0 0
      %2922 = vmatmul.mubr.bf16.gmra.mrb[0].mxu0 %v2747
      %v2923 = vpop.f32.mrb[0].mxu0
      %v2924 = vadd.f32 0.0, %v2923
      %v2925 = vpop.f32.mrb[0].mxu0
      %v2926 = vpop.f32.mrb[0].mxu0
      %v2927 = vadd.f32 0.0, %v2926
      %v2928 = vpop.f32.mrb[0].mxu0
      %2929 = vmatprep.mubr.bf16.mxu0 0
      %2930 = vmatmul.mubr.bf16.gmra.mrb[0].mxu0 %v2750
      %v2931 = vpop.f32.mrb[0].mxu0
      %v2932 = vadd.f32 0.0, %v2931
      %v2933 = vpop.f32.mrb[0].mxu0
      %v2934 = vpop.f32.mrb[0].mxu0
      %v2935 = vadd.f32 0.0, %v2934
      %v2936 = vpop.f32.mrb[0].mxu0
      %2937 = vmatprep.mubr.bf16.mxu0 0
      %2938 = vmatmul.mubr.bf16.gmra.mrb[0].mxu0 %v2753
      %v2939 = vpop.f32.mrb[0].mxu0
      %v2940 = vadd.f32 0.0, %v2939
      %v2941 = vpop.f32.mrb[0].mxu0
      %v2942 = vpop.f32.mrb[0].mxu0
      %v2943 = vadd.f32 0.0, %v2942
      %v2944 = vpop.f32.mrb[0].mxu0
      %2945 = vmatprep.mubr.bf16.mxu0 0
      %2946 = vmatmul.mubr.bf16.gmra.mrb[0].mxu0 %v2756
      %v2947 = vpop.f32.mrb[0].mxu0
      %v2948 = vadd.f32 0.0, %v2947
      %v2949 = vpop.f32.mrb[0].mxu0
      %v2950 = vpop.f32.mrb[0].mxu0
      %v2951 = vadd.f32 0.0, %v2950
      %v2952 = vpop.f32.mrb[0].mxu0
      %2953 = vdwg.mxu0
      %v2954 = vadd.f32 %v2577, %v2796
      %v2955 = vadd.f32 %v2578, %v2799
      %v2956 = vadd.f32 %v2579, %v2804
      %v2957 = vadd.f32 %v2580, %v2807
      %v2958 = vadd.f32 %v2581, %v2812
      %v2959 = vadd.f32 %v2582, %v2815
      %v2960 = vadd.f32 %v2583, %v2820
      %v2961 = vadd.f32 %v2584, %v2823
      %v2962 = vadd.f32 %v2585, %v2828
      %v2963 = vadd.f32 %v2586, %v2831
      %v2964 = vadd.f32 %v2587, %v2836
      %v2965 = vadd.f32 %v2588, %v2839
      %v2966 = vadd.f32 %v2589, %v2844
      %v2967 = vadd.f32 %v2590, %v2847
      %v2968 = vadd.f32 %v2591, %v2852
      %v2969 = vadd.f32 %v2592, %v2855
      %v2970 = vadd.f32 %v2593, %v2860
      %v2971 = vadd.f32 %v2594, %v2863
      %v2972 = vadd.f32 %v2595, %v2868
      %v2973 = vadd.f32 %v2596, %v2871
      %v2974 = vadd.f32 %v2597, %v2876
      %v2975 = vadd.f32 %v2598, %v2879
      %v2976 = vadd.f32 %v2599, %v2884
      %v2977 = vadd.f32 %v2600, %v2887
      %v2978 = vadd.f32 %v2601, %v2892
      %v2979 = vadd.f32 %v2602, %v2895
      %v2980 = vadd.f32 %v2603, %v2900
      %v2981 = vadd.f32 %v2604, %v2903
      %v2982 = vadd.f32 %v2605, %v2908
      %v2983 = vadd.f32 %v2606, %v2911
      %v2984 = vadd.f32 %v2607, %v2916
      %v2985 = vadd.f32 %v2608, %v2919
      %v2986 = vadd.f32 %v2609, %v2924
      %v2987 = vadd.f32 %v2610, %v2927
      %v2988 = vadd.f32 %v2611, %v2932
      %v2989 = vadd.f32 %v2612, %v2935
      %v2990 = vadd.f32 %v2613, %v2940
      %v2991 = vadd.f32 %v2614, %v2943
      %v2992 = vadd.f32 %v2615, %v2948
      %v2993 = vadd.f32 %v2616, %v2951
      %v2994 = vld [vmem:[#allocation2 + $0x2b] sm:$0xff]
      %v2995 = vld [vmem:[#allocation2 + $0x33] sm:$0xff]
      %v2996 = vld [vmem:[#allocation2 + $0x3b] sm:$0xff]
      %v2997 = vld [vmem:[#allocation2 + $0x43] sm:$0xff]
      %v2998 = vld [vmem:[#allocation2 + $0x4b] sm:$0xff]
      %v2999 = vld [vmem:[#allocation2 + $0x53] sm:$0xff]
      %v3000 = vld [vmem:[#allocation2 + $0x5b] sm:$0xff]
      %v3001 = vld [vmem:[#allocation2 + $0x63] sm:$0xff]
      %v3002 = vld [vmem:[#allocation2 + $0x6b] sm:$0xff]
      %v3003 = vld [vmem:[#allocation2 + $0x73] sm:$0xff]
      %v3004 = vld [vmem:[#allocation2 + $0x7b] sm:$0xff]
      %v3005 = vld [vmem:[#allocation2 + $0x83] sm:$0xff]
      %v3006 = vld [vmem:[#allocation2 + $0x8b] sm:$0xff]
      %v3007 = vld [vmem:[#allocation2 + $0x93] sm:$0xff]
      %v3008 = vld [vmem:[#allocation2 + $0x9b] sm:$0xff]
      %v3009 = vld [vmem:[#allocation2 + $0xa3] sm:$0xff]
      %v3010 = vld [vmem:[#allocation2 + $0xab] sm:$0xff]
      %v3011 = vld [vmem:[#allocation2 + $0xb3] sm:$0xff]
      %v3012 = vld [vmem:[#allocation2 + $0xbb] sm:$0xff]
      %v3013 = vld [vmem:[#allocation2 + $0xc3] sm:$0xff]
      %v3014 = vld [vmem:[#allocation2 + $0xcb] sm:$0xff]
      %v3015 = vld [vmem:[#allocation2 + $0xd3] sm:$0xff]
      %v3016 = vld [vmem:[#allocation2 + $0xdb] sm:$0xff]
      %v3017 = vld [vmem:[#allocation2 + $0xe3] sm:$0xff]
      %v3018 = vld [vmem:[#allocation2 + $0xeb] sm:$0xff]
      %v3019 = vld [vmem:[#allocation2 + $0xf3] sm:$0xff]
      %v3020 = vld [vmem:[#allocation2 + $0xfb] sm:$0xff]
      %v3021 = vld [vmem:[#allocation2 + $0x103] sm:$0xff]
      %v3022 = vld [vmem:[#allocation2 + $0x10b] sm:$0xff]
      %v3023 = vld [vmem:[#allocation2 + $0x113] sm:$0xff]
      %v3024 = vld [vmem:[#allocation2 + $0x11b] sm:$0xff]
      %v3025 = vld [vmem:[#allocation2 + $0x123] sm:$0xff]
      %v3026 = vld [vmem:[#allocation2 + $0x12b] sm:$0xff]
      %v3027 = vld [vmem:[#allocation2 + $0x133] sm:$0xff]
      %v3028 = vld [vmem:[#allocation2 + $0x13b] sm:$0xff]
      %v3029 = vld [vmem:[#allocation2 + $0x143] sm:$0xff]
      %v3030 = vld [vmem:[#allocation2 + $0x14b] sm:$0xff]
      %v3031 = vld [vmem:[#allocation2 + $0x153] sm:$0xff]
      %v3032 = vld [vmem:[#allocation2 + $0x15b] sm:$0xff]
      %v3033 = vld [vmem:[#allocation2 + $0x163] sm:$0xf]
      %v3034 = vpack.c.bf16 %v2995, %v2994
      %v3035 = vpack.c.bf16 %v2997, %v2996
      %v3036 = vpack.c.bf16 %v2999, %v2998
      %v3037 = vpack.c.bf16 %v3001, %v3000
      %v3038 = vpack.c.bf16 %v3003, %v3002
      %v3039 = vpack.c.bf16 %v3005, %v3004
      %v3040 = vpack.c.bf16 %v3007, %v3006
      %v3041 = vpack.c.bf16 %v3009, %v3008
      %v3042 = vpack.c.bf16 %v3011, %v3010
      %v3043 = vpack.c.bf16 %v3013, %v3012
      %v3044 = vpack.c.bf16 %v3015, %v3014
      %v3045 = vpack.c.bf16 %v3017, %v3016
      %v3046 = vpack.c.bf16 %v3019, %v3018
      %v3047 = vpack.c.bf16 %v3021, %v3020
      %v3048 = vpack.c.bf16 %v3023, %v3022
      %v3049 = vpack.c.bf16 %v3025, %v3024
      %v3050 = vpack.c.bf16 %v3027, %v3026
      %v3051 = vpack.c.bf16 %v3029, %v3028
      %v3052 = vpack.c.bf16 %v3031, %v3030
      %v3053 = vpack.c.bf16 %v3033, %v3032
      %s3054 = scalar_lea.vmem %s3, 100
      %v3055 = vld [vmem:[%s3054] sm:$0xf]
      %v3056 = vld [vmem:[%s3054 + $0x4] sm:$0xf]
      %v3057 = vld [vmem:[%s3054 + $0x8] sm:$0xf]
      %v3058 = vld [vmem:[%s3054 + $0xc] sm:$0xf]
      %v3059 = vld [vmem:[%s3054 + $0x10] sm:$0xf]
      %v3065 = vunpack.c.l.b16 %v3055
      %v3066 = vunpack.c.l.b16 %v3056
      %v3067 = vunpack.c.l.b16 %v3057
      %v3068 = vunpack.c.l.b16 %v3058
      %v3069 = vunpack.c.l.b16 %v3059
      %v3070 = vpack.c.b16 %v3066, %v3065
      %v3071 = vpack.c.b16 %v3068, %v3067
      %v3072 = vpack.c.b16 %v3069, %v3069
      %v3076 = vsel %vm1334, %v3034, 0
      %v3079 = vsel %vm1334, %v3035, 0
      %v3082 = vsel %vm1334, %v3036, 0
      %v3085 = vsel %vm1334, %v3037, 0
      %v3088 = vsel %vm1334, %v3038, 0
      %v3091 = vsel %vm1334, %v3039, 0
      %v3094 = vsel %vm1334, %v3040, 0
      %v3097 = vsel %vm1334, %v3041, 0
      %v3100 = vsel %vm1334, %v3042, 0
      %v3103 = vsel %vm1334, %v3043, 0
      %v3106 = vsel %vm1334, %v3044, 0
      %v3109 = vsel %vm1334, %v3045, 0
      %v3112 = vsel %vm1334, %v3046, 0
      %v3115 = vsel %vm1334, %v3047, 0
      %v3118 = vsel %vm1334, %v3048, 0
      %v3121 = vsel %vm1334, %v3049, 0
      %v3124 = vsel %vm1334, %v3050, 0
      %v3127 = vsel %vm1334, %v3051, 0
      %v3130 = vsel %vm1334, %v3052, 0
      %v3133 = vsel %vm1334, %v3053, 0
      %v3136 = vsel %vm1395, %v3072, 0
      %3138 = vmatprep.subr.bf16.mxu0 0
      %3139 = vmatpush1.bf16.msra.mxu0 %v3070
      %3140 = vmatprep.subr.bf16.mxu0 0
      %3141 = vmatpush1.bf16.msra.mxu0 %v3071
      %3142 = vmatprep.subr.bf16.mxu0 0
      %3143 = vmatpush1.bf16.msra.mxu0 %v3136
      %3144 = vmatprep.subr.bf16.mxu0 0
      %3145 = vmatpush1.bf16.msra.mxu0 0
      %3146 = vmatprep.subr.bf16.mxu0 0
      %3147 = vmatpush1.bf16.msra.mxu0 0
      %3148 = vmatprep.subr.bf16.mxu0 0
      %3149 = vmatpush1.bf16.msra.mxu0 0
      %3150 = vmatprep.subr.bf16.mxu0 0
      %3151 = vmatpush1.bf16.msra.mxu0 0
      %3152 = vmatprep.subr.bf16.mxu0 0
      %3153 = vmatpush1.bf16.msra.mxu0 0
      %3154 = vmatprep.subr.bf16.mxu0 0
      %3155 = vmatpush1.bf16.msra.mxu0 0
      %3156 = vmatprep.subr.bf16.mxu0 0
      %3157 = vmatpush1.bf16.msra.mxu0 0
      %3158 = vmatprep.subr.bf16.mxu0 0
      %3159 = vmatpush1.bf16.msra.mxu0 0
      %3160 = vmatprep.subr.bf16.mxu0 0
      %3161 = vmatpush1.bf16.msra.mxu0 0
      %3162 = vmatprep.subr.bf16.mxu0 0
      %3163 = vmatpush1.bf16.msra.mxu0 0
      %3164 = vmatprep.subr.bf16.mxu0 0
      %3165 = vmatpush1.bf16.msra.mxu0 0
      %3166 = vmatprep.subr.bf16.mxu0 0
      %3167 = vmatpush1.bf16.msra.mxu0 0
      %3168 = vmatprep.subr.bf16.mxu0 0
      %3169 = vmatpush1.bf16.msra.mxu0 0
      %3170 = vmatprep.mubr.bf16.mxu0 0
      %3171 = vmatmul.mubr.bf16.gmra.mrb[0].mxu0 %v3076
      %v3172 = vpop.f32.mrb[0].mxu0
      %v3173 = vadd.f32 0.0, %v3172
      %v3174 = vpop.f32.mrb[0].mxu0
      %v3175 = vpop.f32.mrb[0].mxu0
      %v3176 = vadd.f32 0.0, %v3175
      %v3177 = vpop.f32.mrb[0].mxu0
      %3178 = vmatprep.mubr.bf16.mxu0 0
      %3179 = vmatmul.mubr.bf16.gmra.mrb[0].mxu0 %v3079
      %v3180 = vpop.f32.mrb[0].mxu0
      %v3181 = vadd.f32 0.0, %v3180
      %v3182 = vpop.f32.mrb[0].mxu0
      %v3183 = vpop.f32.mrb[0].mxu0
      %v3184 = vadd.f32 0.0, %v3183
      %v3185 = vpop.f32.mrb[0].mxu0
      %3186 = vmatprep.mubr.bf16.mxu0 0
      %3187 = vmatmul.mubr.bf16.gmra.mrb[0].mxu0 %v3082
      %v3188 = vpop.f32.mrb[0].mxu0
      %v3189 = vadd.f32 0.0, %v3188
      %v3190 = vpop.f32.mrb[0].mxu0
      %v3191 = vpop.f32.mrb[0].mxu0
      %v3192 = vadd.f32 0.0, %v3191
      %v3193 = vpop.f32.mrb[0].mxu0
      %3194 = vmatprep.mubr.bf16.mxu0 0
      %3195 = vmatmul.mubr.bf16.gmra.mrb[0].mxu0 %v3085
      %v3196 = vpop.f32.mrb[0].mxu0
      %v3197 = vadd.f32 0.0, %v3196
      %v3198 = vpop.f32.mrb[0].mxu0
      %v3199 = vpop.f32.mrb[0].mxu0
      %v3200 = vadd.f32 0.0, %v3199
      %v3201 = vpop.f32.mrb[0].mxu0
      %3202 = vmatprep.mubr.bf16.mxu0 0
      %3203 = vmatmul.mubr.bf16.gmra.mrb[0].mxu0 %v3088
      %v3204 = vpop.f32.mrb[0].mxu0
      %v3205 = vadd.f32 0.0, %v3204
      %v3206 = vpop.f32.mrb[0].mxu0
      %v3207 = vpop.f32.mrb[0].mxu0
      %v3208 = vadd.f32 0.0, %v3207
      %v3209 = vpop.f32.mrb[0].mxu0
      %3210 = vmatprep.mubr.bf16.mxu0 0
      %3211 = vmatmul.mubr.bf16.gmra.mrb[0].mxu0 %v3091
      %v3212 = vpop.f32.mrb[0].mxu0
      %v3213 = vadd.f32 0.0, %v3212
      %v3214 = vpop.f32.mrb[0].mxu0
      %v3215 = vpop.f32.mrb[0].mxu0
      %v3216 = vadd.f32 0.0, %v3215
      %v3217 = vpop.f32.mrb[0].mxu0
      %3218 = vmatprep.mubr.bf16.mxu0 0
      %3219 = vmatmul.mubr.bf16.gmra.mrb[0].mxu0 %v3094
      %v3220 = vpop.f32.mrb[0].mxu0
      %v3221 = vadd.f32 0.0, %v3220
      %v3222 = vpop.f32.mrb[0].mxu0
      %v3223 = vpop.f32.mrb[0].mxu0
      %v3224 = vadd.f32 0.0, %v3223
      %v3225 = vpop.f32.mrb[0].mxu0
      %3226 = vmatprep.mubr.bf16.mxu0 0
      %3227 = vmatmul.mubr.bf16.gmra.mrb[0].mxu0 %v3097
      %v3228 = vpop.f32.mrb[0].mxu0
      %v3229 = vadd.f32 0.0, %v3228
      %v3230 = vpop.f32.mrb[0].mxu0
      %v3231 = vpop.f32.mrb[0].mxu0
      %v3232 = vadd.f32 0.0, %v3231
      %v3233 = vpop.f32.mrb[0].mxu0
      %3234 = vmatprep.mubr.bf16.mxu0 0
      %3235 = vmatmul.mubr.bf16.gmra.mrb[0].mxu0 %v3100
      %v3236 = vpop.f32.mrb[0].mxu0
      %v3237 = vadd.f32 0.0, %v3236
      %v3238 = vpop.f32.mrb[0].mxu0
      %v3239 = vpop.f32.mrb[0].mxu0
      %v3240 = vadd.f32 0.0, %v3239
      %v3241 = vpop.f32.mrb[0].mxu0
      %3242 = vmatprep.mubr.bf16.mxu0 0
      %3243 = vmatmul.mubr.bf16.gmra.mrb[0].mxu0 %v3103
      %v3244 = vpop.f32.mrb[0].mxu0
      %v3245 = vadd.f32 0.0, %v3244
      %v3246 = vpop.f32.mrb[0].mxu0
      %v3247 = vpop.f32.mrb[0].mxu0
      %v3248 = vadd.f32 0.0, %v3247
      %v3249 = vpop.f32.mrb[0].mxu0
      %3250 = vmatprep.mubr.bf16.mxu0 0
      %3251 = vmatmul.mubr.bf16.gmra.mrb[0].mxu0 %v3106
      %v3252 = vpop.f32.mrb[0].mxu0
      %v3253 = vadd.f32 0.0, %v3252
      %v3254 = vpop.f32.mrb[0].mxu0
      %v3255 = vpop.f32.mrb[0].mxu0
      %v3256 = vadd.f32 0.0, %v3255
      %v3257 = vpop.f32.mrb[0].mxu0
      %3258 = vmatprep.mubr.bf16.mxu0 0
      %3259 = vmatmul.mubr.bf16.gmra.mrb[0].mxu0 %v3109
      %v3260 = vpop.f32.mrb[0].mxu0
      %v3261 = vadd.f32 0.0, %v3260
      %v3262 = vpop.f32.mrb[0].mxu0
      %v3263 = vpop.f32.mrb[0].mxu0
      %v3264 = vadd.f32 0.0, %v3263
      %v3265 = vpop.f32.mrb[0].mxu0
      %3266 = vmatprep.mubr.bf16.mxu0 0
      %3267 = vmatmul.mubr.bf16.gmra.mrb[0].mxu0 %v3112
      %v3268 = vpop.f32.mrb[0].mxu0
      %v3269 = vadd.f32 0.0, %v3268
      %v3270 = vpop.f32.mrb[0].mxu0
      %v3271 = vpop.f32.mrb[0].mxu0
      %v3272 = vadd.f32 0.0, %v3271
      %v3273 = vpop.f32.mrb[0].mxu0
      %3274 = vmatprep.mubr.bf16.mxu0 0
      %3275 = vmatmul.mubr.bf16.gmra.mrb[0].mxu0 %v3115
      %v3276 = vpop.f32.mrb[0].mxu0
      %v3277 = vadd.f32 0.0, %v3276
      %v3278 = vpop.f32.mrb[0].mxu0
      %v3279 = vpop.f32.mrb[0].mxu0
      %v3280 = vadd.f32 0.0, %v3279
      %v3281 = vpop.f32.mrb[0].mxu0
      %3282 = vmatprep.mubr.bf16.mxu0 0
      %3283 = vmatmul.mubr.bf16.gmra.mrb[0].mxu0 %v3118
      %v3284 = vpop.f32.mrb[0].mxu0
      %v3285 = vadd.f32 0.0, %v3284
      %v3286 = vpop.f32.mrb[0].mxu0
      %v3287 = vpop.f32.mrb[0].mxu0
      %v3288 = vadd.f32 0.0, %v3287
      %v3289 = vpop.f32.mrb[0].mxu0
      %3290 = vmatprep.mubr.bf16.mxu0 0
      %3291 = vmatmul.mubr.bf16.gmra.mrb[0].mxu0 %v3121
      %v3292 = vpop.f32.mrb[0].mxu0
      %v3293 = vadd.f32 0.0, %v3292
      %v3294 = vpop.f32.mrb[0].mxu0
      %v3295 = vpop.f32.mrb[0].mxu0
      %v3296 = vadd.f32 0.0, %v3295
      %v3297 = vpop.f32.mrb[0].mxu0
      %3298 = vmatprep.mubr.bf16.mxu0 0
      %3299 = vmatmul.mubr.bf16.gmra.mrb[0].mxu0 %v3124
      %v3300 = vpop.f32.mrb[0].mxu0
      %v3301 = vadd.f32 0.0, %v3300
      %v3302 = vpop.f32.mrb[0].mxu0
      %v3303 = vpop.f32.mrb[0].mxu0
      %v3304 = vadd.f32 0.0, %v3303
      %v3305 = vpop.f32.mrb[0].mxu0
      %3306 = vmatprep.mubr.bf16.mxu0 0
      %3307 = vmatmul.mubr.bf16.gmra.mrb[0].mxu0 %v3127
      %v3308 = vpop.f32.mrb[0].mxu0
      %v3309 = vadd.f32 0.0, %v3308
      %v3310 = vpop.f32.mrb[0].mxu0
      %v3311 = vpop.f32.mrb[0].mxu0
      %v3312 = vadd.f32 0.0, %v3311
      %v3313 = vpop.f32.mrb[0].mxu0
      %3314 = vmatprep.mubr.bf16.mxu0 0
      %3315 = vmatmul.mubr.bf16.gmra.mrb[0].mxu0 %v3130
      %v3316 = vpop.f32.mrb[0].mxu0
      %v3317 = vadd.f32 0.0, %v3316
      %v3318 = vpop.f32.mrb[0].mxu0
      %v3319 = vpop.f32.mrb[0].mxu0
      %v3320 = vadd.f32 0.0, %v3319
      %v3321 = vpop.f32.mrb[0].mxu0
      %3322 = vmatprep.mubr.bf16.mxu0 0
      %3323 = vmatmul.mubr.bf16.gmra.mrb[0].mxu0 %v3133
      %v3324 = vpop.f32.mrb[0].mxu0
      %v3325 = vadd.f32 0.0, %v3324
      %v3326 = vpop.f32.mrb[0].mxu0
      %v3327 = vpop.f32.mrb[0].mxu0
      %v3328 = vadd.f32 0.0, %v3327
      %v3329 = vpop.f32.mrb[0].mxu0
      %3330 = vdwg.mxu0
      %v3331 = vadd.f32 %v2954, %v3173
      %v3332 = vadd.f32 %v2955, %v3176
      %v3333 = vadd.f32 %v2956, %v3181
      %v3334 = vadd.f32 %v2957, %v3184
      %v3335 = vadd.f32 %v2958, %v3189
      %v3336 = vadd.f32 %v2959, %v3192
      %v3337 = vadd.f32 %v2960, %v3197
      %v3338 = vadd.f32 %v2961, %v3200
      %v3339 = vadd.f32 %v2962, %v3205
      %v3340 = vadd.f32 %v2963, %v3208
      %v3341 = vadd.f32 %v2964, %v3213
      %v3342 = vadd.f32 %v2965, %v3216
      %v3343 = vadd.f32 %v2966, %v3221
      %v3344 = vadd.f32 %v2967, %v3224
      %v3345 = vadd.f32 %v2968, %v3229
      %v3346 = vadd.f32 %v2969, %v3232
      %v3347 = vadd.f32 %v2970, %v3237
      %v3348 = vadd.f32 %v2971, %v3240
      %v3349 = vadd.f32 %v2972, %v3245
      %v3350 = vadd.f32 %v2973, %v3248
      %v3351 = vadd.f32 %v2974, %v3253
      %v3352 = vadd.f32 %v2975, %v3256
      %v3353 = vadd.f32 %v2976, %v3261
      %v3354 = vadd.f32 %v2977, %v3264
      %v3355 = vadd.f32 %v2978, %v3269
      %v3356 = vadd.f32 %v2979, %v3272
      %v3357 = vadd.f32 %v2980, %v3277
      %v3358 = vadd.f32 %v2981, %v3280
      %v3359 = vadd.f32 %v2982, %v3285
      %v3360 = vadd.f32 %v2983, %v3288
      %v3361 = vadd.f32 %v2984, %v3293
      %v3362 = vadd.f32 %v2985, %v3296
      %v3363 = vadd.f32 %v2986, %v3301
      %v3364 = vadd.f32 %v2987, %v3304
      %v3365 = vadd.f32 %v2988, %v3309
      %v3366 = vadd.f32 %v2989, %v3312
      %v3367 = vadd.f32 %v2990, %v3317
      %v3368 = vadd.f32 %v2991, %v3320
      %v3369 = vadd.f32 %v2992, %v3325
      %v3370 = vadd.f32 %v2993, %v3328
      %v3371 = vld [vmem:[#allocation2 + $0x3d] sm:$0xff]
      %v3372 = vld [vmem:[#allocation2 + $0x45] sm:$0xff]
      %v3373 = vld [vmem:[#allocation2 + $0x4d] sm:$0xff]
      %v3374 = vld [vmem:[#allocation2 + $0x55] sm:$0xff]
      %v3375 = vld [vmem:[#allocation2 + $0x5d] sm:$0xff]
      %v3376 = vld [vmem:[#allocation2 + $0x65] sm:$0xff]
      %v3377 = vld [vmem:[#allocation2 + $0x6d] sm:$0xff]
      %v3378 = vld [vmem:[#allocation2 + $0x75] sm:$0xff]
      %v3379 = vld [vmem:[#allocation2 + $0x7d] sm:$0xff]
      %v3380 = vld [vmem:[#allocation2 + $0x85] sm:$0xff]
      %v3381 = vld [vmem:[#allocation2 + $0x8d] sm:$0xff]
      %v3382 = vld [vmem:[#allocation2 + $0x95] sm:$0xff]
      %v3383 = vld [vmem:[#allocation2 + $0x9d] sm:$0xff]
      %v3384 = vld [vmem:[#allocation2 + $0xa5] sm:$0xff]
      %v3385 = vld [vmem:[#allocation2 + $0xad] sm:$0xff]
      %v3386 = vld [vmem:[#allocation2 + $0xb5] sm:$0xff]
      %v3387 = vld [vmem:[#allocation2 + $0xbd] sm:$0xff]
      %v3388 = vld [vmem:[#allocation2 + $0xc5] sm:$0xff]
      %v3389 = vld [vmem:[#allocation2 + $0xcd] sm:$0xff]
      %v3390 = vld [vmem:[#allocation2 + $0xd5] sm:$0xff]
      %v3391 = vld [vmem:[#allocation2 + $0xdd] sm:$0xff]
      %v3392 = vld [vmem:[#allocation2 + $0xe5] sm:$0xff]
      %v3393 = vld [vmem:[#allocation2 + $0xed] sm:$0xff]
      %v3394 = vld [vmem:[#allocation2 + $0xf5] sm:$0xff]
      %v3395 = vld [vmem:[#allocation2 + $0xfd] sm:$0xff]
      %v3396 = vld [vmem:[#allocation2 + $0x105] sm:$0xff]
      %v3397 = vld [vmem:[#allocation2 + $0x10d] sm:$0xff]
      %v3398 = vld [vmem:[#allocation2 + $0x115] sm:$0xff]
      %v3399 = vld [vmem:[#allocation2 + $0x11d] sm:$0xff]
      %v3400 = vld [vmem:[#allocation2 + $0x125] sm:$0xff]
      %v3401 = vld [vmem:[#allocation2 + $0x12d] sm:$0xff]
      %v3402 = vld [vmem:[#allocation2 + $0x135] sm:$0xff]
      %v3403 = vld [vmem:[#allocation2 + $0x13d] sm:$0xff]
      %v3404 = vld [vmem:[#allocation2 + $0x145] sm:$0xff]
      %v3405 = vld [vmem:[#allocation2 + $0x14d] sm:$0xff]
      %v3406 = vld [vmem:[#allocation2 + $0x155] sm:$0xff]
      %v3407 = vld [vmem:[#allocation2 + $0x15d] sm:$0xff]
      %v3408 = vld [vmem:[#allocation2 + $0x165] sm:$0xff]
      %v3409 = vld [vmem:[#allocation2 + $0x16d] sm:$0xff]
      %v3410 = vld [vmem:[#allocation2 + $0x175] sm:$0xf]
      %v3411 = vpack.c.bf16 %v3372, %v3371
      %v3412 = vpack.c.bf16 %v3374, %v3373
      %v3413 = vpack.c.bf16 %v3376, %v3375
      %v3414 = vpack.c.bf16 %v3378, %v3377
      %v3415 = vpack.c.bf16 %v3380, %v3379
      %v3416 = vpack.c.bf16 %v3382, %v3381
      %v3417 = vpack.c.bf16 %v3384, %v3383
      %v3418 = vpack.c.bf16 %v3386, %v3385
      %v3419 = vpack.c.bf16 %v3388, %v3387
      %v3420 = vpack.c.bf16 %v3390, %v3389
      %v3421 = vpack.c.bf16 %v3392, %v3391
      %v3422 = vpack.c.bf16 %v3394, %v3393
      %v3423 = vpack.c.bf16 %v3396, %v3395
      %v3424 = vpack.c.bf16 %v3398, %v3397
      %v3425 = vpack.c.bf16 %v3400, %v3399
      %v3426 = vpack.c.bf16 %v3402, %v3401
      %v3427 = vpack.c.bf16 %v3404, %v3403
      %v3428 = vpack.c.bf16 %v3406, %v3405
      %v3429 = vpack.c.bf16 %v3408, %v3407
      %v3430 = vpack.c.bf16 %v3410, %v3409
      %s3431 = scalar_lea.vmem %s3, 120
      %v3432 = vld [vmem:[%s3431] sm:$0xf]
      %v3433 = vld [vmem:[%s3431 + $0x4] sm:$0xf]
      %v3434 = vld [vmem:[%s3431 + $0x8] sm:$0xf]
      %v3435 = vld [vmem:[%s3431 + $0xc] sm:$0xf]
      %v3436 = vld [vmem:[%s3431 + $0x10] sm:$0xf]
      %v3442 = vunpack.c.l.b16 %v3432
      %v3443 = vunpack.c.l.b16 %v3433
      %v3444 = vunpack.c.l.b16 %v3434
      %v3445 = vunpack.c.l.b16 %v3435
      %v3446 = vunpack.c.l.b16 %v3436
      %v3447 = vpack.c.b16 %v3443, %v3442
      %v3448 = vpack.c.b16 %v3445, %v3444
      %v3449 = vpack.c.b16 %v3446, %v3446
      %v3453 = vsel %vm1334, %v3411, 0
      %v3456 = vsel %vm1334, %v3412, 0
      %v3459 = vsel %vm1334, %v3413, 0
      %v3462 = vsel %vm1334, %v3414, 0
      %v3465 = vsel %vm1334, %v3415, 0
      %v3468 = vsel %vm1334, %v3416, 0
      %v3471 = vsel %vm1334, %v3417, 0
      %v3474 = vsel %vm1334, %v3418, 0
      %v3477 = vsel %vm1334, %v3419, 0
      %v3480 = vsel %vm1334, %v3420, 0
      %v3483 = vsel %vm1334, %v3421, 0
      %v3486 = vsel %vm1334, %v3422, 0
      %v3489 = vsel %vm1334, %v3423, 0
      %v3492 = vsel %vm1334, %v3424, 0
      %v3495 = vsel %vm1334, %v3425, 0
      %v3498 = vsel %vm1334, %v3426, 0
      %v3501 = vsel %vm1334, %v3427, 0
      %v3504 = vsel %vm1334, %v3428, 0
      %v3507 = vsel %vm1334, %v3429, 0
      %v3510 = vsel %vm1334, %v3430, 0
      %v3513 = vsel %vm1395, %v3449, 0
      %3515 = vmatprep.subr.bf16.mxu0 0
      %3516 = vmatpush1.bf16.msra.mxu0 %v3447
      %3517 = vmatprep.subr.bf16.mxu0 0
      %3518 = vmatpush1.bf16.msra.mxu0 %v3448
      %3519 = vmatprep.subr.bf16.mxu0 0
      %3520 = vmatpush1.bf16.msra.mxu0 %v3513
      %3521 = vmatprep.subr.bf16.mxu0 0
      %3522 = vmatpush1.bf16.msra.mxu0 0
      %3523 = vmatprep.subr.bf16.mxu0 0
      %3524 = vmatpush1.bf16.msra.mxu0 0
      %3525 = vmatprep.subr.bf16.mxu0 0
      %3526 = vmatpush1.bf16.msra.mxu0 0
      %3527 = vmatprep.subr.bf16.mxu0 0
      %3528 = vmatpush1.bf16.msra.mxu0 0
      %3529 = vmatprep.subr.bf16.mxu0 0
      %3530 = vmatpush1.bf16.msra.mxu0 0
      %3531 = vmatprep.subr.bf16.mxu0 0
      %3532 = vmatpush1.bf16.msra.mxu0 0
      %3533 = vmatprep.subr.bf16.mxu0 0
      %3534 = vmatpush1.bf16.msra.mxu0 0
      %3535 = vmatprep.subr.bf16.mxu0 0
      %3536 = vmatpush1.bf16.msra.mxu0 0
      %3537 = vmatprep.subr.bf16.mxu0 0
      %3538 = vmatpush1.bf16.msra.mxu0 0
      %3539 = vmatprep.subr.bf16.mxu0 0
      %3540 = vmatpush1.bf16.msra.mxu0 0
      %3541 = vmatprep.subr.bf16.mxu0 0
      %3542 = vmatpush1.bf16.msra.mxu0 0
      %3543 = vmatprep.subr.bf16.mxu0 0
      %3544 = vmatpush1.bf16.msra.mxu0 0
      %3545 = vmatprep.subr.bf16.mxu0 0
      %3546 = vmatpush1.bf16.msra.mxu0 0
      %3547 = vmatprep.mubr.bf16.mxu0 0
      %3548 = vmatmul.mubr.bf16.gmra.mrb[0].mxu0 %v3453
      %v3549 = vpop.f32.mrb[0].mxu0
      %v3550 = vadd.f32 0.0, %v3549
      %v3551 = vpop.f32.mrb[0].mxu0
      %v3552 = vpop.f32.mrb[0].mxu0
      %v3553 = vadd.f32 0.0, %v3552
      %v3554 = vpop.f32.mrb[0].mxu0
      %3555 = vmatprep.mubr.bf16.mxu0 0
      %3556 = vmatmul.mubr.bf16.gmra.mrb[0].mxu0 %v3456
      %v3557 = vpop.f32.mrb[0].mxu0
      %v3558 = vadd.f32 0.0, %v3557
      %v3559 = vpop.f32.mrb[0].mxu0
      %v3560 = vpop.f32.mrb[0].mxu0
      %v3561 = vadd.f32 0.0, %v3560
      %v3562 = vpop.f32.mrb[0].mxu0
      %3563 = vmatprep.mubr.bf16.mxu0 0
      %3564 = vmatmul.mubr.bf16.gmra.mrb[0].mxu0 %v3459
      %v3565 = vpop.f32.mrb[0].mxu0
      %v3566 = vadd.f32 0.0, %v3565
      %v3567 = vpop.f32.mrb[0].mxu0
      %v3568 = vpop.f32.mrb[0].mxu0
      %v3569 = vadd.f32 0.0, %v3568
      %v3570 = vpop.f32.mrb[0].mxu0
      %3571 = vmatprep.mubr.bf16.mxu0 0
      %3572 = vmatmul.mubr.bf16.gmra.mrb[0].mxu0 %v3462
      %v3573 = vpop.f32.mrb[0].mxu0
      %v3574 = vadd.f32 0.0, %v3573
      %v3575 = vpop.f32.mrb[0].mxu0
      %v3576 = vpop.f32.mrb[0].mxu0
      %v3577 = vadd.f32 0.0, %v3576
      %v3578 = vpop.f32.mrb[0].mxu0
      %3579 = vmatprep.mubr.bf16.mxu0 0
      %3580 = vmatmul.mubr.bf16.gmra.mrb[0].mxu0 %v3465
      %v3581 = vpop.f32.mrb[0].mxu0
      %v3582 = vadd.f32 0.0, %v3581
      %v3583 = vpop.f32.mrb[0].mxu0
      %v3584 = vpop.f32.mrb[0].mxu0
      %v3585 = vadd.f32 0.0, %v3584
      %v3586 = vpop.f32.mrb[0].mxu0
      %3587 = vmatprep.mubr.bf16.mxu0 0
      %3588 = vmatmul.mubr.bf16.gmra.mrb[0].mxu0 %v3468
      %v3589 = vpop.f32.mrb[0].mxu0
      %v3590 = vadd.f32 0.0, %v3589
      %v3591 = vpop.f32.mrb[0].mxu0
      %v3592 = vpop.f32.mrb[0].mxu0
      %v3593 = vadd.f32 0.0, %v3592
      %v3594 = vpop.f32.mrb[0].mxu0
      %3595 = vmatprep.mubr.bf16.mxu0 0
      %3596 = vmatmul.mubr.bf16.gmra.mrb[0].mxu0 %v3471
      %v3597 = vpop.f32.mrb[0].mxu0
      %v3598 = vadd.f32 0.0, %v3597
      %v3599 = vpop.f32.mrb[0].mxu0
      %v3600 = vpop.f32.mrb[0].mxu0
      %v3601 = vadd.f32 0.0, %v3600
      %v3602 = vpop.f32.mrb[0].mxu0
      %3603 = vmatprep.mubr.bf16.mxu0 0
      %3604 = vmatmul.mubr.bf16.gmra.mrb[0].mxu0 %v3474
      %v3605 = vpop.f32.mrb[0].mxu0
      %v3606 = vadd.f32 0.0, %v3605
      %v3607 = vpop.f32.mrb[0].mxu0
      %v3608 = vpop.f32.mrb[0].mxu0
      %v3609 = vadd.f32 0.0, %v3608
      %v3610 = vpop.f32.mrb[0].mxu0
      %3611 = vmatprep.mubr.bf16.mxu0 0
      %3612 = vmatmul.mubr.bf16.gmra.mrb[0].mxu0 %v3477
      %v3613 = vpop.f32.mrb[0].mxu0
      %v3614 = vadd.f32 0.0, %v3613
      %v3615 = vpop.f32.mrb[0].mxu0
      %v3616 = vpop.f32.mrb[0].mxu0
      %v3617 = vadd.f32 0.0, %v3616
      %v3618 = vpop.f32.mrb[0].mxu0
      %3619 = vmatprep.mubr.bf16.mxu0 0
      %3620 = vmatmul.mubr.bf16.gmra.mrb[0].mxu0 %v3480
      %v3621 = vpop.f32.mrb[0].mxu0
      %v3622 = vadd.f32 0.0, %v3621
      %v3623 = vpop.f32.mrb[0].mxu0
      %v3624 = vpop.f32.mrb[0].mxu0
      %v3625 = vadd.f32 0.0, %v3624
      %v3626 = vpop.f32.mrb[0].mxu0
      %3627 = vmatprep.mubr.bf16.mxu0 0
      %3628 = vmatmul.mubr.bf16.gmra.mrb[0].mxu0 %v3483
      %v3629 = vpop.f32.mrb[0].mxu0
      %v3630 = vadd.f32 0.0, %v3629
      %v3631 = vpop.f32.mrb[0].mxu0
      %v3632 = vpop.f32.mrb[0].mxu0
      %v3633 = vadd.f32 0.0, %v3632
      %v3634 = vpop.f32.mrb[0].mxu0
      %3635 = vmatprep.mubr.bf16.mxu0 0
      %3636 = vmatmul.mubr.bf16.gmra.mrb[0].mxu0 %v3486
      %v3637 = vpop.f32.mrb[0].mxu0
      %v3638 = vadd.f32 0.0, %v3637
      %v3639 = vpop.f32.mrb[0].mxu0
      %v3640 = vpop.f32.mrb[0].mxu0
      %v3641 = vadd.f32 0.0, %v3640
      %v3642 = vpop.f32.mrb[0].mxu0
      %3643 = vmatprep.mubr.bf16.mxu0 0
      %3644 = vmatmul.mubr.bf16.gmra.mrb[0].mxu0 %v3489
      %v3645 = vpop.f32.mrb[0].mxu0
      %v3646 = vadd.f32 0.0, %v3645
      %v3647 = vpop.f32.mrb[0].mxu0
      %v3648 = vpop.f32.mrb[0].mxu0
      %v3649 = vadd.f32 0.0, %v3648
      %v3650 = vpop.f32.mrb[0].mxu0
      %3651 = vmatprep.mubr.bf16.mxu0 0
      %3652 = vmatmul.mubr.bf16.gmra.mrb[0].mxu0 %v3492
      %v3653 = vpop.f32.mrb[0].mxu0
      %v3654 = vadd.f32 0.0, %v3653
      %v3655 = vpop.f32.mrb[0].mxu0
      %v3656 = vpop.f32.mrb[0].mxu0
      %v3657 = vadd.f32 0.0, %v3656
      %v3658 = vpop.f32.mrb[0].mxu0
      %3659 = vmatprep.mubr.bf16.mxu0 0
      %3660 = vmatmul.mubr.bf16.gmra.mrb[0].mxu0 %v3495
      %v3661 = vpop.f32.mrb[0].mxu0
      %v3662 = vadd.f32 0.0, %v3661
      %v3663 = vpop.f32.mrb[0].mxu0
      %v3664 = vpop.f32.mrb[0].mxu0
      %v3665 = vadd.f32 0.0, %v3664
      %v3666 = vpop.f32.mrb[0].mxu0
      %3667 = vmatprep.mubr.bf16.mxu0 0
      %3668 = vmatmul.mubr.bf16.gmra.mrb[0].mxu0 %v3498
      %v3669 = vpop.f32.mrb[0].mxu0
      %v3670 = vadd.f32 0.0, %v3669
      %v3671 = vpop.f32.mrb[0].mxu0
      %v3672 = vpop.f32.mrb[0].mxu0
      %v3673 = vadd.f32 0.0, %v3672
      %v3674 = vpop.f32.mrb[0].mxu0
      %3675 = vmatprep.mubr.bf16.mxu0 0
      %3676 = vmatmul.mubr.bf16.gmra.mrb[0].mxu0 %v3501
      %v3677 = vpop.f32.mrb[0].mxu0
      %v3678 = vadd.f32 0.0, %v3677
      %v3679 = vpop.f32.mrb[0].mxu0
      %v3680 = vpop.f32.mrb[0].mxu0
      %v3681 = vadd.f32 0.0, %v3680
      %v3682 = vpop.f32.mrb[0].mxu0
      %3683 = vmatprep.mubr.bf16.mxu0 0
      %3684 = vmatmul.mubr.bf16.gmra.mrb[0].mxu0 %v3504
      %v3685 = vpop.f32.mrb[0].mxu0
      %v3686 = vadd.f32 0.0, %v3685
      %v3687 = vpop.f32.mrb[0].mxu0
      %v3688 = vpop.f32.mrb[0].mxu0
      %v3689 = vadd.f32 0.0, %v3688
      %v3690 = vpop.f32.mrb[0].mxu0
      %3691 = vmatprep.mubr.bf16.mxu0 0
      %3692 = vmatmul.mubr.bf16.gmra.mrb[0].mxu0 %v3507
      %v3693 = vpop.f32.mrb[0].mxu0
      %v3694 = vadd.f32 0.0, %v3693
      %v3695 = vpop.f32.mrb[0].mxu0
      %v3696 = vpop.f32.mrb[0].mxu0
      %v3697 = vadd.f32 0.0, %v3696
      %v3698 = vpop.f32.mrb[0].mxu0
      %3699 = vmatprep.mubr.bf16.mxu0 0
      %3700 = vmatmul.mubr.bf16.gmra.mrb[0].mxu0 %v3510
      %v3701 = vpop.f32.mrb[0].mxu0
      %v3702 = vadd.f32 0.0, %v3701
      %v3703 = vpop.f32.mrb[0].mxu0
      %v3704 = vpop.f32.mrb[0].mxu0
      %v3705 = vadd.f32 0.0, %v3704
      %v3706 = vpop.f32.mrb[0].mxu0
      %3707 = vdwg.mxu0
      %v3708 = vadd.f32 %v3331, %v3550
      %v3709 = vadd.f32 %v3332, %v3553
      %v3710 = vadd.f32 %v3333, %v3558
      %v3711 = vadd.f32 %v3334, %v3561
      %v3712 = vadd.f32 %v3335, %v3566
      %v3713 = vadd.f32 %v3336, %v3569
      %v3714 = vadd.f32 %v3337, %v3574
      %v3715 = vadd.f32 %v3338, %v3577
      %v3716 = vadd.f32 %v3339, %v3582
      %v3717 = vadd.f32 %v3340, %v3585
      %v3718 = vadd.f32 %v3341, %v3590
      %v3719 = vadd.f32 %v3342, %v3593
      %v3720 = vadd.f32 %v3343, %v3598
      %v3721 = vadd.f32 %v3344, %v3601
      %v3722 = vadd.f32 %v3345, %v3606
      %v3723 = vadd.f32 %v3346, %v3609
      %v3724 = vadd.f32 %v3347, %v3614
      %v3725 = vadd.f32 %v3348, %v3617
      %v3726 = vadd.f32 %v3349, %v3622
      %v3727 = vadd.f32 %v3350, %v3625
      %v3728 = vadd.f32 %v3351, %v3630
      %v3729 = vadd.f32 %v3352, %v3633
      %v3730 = vadd.f32 %v3353, %v3638
      %v3731 = vadd.f32 %v3354, %v3641
      %v3732 = vadd.f32 %v3355, %v3646
      %v3733 = vadd.f32 %v3356, %v3649
      %v3734 = vadd.f32 %v3357, %v3654
      %v3735 = vadd.f32 %v3358, %v3657
      %v3736 = vadd.f32 %v3359, %v3662
      %v3737 = vadd.f32 %v3360, %v3665
      %v3738 = vadd.f32 %v3361, %v3670
      %v3739 = vadd.f32 %v3362, %v3673
      %v3740 = vadd.f32 %v3363, %v3678
      %v3741 = vadd.f32 %v3364, %v3681
      %v3742 = vadd.f32 %v3365, %v3686
      %v3743 = vadd.f32 %v3366, %v3689
      %v3744 = vadd.f32 %v3367, %v3694
      %v3745 = vadd.f32 %v3368, %v3697
      %v3746 = vadd.f32 %v3369, %v3702
      %v3747 = vadd.f32 %v3370, %v3705
      %v3748 = vld [vmem:[#allocation2 + $0x3e] sm:$0xff]
      %v3749 = vld [vmem:[#allocation2 + $0x46] sm:$0xff]
      %v3750 = vld [vmem:[#allocation2 + $0x4e] sm:$0xff]
      %v3751 = vld [vmem:[#allocation2 + $0x56] sm:$0xff]
      %v3752 = vld [vmem:[#allocation2 + $0x5e] sm:$0xff]
      %v3753 = vld [vmem:[#allocation2 + $0x66] sm:$0xff]
      %v3754 = vld [vmem:[#allocation2 + $0x6e] sm:$0xff]
      %v3755 = vld [vmem:[#allocation2 + $0x76] sm:$0xff]
      %v3756 = vld [vmem:[#allocation2 + $0x7e] sm:$0xff]
      %v3757 = vld [vmem:[#allocation2 + $0x86] sm:$0xff]
      %v3758 = vld [vmem:[#allocation2 + $0x8e] sm:$0xff]
      %v3759 = vld [vmem:[#allocation2 + $0x96] sm:$0xff]
      %v3760 = vld [vmem:[#allocation2 + $0x9e] sm:$0xff]
      %v3761 = vld [vmem:[#allocation2 + $0xa6] sm:$0xff]
      %v3762 = vld [vmem:[#allocation2 + $0xae] sm:$0xff]
      %v3763 = vld [vmem:[#allocation2 + $0xb6] sm:$0xff]
      %v3764 = vld [vmem:[#allocation2 + $0xbe] sm:$0xff]
      %v3765 = vld [vmem:[#allocation2 + $0xc6] sm:$0xff]
      %v3766 = vld [vmem:[#allocation2 + $0xce] sm:$0xff]
      %v3767 = vld [vmem:[#allocation2 + $0xd6] sm:$0xff]
      %v3768 = vld [vmem:[#allocation2 + $0xde] sm:$0xff]
      %v3769 = vld [vmem:[#allocation2 + $0xe6] sm:$0xff]
      %v3770 = vld [vmem:[#allocation2 + $0xee] sm:$0xff]
      %v3771 = vld [vmem:[#allocation2 + $0xf6] sm:$0xff]
      %v3772 = vld [vmem:[#allocation2 + $0xfe] sm:$0xff]
      %v3773 = vld [vmem:[#allocation2 + $0x106] sm:$0xff]
      %v3774 = vld [vmem:[#allocation2 + $0x10e] sm:$0xff]
      %v3775 = vld [vmem:[#allocation2 + $0x116] sm:$0xff]
      %v3776 = vld [vmem:[#allocation2 + $0x11e] sm:$0xff]
      %v3777 = vld [vmem:[#allocation2 + $0x126] sm:$0xff]
      %v3778 = vld [vmem:[#allocation2 + $0x12e] sm:$0xff]
      %v3779 = vld [vmem:[#allocation2 + $0x136] sm:$0xff]
      %v3780 = vld [vmem:[#allocation2 + $0x13e] sm:$0xff]
      %v3781 = vld [vmem:[#allocation2 + $0x146] sm:$0xff]
      %v3782 = vld [vmem:[#allocation2 + $0x14e] sm:$0xff]
      %v3783 = vld [vmem:[#allocation2 + $0x156] sm:$0xff]
      %v3784 = vld [vmem:[#allocation2 + $0x15e] sm:$0xff]
      %v3785 = vld [vmem:[#allocation2 + $0x166] sm:$0xff]
      %v3786 = vld [vmem:[#allocation2 + $0x16e] sm:$0xff]
      %v3787 = vld [vmem:[#allocation2 + $0x176] sm:$0xf]
      %v3788 = vpack.c.bf16 %v3749, %v3748
      %v3789 = vpack.c.bf16 %v3751, %v3750
      %v3790 = vpack.c.bf16 %v3753, %v3752
      %v3791 = vpack.c.bf16 %v3755, %v3754
      %v3792 = vpack.c.bf16 %v3757, %v3756
      %v3793 = vpack.c.bf16 %v3759, %v3758
      %v3794 = vpack.c.bf16 %v3761, %v3760
      %v3795 = vpack.c.bf16 %v3763, %v3762
      %v3796 = vpack.c.bf16 %v3765, %v3764
      %v3797 = vpack.c.bf16 %v3767, %v3766
      %v3798 = vpack.c.bf16 %v3769, %v3768
      %v3799 = vpack.c.bf16 %v3771, %v3770
      %v3800 = vpack.c.bf16 %v3773, %v3772
      %v3801 = vpack.c.bf16 %v3775, %v3774
      %v3802 = vpack.c.bf16 %v3777, %v3776
      %v3803 = vpack.c.bf16 %v3779, %v3778
      %v3804 = vpack.c.bf16 %v3781, %v3780
      %v3805 = vpack.c.bf16 %v3783, %v3782
      %v3806 = vpack.c.bf16 %v3785, %v3784
      %v3807 = vpack.c.bf16 %v3787, %v3786
      %s3808 = scalar_lea.vmem %s3, 140
      %v3809 = vld [vmem:[%s3808] sm:$0xf]
      %v3810 = vld [vmem:[%s3808 + $0x4] sm:$0xf]
      %v3811 = vld [vmem:[%s3808 + $0x8] sm:$0xf]
      %v3812 = vld [vmem:[%s3808 + $0xc] sm:$0xf]
      %v3813 = vld [vmem:[%s3808 + $0x10] sm:$0xf]
      %v3819 = vunpack.c.l.b16 %v3809
      %v3820 = vunpack.c.l.b16 %v3810
      %v3821 = vunpack.c.l.b16 %v3811
      %v3822 = vunpack.c.l.b16 %v3812
      %v3823 = vunpack.c.l.b16 %v3813
      %v3824 = vpack.c.b16 %v3820, %v3819
      %v3825 = vpack.c.b16 %v3822, %v3821
      %v3826 = vpack.c.b16 %v3823, %v3823
      %v3830 = vsel %vm1334, %v3788, 0
      %v3833 = vsel %vm1334, %v3789, 0
      %v3836 = vsel %vm1334, %v3790, 0
      %v3839 = vsel %vm1334, %v3791, 0
      %v3842 = vsel %vm1334, %v3792, 0
      %v3845 = vsel %vm1334, %v3793, 0
      %v3848 = vsel %vm1334, %v3794, 0
      %v3851 = vsel %vm1334, %v3795, 0
      %v3854 = vsel %vm1334, %v3796, 0
      %v3857 = vsel %vm1334, %v3797, 0
      %v3860 = vsel %vm1334, %v3798, 0
      %v3863 = vsel %vm1334, %v3799, 0
      %v3866 = vsel %vm1334, %v3800, 0
      %v3869 = vsel %vm1334, %v3801, 0
      %v3872 = vsel %vm1334, %v3802, 0
      %v3875 = vsel %vm1334, %v3803, 0
      %v3878 = vsel %vm1334, %v3804, 0
      %v3881 = vsel %vm1334, %v3805, 0
      %v3884 = vsel %vm1334, %v3806, 0
      %v3887 = vsel %vm1334, %v3807, 0
      %v3890 = vsel %vm1395, %v3826, 0
      %3892 = vmatprep.subr.bf16.mxu0 0
      %3893 = vmatpush1.bf16.msra.mxu0 %v3824
      %3894 = vmatprep.subr.bf16.mxu0 0
      %3895 = vmatpush1.bf16.msra.mxu0 %v3825
      %3896 = vmatprep.subr.bf16.mxu0 0
      %3897 = vmatpush1.bf16.msra.mxu0 %v3890
      %3898 = vmatprep.subr.bf16.mxu0 0
      %3899 = vmatpush1.bf16.msra.mxu0 0
      %3900 = vmatprep.subr.bf16.mxu0 0
      %3901 = vmatpush1.bf16.msra.mxu0 0
      %3902 = vmatprep.subr.bf16.mxu0 0
      %3903 = vmatpush1.bf16.msra.mxu0 0
      %3904 = vmatprep.subr.bf16.mxu0 0
      %3905 = vmatpush1.bf16.msra.mxu0 0
      %3906 = vmatprep.subr.bf16.mxu0 0
      %3907 = vmatpush1.bf16.msra.mxu0 0
      %3908 = vmatprep.subr.bf16.mxu0 0
      %3909 = vmatpush1.bf16.msra.mxu0 0
      %3910 = vmatprep.subr.bf16.mxu0 0
      %3911 = vmatpush1.bf16.msra.mxu0 0
      %3912 = vmatprep.subr.bf16.mxu0 0
      %3913 = vmatpush1.bf16.msra.mxu0 0
      %3914 = vmatprep.subr.bf16.mxu0 0
      %3915 = vmatpush1.bf16.msra.mxu0 0
      %3916 = vmatprep.subr.bf16.mxu0 0
      %3917 = vmatpush1.bf16.msra.mxu0 0
      %3918 = vmatprep.subr.bf16.mxu0 0
      %3919 = vmatpush1.bf16.msra.mxu0 0
      %3920 = vmatprep.subr.bf16.mxu0 0
      %3921 = vmatpush1.bf16.msra.mxu0 0
      %3922 = vmatprep.subr.bf16.mxu0 0
      %3923 = vmatpush1.bf16.msra.mxu0 0
      %3924 = vmatprep.mubr.bf16.mxu0 0
      %3925 = vmatmul.mubr.bf16.gmra.mrb[0].mxu0 %v3830
      %v3926 = vpop.f32.mrb[0].mxu0
      %v3927 = vadd.f32 0.0, %v3926
      %v3928 = vpop.f32.mrb[0].mxu0
      %v3929 = vpop.f32.mrb[0].mxu0
      %v3930 = vadd.f32 0.0, %v3929
      %v3931 = vpop.f32.mrb[0].mxu0
      %3932 = vmatprep.mubr.bf16.mxu0 0
      %3933 = vmatmul.mubr.bf16.gmra.mrb[0].mxu0 %v3833
      %v3934 = vpop.f32.mrb[0].mxu0
      %v3935 = vadd.f32 0.0, %v3934
      %v3936 = vpop.f32.mrb[0].mxu0
      %v3937 = vpop.f32.mrb[0].mxu0
      %v3938 = vadd.f32 0.0, %v3937
      %v3939 = vpop.f32.mrb[0].mxu0
      %3940 = vmatprep.mubr.bf16.mxu0 0
      %3941 = vmatmul.mubr.bf16.gmra.mrb[0].mxu0 %v3836
      %v3942 = vpop.f32.mrb[0].mxu0
      %v3943 = vadd.f32 0.0, %v3942
      %v3944 = vpop.f32.mrb[0].mxu0
      %v3945 = vpop.f32.mrb[0].mxu0
      %v3946 = vadd.f32 0.0, %v3945
      %v3947 = vpop.f32.mrb[0].mxu0
      %3948 = vmatprep.mubr.bf16.mxu0 0
      %3949 = vmatmul.mubr.bf16.gmra.mrb[0].mxu0 %v3839
      %v3950 = vpop.f32.mrb[0].mxu0
      %v3951 = vadd.f32 0.0, %v3950
      %v3952 = vpop.f32.mrb[0].mxu0
      %v3953 = vpop.f32.mrb[0].mxu0
      %v3954 = vadd.f32 0.0, %v3953
      %v3955 = vpop.f32.mrb[0].mxu0
      %3956 = vmatprep.mubr.bf16.mxu0 0
      %3957 = vmatmul.mubr.bf16.gmra.mrb[0].mxu0 %v3842
      %v3958 = vpop.f32.mrb[0].mxu0
      %v3959 = vadd.f32 0.0, %v3958
      %v3960 = vpop.f32.mrb[0].mxu0
      %v3961 = vpop.f32.mrb[0].mxu0
      %v3962 = vadd.f32 0.0, %v3961
      %v3963 = vpop.f32.mrb[0].mxu0
      %3964 = vmatprep.mubr.bf16.mxu0 0
      %3965 = vmatmul.mubr.bf16.gmra.mrb[0].mxu0 %v3845
      %v3966 = vpop.f32.mrb[0].mxu0
      %v3967 = vadd.f32 0.0, %v3966
      %v3968 = vpop.f32.mrb[0].mxu0
      %v3969 = vpop.f32.mrb[0].mxu0
      %v3970 = vadd.f32 0.0, %v3969
      %v3971 = vpop.f32.mrb[0].mxu0
      %3972 = vmatprep.mubr.bf16.mxu0 0
      %3973 = vmatmul.mubr.bf16.gmra.mrb[0].mxu0 %v3848
      %v3974 = vpop.f32.mrb[0].mxu0
      %v3975 = vadd.f32 0.0, %v3974
      %v3976 = vpop.f32.mrb[0].mxu0
      %v3977 = vpop.f32.mrb[0].mxu0
      %v3978 = vadd.f32 0.0, %v3977
      %v3979 = vpop.f32.mrb[0].mxu0
      %3980 = vmatprep.mubr.bf16.mxu0 0
      %3981 = vmatmul.mubr.bf16.gmra.mrb[0].mxu0 %v3851
      %v3982 = vpop.f32.mrb[0].mxu0
      %v3983 = vadd.f32 0.0, %v3982
      %v3984 = vpop.f32.mrb[0].mxu0
      %v3985 = vpop.f32.mrb[0].mxu0
      %v3986 = vadd.f32 0.0, %v3985
      %v3987 = vpop.f32.mrb[0].mxu0
      %3988 = vmatprep.mubr.bf16.mxu0 0
      %3989 = vmatmul.mubr.bf16.gmra.mrb[0].mxu0 %v3854
      %v3990 = vpop.f32.mrb[0].mxu0
      %v3991 = vadd.f32 0.0, %v3990
      %v3992 = vpop.f32.mrb[0].mxu0
      %v3993 = vpop.f32.mrb[0].mxu0
      %v3994 = vadd.f32 0.0, %v3993
      %v3995 = vpop.f32.mrb[0].mxu0
      %3996 = vmatprep.mubr.bf16.mxu0 0
      %3997 = vmatmul.mubr.bf16.gmra.mrb[0].mxu0 %v3857
      %v3998 = vpop.f32.mrb[0].mxu0
      %v3999 = vadd.f32 0.0, %v3998
      %v4000 = vpop.f32.mrb[0].mxu0
      %v4001 = vpop.f32.mrb[0].mxu0
      %v4002 = vadd.f32 0.0, %v4001
      %v4003 = vpop.f32.mrb[0].mxu0
      %4004 = vmatprep.mubr.bf16.mxu0 0
      %4005 = vmatmul.mubr.bf16.gmra.mrb[0].mxu0 %v3860
      %v4006 = vpop.f32.mrb[0].mxu0
      %v4007 = vadd.f32 0.0, %v4006
      %v4008 = vpop.f32.mrb[0].mxu0
      %v4009 = vpop.f32.mrb[0].mxu0
      %v4010 = vadd.f32 0.0, %v4009
      %v4011 = vpop.f32.mrb[0].mxu0
      %4012 = vmatprep.mubr.bf16.mxu0 0
      %4013 = vmatmul.mubr.bf16.gmra.mrb[0].mxu0 %v3863
      %v4014 = vpop.f32.mrb[0].mxu0
      %v4015 = vadd.f32 0.0, %v4014
      %v4016 = vpop.f32.mrb[0].mxu0
      %v4017 = vpop.f32.mrb[0].mxu0
      %v4018 = vadd.f32 0.0, %v4017
      %v4019 = vpop.f32.mrb[0].mxu0
      %4020 = vmatprep.mubr.bf16.mxu0 0
      %4021 = vmatmul.mubr.bf16.gmra.mrb[0].mxu0 %v3866
      %v4022 = vpop.f32.mrb[0].mxu0
      %v4023 = vadd.f32 0.0, %v4022
      %v4024 = vpop.f32.mrb[0].mxu0
      %v4025 = vpop.f32.mrb[0].mxu0
      %v4026 = vadd.f32 0.0, %v4025
      %v4027 = vpop.f32.mrb[0].mxu0
      %4028 = vmatprep.mubr.bf16.mxu0 0
      %4029 = vmatmul.mubr.bf16.gmra.mrb[0].mxu0 %v3869
      %v4030 = vpop.f32.mrb[0].mxu0
      %v4031 = vadd.f32 0.0, %v4030
      %v4032 = vpop.f32.mrb[0].mxu0
      %v4033 = vpop.f32.mrb[0].mxu0
      %v4034 = vadd.f32 0.0, %v4033
      %v4035 = vpop.f32.mrb[0].mxu0
      %4036 = vmatprep.mubr.bf16.mxu0 0
      %4037 = vmatmul.mubr.bf16.gmra.mrb[0].mxu0 %v3872
      %v4038 = vpop.f32.mrb[0].mxu0
      %v4039 = vadd.f32 0.0, %v4038
      %v4040 = vpop.f32.mrb[0].mxu0
      %v4041 = vpop.f32.mrb[0].mxu0
      %v4042 = vadd.f32 0.0, %v4041
      %v4043 = vpop.f32.mrb[0].mxu0
      %4044 = vmatprep.mubr.bf16.mxu0 0
      %4045 = vmatmul.mubr.bf16.gmra.mrb[0].mxu0 %v3875
      %v4046 = vpop.f32.mrb[0].mxu0
      %v4047 = vadd.f32 0.0, %v4046
      %v4048 = vpop.f32.mrb[0].mxu0
      %v4049 = vpop.f32.mrb[0].mxu0
      %v4050 = vadd.f32 0.0, %v4049
      %v4051 = vpop.f32.mrb[0].mxu0
      %4052 = vmatprep.mubr.bf16.mxu0 0
      %4053 = vmatmul.mubr.bf16.gmra.mrb[0].mxu0 %v3878
      %v4054 = vpop.f32.mrb[0].mxu0
      %v4055 = vadd.f32 0.0, %v4054
      %v4056 = vpop.f32.mrb[0].mxu0
      %v4057 = vpop.f32.mrb[0].mxu0
      %v4058 = vadd.f32 0.0, %v4057
      %v4059 = vpop.f32.mrb[0].mxu0
      %4060 = vmatprep.mubr.bf16.mxu0 0
      %4061 = vmatmul.mubr.bf16.gmra.mrb[0].mxu0 %v3881
      %v4062 = vpop.f32.mrb[0].mxu0
      %v4063 = vadd.f32 0.0, %v4062
      %v4064 = vpop.f32.mrb[0].mxu0
      %v4065 = vpop.f32.mrb[0].mxu0
      %v4066 = vadd.f32 0.0, %v4065
      %v4067 = vpop.f32.mrb[0].mxu0
      %4068 = vmatprep.mubr.bf16.mxu0 0
      %4069 = vmatmul.mubr.bf16.gmra.mrb[0].mxu0 %v3884
      %v4070 = vpop.f32.mrb[0].mxu0
      %v4071 = vadd.f32 0.0, %v4070
      %v4072 = vpop.f32.mrb[0].mxu0
      %v4073 = vpop.f32.mrb[0].mxu0
      %v4074 = vadd.f32 0.0, %v4073
      %v4075 = vpop.f32.mrb[0].mxu0
      %4076 = vmatprep.mubr.bf16.mxu0 0
      %4077 = vmatmul.mubr.bf16.gmra.mrb[0].mxu0 %v3887
      %v4078 = vpop.f32.mrb[0].mxu0
      %v4079 = vadd.f32 0.0, %v4078
      %v4080 = vpop.f32.mrb[0].mxu0
      %v4081 = vpop.f32.mrb[0].mxu0
      %v4082 = vadd.f32 0.0, %v4081
      %v4083 = vpop.f32.mrb[0].mxu0
      %4084 = vdwg.mxu0
      %v4085 = vadd.f32 %v3708, %v3927
      %v4086 = vadd.f32 %v3709, %v3930
      %v4087 = vadd.f32 %v3710, %v3935
      %v4088 = vadd.f32 %v3711, %v3938
      %v4089 = vadd.f32 %v3712, %v3943
      %v4090 = vadd.f32 %v3713, %v3946
      %v4091 = vadd.f32 %v3714, %v3951
      %v4092 = vadd.f32 %v3715, %v3954
      %v4093 = vadd.f32 %v3716, %v3959
      %v4094 = vadd.f32 %v3717, %v3962
      %v4095 = vadd.f32 %v3718, %v3967
      %v4096 = vadd.f32 %v3719, %v3970
      %v4097 = vadd.f32 %v3720, %v3975
      %v4098 = vadd.f32 %v3721, %v3978
      %v4099 = vadd.f32 %v3722, %v3983
      %v4100 = vadd.f32 %v3723, %v3986
      %v4101 = vadd.f32 %v3724, %v3991
      %v4102 = vadd.f32 %v3725, %v3994
      %v4103 = vadd.f32 %v3726, %v3999
      %v4104 = vadd.f32 %v3727, %v4002
      %v4105 = vadd.f32 %v3728, %v4007
      %v4106 = vadd.f32 %v3729, %v4010
      %v4107 = vadd.f32 %v3730, %v4015
      %v4108 = vadd.f32 %v3731, %v4018
      %v4109 = vadd.f32 %v3732, %v4023
      %v4110 = vadd.f32 %v3733, %v4026
      %v4111 = vadd.f32 %v3734, %v4031
      %v4112 = vadd.f32 %v3735, %v4034
      %v4113 = vadd.f32 %v3736, %v4039
      %v4114 = vadd.f32 %v3737, %v4042
      %v4115 = vadd.f32 %v3738, %v4047
      %v4116 = vadd.f32 %v3739, %v4050
      %v4117 = vadd.f32 %v3740, %v4055
      %v4118 = vadd.f32 %v3741, %v4058
      %v4119 = vadd.f32 %v3742, %v4063
      %v4120 = vadd.f32 %v3743, %v4066
      %v4121 = vadd.f32 %v3744, %v4071
      %v4122 = vadd.f32 %v3745, %v4074
      %v4123 = vadd.f32 %v3746, %v4079
      %v4124 = vadd.f32 %v3747, %v4082
      %v4125 = vld [vmem:[#allocation2 + $0x3f] sm:$0xff]
      %v4126 = vld [vmem:[#allocation2 + $0x47] sm:$0xff]
      %v4127 = vld [vmem:[#allocation2 + $0x4f] sm:$0xff]
      %v4128 = vld [vmem:[#allocation2 + $0x57] sm:$0xff]
      %v4129 = vld [vmem:[#allocation2 + $0x5f] sm:$0xff]
      %v4130 = vld [vmem:[#allocation2 + $0x67] sm:$0xff]
      %v4131 = vld [vmem:[#allocation2 + $0x6f] sm:$0xff]
      %v4132 = vld [vmem:[#allocation2 + $0x77] sm:$0xff]
      %v4133 = vld [vmem:[#allocation2 + $0x7f] sm:$0xff]
      %v4134 = vld [vmem:[#allocation2 + $0x87] sm:$0xff]
      %v4135 = vld [vmem:[#allocation2 + $0x8f] sm:$0xff]
      %v4136 = vld [vmem:[#allocation2 + $0x97] sm:$0xff]
      %v4137 = vld [vmem:[#allocation2 + $0x9f] sm:$0xff]
      %v4138 = vld [vmem:[#allocation2 + $0xa7] sm:$0xff]
      %v4139 = vld [vmem:[#allocation2 + $0xaf] sm:$0xff]
      %v4140 = vld [vmem:[#allocation2 + $0xb7] sm:$0xff]
      %v4141 = vld [vmem:[#allocation2 + $0xbf] sm:$0xff]
      %v4142 = vld [vmem:[#allocation2 + $0xc7] sm:$0xff]
      %v4143 = vld [vmem:[#allocation2 + $0xcf] sm:$0xff]
      %v4144 = vld [vmem:[#allocation2 + $0xd7] sm:$0xff]
      %v4145 = vld [vmem:[#allocation2 + $0xdf] sm:$0xff]
      %v4146 = vld [vmem:[#allocation2 + $0xe7] sm:$0xff]
      %v4147 = vld [vmem:[#allocation2 + $0xef] sm:$0xff]
      %v4148 = vld [vmem:[#allocation2 + $0xf7] sm:$0xff]
      %v4149 = vld [vmem:[#allocation2 + $0xff] sm:$0xff]
      %v4150 = vld [vmem:[#allocation2 + $0x107] sm:$0xff]
      %v4151 = vld [vmem:[#allocation2 + $0x10f] sm:$0xff]
      %v4152 = vld [vmem:[#allocation2 + $0x117] sm:$0xff]
      %v4153 = vld [vmem:[#allocation2 + $0x11f] sm:$0xff]
      %v4154 = vld [vmem:[#allocation2 + $0x127] sm:$0xff]
      %v4155 = vld [vmem:[#allocation2 + $0x12f] sm:$0xff]
      %v4156 = vld [vmem:[#allocation2 + $0x137] sm:$0xff]
      %v4157 = vld [vmem:[#allocation2 + $0x13f] sm:$0xff]
      %v4158 = vld [vmem:[#allocation2 + $0x147] sm:$0xff]
      %v4159 = vld [vmem:[#allocation2 + $0x14f] sm:$0xff]
      %v4160 = vld [vmem:[#allocation2 + $0x157] sm:$0xff]
      %v4161 = vld [vmem:[#allocation2 + $0x15f] sm:$0xff]
      %v4162 = vld [vmem:[#allocation2 + $0x167] sm:$0xff]
      %v4163 = vld [vmem:[#allocation2 + $0x16f] sm:$0xff]
      %v4164 = vld [vmem:[#allocation2 + $0x177] sm:$0xf]
      %v4165 = vpack.c.bf16 %v4126, %v4125
      %v4166 = vpack.c.bf16 %v4128, %v4127
      %v4167 = vpack.c.bf16 %v4130, %v4129
      %v4168 = vpack.c.bf16 %v4132, %v4131
      %v4169 = vpack.c.bf16 %v4134, %v4133
      %v4170 = vpack.c.bf16 %v4136, %v4135
      %v4171 = vpack.c.bf16 %v4138, %v4137
      %v4172 = vpack.c.bf16 %v4140, %v4139
      %v4173 = vpack.c.bf16 %v4142, %v4141
      %v4174 = vpack.c.bf16 %v4144, %v4143
      %v4175 = vpack.c.bf16 %v4146, %v4145
      %v4176 = vpack.c.bf16 %v4148, %v4147
      %v4177 = vpack.c.bf16 %v4150, %v4149
      %v4178 = vpack.c.bf16 %v4152, %v4151
      %v4179 = vpack.c.bf16 %v4154, %v4153
      %v4180 = vpack.c.bf16 %v4156, %v4155
      %v4181 = vpack.c.bf16 %v4158, %v4157
      %v4182 = vpack.c.bf16 %v4160, %v4159
      %v4183 = vpack.c.bf16 %v4162, %v4161
      %v4184 = vpack.c.bf16 %v4164, %v4163
      %s4185 = scalar_lea.vmem %s3, 160
      %v4186 = vld [vmem:[%s4185] sm:$0xf]
      %v4187 = vld [vmem:[%s4185 + $0x4] sm:$0xf]
      %v4188 = vld [vmem:[%s4185 + $0x8] sm:$0xf]
      %v4189 = vld [vmem:[%s4185 + $0xc] sm:$0xf]
      %v4190 = vld [vmem:[%s4185 + $0x10] sm:$0xf]
      %v4196 = vunpack.c.l.b16 %v4186
      %v4197 = vunpack.c.l.b16 %v4187
      %v4198 = vunpack.c.l.b16 %v4188
      %v4199 = vunpack.c.l.b16 %v4189
      %v4200 = vunpack.c.l.b16 %v4190
      %v4201 = vpack.c.b16 %v4197, %v4196
      %v4202 = vpack.c.b16 %v4199, %v4198
      %v4203 = vpack.c.b16 %v4200, %v4200
      %v4207 = vsel %vm1334, %v4165, 0
      %v4210 = vsel %vm1334, %v4166, 0
      %v4213 = vsel %vm1334, %v4167, 0
      %v4216 = vsel %vm1334, %v4168, 0
      %v4219 = vsel %vm1334, %v4169, 0
      %v4222 = vsel %vm1334, %v4170, 0
      %v4225 = vsel %vm1334, %v4171, 0
      %v4228 = vsel %vm1334, %v4172, 0
      %v4231 = vsel %vm1334, %v4173, 0
      %v4234 = vsel %vm1334, %v4174, 0
      %v4237 = vsel %vm1334, %v4175, 0
      %v4240 = vsel %vm1334, %v4176, 0
      %v4243 = vsel %vm1334, %v4177, 0
      %v4246 = vsel %vm1334, %v4178, 0
      %v4249 = vsel %vm1334, %v4179, 0
      %v4252 = vsel %vm1334, %v4180, 0
      %v4255 = vsel %vm1334, %v4181, 0
      %v4258 = vsel %vm1334, %v4182, 0
      %v4261 = vsel %vm1334, %v4183, 0
      %v4264 = vsel %vm1334, %v4184, 0
      %v4267 = vsel %vm1395, %v4203, 0
      %4269 = vmatprep.subr.bf16.mxu0 0
      %4270 = vmatpush1.bf16.msra.mxu0 %v4201
      %4271 = vmatprep.subr.bf16.mxu0 0
      %4272 = vmatpush1.bf16.msra.mxu0 %v4202
      %4273 = vmatprep.subr.bf16.mxu0 0
      %4274 = vmatpush1.bf16.msra.mxu0 %v4267
      %4275 = vmatprep.subr.bf16.mxu0 0
      %4276 = vmatpush1.bf16.msra.mxu0 0
      %4277 = vmatprep.subr.bf16.mxu0 0
      %4278 = vmatpush1.bf16.msra.mxu0 0
      %4279 = vmatprep.subr.bf16.mxu0 0
      %4280 = vmatpush1.bf16.msra.mxu0 0
      %4281 = vmatprep.subr.bf16.mxu0 0
      %4282 = vmatpush1.bf16.msra.mxu0 0
      %4283 = vmatprep.subr.bf16.mxu0 0
      %4284 = vmatpush1.bf16.msra.mxu0 0
      %4285 = vmatprep.subr.bf16.mxu0 0
      %4286 = vmatpush1.bf16.msra.mxu0 0
      %4287 = vmatprep.subr.bf16.mxu0 0
      %4288 = vmatpush1.bf16.msra.mxu0 0
      %4289 = vmatprep.subr.bf16.mxu0 0
      %4290 = vmatpush1.bf16.msra.mxu0 0
      %4291 = vmatprep.subr.bf16.mxu0 0
      %4292 = vmatpush1.bf16.msra.mxu0 0
      %4293 = vmatprep.subr.bf16.mxu0 0
      %4294 = vmatpush1.bf16.msra.mxu0 0
      %4295 = vmatprep.subr.bf16.mxu0 0
      %4296 = vmatpush1.bf16.msra.mxu0 0
      %4297 = vmatprep.subr.bf16.mxu0 0
      %4298 = vmatpush1.bf16.msra.mxu0 0
      %4299 = vmatprep.subr.bf16.mxu0 0
      %4300 = vmatpush1.bf16.msra.mxu0 0
      %4301 = vmatprep.mubr.bf16.mxu0 0
      %4302 = vmatmul.mubr.bf16.gmra.mrb[0].mxu0 %v4207
      %v4303 = vpop.f32.mrb[0].mxu0
      %v4304 = vadd.f32 0.0, %v4303
      %v4305 = vpop.f32.mrb[0].mxu0
      %v4306 = vpop.f32.mrb[0].mxu0
      %v4307 = vadd.f32 0.0, %v4306
      %v4308 = vpop.f32.mrb[0].mxu0
      %4309 = vmatprep.mubr.bf16.mxu0 0
      %4310 = vmatmul.mubr.bf16.gmra.mrb[0].mxu0 %v4210
      %v4311 = vpop.f32.mrb[0].mxu0
      %v4312 = vadd.f32 0.0, %v4311
      %v4313 = vpop.f32.mrb[0].mxu0
      %v4314 = vpop.f32.mrb[0].mxu0
      %v4315 = vadd.f32 0.0, %v4314
      %v4316 = vpop.f32.mrb[0].mxu0
      %4317 = vmatprep.mubr.bf16.mxu0 0
      %4318 = vmatmul.mubr.bf16.gmra.mrb[0].mxu0 %v4213
      %v4319 = vpop.f32.mrb[0].mxu0
      %v4320 = vadd.f32 0.0, %v4319
      %v4321 = vpop.f32.mrb[0].mxu0
      %v4322 = vpop.f32.mrb[0].mxu0
      %v4323 = vadd.f32 0.0, %v4322
      %v4324 = vpop.f32.mrb[0].mxu0
      %4325 = vmatprep.mubr.bf16.mxu0 0
      %4326 = vmatmul.mubr.bf16.gmra.mrb[0].mxu0 %v4216
      %v4327 = vpop.f32.mrb[0].mxu0
      %v4328 = vadd.f32 0.0, %v4327
      %v4329 = vpop.f32.mrb[0].mxu0
      %v4330 = vpop.f32.mrb[0].mxu0
      %v4331 = vadd.f32 0.0, %v4330
      %v4332 = vpop.f32.mrb[0].mxu0
      %4333 = vmatprep.mubr.bf16.mxu0 0
      %4334 = vmatmul.mubr.bf16.gmra.mrb[0].mxu0 %v4219
      %v4335 = vpop.f32.mrb[0].mxu0
      %v4336 = vadd.f32 0.0, %v4335
      %v4337 = vpop.f32.mrb[0].mxu0
      %v4338 = vpop.f32.mrb[0].mxu0
      %v4339 = vadd.f32 0.0, %v4338
      %v4340 = vpop.f32.mrb[0].mxu0
      %4341 = vmatprep.mubr.bf16.mxu0 0
      %4342 = vmatmul.mubr.bf16.gmra.mrb[0].mxu0 %v4222
      %v4343 = vpop.f32.mrb[0].mxu0
      %v4344 = vadd.f32 0.0, %v4343
      %v4345 = vpop.f32.mrb[0].mxu0
      %v4346 = vpop.f32.mrb[0].mxu0
      %v4347 = vadd.f32 0.0, %v4346
      %v4348 = vpop.f32.mrb[0].mxu0
      %4349 = vmatprep.mubr.bf16.mxu0 0
      %4350 = vmatmul.mubr.bf16.gmra.mrb[0].mxu0 %v4225
      %v4351 = vpop.f32.mrb[0].mxu0
      %v4352 = vadd.f32 0.0, %v4351
      %v4353 = vpop.f32.mrb[0].mxu0
      %v4354 = vpop.f32.mrb[0].mxu0
      %v4355 = vadd.f32 0.0, %v4354
      %v4356 = vpop.f32.mrb[0].mxu0
      %4357 = vmatprep.mubr.bf16.mxu0 0
      %4358 = vmatmul.mubr.bf16.gmra.mrb[0].mxu0 %v4228
      %v4359 = vpop.f32.mrb[0].mxu0
      %v4360 = vadd.f32 0.0, %v4359
      %v4361 = vpop.f32.mrb[0].mxu0
      %v4362 = vpop.f32.mrb[0].mxu0
      %v4363 = vadd.f32 0.0, %v4362
      %v4364 = vpop.f32.mrb[0].mxu0
      %4365 = vmatprep.mubr.bf16.mxu0 0
      %4366 = vmatmul.mubr.bf16.gmra.mrb[0].mxu0 %v4231
      %v4367 = vpop.f32.mrb[0].mxu0
      %v4368 = vadd.f32 0.0, %v4367
      %v4369 = vpop.f32.mrb[0].mxu0
      %v4370 = vpop.f32.mrb[0].mxu0
      %v4371 = vadd.f32 0.0, %v4370
      %v4372 = vpop.f32.mrb[0].mxu0
      %4373 = vmatprep.mubr.bf16.mxu0 0
      %4374 = vmatmul.mubr.bf16.gmra.mrb[0].mxu0 %v4234
      %v4375 = vpop.f32.mrb[0].mxu0
      %v4376 = vadd.f32 0.0, %v4375
      %v4377 = vpop.f32.mrb[0].mxu0
      %v4378 = vpop.f32.mrb[0].mxu0
      %v4379 = vadd.f32 0.0, %v4378
      %v4380 = vpop.f32.mrb[0].mxu0
      %4381 = vmatprep.mubr.bf16.mxu0 0
      %4382 = vmatmul.mubr.bf16.gmra.mrb[0].mxu0 %v4237
      %v4383 = vpop.f32.mrb[0].mxu0
      %v4384 = vadd.f32 0.0, %v4383
      %v4385 = vpop.f32.mrb[0].mxu0
      %v4386 = vpop.f32.mrb[0].mxu0
      %v4387 = vadd.f32 0.0, %v4386
      %v4388 = vpop.f32.mrb[0].mxu0
      %4389 = vmatprep.mubr.bf16.mxu0 0
      %4390 = vmatmul.mubr.bf16.gmra.mrb[0].mxu0 %v4240
      %v4391 = vpop.f32.mrb[0].mxu0
      %v4392 = vadd.f32 0.0, %v4391
      %v4393 = vpop.f32.mrb[0].mxu0
      %v4394 = vpop.f32.mrb[0].mxu0
      %v4395 = vadd.f32 0.0, %v4394
      %v4396 = vpop.f32.mrb[0].mxu0
      %4397 = vmatprep.mubr.bf16.mxu0 0
      %4398 = vmatmul.mubr.bf16.gmra.mrb[0].mxu0 %v4243
      %v4399 = vpop.f32.mrb[0].mxu0
      %v4400 = vadd.f32 0.0, %v4399
      %v4401 = vpop.f32.mrb[0].mxu0
      %v4402 = vpop.f32.mrb[0].mxu0
      %v4403 = vadd.f32 0.0, %v4402
      %v4404 = vpop.f32.mrb[0].mxu0
      %4405 = vmatprep.mubr.bf16.mxu0 0
      %4406 = vmatmul.mubr.bf16.gmra.mrb[0].mxu0 %v4246
      %v4407 = vpop.f32.mrb[0].mxu0
      %v4408 = vadd.f32 0.0, %v4407
      %v4409 = vpop.f32.mrb[0].mxu0
      %v4410 = vpop.f32.mrb[0].mxu0
      %v4411 = vadd.f32 0.0, %v4410
      %v4412 = vpop.f32.mrb[0].mxu0
      %4413 = vmatprep.mubr.bf16.mxu0 0
      %4414 = vmatmul.mubr.bf16.gmra.mrb[0].mxu0 %v4249
      %v4415 = vpop.f32.mrb[0].mxu0
      %v4416 = vadd.f32 0.0, %v4415
      %v4417 = vpop.f32.mrb[0].mxu0
      %v4418 = vpop.f32.mrb[0].mxu0
      %v4419 = vadd.f32 0.0, %v4418
      %v4420 = vpop.f32.mrb[0].mxu0
      %4421 = vmatprep.mubr.bf16.mxu0 0
      %4422 = vmatmul.mubr.bf16.gmra.mrb[0].mxu0 %v4252
      %v4423 = vpop.f32.mrb[0].mxu0
      %v4424 = vadd.f32 0.0, %v4423
      %v4425 = vpop.f32.mrb[0].mxu0
      %v4426 = vpop.f32.mrb[0].mxu0
      %v4427 = vadd.f32 0.0, %v4426
      %v4428 = vpop.f32.mrb[0].mxu0
      %4429 = vmatprep.mubr.bf16.mxu0 0
      %4430 = vmatmul.mubr.bf16.gmra.mrb[0].mxu0 %v4255
      %v4431 = vpop.f32.mrb[0].mxu0
      %v4432 = vadd.f32 0.0, %v4431
      %v4433 = vpop.f32.mrb[0].mxu0
      %v4434 = vpop.f32.mrb[0].mxu0
      %v4435 = vadd.f32 0.0, %v4434
      %v4436 = vpop.f32.mrb[0].mxu0
      %4437 = vmatprep.mubr.bf16.mxu0 0
      %4438 = vmatmul.mubr.bf16.gmra.mrb[0].mxu0 %v4258
      %v4439 = vpop.f32.mrb[0].mxu0
      %v4440 = vadd.f32 0.0, %v4439
      %v4441 = vpop.f32.mrb[0].mxu0
      %v4442 = vpop.f32.mrb[0].mxu0
      %v4443 = vadd.f32 0.0, %v4442
      %v4444 = vpop.f32.mrb[0].mxu0
      %4445 = vmatprep.mubr.bf16.mxu0 0
      %4446 = vmatmul.mubr.bf16.gmra.mrb[0].mxu0 %v4261
      %v4447 = vpop.f32.mrb[0].mxu0
      %v4448 = vadd.f32 0.0, %v4447
      %v4449 = vpop.f32.mrb[0].mxu0
      %v4450 = vpop.f32.mrb[0].mxu0
      %v4451 = vadd.f32 0.0, %v4450
      %v4452 = vpop.f32.mrb[0].mxu0
      %4453 = vmatprep.mubr.bf16.mxu0 0
      %4454 = vmatmul.mubr.bf16.gmra.mrb[0].mxu0 %v4264
      %v4455 = vpop.f32.mrb[0].mxu0
      %v4456 = vadd.f32 0.0, %v4455
      %v4457 = vpop.f32.mrb[0].mxu0
      %v4458 = vpop.f32.mrb[0].mxu0
      %v4459 = vadd.f32 0.0, %v4458
      %v4460 = vpop.f32.mrb[0].mxu0
      %4461 = vdwg.mxu0
      %v4462 = vadd.f32 %v4085, %v4304
      %v4463 = vadd.f32 %v4086, %v4307
      %v4464 = vadd.f32 %v4087, %v4312
      %v4465 = vadd.f32 %v4088, %v4315
      %v4466 = vadd.f32 %v4089, %v4320
      %v4467 = vadd.f32 %v4090, %v4323
      %v4468 = vadd.f32 %v4091, %v4328
      %v4469 = vadd.f32 %v4092, %v4331
      %v4470 = vadd.f32 %v4093, %v4336
      %v4471 = vadd.f32 %v4094, %v4339
      %v4472 = vadd.f32 %v4095, %v4344
      %v4473 = vadd.f32 %v4096, %v4347
      %v4474 = vadd.f32 %v4097, %v4352
      %v4475 = vadd.f32 %v4098, %v4355
      %v4476 = vadd.f32 %v4099, %v4360
      %v4477 = vadd.f32 %v4100, %v4363
      %v4478 = vadd.f32 %v4101, %v4368
      %v4479 = vadd.f32 %v4102, %v4371
      %v4480 = vadd.f32 %v4103, %v4376
      %v4481 = vadd.f32 %v4104, %v4379
      %v4482 = vadd.f32 %v4105, %v4384
      %v4483 = vadd.f32 %v4106, %v4387
      %v4484 = vadd.f32 %v4107, %v4392
      %v4485 = vadd.f32 %v4108, %v4395
      %v4486 = vadd.f32 %v4109, %v4400
      %v4487 = vadd.f32 %v4110, %v4403
      %v4488 = vadd.f32 %v4111, %v4408
      %v4489 = vadd.f32 %v4112, %v4411
      %v4490 = vadd.f32 %v4113, %v4416
      %v4491 = vadd.f32 %v4114, %v4419
      %v4492 = vadd.f32 %v4115, %v4424
      %v4493 = vadd.f32 %v4116, %v4427
      %v4494 = vadd.f32 %v4117, %v4432
      %v4495 = vadd.f32 %v4118, %v4435
      %v4496 = vadd.f32 %v4119, %v4440
      %v4497 = vadd.f32 %v4120, %v4443
      %v4498 = vadd.f32 %v4121, %v4448
      %v4499 = vadd.f32 %v4122, %v4451
      %v4500 = vadd.f32 %v4123, %v4456
      %v4501 = vadd.f32 %v4124, %v4459
      %v4502 = vld [vmem:[%s6] sm:$0x1]
      %v4504 = vlaneseq
      %v4505 = vshrl.u32 %v4504, 7
      %v4506 = vsub.s32 0, %v4505
      %v4507 = vrot.slane %v4502, %v4506
      %v4509 = vadd.f32 %v4462, %v4507
      %v4510 = vadd.f32 %v4463, %v4507
      %v4511 = vadd.f32 %v4464, %v4507
      %v4512 = vadd.f32 %v4465, %v4507
      %v4513 = vadd.f32 %v4466, %v4507
      %v4514 = vadd.f32 %v4467, %v4507
      %v4515 = vadd.f32 %v4468, %v4507
      %v4516 = vadd.f32 %v4469, %v4507
      %v4517 = vadd.f32 %v4470, %v4507
      %v4518 = vadd.f32 %v4471, %v4507
      %v4519 = vadd.f32 %v4472, %v4507
      %v4520 = vadd.f32 %v4473, %v4507
      %v4521 = vadd.f32 %v4474, %v4507
      %v4522 = vadd.f32 %v4475, %v4507
      %v4523 = vadd.f32 %v4476, %v4507
      %v4524 = vadd.f32 %v4477, %v4507
      %v4525 = vadd.f32 %v4478, %v4507
      %v4526 = vadd.f32 %v4479, %v4507
      %v4527 = vadd.f32 %v4480, %v4507
      %v4528 = vadd.f32 %v4481, %v4507
      %v4529 = vadd.f32 %v4482, %v4507
      %v4530 = vadd.f32 %v4483, %v4507
      %v4531 = vadd.f32 %v4484, %v4507
      %v4532 = vadd.f32 %v4485, %v4507
      %v4533 = vadd.f32 %v4486, %v4507
      %v4534 = vadd.f32 %v4487, %v4507
      %v4535 = vadd.f32 %v4488, %v4507
      %v4536 = vadd.f32 %v4489, %v4507
      %v4537 = vadd.f32 %v4490, %v4507
      %v4538 = vadd.f32 %v4491, %v4507
      %v4539 = vadd.f32 %v4492, %v4507
      %v4540 = vadd.f32 %v4493, %v4507
      %v4541 = vadd.f32 %v4494, %v4507
      %v4542 = vadd.f32 %v4495, %v4507
      %v4543 = vadd.f32 %v4496, %v4507
      %v4544 = vadd.f32 %v4497, %v4507
      %v4545 = vadd.f32 %v4498, %v4507
      %v4546 = vadd.f32 %v4499, %v4507
      %v4547 = vadd.f32 %v4500, %v4507
      %v4548 = vadd.f32 %v4501, %v4507
      %v4549 = vtanh.pop %v4509
      %v4550 = vtanh.pop %v4510
      %v4551 = vtanh.pop %v4511
      %v4552 = vtanh.pop %v4512
      %v4553 = vtanh.pop %v4513
      %v4554 = vtanh.pop %v4514
      %v4555 = vtanh.pop %v4515
      %v4556 = vtanh.pop %v4516
      %v4557 = vtanh.pop %v4517
      %v4558 = vtanh.pop %v4518
      %v4559 = vtanh.pop %v4519
      %v4560 = vtanh.pop %v4520
      %v4561 = vtanh.pop %v4521
      %v4562 = vtanh.pop %v4522
      %v4563 = vtanh.pop %v4523
      %v4564 = vtanh.pop %v4524
      %v4565 = vtanh.pop %v4525
      %v4566 = vtanh.pop %v4526
      %v4567 = vtanh.pop %v4527
      %v4568 = vtanh.pop %v4528
      %v4569 = vtanh.pop %v4529
      %v4570 = vtanh.pop %v4530
      %v4571 = vtanh.pop %v4531
      %v4572 = vtanh.pop %v4532
      %v4573 = vtanh.pop %v4533
      %v4574 = vtanh.pop %v4534
      %v4575 = vtanh.pop %v4535
      %v4576 = vtanh.pop %v4536
      %v4577 = vtanh.pop %v4537
      %v4578 = vtanh.pop %v4538
      %v4579 = vtanh.pop %v4539
      %v4580 = vtanh.pop %v4540
      %v4581 = vtanh.pop %v4541
      %v4582 = vtanh.pop %v4542
      %v4583 = vtanh.pop %v4543
      %v4584 = vtanh.pop %v4544
      %v4585 = vtanh.pop %v4545
      %v4586 = vtanh.pop %v4546
      %v4587 = vtanh.pop %v4547
      %v4588 = vtanh.pop %v4548
      %v4589 = vmul.f32 %v4549, %v911
      %v4590 = vmul.f32 %v4550, %v916
      %v4591 = vmul.f32 %v4551, %v921
      %v4592 = vmul.f32 %v4552, %v926
      %v4593 = vmul.f32 %v4553, %v931
      %v4594 = vmul.f32 %v4554, %v936
      %v4595 = vmul.f32 %v4555, %v941
      %v4596 = vmul.f32 %v4556, %v946
      %v4597 = vmul.f32 %v4557, %v951
      %v4598 = vmul.f32 %v4558, %v956
      %v4599 = vmul.f32 %v4559, %v961
      %v4600 = vmul.f32 %v4560, %v966
      %v4601 = vmul.f32 %v4561, %v971
      %v4602 = vmul.f32 %v4562, %v976
      %v4603 = vmul.f32 %v4563, %v981
      %v4604 = vmul.f32 %v4564, %v986
      %v4605 = vmul.f32 %v4565, %v991
      %v4606 = vmul.f32 %v4566, %v996
      %v4607 = vmul.f32 %v4567, %v1001
      %v4608 = vmul.f32 %v4568, %v1006
      %v4609 = vmul.f32 %v4569, %v1011
      %v4610 = vmul.f32 %v4570, %v1016
      %v4611 = vmul.f32 %v4571, %v1021
      %v4612 = vmul.f32 %v4572, %v1026
      %v4613 = vmul.f32 %v4573, %v1031
      %v4614 = vmul.f32 %v4574, %v1036
      %v4615 = vmul.f32 %v4575, %v1041
      %v4616 = vmul.f32 %v4576, %v1046
      %v4617 = vmul.f32 %v4577, %v1051
      %v4618 = vmul.f32 %v4578, %v1056
      %v4619 = vmul.f32 %v4579, %v1061
      %v4620 = vmul.f32 %v4580, %v1066
      %v4621 = vmul.f32 %v4581, %v1071
      %v4622 = vmul.f32 %v4582, %v1076
      %v4623 = vmul.f32 %v4583, %v1081
      %v4624 = vmul.f32 %v4584, %v1086
      %v4625 = vmul.f32 %v4585, %v1091
      %v4626 = vmul.f32 %v4586, %v1096
      %v4627 = vmul.f32 %v4587, %v1101
      %v4628 = vmul.f32 %v4588, %v1106
      %4629 = vst [vmem:[#allocation3 + $0x2a] sm:$0xff] %v4589
      %4630 = vst [vmem:[#allocation3 + $0x32] sm:$0xff] %v4590
      %4631 = vst [vmem:[#allocation3 + $0x3a] sm:$0xff] %v4591
      %4632 = vst [vmem:[#allocation3 + $0x42] sm:$0xff] %v4592
      %4633 = vst [vmem:[#allocation3 + $0x4a] sm:$0xff] %v4593
      %4634 = vst [vmem:[#allocation3 + $0x52] sm:$0xff] %v4594
      %4635 = vst [vmem:[#allocation3 + $0x5a] sm:$0xff] %v4595
      %4636 = vst [vmem:[#allocation3 + $0x62] sm:$0xff] %v4596
      %4637 = vst [vmem:[#allocation3 + $0x6a] sm:$0xff] %v4597
      %4638 = vst [vmem:[#allocation3 + $0x72] sm:$0xff] %v4598
      %4639 = vst [vmem:[#allocation3 + $0x7a] sm:$0xff] %v4599
      %4640 = vst [vmem:[#allocation3 + $0x82] sm:$0xff] %v4600
      %4641 = vst [vmem:[#allocation3 + $0x8a] sm:$0xff] %v4601
      %4642 = vst [vmem:[#allocation3 + $0x92] sm:$0xff] %v4602
      %4643 = vst [vmem:[#allocation3 + $0x9a] sm:$0xff] %v4603
      %4644 = vst [vmem:[#allocation3 + $0xa2] sm:$0xff] %v4604
      %4645 = vst [vmem:[#allocation3 + $0xaa] sm:$0xff] %v4605
      %4646 = vst [vmem:[#allocation3 + $0xb2] sm:$0xff] %v4606
      %4647 = vst [vmem:[#allocation3 + $0xba] sm:$0xff] %v4607
      %4648 = vst [vmem:[#allocation3 + $0xc2] sm:$0xff] %v4608
      %4649 = vst [vmem:[#allocation3 + $0xca] sm:$0xff] %v4609
      %4650 = vst [vmem:[#allocation3 + $0xd2] sm:$0xff] %v4610
      %4651 = vst [vmem:[#allocation3 + $0xda] sm:$0xff] %v4611
      %4652 = vst [vmem:[#allocation3 + $0xe2] sm:$0xff] %v4612
      %4653 = vst [vmem:[#allocation3 + $0xea] sm:$0xff] %v4613
      %4654 = vst [vmem:[#allocation3 + $0xf2] sm:$0xff] %v4614
      %4655 = vst [vmem:[#allocation3 + $0xfa] sm:$0xff] %v4615
      %4656 = vst [vmem:[#allocation3 + $0x102] sm:$0xff] %v4616
      %4657 = vst [vmem:[#allocation3 + $0x10a] sm:$0xff] %v4617
      %4658 = vst [vmem:[#allocation3 + $0x112] sm:$0xff] %v4618
      %4659 = vst [vmem:[#allocation3 + $0x11a] sm:$0xff] %v4619
      %4660 = vst [vmem:[#allocation3 + $0x122] sm:$0xff] %v4620
      %4661 = vst [vmem:[#allocation3 + $0x12a] sm:$0xff] %v4621
      %4662 = vst [vmem:[#allocation3 + $0x132] sm:$0xff] %v4622
      %4663 = vst [vmem:[#allocation3 + $0x13a] sm:$0xff] %v4623
      %4664 = vst [vmem:[#allocation3 + $0x142] sm:$0xff] %v4624
      %4665 = vst [vmem:[#allocation3 + $0x14a] sm:$0xff] %v4625
      %4666 = vst [vmem:[#allocation3 + $0x152] sm:$0xff] %v4626
      %4667 = vst [vmem:[#allocation3 + $0x15a] sm:$0xff] %v4627
      %4668 = vst [vmem:[#allocation3 + $0x162] sm:$0xf] %v4628
      %v4669 = vld [vmem:[#allocation3 + $0x15] sm:$0xff]
      %v4670 = vld [vmem:[#allocation3 + $0x1d] sm:$0xff]
      %v4671 = vld [vmem:[#allocation3 + $0x25] sm:$0xff]
      %v4672 = vld [vmem:[#allocation3 + $0x2d] sm:$0xff]
      %v4673 = vld [vmem:[#allocation3 + $0x35] sm:$0xff]
      %v4674 = vld [vmem:[#allocation3 + $0x3d] sm:$0xff]
      %v4675 = vld [vmem:[#allocation3 + $0x45] sm:$0xff]
      %v4676 = vld [vmem:[#allocation3 + $0x4d] sm:$0xff]
      %v4677 = vld [vmem:[#allocation3 + $0x55] sm:$0xff]
      %v4678 = vld [vmem:[#allocation3 + $0x5d] sm:$0xff]
      %v4679 = vld [vmem:[#allocation3 + $0x65] sm:$0xff]
      %v4680 = vld [vmem:[#allocation3 + $0x6d] sm:$0xff]
      %v4681 = vld [vmem:[#allocation3 + $0x75] sm:$0xff]
      %v4682 = vld [vmem:[#allocation3 + $0x7d] sm:$0xff]
      %v4683 = vld [vmem:[#allocation3 + $0x85] sm:$0xff]
      %v4684 = vld [vmem:[#allocation3 + $0x8d] sm:$0xff]
      %v4685 = vld [vmem:[#allocation3 + $0x95] sm:$0xff]
      %v4686 = vld [vmem:[#allocation3 + $0x9d] sm:$0xff]
      %v4687 = vld [vmem:[#allocation3 + $0xa5] sm:$0xff]
      %v4688 = vld [vmem:[#allocation3 + $0xad] sm:$0xff]
      %v4689 = vld [vmem:[#allocation3 + $0xb5] sm:$0xff]
      %v4690 = vld [vmem:[#allocation3 + $0xbd] sm:$0xff]
      %v4691 = vld [vmem:[#allocation3 + $0xc5] sm:$0xff]
      %v4692 = vld [vmem:[#allocation3 + $0xcd] sm:$0xff]
      %v4693 = vld [vmem:[#allocation3 + $0xd5] sm:$0xff]
      %v4694 = vld [vmem:[#allocation3 + $0xdd] sm:$0xff]
      %v4695 = vld [vmem:[#allocation3 + $0xe5] sm:$0xff]
      %v4696 = vld [vmem:[#allocation3 + $0xed] sm:$0xff]
      %v4697 = vld [vmem:[#allocation3 + $0xf5] sm:$0xff]
      %v4698 = vld [vmem:[#allocation3 + $0xfd] sm:$0xff]
      %v4699 = vld [vmem:[#allocation3 + $0x105] sm:$0xff]
      %v4700 = vld [vmem:[#allocation3 + $0x10d] sm:$0xff]
      %v4701 = vld [vmem:[#allocation3 + $0x115] sm:$0xff]
      %v4702 = vld [vmem:[#allocation3 + $0x11d] sm:$0xff]
      %v4703 = vld [vmem:[#allocation3 + $0x125] sm:$0xff]
      %v4704 = vld [vmem:[#allocation3 + $0x12d] sm:$0xff]
      %v4705 = vld [vmem:[#allocation3 + $0x135] sm:$0xff]
      %v4706 = vld [vmem:[#allocation3 + $0x13d] sm:$0xff]
      %v4707 = vld [vmem:[#allocation3 + $0x145] sm:$0xff]
      %v4708 = vld [vmem:[#allocation3 + $0x14d] sm:$0xf]
      %v4709 = vpack.c.bf16 %v4670, %v4669
      %v4710 = vpack.c.bf16 %v4672, %v4671
      %v4711 = vpack.c.bf16 %v4674, %v4673
      %v4712 = vpack.c.bf16 %v4676, %v4675
      %v4713 = vpack.c.bf16 %v4678, %v4677
      %v4714 = vpack.c.bf16 %v4680, %v4679
      %v4715 = vpack.c.bf16 %v4682, %v4681
      %v4716 = vpack.c.bf16 %v4684, %v4683
      %v4717 = vpack.c.bf16 %v4686, %v4685
      %v4718 = vpack.c.bf16 %v4688, %v4687
      %v4719 = vpack.c.bf16 %v4690, %v4689
      %v4720 = vpack.c.bf16 %v4692, %v4691
      %v4721 = vpack.c.bf16 %v4694, %v4693
      %v4722 = vpack.c.bf16 %v4696, %v4695
      %v4723 = vpack.c.bf16 %v4698, %v4697
      %v4724 = vpack.c.bf16 %v4700, %v4699
      %v4725 = vpack.c.bf16 %v4702, %v4701
      %v4726 = vpack.c.bf16 %v4704, %v4703
      %v4727 = vpack.c.bf16 %v4706, %v4705
      %v4728 = vpack.c.bf16 %v4708, %v4707
      %v4729 = vld [vmem:[%s4] sm:$0xf]
      %v4730 = vld [vmem:[%s4 + $0x4] sm:$0xf]
      %v4731 = vld [vmem:[%s4 + $0x8] sm:$0xf]
      %v4732 = vld [vmem:[#allocation3 + $0x16] sm:$0xff]
      %v4733 = vld [vmem:[#allocation3 + $0x1e] sm:$0xff]
      %v4734 = vld [vmem:[#allocation3 + $0x26] sm:$0xff]
      %v4735 = vld [vmem:[#allocation3 + $0x2e] sm:$0xff]
      %v4736 = vld [vmem:[#allocation3 + $0x36] sm:$0xff]
      %v4737 = vld [vmem:[#allocation3 + $0x3e] sm:$0xff]
      %v4738 = vld [vmem:[#allocation3 + $0x46] sm:$0xff]
      %v4739 = vld [vmem:[#allocation3 + $0x4e] sm:$0xff]
      %v4740 = vld [vmem:[#allocation3 + $0x56] sm:$0xff]
      %v4741 = vld [vmem:[#allocation3 + $0x5e] sm:$0xff]
      %v4742 = vld [vmem:[#allocation3 + $0x66] sm:$0xff]
      %v4743 = vld [vmem:[#allocation3 + $0x6e] sm:$0xff]
      %v4744 = vld [vmem:[#allocation3 + $0x76] sm:$0xff]
      %v4745 = vld [vmem:[#allocation3 + $0x7e] sm:$0xff]
      %v4746 = vld [vmem:[#allocation3 + $0x86] sm:$0xff]
      %v4747 = vld [vmem:[#allocation3 + $0x8e] sm:$0xff]
      %v4748 = vld [vmem:[#allocation3 + $0x96] sm:$0xff]
      %v4749 = vld [vmem:[#allocation3 + $0x9e] sm:$0xff]
      %v4750 = vld [vmem:[#allocation3 + $0xa6] sm:$0xff]
      %v4751 = vld [vmem:[#allocation3 + $0xae] sm:$0xff]
      %v4752 = vld [vmem:[#allocation3 + $0xb6] sm:$0xff]
      %v4753 = vld [vmem:[#allocation3 + $0xbe] sm:$0xff]
      %v4754 = vld [vmem:[#allocation3 + $0xc6] sm:$0xff]
      %v4755 = vld [vmem:[#allocation3 + $0xce] sm:$0xff]
      %v4756 = vld [vmem:[#allocation3 + $0xd6] sm:$0xff]
      %v4757 = vld [vmem:[#allocation3 + $0xde] sm:$0xff]
      %v4758 = vld [vmem:[#allocation3 + $0xe6] sm:$0xff]
      %v4759 = vld [vmem:[#allocation3 + $0xee] sm:$0xff]
      %v4760 = vld [vmem:[#allocation3 + $0xf6] sm:$0xff]
      %v4761 = vld [vmem:[#allocation3 + $0xfe] sm:$0xff]
      %v4762 = vld [vmem:[#allocation3 + $0x106] sm:$0xff]
      %v4763 = vld [vmem:[#allocation3 + $0x10e] sm:$0xff]
      %v4764 = vld [vmem:[#allocation3 + $0x116] sm:$0xff]
      %v4765 = vld [vmem:[#allocation3 + $0x11e] sm:$0xff]
      %v4766 = vld [vmem:[#allocation3 + $0x126] sm:$0xff]
      %v4767 = vld [vmem:[#allocation3 + $0x12e] sm:$0xff]
      %v4768 = vld [vmem:[#allocation3 + $0x136] sm:$0xff]
      %v4769 = vld [vmem:[#allocation3 + $0x13e] sm:$0xff]
      %v4770 = vld [vmem:[#allocation3 + $0x146] sm:$0xff]
      %v4771 = vld [vmem:[#allocation3 + $0x14e] sm:$0xf]
      %v4772 = vpack.c.bf16 %v4733, %v4732
      %v4773 = vpack.c.bf16 %v4735, %v4734
      %v4774 = vpack.c.bf16 %v4737, %v4736
      %v4775 = vpack.c.bf16 %v4739, %v4738
      %v4776 = vpack.c.bf16 %v4741, %v4740
      %v4777 = vpack.c.bf16 %v4743, %v4742
      %v4778 = vpack.c.bf16 %v4745, %v4744
      %v4779 = vpack.c.bf16 %v4747, %v4746
      %v4780 = vpack.c.bf16 %v4749, %v4748
      %v4781 = vpack.c.bf16 %v4751, %v4750
      %v4782 = vpack.c.bf16 %v4753, %v4752
      %v4783 = vpack.c.bf16 %v4755, %v4754
      %v4784 = vpack.c.bf16 %v4757, %v4756
      %v4785 = vpack.c.bf16 %v4759, %v4758
      %v4786 = vpack.c.bf16 %v4761, %v4760
      %v4787 = vpack.c.bf16 %v4763, %v4762
      %v4788 = vpack.c.bf16 %v4765, %v4764
      %v4789 = vpack.c.bf16 %v4767, %v4766
      %v4790 = vpack.c.bf16 %v4769, %v4768
      %v4791 = vpack.c.bf16 %v4771, %v4770
      %s4792 = scalar_lea.vmem %s4, 12
      %v4793 = vld [vmem:[%s4792] sm:$0xf]
      %v4794 = vld [vmem:[%s4792 + $0x4] sm:$0xf]
      %v4795 = vld [vmem:[%s4792 + $0x8] sm:$0xf]
      %v4799 = vunpack.c.l.b16 %v4793
      %v4800 = vunpack.c.l.b16 %v4794
      %v4801 = vunpack.c.l.b16 %v4795
      %v4802 = vpack.c.b16 %v4800, %v4799
      %v4803 = vpack.c.b16 %v4801, %v4801
      %vm4805 = vcmask 195584
      %v4807 = vsel %vm4805, %v4772, 0
      %v4810 = vsel %vm4805, %v4773, 0
      %v4813 = vsel %vm4805, %v4774, 0
      %v4816 = vsel %vm4805, %v4775, 0
      %v4819 = vsel %vm4805, %v4776, 0
      %v4822 = vsel %vm4805, %v4777, 0
      %v4825 = vsel %vm4805, %v4778, 0
      %v4828 = vsel %vm4805, %v4779, 0
      %v4831 = vsel %vm4805, %v4780, 0
      %v4834 = vsel %vm4805, %v4781, 0
      %v4837 = vsel %vm4805, %v4782, 0
      %v4840 = vsel %vm4805, %v4783, 0
      %v4843 = vsel %vm4805, %v4784, 0
      %v4846 = vsel %vm4805, %v4785, 0
      %v4849 = vsel %vm4805, %v4786, 0
      %v4852 = vsel %vm4805, %v4787, 0
      %v4855 = vsel %vm4805, %v4788, 0
      %v4858 = vsel %vm4805, %v4789, 0
      %v4861 = vsel %vm4805, %v4790, 0
      %v4864 = vsel %vm4805, %v4791, 0
      %v4867 = vsel %vm1395, %v4803, 0
      %4869 = vmatprep.subr.bf16.mxu0 0
      %4870 = vmatpush1.bf16.msra.mxu0 %v4802
      %4871 = vmatprep.subr.bf16.mxu0 0
      %4872 = vmatpush1.bf16.msra.mxu0 %v4867
      %4873 = vmatprep.subr.bf16.mxu0 0
      %4874 = vmatpush1.bf16.msra.mxu0 0
      %4875 = vmatprep.subr.bf16.mxu0 0
      %4876 = vmatpush1.bf16.msra.mxu0 0
      %4877 = vmatprep.subr.bf16.mxu0 0
      %4878 = vmatpush1.bf16.msra.mxu0 0
      %4879 = vmatprep.subr.bf16.mxu0 0
      %4880 = vmatpush1.bf16.msra.mxu0 0
      %4881 = vmatprep.subr.bf16.mxu0 0
      %4882 = vmatpush1.bf16.msra.mxu0 0
      %4883 = vmatprep.subr.bf16.mxu0 0
      %4884 = vmatpush1.bf16.msra.mxu0 0
      %4885 = vmatprep.subr.bf16.mxu0 0
      %4886 = vmatpush1.bf16.msra.mxu0 0
      %4887 = vmatprep.subr.bf16.mxu0 0
      %4888 = vmatpush1.bf16.msra.mxu0 0
      %4889 = vmatprep.subr.bf16.mxu0 0
      %4890 = vmatpush1.bf16.msra.mxu0 0
      %4891 = vmatprep.subr.bf16.mxu0 0
      %4892 = vmatpush1.bf16.msra.mxu0 0
      %4893 = vmatprep.subr.bf16.mxu0 0
      %4894 = vmatpush1.bf16.msra.mxu0 0
      %4895 = vmatprep.subr.bf16.mxu0 0
      %4896 = vmatpush1.bf16.msra.mxu0 0
      %4897 = vmatprep.subr.bf16.mxu0 0
      %4898 = vmatpush1.bf16.msra.mxu0 0
      %4899 = vmatprep.subr.bf16.mxu0 0
      %4900 = vmatpush1.bf16.msra.mxu0 0
      %4901 = vmatprep.mubr.bf16.mxu0 0
      %4902 = vmatmul.mubr.bf16.gmra.mrb[0].mxu0 %v4807
      %v4903 = vpop.f32.mrb[0].mxu0
      %v4904 = vadd.f32 0.0, %v4903
      %v4905 = vpop.f32.mrb[0].mxu0
      %v4906 = vpop.f32.mrb[0].mxu0
      %v4907 = vadd.f32 0.0, %v4906
      %v4908 = vpop.f32.mrb[0].mxu0
      %4909 = vmatprep.mubr.bf16.mxu0 0
      %4910 = vmatmul.mubr.bf16.gmra.mrb[0].mxu0 %v4810
      %v4911 = vpop.f32.mrb[0].mxu0
      %v4912 = vadd.f32 0.0, %v4911
      %v4913 = vpop.f32.mrb[0].mxu0
      %v4914 = vpop.f32.mrb[0].mxu0
      %v4915 = vadd.f32 0.0, %v4914
      %v4916 = vpop.f32.mrb[0].mxu0
      %4917 = vmatprep.mubr.bf16.mxu0 0
      %4918 = vmatmul.mubr.bf16.gmra.mrb[0].mxu0 %v4813
      %v4919 = vpop.f32.mrb[0].mxu0
      %v4920 = vadd.f32 0.0, %v4919
      %v4921 = vpop.f32.mrb[0].mxu0
      %v4922 = vpop.f32.mrb[0].mxu0
      %v4923 = vadd.f32 0.0, %v4922
      %v4924 = vpop.f32.mrb[0].mxu0
      %4925 = vmatprep.mubr.bf16.mxu0 0
      %4926 = vmatmul.mubr.bf16.gmra.mrb[0].mxu0 %v4816
      %v4927 = vpop.f32.mrb[0].mxu0
      %v4928 = vadd.f32 0.0, %v4927
      %v4929 = vpop.f32.mrb[0].mxu0
      %v4930 = vpop.f32.mrb[0].mxu0
      %v4931 = vadd.f32 0.0, %v4930
      %v4932 = vpop.f32.mrb[0].mxu0
      %4933 = vmatprep.mubr.bf16.mxu0 0
      %4934 = vmatmul.mubr.bf16.gmra.mrb[0].mxu0 %v4819
      %v4935 = vpop.f32.mrb[0].mxu0
      %v4936 = vadd.f32 0.0, %v4935
      %v4937 = vpop.f32.mrb[0].mxu0
      %v4938 = vpop.f32.mrb[0].mxu0
      %v4939 = vadd.f32 0.0, %v4938
      %v4940 = vpop.f32.mrb[0].mxu0
      %4941 = vmatprep.mubr.bf16.mxu0 0
      %4942 = vmatmul.mubr.bf16.gmra.mrb[0].mxu0 %v4822
      %v4943 = vpop.f32.mrb[0].mxu0
      %v4944 = vadd.f32 0.0, %v4943
      %v4945 = vpop.f32.mrb[0].mxu0
      %v4946 = vpop.f32.mrb[0].mxu0
      %v4947 = vadd.f32 0.0, %v4946
      %v4948 = vpop.f32.mrb[0].mxu0
      %4949 = vmatprep.mubr.bf16.mxu0 0
      %4950 = vmatmul.mubr.bf16.gmra.mrb[0].mxu0 %v4825
      %v4951 = vpop.f32.mrb[0].mxu0
      %v4952 = vadd.f32 0.0, %v4951
      %v4953 = vpop.f32.mrb[0].mxu0
      %v4954 = vpop.f32.mrb[0].mxu0
      %v4955 = vadd.f32 0.0, %v4954
      %v4956 = vpop.f32.mrb[0].mxu0
      %4957 = vmatprep.mubr.bf16.mxu0 0
      %4958 = vmatmul.mubr.bf16.gmra.mrb[0].mxu0 %v4828
      %v4959 = vpop.f32.mrb[0].mxu0
      %v4960 = vadd.f32 0.0, %v4959
      %v4961 = vpop.f32.mrb[0].mxu0
      %v4962 = vpop.f32.mrb[0].mxu0
      %v4963 = vadd.f32 0.0, %v4962
      %v4964 = vpop.f32.mrb[0].mxu0
      %4965 = vmatprep.mubr.bf16.mxu0 0
      %4966 = vmatmul.mubr.bf16.gmra.mrb[0].mxu0 %v4831
      %v4967 = vpop.f32.mrb[0].mxu0
      %v4968 = vadd.f32 0.0, %v4967
      %v4969 = vpop.f32.mrb[0].mxu0
      %v4970 = vpop.f32.mrb[0].mxu0
      %v4971 = vadd.f32 0.0, %v4970
      %v4972 = vpop.f32.mrb[0].mxu0
      %4973 = vmatprep.mubr.bf16.mxu0 0
      %4974 = vmatmul.mubr.bf16.gmra.mrb[0].mxu0 %v4834
      %v4975 = vpop.f32.mrb[0].mxu0
      %v4976 = vadd.f32 0.0, %v4975
      %v4977 = vpop.f32.mrb[0].mxu0
      %v4978 = vpop.f32.mrb[0].mxu0
      %v4979 = vadd.f32 0.0, %v4978
      %v4980 = vpop.f32.mrb[0].mxu0
      %4981 = vmatprep.mubr.bf16.mxu0 0
      %4982 = vmatmul.mubr.bf16.gmra.mrb[0].mxu0 %v4837
      %v4983 = vpop.f32.mrb[0].mxu0
      %v4984 = vadd.f32 0.0, %v4983
      %v4985 = vpop.f32.mrb[0].mxu0
      %v4986 = vpop.f32.mrb[0].mxu0
      %v4987 = vadd.f32 0.0, %v4986
      %v4988 = vpop.f32.mrb[0].mxu0
      %4989 = vmatprep.mubr.bf16.mxu0 0
      %4990 = vmatmul.mubr.bf16.gmra.mrb[0].mxu0 %v4840
      %v4991 = vpop.f32.mrb[0].mxu0
      %v4992 = vadd.f32 0.0, %v4991
      %v4993 = vpop.f32.mrb[0].mxu0
      %v4994 = vpop.f32.mrb[0].mxu0
      %v4995 = vadd.f32 0.0, %v4994
      %v4996 = vpop.f32.mrb[0].mxu0
      %4997 = vmatprep.mubr.bf16.mxu0 0
      %4998 = vmatmul.mubr.bf16.gmra.mrb[0].mxu0 %v4843
      %v4999 = vpop.f32.mrb[0].mxu0
      %v5000 = vadd.f32 0.0, %v4999
      %v5001 = vpop.f32.mrb[0].mxu0
      %v5002 = vpop.f32.mrb[0].mxu0
      %v5003 = vadd.f32 0.0, %v5002
      %v5004 = vpop.f32.mrb[0].mxu0
      %5005 = vmatprep.mubr.bf16.mxu0 0
      %5006 = vmatmul.mubr.bf16.gmra.mrb[0].mxu0 %v4846
      %v5007 = vpop.f32.mrb[0].mxu0
      %v5008 = vadd.f32 0.0, %v5007
      %v5009 = vpop.f32.mrb[0].mxu0
      %v5010 = vpop.f32.mrb[0].mxu0
      %v5011 = vadd.f32 0.0, %v5010
      %v5012 = vpop.f32.mrb[0].mxu0
      %5013 = vmatprep.mubr.bf16.mxu0 0
      %5014 = vmatmul.mubr.bf16.gmra.mrb[0].mxu0 %v4849
      %v5015 = vpop.f32.mrb[0].mxu0
      %v5016 = vadd.f32 0.0, %v5015
      %v5017 = vpop.f32.mrb[0].mxu0
      %v5018 = vpop.f32.mrb[0].mxu0
      %v5019 = vadd.f32 0.0, %v5018
      %v5020 = vpop.f32.mrb[0].mxu0
      %5021 = vmatprep.mubr.bf16.mxu0 0
      %5022 = vmatmul.mubr.bf16.gmra.mrb[0].mxu0 %v4852
      %v5023 = vpop.f32.mrb[0].mxu0
      %v5024 = vadd.f32 0.0, %v5023
      %v5025 = vpop.f32.mrb[0].mxu0
      %v5026 = vpop.f32.mrb[0].mxu0
      %v5027 = vadd.f32 0.0, %v5026
      %v5028 = vpop.f32.mrb[0].mxu0
      %5029 = vmatprep.mubr.bf16.mxu0 0
      %5030 = vmatmul.mubr.bf16.gmra.mrb[0].mxu0 %v4855
      %v5031 = vpop.f32.mrb[0].mxu0
      %v5032 = vadd.f32 0.0, %v5031
      %v5033 = vpop.f32.mrb[0].mxu0
      %v5034 = vpop.f32.mrb[0].mxu0
      %v5035 = vadd.f32 0.0, %v5034
      %v5036 = vpop.f32.mrb[0].mxu0
      %5037 = vmatprep.mubr.bf16.mxu0 0
      %5038 = vmatmul.mubr.bf16.gmra.mrb[0].mxu0 %v4858
      %v5039 = vpop.f32.mrb[0].mxu0
      %v5040 = vadd.f32 0.0, %v5039
      %v5041 = vpop.f32.mrb[0].mxu0
      %v5042 = vpop.f32.mrb[0].mxu0
      %v5043 = vadd.f32 0.0, %v5042
      %v5044 = vpop.f32.mrb[0].mxu0
      %5045 = vmatprep.mubr.bf16.mxu0 0
      %5046 = vmatmul.mubr.bf16.gmra.mrb[0].mxu0 %v4861
      %v5047 = vpop.f32.mrb[0].mxu0
      %v5048 = vadd.f32 0.0, %v5047
      %v5049 = vpop.f32.mrb[0].mxu0
      %v5050 = vpop.f32.mrb[0].mxu0
      %v5051 = vadd.f32 0.0, %v5050
      %v5052 = vpop.f32.mrb[0].mxu0
      %5053 = vmatprep.mubr.bf16.mxu0 0
      %5054 = vmatmul.mubr.bf16.gmra.mrb[0].mxu0 %v4864
      %v5055 = vpop.f32.mrb[0].mxu0
      %v5056 = vadd.f32 0.0, %v5055
      %v5057 = vpop.f32.mrb[0].mxu0
      %v5058 = vpop.f32.mrb[0].mxu0
      %v5059 = vadd.f32 0.0, %v5058
      %v5060 = vpop.f32.mrb[0].mxu0
      %5061 = vdwg.mxu0
      %v5065 = vunpack.c.l.b16 %v4729
      %v5066 = vunpack.c.l.b16 %v4730
      %v5067 = vunpack.c.l.b16 %v4731
      %v5068 = vpack.c.b16 %v5066, %v5065
      %v5069 = vpack.c.b16 %v5067, %v5067
      %v5072 = vsel %vm4805, %v4709, 0
      %v5075 = vsel %vm4805, %v4710, 0
      %v5078 = vsel %vm4805, %v4711, 0
      %v5081 = vsel %vm4805, %v4712, 0
      %v5084 = vsel %vm4805, %v4713, 0
      %v5087 = vsel %vm4805, %v4714, 0
      %v5090 = vsel %vm4805, %v4715, 0
      %v5093 = vsel %vm4805, %v4716, 0
      %v5096 = vsel %vm4805, %v4717, 0
      %v5099 = vsel %vm4805, %v4718, 0
      %v5102 = vsel %vm4805, %v4719, 0
      %v5105 = vsel %vm4805, %v4720, 0
      %v5108 = vsel %vm4805, %v4721, 0
      %v5111 = vsel %vm4805, %v4722, 0
      %v5114 = vsel %vm4805, %v4723, 0
      %v5117 = vsel %vm4805, %v4724, 0
      %v5120 = vsel %vm4805, %v4725, 0
      %v5123 = vsel %vm4805, %v4726, 0
      %v5126 = vsel %vm4805, %v4727, 0
      %v5129 = vsel %vm4805, %v4728, 0
      %v5132 = vsel %vm1395, %v5069, 0
      %5134 = vmatprep.subr.bf16.mxu0 0
      %5135 = vmatpush1.bf16.msra.mxu0 %v5068
      %5136 = vmatprep.subr.bf16.mxu0 0
      %5137 = vmatpush1.bf16.msra.mxu0 %v5132
      %5138 = vmatprep.subr.bf16.mxu0 0
      %5139 = vmatpush1.bf16.msra.mxu0 0
      %5140 = vmatprep.subr.bf16.mxu0 0
      %5141 = vmatpush1.bf16.msra.mxu0 0
      %5142 = vmatprep.subr.bf16.mxu0 0
      %5143 = vmatpush1.bf16.msra.mxu0 0
      %5144 = vmatprep.subr.bf16.mxu0 0
      %5145 = vmatpush1.bf16.msra.mxu0 0
      %5146 = vmatprep.subr.bf16.mxu0 0
      %5147 = vmatpush1.bf16.msra.mxu0 0
      %5148 = vmatprep.subr.bf16.mxu0 0
      %5149 = vmatpush1.bf16.msra.mxu0 0
      %5150 = vmatprep.subr.bf16.mxu0 0
      %5151 = vmatpush1.bf16.msra.mxu0 0
      %5152 = vmatprep.subr.bf16.mxu0 0
      %5153 = vmatpush1.bf16.msra.mxu0 0
      %5154 = vmatprep.subr.bf16.mxu0 0
      %5155 = vmatpush1.bf16.msra.mxu0 0
      %5156 = vmatprep.subr.bf16.mxu0 0
      %5157 = vmatpush1.bf16.msra.mxu0 0
      %5158 = vmatprep.subr.bf16.mxu0 0
      %5159 = vmatpush1.bf16.msra.mxu0 0
      %5160 = vmatprep.subr.bf16.mxu0 0
      %5161 = vmatpush1.bf16.msra.mxu0 0
      %5162 = vmatprep.subr.bf16.mxu0 0
      %5163 = vmatpush1.bf16.msra.mxu0 0
      %5164 = vmatprep.subr.bf16.mxu0 0
      %5165 = vmatpush1.bf16.msra.mxu0 0
      %5166 = vmatprep.mubr.bf16.mxu0 0
      %5167 = vmatmul.mubr.bf16.gmra.mrb[0].mxu0 %v5072
      %v5168 = vpop.f32.mrb[0].mxu0
      %v5169 = vadd.f32 %v4904, %v5168
      %v5170 = vpop.f32.mrb[0].mxu0
      %v5171 = vpop.f32.mrb[0].mxu0
      %v5172 = vadd.f32 %v4907, %v5171
      %v5173 = vpop.f32.mrb[0].mxu0
      %5174 = vmatprep.mubr.bf16.mxu0 0
      %5175 = vmatmul.mubr.bf16.gmra.mrb[0].mxu0 %v5075
      %v5176 = vpop.f32.mrb[0].mxu0
      %v5177 = vadd.f32 %v4912, %v5176
      %v5178 = vpop.f32.mrb[0].mxu0
      %v5179 = vpop.f32.mrb[0].mxu0
      %v5180 = vadd.f32 %v4915, %v5179
      %v5181 = vpop.f32.mrb[0].mxu0
      %5182 = vmatprep.mubr.bf16.mxu0 0
      %5183 = vmatmul.mubr.bf16.gmra.mrb[0].mxu0 %v5078
      %v5184 = vpop.f32.mrb[0].mxu0
      %v5185 = vadd.f32 %v4920, %v5184
      %v5186 = vpop.f32.mrb[0].mxu0
      %v5187 = vpop.f32.mrb[0].mxu0
      %v5188 = vadd.f32 %v4923, %v5187
      %v5189 = vpop.f32.mrb[0].mxu0
      %5190 = vmatprep.mubr.bf16.mxu0 0
      %5191 = vmatmul.mubr.bf16.gmra.mrb[0].mxu0 %v5081
      %v5192 = vpop.f32.mrb[0].mxu0
      %v5193 = vadd.f32 %v4928, %v5192
      %v5194 = vpop.f32.mrb[0].mxu0
      %v5195 = vpop.f32.mrb[0].mxu0
      %v5196 = vadd.f32 %v4931, %v5195
      %v5197 = vpop.f32.mrb[0].mxu0
      %5198 = vmatprep.mubr.bf16.mxu0 0
      %5199 = vmatmul.mubr.bf16.gmra.mrb[0].mxu0 %v5084
      %v5200 = vpop.f32.mrb[0].mxu0
      %v5201 = vadd.f32 %v4936, %v5200
      %v5202 = vpop.f32.mrb[0].mxu0
      %v5203 = vpop.f32.mrb[0].mxu0
      %v5204 = vadd.f32 %v4939, %v5203
      %v5205 = vpop.f32.mrb[0].mxu0
      %5206 = vmatprep.mubr.bf16.mxu0 0
      %5207 = vmatmul.mubr.bf16.gmra.mrb[0].mxu0 %v5087
      %v5208 = vpop.f32.mrb[0].mxu0
      %v5209 = vadd.f32 %v4944, %v5208
      %v5210 = vpop.f32.mrb[0].mxu0
      %v5211 = vpop.f32.mrb[0].mxu0
      %v5212 = vadd.f32 %v4947, %v5211
      %v5213 = vpop.f32.mrb[0].mxu0
      %5214 = vmatprep.mubr.bf16.mxu0 0
      %5215 = vmatmul.mubr.bf16.gmra.mrb[0].mxu0 %v5090
      %v5216 = vpop.f32.mrb[0].mxu0
      %v5217 = vadd.f32 %v4952, %v5216
      %v5218 = vpop.f32.mrb[0].mxu0
      %v5219 = vpop.f32.mrb[0].mxu0
      %v5220 = vadd.f32 %v4955, %v5219
      %v5221 = vpop.f32.mrb[0].mxu0
      %5222 = vmatprep.mubr.bf16.mxu0 0
      %5223 = vmatmul.mubr.bf16.gmra.mrb[0].mxu0 %v5093
      %v5224 = vpop.f32.mrb[0].mxu0
      %v5225 = vadd.f32 %v4960, %v5224
      %v5226 = vpop.f32.mrb[0].mxu0
      %v5227 = vpop.f32.mrb[0].mxu0
      %v5228 = vadd.f32 %v4963, %v5227
      %v5229 = vpop.f32.mrb[0].mxu0
      %5230 = vmatprep.mubr.bf16.mxu0 0
      %5231 = vmatmul.mubr.bf16.gmra.mrb[0].mxu0 %v5096
      %v5232 = vpop.f32.mrb[0].mxu0
      %v5233 = vadd.f32 %v4968, %v5232
      %v5234 = vpop.f32.mrb[0].mxu0
      %v5235 = vpop.f32.mrb[0].mxu0
      %v5236 = vadd.f32 %v4971, %v5235
      %v5237 = vpop.f32.mrb[0].mxu0
      %5238 = vmatprep.mubr.bf16.mxu0 0
      %5239 = vmatmul.mubr.bf16.gmra.mrb[0].mxu0 %v5099
      %v5240 = vpop.f32.mrb[0].mxu0
      %v5241 = vadd.f32 %v4976, %v5240
      %v5242 = vpop.f32.mrb[0].mxu0
      %v5243 = vpop.f32.mrb[0].mxu0
      %v5244 = vadd.f32 %v4979, %v5243
      %v5245 = vpop.f32.mrb[0].mxu0
      %5246 = vmatprep.mubr.bf16.mxu0 0
      %5247 = vmatmul.mubr.bf16.gmra.mrb[0].mxu0 %v5102
      %v5248 = vpop.f32.mrb[0].mxu0
      %v5249 = vadd.f32 %v4984, %v5248
      %v5250 = vpop.f32.mrb[0].mxu0
      %v5251 = vpop.f32.mrb[0].mxu0
      %v5252 = vadd.f32 %v4987, %v5251
      %v5253 = vpop.f32.mrb[0].mxu0
      %5254 = vmatprep.mubr.bf16.mxu0 0
      %5255 = vmatmul.mubr.bf16.gmra.mrb[0].mxu0 %v5105
      %v5256 = vpop.f32.mrb[0].mxu0
      %v5257 = vadd.f32 %v4992, %v5256
      %v5258 = vpop.f32.mrb[0].mxu0
      %v5259 = vpop.f32.mrb[0].mxu0
      %v5260 = vadd.f32 %v4995, %v5259
      %v5261 = vpop.f32.mrb[0].mxu0
      %5262 = vmatprep.mubr.bf16.mxu0 0
      %5263 = vmatmul.mubr.bf16.gmra.mrb[0].mxu0 %v5108
      %v5264 = vpop.f32.mrb[0].mxu0
      %v5265 = vadd.f32 %v5000, %v5264
      %v5266 = vpop.f32.mrb[0].mxu0
      %v5267 = vpop.f32.mrb[0].mxu0
      %v5268 = vadd.f32 %v5003, %v5267
      %v5269 = vpop.f32.mrb[0].mxu0
      %5270 = vmatprep.mubr.bf16.mxu0 0
      %5271 = vmatmul.mubr.bf16.gmra.mrb[0].mxu0 %v5111
      %v5272 = vpop.f32.mrb[0].mxu0
      %v5273 = vadd.f32 %v5008, %v5272
      %v5274 = vpop.f32.mrb[0].mxu0
      %v5275 = vpop.f32.mrb[0].mxu0
      %v5276 = vadd.f32 %v5011, %v5275
      %v5277 = vpop.f32.mrb[0].mxu0
      %5278 = vmatprep.mubr.bf16.mxu0 0
      %5279 = vmatmul.mubr.bf16.gmra.mrb[0].mxu0 %v5114
      %v5280 = vpop.f32.mrb[0].mxu0
      %v5281 = vadd.f32 %v5016, %v5280
      %v5282 = vpop.f32.mrb[0].mxu0
      %v5283 = vpop.f32.mrb[0].mxu0
      %v5284 = vadd.f32 %v5019, %v5283
      %v5285 = vpop.f32.mrb[0].mxu0
      %5286 = vmatprep.mubr.bf16.mxu0 0
      %5287 = vmatmul.mubr.bf16.gmra.mrb[0].mxu0 %v5117
      %v5288 = vpop.f32.mrb[0].mxu0
      %v5289 = vadd.f32 %v5024, %v5288
      %v5290 = vpop.f32.mrb[0].mxu0
      %v5291 = vpop.f32.mrb[0].mxu0
      %v5292 = vadd.f32 %v5027, %v5291
      %v5293 = vpop.f32.mrb[0].mxu0
      %5294 = vmatprep.mubr.bf16.mxu0 0
      %5295 = vmatmul.mubr.bf16.gmra.mrb[0].mxu0 %v5120
      %v5296 = vpop.f32.mrb[0].mxu0
      %v5297 = vadd.f32 %v5032, %v5296
      %v5298 = vpop.f32.mrb[0].mxu0
      %v5299 = vpop.f32.mrb[0].mxu0
      %v5300 = vadd.f32 %v5035, %v5299
      %v5301 = vpop.f32.mrb[0].mxu0
      %5302 = vmatprep.mubr.bf16.mxu0 0
      %5303 = vmatmul.mubr.bf16.gmra.mrb[0].mxu0 %v5123
      %v5304 = vpop.f32.mrb[0].mxu0
      %v5305 = vadd.f32 %v5040, %v5304
      %v5306 = vpop.f32.mrb[0].mxu0
      %v5307 = vpop.f32.mrb[0].mxu0
      %v5308 = vadd.f32 %v5043, %v5307
      %v5309 = vpop.f32.mrb[0].mxu0
      %5310 = vmatprep.mubr.bf16.mxu0 0
      %5311 = vmatmul.mubr.bf16.gmra.mrb[0].mxu0 %v5126
      %v5312 = vpop.f32.mrb[0].mxu0
      %v5313 = vadd.f32 %v5048, %v5312
      %v5314 = vpop.f32.mrb[0].mxu0
      %v5315 = vpop.f32.mrb[0].mxu0
      %v5316 = vadd.f32 %v5051, %v5315
      %v5317 = vpop.f32.mrb[0].mxu0
      %5318 = vmatprep.mubr.bf16.mxu0 0
      %5319 = vmatmul.mubr.bf16.gmra.mrb[0].mxu0 %v5129
      %v5320 = vpop.f32.mrb[0].mxu0
      %v5321 = vadd.f32 %v5056, %v5320
      %v5322 = vpop.f32.mrb[0].mxu0
      %v5323 = vpop.f32.mrb[0].mxu0
      %v5324 = vadd.f32 %v5059, %v5323
      %v5325 = vpop.f32.mrb[0].mxu0
      %5326 = vdwg.mxu0
      %v5327 = vld [vmem:[#allocation3 + $0x17] sm:$0xff]
      %v5328 = vld [vmem:[#allocation3 + $0x1f] sm:$0xff]
      %v5329 = vld [vmem:[#allocation3 + $0x27] sm:$0xff]
      %v5330 = vld [vmem:[#allocation3 + $0x2f] sm:$0xff]
      %v5331 = vld [vmem:[#allocation3 + $0x37] sm:$0xff]
      %v5332 = vld [vmem:[#allocation3 + $0x3f] sm:$0xff]
      %v5333 = vld [vmem:[#allocation3 + $0x47] sm:$0xff]
      %v5334 = vld [vmem:[#allocation3 + $0x4f] sm:$0xff]
      %v5335 = vld [vmem:[#allocation3 + $0x57] sm:$0xff]
      %v5336 = vld [vmem:[#allocation3 + $0x5f] sm:$0xff]
      %v5337 = vld [vmem:[#allocation3 + $0x67] sm:$0xff]
      %v5338 = vld [vmem:[#allocation3 + $0x6f] sm:$0xff]
      %v5339 = vld [vmem:[#allocation3 + $0x77] sm:$0xff]
      %v5340 = vld [vmem:[#allocation3 + $0x7f] sm:$0xff]
      %v5341 = vld [vmem:[#allocation3 + $0x87] sm:$0xff]
      %v5342 = vld [vmem:[#allocation3 + $0x8f] sm:$0xff]
      %v5343 = vld [vmem:[#allocation3 + $0x97] sm:$0xff]
      %v5344 = vld [vmem:[#allocation3 + $0x9f] sm:$0xff]
      %v5345 = vld [vmem:[#allocation3 + $0xa7] sm:$0xff]
      %v5346 = vld [vmem:[#allocation3 + $0xaf] sm:$0xff]
      %v5347 = vld [vmem:[#allocation3 + $0xb7] sm:$0xff]
      %v5348 = vld [vmem:[#allocation3 + $0xbf] sm:$0xff]
      %v5349 = vld [vmem:[#allocation3 + $0xc7] sm:$0xff]
      %v5350 = vld [vmem:[#allocation3 + $0xcf] sm:$0xff]
      %v5351 = vld [vmem:[#allocation3 + $0xd7] sm:$0xff]
      %v5352 = vld [vmem:[#allocation3 + $0xdf] sm:$0xff]
      %v5353 = vld [vmem:[#allocation3 + $0xe7] sm:$0xff]
      %v5354 = vld [vmem:[#allocation3 + $0xef] sm:$0xff]
      %v5355 = vld [vmem:[#allocation3 + $0xf7] sm:$0xff]
      %v5356 = vld [vmem:[#allocation3 + $0xff] sm:$0xff]
      %v5357 = vld [vmem:[#allocation3 + $0x107] sm:$0xff]
      %v5358 = vld [vmem:[#allocation3 + $0x10f] sm:$0xff]
      %v5359 = vld [vmem:[#allocation3 + $0x117] sm:$0xff]
      %v5360 = vld [vmem:[#allocation3 + $0x11f] sm:$0xff]
      %v5361 = vld [vmem:[#allocation3 + $0x127] sm:$0xff]
      %v5362 = vld [vmem:[#allocation3 + $0x12f] sm:$0xff]
      %v5363 = vld [vmem:[#allocation3 + $0x137] sm:$0xff]
      %v5364 = vld [vmem:[#allocation3 + $0x13f] sm:$0xff]
      %v5365 = vld [vmem:[#allocation3 + $0x147] sm:$0xff]
      %v5366 = vld [vmem:[#allocation3 + $0x14f] sm:$0xf]
      %v5367 = vpack.c.bf16 %v5328, %v5327
      %v5368 = vpack.c.bf16 %v5330, %v5329
      %v5369 = vpack.c.bf16 %v5332, %v5331
      %v5370 = vpack.c.bf16 %v5334, %v5333
      %v5371 = vpack.c.bf16 %v5336, %v5335
      %v5372 = vpack.c.bf16 %v5338, %v5337
      %v5373 = vpack.c.bf16 %v5340, %v5339
      %v5374 = vpack.c.bf16 %v5342, %v5341
      %v5375 = vpack.c.bf16 %v5344, %v5343
      %v5376 = vpack.c.bf16 %v5346, %v5345
      %v5377 = vpack.c.bf16 %v5348, %v5347
      %v5378 = vpack.c.bf16 %v5350, %v5349
      %v5379 = vpack.c.bf16 %v5352, %v5351
      %v5380 = vpack.c.bf16 %v5354, %v5353
      %v5381 = vpack.c.bf16 %v5356, %v5355
      %v5382 = vpack.c.bf16 %v5358, %v5357
      %v5383 = vpack.c.bf16 %v5360, %v5359
      %v5384 = vpack.c.bf16 %v5362, %v5361
      %v5385 = vpack.c.bf16 %v5364, %v5363
      %v5386 = vpack.c.bf16 %v5366, %v5365
      %s5387 = scalar_lea.vmem %s4, 24
      %v5388 = vld [vmem:[%s5387] sm:$0xf]
      %v5389 = vld [vmem:[%s5387 + $0x4] sm:$0xf]
      %v5390 = vld [vmem:[%s5387 + $0x8] sm:$0xf]
      %v5394 = vunpack.c.l.b16 %v5388
      %v5395 = vunpack.c.l.b16 %v5389
      %v5396 = vunpack.c.l.b16 %v5390
      %v5397 = vpack.c.b16 %v5395, %v5394
      %v5398 = vpack.c.b16 %v5396, %v5396
      %v5401 = vsel %vm4805, %v5367, 0
      %v5404 = vsel %vm4805, %v5368, 0
      %v5407 = vsel %vm4805, %v5369, 0
      %v5410 = vsel %vm4805, %v5370, 0
      %v5413 = vsel %vm4805, %v5371, 0
      %v5416 = vsel %vm4805, %v5372, 0
      %v5419 = vsel %vm4805, %v5373, 0
      %v5422 = vsel %vm4805, %v5374, 0
      %v5425 = vsel %vm4805, %v5375, 0
      %v5428 = vsel %vm4805, %v5376, 0
      %v5431 = vsel %vm4805, %v5377, 0
      %v5434 = vsel %vm4805, %v5378, 0
      %v5437 = vsel %vm4805, %v5379, 0
      %v5440 = vsel %vm4805, %v5380, 0
      %v5443 = vsel %vm4805, %v5381, 0
      %v5446 = vsel %vm4805, %v5382, 0
      %v5449 = vsel %vm4805, %v5383, 0
      %v5452 = vsel %vm4805, %v5384, 0
      %v5455 = vsel %vm4805, %v5385, 0
      %v5458 = vsel %vm4805, %v5386, 0
      %v5461 = vsel %vm1395, %v5398, 0
      %5463 = vmatprep.subr.bf16.mxu0 0
      %5464 = vmatpush1.bf16.msra.mxu0 %v5397
      %5465 = vmatprep.subr.bf16.mxu0 0
      %5466 = vmatpush1.bf16.msra.mxu0 %v5461
      %5467 = vmatprep.subr.bf16.mxu0 0
      %5468 = vmatpush1.bf16.msra.mxu0 0
      %5469 = vmatprep.subr.bf16.mxu0 0
      %5470 = vmatpush1.bf16.msra.mxu0 0
      %5471 = vmatprep.subr.bf16.mxu0 0
      %5472 = vmatpush1.bf16.msra.mxu0 0
      %5473 = vmatprep.subr.bf16.mxu0 0
      %5474 = vmatpush1.bf16.msra.mxu0 0
      %5475 = vmatprep.subr.bf16.mxu0 0
      %5476 = vmatpush1.bf16.msra.mxu0 0
      %5477 = vmatprep.subr.bf16.mxu0 0
      %5478 = vmatpush1.bf16.msra.mxu0 0
      %5479 = vmatprep.subr.bf16.mxu0 0
      %5480 = vmatpush1.bf16.msra.mxu0 0
      %5481 = vmatprep.subr.bf16.mxu0 0
      %5482 = vmatpush1.bf16.msra.mxu0 0
      %5483 = vmatprep.subr.bf16.mxu0 0
      %5484 = vmatpush1.bf16.msra.mxu0 0
      %5485 = vmatprep.subr.bf16.mxu0 0
      %5486 = vmatpush1.bf16.msra.mxu0 0
      %5487 = vmatprep.subr.bf16.mxu0 0
      %5488 = vmatpush1.bf16.msra.mxu0 0
      %5489 = vmatprep.subr.bf16.mxu0 0
      %5490 = vmatpush1.bf16.msra.mxu0 0
      %5491 = vmatprep.subr.bf16.mxu0 0
      %5492 = vmatpush1.bf16.msra.mxu0 0
      %5493 = vmatprep.subr.bf16.mxu0 0
      %5494 = vmatpush1.bf16.msra.mxu0 0
      %5495 = vmatprep.mubr.bf16.mxu0 0
      %5496 = vmatmul.mubr.bf16.gmra.mrb[0].mxu0 %v5401
      %v5497 = vpop.f32.mrb[0].mxu0
      %v5498 = vadd.f32 0.0, %v5497
      %v5499 = vpop.f32.mrb[0].mxu0
      %v5500 = vpop.f32.mrb[0].mxu0
      %v5501 = vadd.f32 0.0, %v5500
      %v5502 = vpop.f32.mrb[0].mxu0
      %5503 = vmatprep.mubr.bf16.mxu0 0
      %5504 = vmatmul.mubr.bf16.gmra.mrb[0].mxu0 %v5404
      %v5505 = vpop.f32.mrb[0].mxu0
      %v5506 = vadd.f32 0.0, %v5505
      %v5507 = vpop.f32.mrb[0].mxu0
      %v5508 = vpop.f32.mrb[0].mxu0
      %v5509 = vadd.f32 0.0, %v5508
      %v5510 = vpop.f32.mrb[0].mxu0
      %5511 = vmatprep.mubr.bf16.mxu0 0
      %5512 = vmatmul.mubr.bf16.gmra.mrb[0].mxu0 %v5407
      %v5513 = vpop.f32.mrb[0].mxu0
      %v5514 = vadd.f32 0.0, %v5513
      %v5515 = vpop.f32.mrb[0].mxu0
      %v5516 = vpop.f32.mrb[0].mxu0
      %v5517 = vadd.f32 0.0, %v5516
      %v5518 = vpop.f32.mrb[0].mxu0
      %5519 = vmatprep.mubr.bf16.mxu0 0
      %5520 = vmatmul.mubr.bf16.gmra.mrb[0].mxu0 %v5410
      %v5521 = vpop.f32.mrb[0].mxu0
      %v5522 = vadd.f32 0.0, %v5521
      %v5523 = vpop.f32.mrb[0].mxu0
      %v5524 = vpop.f32.mrb[0].mxu0
      %v5525 = vadd.f32 0.0, %v5524
      %v5526 = vpop.f32.mrb[0].mxu0
      %5527 = vmatprep.mubr.bf16.mxu0 0
      %5528 = vmatmul.mubr.bf16.gmra.mrb[0].mxu0 %v5413
      %v5529 = vpop.f32.mrb[0].mxu0
      %v5530 = vadd.f32 0.0, %v5529
      %v5531 = vpop.f32.mrb[0].mxu0
      %v5532 = vpop.f32.mrb[0].mxu0
      %v5533 = vadd.f32 0.0, %v5532
      %v5534 = vpop.f32.mrb[0].mxu0
      %5535 = vmatprep.mubr.bf16.mxu0 0
      %5536 = vmatmul.mubr.bf16.gmra.mrb[0].mxu0 %v5416
      %v5537 = vpop.f32.mrb[0].mxu0
      %v5538 = vadd.f32 0.0, %v5537
      %v5539 = vpop.f32.mrb[0].mxu0
      %v5540 = vpop.f32.mrb[0].mxu0
      %v5541 = vadd.f32 0.0, %v5540
      %v5542 = vpop.f32.mrb[0].mxu0
      %5543 = vmatprep.mubr.bf16.mxu0 0
      %5544 = vmatmul.mubr.bf16.gmra.mrb[0].mxu0 %v5419
      %v5545 = vpop.f32.mrb[0].mxu0
      %v5546 = vadd.f32 0.0, %v5545
      %v5547 = vpop.f32.mrb[0].mxu0
      %v5548 = vpop.f32.mrb[0].mxu0
      %v5549 = vadd.f32 0.0, %v5548
      %v5550 = vpop.f32.mrb[0].mxu0
      %5551 = vmatprep.mubr.bf16.mxu0 0
      %5552 = vmatmul.mubr.bf16.gmra.mrb[0].mxu0 %v5422
      %v5553 = vpop.f32.mrb[0].mxu0
      %v5554 = vadd.f32 0.0, %v5553
      %v5555 = vpop.f32.mrb[0].mxu0
      %v5556 = vpop.f32.mrb[0].mxu0
      %v5557 = vadd.f32 0.0, %v5556
      %v5558 = vpop.f32.mrb[0].mxu0
      %5559 = vmatprep.mubr.bf16.mxu0 0
      %5560 = vmatmul.mubr.bf16.gmra.mrb[0].mxu0 %v5425
      %v5561 = vpop.f32.mrb[0].mxu0
      %v5562 = vadd.f32 0.0, %v5561
      %v5563 = vpop.f32.mrb[0].mxu0
      %v5564 = vpop.f32.mrb[0].mxu0
      %v5565 = vadd.f32 0.0, %v5564
      %v5566 = vpop.f32.mrb[0].mxu0
      %5567 = vmatprep.mubr.bf16.mxu0 0
      %5568 = vmatmul.mubr.bf16.gmra.mrb[0].mxu0 %v5428
      %v5569 = vpop.f32.mrb[0].mxu0
      %v5570 = vadd.f32 0.0, %v5569
      %v5571 = vpop.f32.mrb[0].mxu0
      %v5572 = vpop.f32.mrb[0].mxu0
      %v5573 = vadd.f32 0.0, %v5572
      %v5574 = vpop.f32.mrb[0].mxu0
      %5575 = vmatprep.mubr.bf16.mxu0 0
      %5576 = vmatmul.mubr.bf16.gmra.mrb[0].mxu0 %v5431
      %v5577 = vpop.f32.mrb[0].mxu0
      %v5578 = vadd.f32 0.0, %v5577
      %v5579 = vpop.f32.mrb[0].mxu0
      %v5580 = vpop.f32.mrb[0].mxu0
      %v5581 = vadd.f32 0.0, %v5580
      %v5582 = vpop.f32.mrb[0].mxu0
      %5583 = vmatprep.mubr.bf16.mxu0 0
      %5584 = vmatmul.mubr.bf16.gmra.mrb[0].mxu0 %v5434
      %v5585 = vpop.f32.mrb[0].mxu0
      %v5586 = vadd.f32 0.0, %v5585
      %v5587 = vpop.f32.mrb[0].mxu0
      %v5588 = vpop.f32.mrb[0].mxu0
      %v5589 = vadd.f32 0.0, %v5588
      %v5590 = vpop.f32.mrb[0].mxu0
      %5591 = vmatprep.mubr.bf16.mxu0 0
      %5592 = vmatmul.mubr.bf16.gmra.mrb[0].mxu0 %v5437
      %v5593 = vpop.f32.mrb[0].mxu0
      %v5594 = vadd.f32 0.0, %v5593
      %v5595 = vpop.f32.mrb[0].mxu0
      %v5596 = vpop.f32.mrb[0].mxu0
      %v5597 = vadd.f32 0.0, %v5596
      %v5598 = vpop.f32.mrb[0].mxu0
      %5599 = vmatprep.mubr.bf16.mxu0 0
      %5600 = vmatmul.mubr.bf16.gmra.mrb[0].mxu0 %v5440
      %v5601 = vpop.f32.mrb[0].mxu0
      %v5602 = vadd.f32 0.0, %v5601
      %v5603 = vpop.f32.mrb[0].mxu0
      %v5604 = vpop.f32.mrb[0].mxu0
      %v5605 = vadd.f32 0.0, %v5604
      %v5606 = vpop.f32.mrb[0].mxu0
      %5607 = vmatprep.mubr.bf16.mxu0 0
      %5608 = vmatmul.mubr.bf16.gmra.mrb[0].mxu0 %v5443
      %v5609 = vpop.f32.mrb[0].mxu0
      %v5610 = vadd.f32 0.0, %v5609
      %v5611 = vpop.f32.mrb[0].mxu0
      %v5612 = vpop.f32.mrb[0].mxu0
      %v5613 = vadd.f32 0.0, %v5612
      %v5614 = vpop.f32.mrb[0].mxu0
      %5615 = vmatprep.mubr.bf16.mxu0 0
      %5616 = vmatmul.mubr.bf16.gmra.mrb[0].mxu0 %v5446
      %v5617 = vpop.f32.mrb[0].mxu0
      %v5618 = vadd.f32 0.0, %v5617
      %v5619 = vpop.f32.mrb[0].mxu0
      %v5620 = vpop.f32.mrb[0].mxu0
      %v5621 = vadd.f32 0.0, %v5620
      %v5622 = vpop.f32.mrb[0].mxu0
      %5623 = vmatprep.mubr.bf16.mxu0 0
      %5624 = vmatmul.mubr.bf16.gmra.mrb[0].mxu0 %v5449
      %v5625 = vpop.f32.mrb[0].mxu0
      %v5626 = vadd.f32 0.0, %v5625
      %v5627 = vpop.f32.mrb[0].mxu0
      %v5628 = vpop.f32.mrb[0].mxu0
      %v5629 = vadd.f32 0.0, %v5628
      %v5630 = vpop.f32.mrb[0].mxu0
      %5631 = vmatprep.mubr.bf16.mxu0 0
      %5632 = vmatmul.mubr.bf16.gmra.mrb[0].mxu0 %v5452
      %v5633 = vpop.f32.mrb[0].mxu0
      %v5634 = vadd.f32 0.0, %v5633
      %v5635 = vpop.f32.mrb[0].mxu0
      %v5636 = vpop.f32.mrb[0].mxu0
      %v5637 = vadd.f32 0.0, %v5636
      %v5638 = vpop.f32.mrb[0].mxu0
      %5639 = vmatprep.mubr.bf16.mxu0 0
      %5640 = vmatmul.mubr.bf16.gmra.mrb[0].mxu0 %v5455
      %v5641 = vpop.f32.mrb[0].mxu0
      %v5642 = vadd.f32 0.0, %v5641
      %v5643 = vpop.f32.mrb[0].mxu0
      %v5644 = vpop.f32.mrb[0].mxu0
      %v5645 = vadd.f32 0.0, %v5644
      %v5646 = vpop.f32.mrb[0].mxu0
      %5647 = vmatprep.mubr.bf16.mxu0 0
      %5648 = vmatmul.mubr.bf16.gmra.mrb[0].mxu0 %v5458
      %v5649 = vpop.f32.mrb[0].mxu0
      %v5650 = vadd.f32 0.0, %v5649
      %v5651 = vpop.f32.mrb[0].mxu0
      %v5652 = vpop.f32.mrb[0].mxu0
      %v5653 = vadd.f32 0.0, %v5652
      %v5654 = vpop.f32.mrb[0].mxu0
      %5655 = vdwg.mxu0
      %v5656 = vadd.f32 %v5169, %v5498
      %v5657 = vadd.f32 %v5172, %v5501
      %v5658 = vadd.f32 %v5177, %v5506
      %v5659 = vadd.f32 %v5180, %v5509
      %v5660 = vadd.f32 %v5185, %v5514
      %v5661 = vadd.f32 %v5188, %v5517
      %v5662 = vadd.f32 %v5193, %v5522
      %v5663 = vadd.f32 %v5196, %v5525
      %v5664 = vadd.f32 %v5201, %v5530
      %v5665 = vadd.f32 %v5204, %v5533
      %v5666 = vadd.f32 %v5209, %v5538
      %v5667 = vadd.f32 %v5212, %v5541
      %v5668 = vadd.f32 %v5217, %v5546
      %v5669 = vadd.f32 %v5220, %v5549
      %v5670 = vadd.f32 %v5225, %v5554
      %v5671 = vadd.f32 %v5228, %v5557
      %v5672 = vadd.f32 %v5233, %v5562
      %v5673 = vadd.f32 %v5236, %v5565
      %v5674 = vadd.f32 %v5241, %v5570
      %v5675 = vadd.f32 %v5244, %v5573
      %v5676 = vadd.f32 %v5249, %v5578
      %v5677 = vadd.f32 %v5252, %v5581
      %v5678 = vadd.f32 %v5257, %v5586
      %v5679 = vadd.f32 %v5260, %v5589
      %v5680 = vadd.f32 %v5265, %v5594
      %v5681 = vadd.f32 %v5268, %v5597
      %v5682 = vadd.f32 %v5273, %v5602
      %v5683 = vadd.f32 %v5276, %v5605
      %v5684 = vadd.f32 %v5281, %v5610
      %v5685 = vadd.f32 %v5284, %v5613
      %v5686 = vadd.f32 %v5289, %v5618
      %v5687 = vadd.f32 %v5292, %v5621
      %v5688 = vadd.f32 %v5297, %v5626
      %v5689 = vadd.f32 %v5300, %v5629
      %v5690 = vadd.f32 %v5305, %v5634
      %v5691 = vadd.f32 %v5308, %v5637
      %v5692 = vadd.f32 %v5313, %v5642
      %v5693 = vadd.f32 %v5316, %v5645
      %v5694 = vadd.f32 %v5321, %v5650
      %v5695 = vadd.f32 %v5324, %v5653
      %v5696 = vld [vmem:[#allocation3 + $0x29] sm:$0xff]
      %v5697 = vld [vmem:[#allocation3 + $0x31] sm:$0xff]
      %v5698 = vld [vmem:[#allocation3 + $0x39] sm:$0xff]
      %v5699 = vld [vmem:[#allocation3 + $0x41] sm:$0xff]
      %v5700 = vld [vmem:[#allocation3 + $0x49] sm:$0xff]
      %v5701 = vld [vmem:[#allocation3 + $0x51] sm:$0xff]
      %v5702 = vld [vmem:[#allocation3 + $0x59] sm:$0xff]
      %v5703 = vld [vmem:[#allocation3 + $0x61] sm:$0xff]
      %v5704 = vld [vmem:[#allocation3 + $0x69] sm:$0xff]
      %v5705 = vld [vmem:[#allocation3 + $0x71] sm:$0xff]
      %v5706 = vld [vmem:[#allocation3 + $0x79] sm:$0xff]
      %v5707 = vld [vmem:[#allocation3 + $0x81] sm:$0xff]
      %v5708 = vld [vmem:[#allocation3 + $0x89] sm:$0xff]
      %v5709 = vld [vmem:[#allocation3 + $0x91] sm:$0xff]
      %v5710 = vld [vmem:[#allocation3 + $0x99] sm:$0xff]
      %v5711 = vld [vmem:[#allocation3 + $0xa1] sm:$0xff]
      %v5712 = vld [vmem:[#allocation3 + $0xa9] sm:$0xff]
      %v5713 = vld [vmem:[#allocation3 + $0xb1] sm:$0xff]
      %v5714 = vld [vmem:[#allocation3 + $0xb9] sm:$0xff]
      %v5715 = vld [vmem:[#allocation3 + $0xc1] sm:$0xff]
      %v5716 = vld [vmem:[#allocation3 + $0xc9] sm:$0xff]
      %v5717 = vld [vmem:[#allocation3 + $0xd1] sm:$0xff]
      %v5718 = vld [vmem:[#allocation3 + $0xd9] sm:$0xff]
      %v5719 = vld [vmem:[#allocation3 + $0xe1] sm:$0xff]
      %v5720 = vld [vmem:[#allocation3 + $0xe9] sm:$0xff]
      %v5721 = vld [vmem:[#allocation3 + $0xf1] sm:$0xff]
      %v5722 = vld [vmem:[#allocation3 + $0xf9] sm:$0xff]
      %v5723 = vld [vmem:[#allocation3 + $0x101] sm:$0xff]
      %v5724 = vld [vmem:[#allocation3 + $0x109] sm:$0xff]
      %v5725 = vld [vmem:[#allocation3 + $0x111] sm:$0xff]
      %v5726 = vld [vmem:[#allocation3 + $0x119] sm:$0xff]
      %v5727 = vld [vmem:[#allocation3 + $0x121] sm:$0xff]
      %v5728 = vld [vmem:[#allocation3 + $0x129] sm:$0xff]
      %v5729 = vld [vmem:[#allocation3 + $0x131] sm:$0xff]
      %v5730 = vld [vmem:[#allocation3 + $0x139] sm:$0xff]
      %v5731 = vld [vmem:[#allocation3 + $0x141] sm:$0xff]
      %v5732 = vld [vmem:[#allocation3 + $0x149] sm:$0xff]
      %v5733 = vld [vmem:[#allocation3 + $0x151] sm:$0xff]
      %v5734 = vld [vmem:[#allocation3 + $0x159] sm:$0xff]
      %v5735 = vld [vmem:[#allocation3 + $0x161] sm:$0xf]
      %v5736 = vpack.c.bf16 %v5697, %v5696
      %v5737 = vpack.c.bf16 %v5699, %v5698
      %v5738 = vpack.c.bf16 %v5701, %v5700
      %v5739 = vpack.c.bf16 %v5703, %v5702
      %v5740 = vpack.c.bf16 %v5705, %v5704
      %v5741 = vpack.c.bf16 %v5707, %v5706
      %v5742 = vpack.c.bf16 %v5709, %v5708
      %v5743 = vpack.c.bf16 %v5711, %v5710
      %v5744 = vpack.c.bf16 %v5713, %v5712
      %v5745 = vpack.c.bf16 %v5715, %v5714
      %v5746 = vpack.c.bf16 %v5717, %v5716
      %v5747 = vpack.c.bf16 %v5719, %v5718
      %v5748 = vpack.c.bf16 %v5721, %v5720
      %v5749 = vpack.c.bf16 %v5723, %v5722
      %v5750 = vpack.c.bf16 %v5725, %v5724
      %v5751 = vpack.c.bf16 %v5727, %v5726
      %v5752 = vpack.c.bf16 %v5729, %v5728
      %v5753 = vpack.c.bf16 %v5731, %v5730
      %v5754 = vpack.c.bf16 %v5733, %v5732
      %v5755 = vpack.c.bf16 %v5735, %v5734
      %s5756 = scalar_lea.vmem %s4, 36
      %v5757 = vld [vmem:[%s5756] sm:$0xf]
      %v5758 = vld [vmem:[%s5756 + $0x4] sm:$0xf]
      %v5759 = vld [vmem:[%s5756 + $0x8] sm:$0xf]
      %v5763 = vunpack.c.l.b16 %v5757
      %v5764 = vunpack.c.l.b16 %v5758
      %v5765 = vunpack.c.l.b16 %v5759
      %v5766 = vpack.c.b16 %v5764, %v5763
      %v5767 = vpack.c.b16 %v5765, %v5765
      %v5770 = vsel %vm4805, %v5736, 0
      %v5773 = vsel %vm4805, %v5737, 0
      %v5776 = vsel %vm4805, %v5738, 0
      %v5779 = vsel %vm4805, %v5739, 0
      %v5782 = vsel %vm4805, %v5740, 0
      %v5785 = vsel %vm4805, %v5741, 0
      %v5788 = vsel %vm4805, %v5742, 0
      %v5791 = vsel %vm4805, %v5743, 0
      %v5794 = vsel %vm4805, %v5744, 0
      %v5797 = vsel %vm4805, %v5745, 0
      %v5800 = vsel %vm4805, %v5746, 0
      %v5803 = vsel %vm4805, %v5747, 0
      %v5806 = vsel %vm4805, %v5748, 0
      %v5809 = vsel %vm4805, %v5749, 0
      %v5812 = vsel %vm4805, %v5750, 0
      %v5815 = vsel %vm4805, %v5751, 0
      %v5818 = vsel %vm4805, %v5752, 0
      %v5821 = vsel %vm4805, %v5753, 0
      %v5824 = vsel %vm4805, %v5754, 0
      %v5827 = vsel %vm4805, %v5755, 0
      %v5830 = vsel %vm1395, %v5767, 0
      %5832 = vmatprep.subr.bf16.mxu0 0
      %5833 = vmatpush1.bf16.msra.mxu0 %v5766
      %5834 = vmatprep.subr.bf16.mxu0 0
      %5835 = vmatpush1.bf16.msra.mxu0 %v5830
      %5836 = vmatprep.subr.bf16.mxu0 0
      %5837 = vmatpush1.bf16.msra.mxu0 0
      %5838 = vmatprep.subr.bf16.mxu0 0
      %5839 = vmatpush1.bf16.msra.mxu0 0
      %5840 = vmatprep.subr.bf16.mxu0 0
      %5841 = vmatpush1.bf16.msra.mxu0 0
      %5842 = vmatprep.subr.bf16.mxu0 0
      %5843 = vmatpush1.bf16.msra.mxu0 0
      %5844 = vmatprep.subr.bf16.mxu0 0
      %5845 = vmatpush1.bf16.msra.mxu0 0
      %5846 = vmatprep.subr.bf16.mxu0 0
      %5847 = vmatpush1.bf16.msra.mxu0 0
      %5848 = vmatprep.subr.bf16.mxu0 0
      %5849 = vmatpush1.bf16.msra.mxu0 0
      %5850 = vmatprep.subr.bf16.mxu0 0
      %5851 = vmatpush1.bf16.msra.mxu0 0
      %5852 = vmatprep.subr.bf16.mxu0 0
      %5853 = vmatpush1.bf16.msra.mxu0 0
      %5854 = vmatprep.subr.bf16.mxu0 0
      %5855 = vmatpush1.bf16.msra.mxu0 0
      %5856 = vmatprep.subr.bf16.mxu0 0
      %5857 = vmatpush1.bf16.msra.mxu0 0
      %5858 = vmatprep.subr.bf16.mxu0 0
      %5859 = vmatpush1.bf16.msra.mxu0 0
      %5860 = vmatprep.subr.bf16.mxu0 0
      %5861 = vmatpush1.bf16.msra.mxu0 0
      %5862 = vmatprep.subr.bf16.mxu0 0
      %5863 = vmatpush1.bf16.msra.mxu0 0
      %5864 = vmatprep.mubr.bf16.mxu0 0
      %5865 = vmatmul.mubr.bf16.gmra.mrb[0].mxu0 %v5770
      %v5866 = vpop.f32.mrb[0].mxu0
      %v5867 = vadd.f32 0.0, %v5866
      %v5868 = vpop.f32.mrb[0].mxu0
      %v5869 = vpop.f32.mrb[0].mxu0
      %v5870 = vadd.f32 0.0, %v5869
      %v5871 = vpop.f32.mrb[0].mxu0
      %5872 = vmatprep.mubr.bf16.mxu0 0
      %5873 = vmatmul.mubr.bf16.gmra.mrb[0].mxu0 %v5773
      %v5874 = vpop.f32.mrb[0].mxu0
      %v5875 = vadd.f32 0.0, %v5874
      %v5876 = vpop.f32.mrb[0].mxu0
      %v5877 = vpop.f32.mrb[0].mxu0
      %v5878 = vadd.f32 0.0, %v5877
      %v5879 = vpop.f32.mrb[0].mxu0
      %5880 = vmatprep.mubr.bf16.mxu0 0
      %5881 = vmatmul.mubr.bf16.gmra.mrb[0].mxu0 %v5776
      %v5882 = vpop.f32.mrb[0].mxu0
      %v5883 = vadd.f32 0.0, %v5882
      %v5884 = vpop.f32.mrb[0].mxu0
      %v5885 = vpop.f32.mrb[0].mxu0
      %v5886 = vadd.f32 0.0, %v5885
      %v5887 = vpop.f32.mrb[0].mxu0
      %5888 = vmatprep.mubr.bf16.mxu0 0
      %5889 = vmatmul.mubr.bf16.gmra.mrb[0].mxu0 %v5779
      %v5890 = vpop.f32.mrb[0].mxu0
      %v5891 = vadd.f32 0.0, %v5890
      %v5892 = vpop.f32.mrb[0].mxu0
      %v5893 = vpop.f32.mrb[0].mxu0
      %v5894 = vadd.f32 0.0, %v5893
      %v5895 = vpop.f32.mrb[0].mxu0
      %5896 = vmatprep.mubr.bf16.mxu0 0
      %5897 = vmatmul.mubr.bf16.gmra.mrb[0].mxu0 %v5782
      %v5898 = vpop.f32.mrb[0].mxu0
      %v5899 = vadd.f32 0.0, %v5898
      %v5900 = vpop.f32.mrb[0].mxu0
      %v5901 = vpop.f32.mrb[0].mxu0
      %v5902 = vadd.f32 0.0, %v5901
      %v5903 = vpop.f32.mrb[0].mxu0
      %5904 = vmatprep.mubr.bf16.mxu0 0
      %5905 = vmatmul.mubr.bf16.gmra.mrb[0].mxu0 %v5785
      %v5906 = vpop.f32.mrb[0].mxu0
      %v5907 = vadd.f32 0.0, %v5906
      %v5908 = vpop.f32.mrb[0].mxu0
      %v5909 = vpop.f32.mrb[0].mxu0
      %v5910 = vadd.f32 0.0, %v5909
      %v5911 = vpop.f32.mrb[0].mxu0
      %5912 = vmatprep.mubr.bf16.mxu0 0
      %5913 = vmatmul.mubr.bf16.gmra.mrb[0].mxu0 %v5788
      %v5914 = vpop.f32.mrb[0].mxu0
      %v5915 = vadd.f32 0.0, %v5914
      %v5916 = vpop.f32.mrb[0].mxu0
      %v5917 = vpop.f32.mrb[0].mxu0
      %v5918 = vadd.f32 0.0, %v5917
      %v5919 = vpop.f32.mrb[0].mxu0
      %5920 = vmatprep.mubr.bf16.mxu0 0
      %5921 = vmatmul.mubr.bf16.gmra.mrb[0].mxu0 %v5791
      %v5922 = vpop.f32.mrb[0].mxu0
      %v5923 = vadd.f32 0.0, %v5922
      %v5924 = vpop.f32.mrb[0].mxu0
      %v5925 = vpop.f32.mrb[0].mxu0
      %v5926 = vadd.f32 0.0, %v5925
      %v5927 = vpop.f32.mrb[0].mxu0
      %5928 = vmatprep.mubr.bf16.mxu0 0
      %5929 = vmatmul.mubr.bf16.gmra.mrb[0].mxu0 %v5794
      %v5930 = vpop.f32.mrb[0].mxu0
      %v5931 = vadd.f32 0.0, %v5930
      %v5932 = vpop.f32.mrb[0].mxu0
      %v5933 = vpop.f32.mrb[0].mxu0
      %v5934 = vadd.f32 0.0, %v5933
      %v5935 = vpop.f32.mrb[0].mxu0
      %5936 = vmatprep.mubr.bf16.mxu0 0
      %5937 = vmatmul.mubr.bf16.gmra.mrb[0].mxu0 %v5797
      %v5938 = vpop.f32.mrb[0].mxu0
      %v5939 = vadd.f32 0.0, %v5938
      %v5940 = vpop.f32.mrb[0].mxu0
      %v5941 = vpop.f32.mrb[0].mxu0
      %v5942 = vadd.f32 0.0, %v5941
      %v5943 = vpop.f32.mrb[0].mxu0
      %5944 = vmatprep.mubr.bf16.mxu0 0
      %5945 = vmatmul.mubr.bf16.gmra.mrb[0].mxu0 %v5800
      %v5946 = vpop.f32.mrb[0].mxu0
      %v5947 = vadd.f32 0.0, %v5946
      %v5948 = vpop.f32.mrb[0].mxu0
      %v5949 = vpop.f32.mrb[0].mxu0
      %v5950 = vadd.f32 0.0, %v5949
      %v5951 = vpop.f32.mrb[0].mxu0
      %5952 = vmatprep.mubr.bf16.mxu0 0
      %5953 = vmatmul.mubr.bf16.gmra.mrb[0].mxu0 %v5803
      %v5954 = vpop.f32.mrb[0].mxu0
      %v5955 = vadd.f32 0.0, %v5954
      %v5956 = vpop.f32.mrb[0].mxu0
      %v5957 = vpop.f32.mrb[0].mxu0
      %v5958 = vadd.f32 0.0, %v5957
      %v5959 = vpop.f32.mrb[0].mxu0
      %5960 = vmatprep.mubr.bf16.mxu0 0
      %5961 = vmatmul.mubr.bf16.gmra.mrb[0].mxu0 %v5806
      %v5962 = vpop.f32.mrb[0].mxu0
      %v5963 = vadd.f32 0.0, %v5962
      %v5964 = vpop.f32.mrb[0].mxu0
      %v5965 = vpop.f32.mrb[0].mxu0
      %v5966 = vadd.f32 0.0, %v5965
      %v5967 = vpop.f32.mrb[0].mxu0
      %5968 = vmatprep.mubr.bf16.mxu0 0
      %5969 = vmatmul.mubr.bf16.gmra.mrb[0].mxu0 %v5809
      %v5970 = vpop.f32.mrb[0].mxu0
      %v5971 = vadd.f32 0.0, %v5970
      %v5972 = vpop.f32.mrb[0].mxu0
      %v5973 = vpop.f32.mrb[0].mxu0
      %v5974 = vadd.f32 0.0, %v5973
      %v5975 = vpop.f32.mrb[0].mxu0
      %5976 = vmatprep.mubr.bf16.mxu0 0
      %5977 = vmatmul.mubr.bf16.gmra.mrb[0].mxu0 %v5812
      %v5978 = vpop.f32.mrb[0].mxu0
      %v5979 = vadd.f32 0.0, %v5978
      %v5980 = vpop.f32.mrb[0].mxu0
      %v5981 = vpop.f32.mrb[0].mxu0
      %v5982 = vadd.f32 0.0, %v5981
      %v5983 = vpop.f32.mrb[0].mxu0
      %5984 = vmatprep.mubr.bf16.mxu0 0
      %5985 = vmatmul.mubr.bf16.gmra.mrb[0].mxu0 %v5815
      %v5986 = vpop.f32.mrb[0].mxu0
      %v5987 = vadd.f32 0.0, %v5986
      %v5988 = vpop.f32.mrb[0].mxu0
      %v5989 = vpop.f32.mrb[0].mxu0
      %v5990 = vadd.f32 0.0, %v5989
      %v5991 = vpop.f32.mrb[0].mxu0
      %5992 = vmatprep.mubr.bf16.mxu0 0
      %5993 = vmatmul.mubr.bf16.gmra.mrb[0].mxu0 %v5818
      %v5994 = vpop.f32.mrb[0].mxu0
      %v5995 = vadd.f32 0.0, %v5994
      %v5996 = vpop.f32.mrb[0].mxu0
      %v5997 = vpop.f32.mrb[0].mxu0
      %v5998 = vadd.f32 0.0, %v5997
      %v5999 = vpop.f32.mrb[0].mxu0
      %6000 = vmatprep.mubr.bf16.mxu0 0
      %6001 = vmatmul.mubr.bf16.gmra.mrb[0].mxu0 %v5821
      %v6002 = vpop.f32.mrb[0].mxu0
      %v6003 = vadd.f32 0.0, %v6002
      %v6004 = vpop.f32.mrb[0].mxu0
      %v6005 = vpop.f32.mrb[0].mxu0
      %v6006 = vadd.f32 0.0, %v6005
      %v6007 = vpop.f32.mrb[0].mxu0
      %6008 = vmatprep.mubr.bf16.mxu0 0
      %6009 = vmatmul.mubr.bf16.gmra.mrb[0].mxu0 %v5824
      %v6010 = vpop.f32.mrb[0].mxu0
      %v6011 = vadd.f32 0.0, %v6010
      %v6012 = vpop.f32.mrb[0].mxu0
      %v6013 = vpop.f32.mrb[0].mxu0
      %v6014 = vadd.f32 0.0, %v6013
      %v6015 = vpop.f32.mrb[0].mxu0
      %6016 = vmatprep.mubr.bf16.mxu0 0
      %6017 = vmatmul.mubr.bf16.gmra.mrb[0].mxu0 %v5827
      %v6018 = vpop.f32.mrb[0].mxu0
      %v6019 = vadd.f32 0.0, %v6018
      %v6020 = vpop.f32.mrb[0].mxu0
      %v6021 = vpop.f32.mrb[0].mxu0
      %v6022 = vadd.f32 0.0, %v6021
      %v6023 = vpop.f32.mrb[0].mxu0
      %6024 = vdwg.mxu0
      %v6025 = vadd.f32 %v5656, %v5867
      %v6026 = vadd.f32 %v5657, %v5870
      %v6027 = vadd.f32 %v5658, %v5875
      %v6028 = vadd.f32 %v5659, %v5878
      %v6029 = vadd.f32 %v5660, %v5883
      %v6030 = vadd.f32 %v5661, %v5886
      %v6031 = vadd.f32 %v5662, %v5891
      %v6032 = vadd.f32 %v5663, %v5894
      %v6033 = vadd.f32 %v5664, %v5899
      %v6034 = vadd.f32 %v5665, %v5902
      %v6035 = vadd.f32 %v5666, %v5907
      %v6036 = vadd.f32 %v5667, %v5910
      %v6037 = vadd.f32 %v5668, %v5915
      %v6038 = vadd.f32 %v5669, %v5918
      %v6039 = vadd.f32 %v5670, %v5923
      %v6040 = vadd.f32 %v5671, %v5926
      %v6041 = vadd.f32 %v5672, %v5931
      %v6042 = vadd.f32 %v5673, %v5934
      %v6043 = vadd.f32 %v5674, %v5939
      %v6044 = vadd.f32 %v5675, %v5942
      %v6045 = vadd.f32 %v5676, %v5947
      %v6046 = vadd.f32 %v5677, %v5950
      %v6047 = vadd.f32 %v5678, %v5955
      %v6048 = vadd.f32 %v5679, %v5958
      %v6049 = vadd.f32 %v5680, %v5963
      %v6050 = vadd.f32 %v5681, %v5966
      %v6051 = vadd.f32 %v5682, %v5971
      %v6052 = vadd.f32 %v5683, %v5974
      %v6053 = vadd.f32 %v5684, %v5979
      %v6054 = vadd.f32 %v5685, %v5982
      %v6055 = vadd.f32 %v5686, %v5987
      %v6056 = vadd.f32 %v5687, %v5990
      %v6057 = vadd.f32 %v5688, %v5995
      %v6058 = vadd.f32 %v5689, %v5998
      %v6059 = vadd.f32 %v5690, %v6003
      %v6060 = vadd.f32 %v5691, %v6006
      %v6061 = vadd.f32 %v5692, %v6011
      %v6062 = vadd.f32 %v5693, %v6014
      %v6063 = vadd.f32 %v5694, %v6019
      %v6064 = vadd.f32 %v5695, %v6022
      %v6065 = vld [vmem:[#allocation3 + $0x2a] sm:$0xff]
      %v6066 = vld [vmem:[#allocation3 + $0x32] sm:$0xff]
      %v6067 = vld [vmem:[#allocation3 + $0x3a] sm:$0xff]
      %v6068 = vld [vmem:[#allocation3 + $0x42] sm:$0xff]
      %v6069 = vld [vmem:[#allocation3 + $0x4a] sm:$0xff]
      %v6070 = vld [vmem:[#allocation3 + $0x52] sm:$0xff]
      %v6071 = vld [vmem:[#allocation3 + $0x5a] sm:$0xff]
      %v6072 = vld [vmem:[#allocation3 + $0x62] sm:$0xff]
      %v6073 = vld [vmem:[#allocation3 + $0x6a] sm:$0xff]
      %v6074 = vld [vmem:[#allocation3 + $0x72] sm:$0xff]
      %v6075 = vld [vmem:[#allocation3 + $0x7a] sm:$0xff]
      %v6076 = vld [vmem:[#allocation3 + $0x82] sm:$0xff]
      %v6077 = vld [vmem:[#allocation3 + $0x8a] sm:$0xff]
      %v6078 = vld [vmem:[#allocation3 + $0x92] sm:$0xff]
      %v6079 = vld [vmem:[#allocation3 + $0x9a] sm:$0xff]
      %v6080 = vld [vmem:[#allocation3 + $0xa2] sm:$0xff]
      %v6081 = vld [vmem:[#allocation3 + $0xaa] sm:$0xff]
      %v6082 = vld [vmem:[#allocation3 + $0xb2] sm:$0xff]
      %v6083 = vld [vmem:[#allocation3 + $0xba] sm:$0xff]
      %v6084 = vld [vmem:[#allocation3 + $0xc2] sm:$0xff]
      %v6085 = vld [vmem:[#allocation3 + $0xca] sm:$0xff]
      %v6086 = vld [vmem:[#allocation3 + $0xd2] sm:$0xff]
      %v6087 = vld [vmem:[#allocation3 + $0xda] sm:$0xff]
      %v6088 = vld [vmem:[#allocation3 + $0xe2] sm:$0xff]
      %v6089 = vld [vmem:[#allocation3 + $0xea] sm:$0xff]
      %v6090 = vld [vmem:[#allocation3 + $0xf2] sm:$0xff]
      %v6091 = vld [vmem:[#allocation3 + $0xfa] sm:$0xff]
      %v6092 = vld [vmem:[#allocation3 + $0x102] sm:$0xff]
      %v6093 = vld [vmem:[#allocation3 + $0x10a] sm:$0xff]
      %v6094 = vld [vmem:[#allocation3 + $0x112] sm:$0xff]
      %v6095 = vld [vmem:[#allocation3 + $0x11a] sm:$0xff]
      %v6096 = vld [vmem:[#allocation3 + $0x122] sm:$0xff]
      %v6097 = vld [vmem:[#allocation3 + $0x12a] sm:$0xff]
      %v6098 = vld [vmem:[#allocation3 + $0x132] sm:$0xff]
      %v6099 = vld [vmem:[#allocation3 + $0x13a] sm:$0xff]
      %v6100 = vld [vmem:[#allocation3 + $0x142] sm:$0xff]
      %v6101 = vld [vmem:[#allocation3 + $0x14a] sm:$0xff]
      %v6102 = vld [vmem:[#allocation3 + $0x152] sm:$0xff]
      %v6103 = vld [vmem:[#allocation3 + $0x15a] sm:$0xff]
      %v6104 = vld [vmem:[#allocation3 + $0x162] sm:$0xf]
      %v6105 = vpack.c.bf16 %v6066, %v6065
      %v6106 = vpack.c.bf16 %v6068, %v6067
      %v6107 = vpack.c.bf16 %v6070, %v6069
      %v6108 = vpack.c.bf16 %v6072, %v6071
      %v6109 = vpack.c.bf16 %v6074, %v6073
      %v6110 = vpack.c.bf16 %v6076, %v6075
      %v6111 = vpack.c.bf16 %v6078, %v6077
      %v6112 = vpack.c.bf16 %v6080, %v6079
      %v6113 = vpack.c.bf16 %v6082, %v6081
      %v6114 = vpack.c.bf16 %v6084, %v6083
      %v6115 = vpack.c.bf16 %v6086, %v6085
      %v6116 = vpack.c.bf16 %v6088, %v6087
      %v6117 = vpack.c.bf16 %v6090, %v6089
      %v6118 = vpack.c.bf16 %v6092, %v6091
      %v6119 = vpack.c.bf16 %v6094, %v6093
      %v6120 = vpack.c.bf16 %v6096, %v6095
      %v6121 = vpack.c.bf16 %v6098, %v6097
      %v6122 = vpack.c.bf16 %v6100, %v6099
      %v6123 = vpack.c.bf16 %v6102, %v6101
      %v6124 = vpack.c.bf16 %v6104, %v6103
      %s6125 = scalar_lea.vmem %s4, 48
      %v6126 = vld [vmem:[%s6125] sm:$0xf]
      %v6127 = vld [vmem:[%s6125 + $0x4] sm:$0xf]
      %v6128 = vld [vmem:[%s6125 + $0x8] sm:$0xf]
      %v6132 = vunpack.c.l.b16 %v6126
      %v6133 = vunpack.c.l.b16 %v6127
      %v6134 = vunpack.c.l.b16 %v6128
      %v6135 = vpack.c.b16 %v6133, %v6132
      %v6136 = vpack.c.b16 %v6134, %v6134
      %v6139 = vsel %vm4805, %v6105, 0
      %v6142 = vsel %vm4805, %v6106, 0
      %v6145 = vsel %vm4805, %v6107, 0
      %v6148 = vsel %vm4805, %v6108, 0
      %v6151 = vsel %vm4805, %v6109, 0
      %v6154 = vsel %vm4805, %v6110, 0
      %v6157 = vsel %vm4805, %v6111, 0
      %v6160 = vsel %vm4805, %v6112, 0
      %v6163 = vsel %vm4805, %v6113, 0
      %v6166 = vsel %vm4805, %v6114, 0
      %v6169 = vsel %vm4805, %v6115, 0
      %v6172 = vsel %vm4805, %v6116, 0
      %v6175 = vsel %vm4805, %v6117, 0
      %v6178 = vsel %vm4805, %v6118, 0
      %v6181 = vsel %vm4805, %v6119, 0
      %v6184 = vsel %vm4805, %v6120, 0
      %v6187 = vsel %vm4805, %v6121, 0
      %v6190 = vsel %vm4805, %v6122, 0
      %v6193 = vsel %vm4805, %v6123, 0
      %v6196 = vsel %vm4805, %v6124, 0
      %v6199 = vsel %vm1395, %v6136, 0
      %6201 = vmatprep.subr.bf16.mxu0 0
      %6202 = vmatpush1.bf16.msra.mxu0 %v6135
      %6203 = vmatprep.subr.bf16.mxu0 0
      %6204 = vmatpush1.bf16.msra.mxu0 %v6199
      %6205 = vmatprep.subr.bf16.mxu0 0
      %6206 = vmatpush1.bf16.msra.mxu0 0
      %6207 = vmatprep.subr.bf16.mxu0 0
      %6208 = vmatpush1.bf16.msra.mxu0 0
      %6209 = vmatprep.subr.bf16.mxu0 0
      %6210 = vmatpush1.bf16.msra.mxu0 0
      %6211 = vmatprep.subr.bf16.mxu0 0
      %6212 = vmatpush1.bf16.msra.mxu0 0
      %6213 = vmatprep.subr.bf16.mxu0 0
      %6214 = vmatpush1.bf16.msra.mxu0 0
      %6215 = vmatprep.subr.bf16.mxu0 0
      %6216 = vmatpush1.bf16.msra.mxu0 0
      %6217 = vmatprep.subr.bf16.mxu0 0
      %6218 = vmatpush1.bf16.msra.mxu0 0
      %6219 = vmatprep.subr.bf16.mxu0 0
      %6220 = vmatpush1.bf16.msra.mxu0 0
      %6221 = vmatprep.subr.bf16.mxu0 0
      %6222 = vmatpush1.bf16.msra.mxu0 0
      %6223 = vmatprep.subr.bf16.mxu0 0
      %6224 = vmatpush1.bf16.msra.mxu0 0
      %6225 = vmatprep.subr.bf16.mxu0 0
      %6226 = vmatpush1.bf16.msra.mxu0 0
      %6227 = vmatprep.subr.bf16.mxu0 0
      %6228 = vmatpush1.bf16.msra.mxu0 0
      %6229 = vmatprep.subr.bf16.mxu0 0
      %6230 = vmatpush1.bf16.msra.mxu0 0
      %6231 = vmatprep.subr.bf16.mxu0 0
      %6232 = vmatpush1.bf16.msra.mxu0 0
      %6233 = vmatprep.mubr.bf16.mxu0 0
      %6234 = vmatmul.mubr.bf16.gmra.mrb[0].mxu0 %v6139
      %v6235 = vpop.f32.mrb[0].mxu0
      %v6236 = vadd.f32 0.0, %v6235
      %v6237 = vpop.f32.mrb[0].mxu0
      %v6238 = vpop.f32.mrb[0].mxu0
      %v6239 = vadd.f32 0.0, %v6238
      %v6240 = vpop.f32.mrb[0].mxu0
      %6241 = vmatprep.mubr.bf16.mxu0 0
      %6242 = vmatmul.mubr.bf16.gmra.mrb[0].mxu0 %v6142
      %v6243 = vpop.f32.mrb[0].mxu0
      %v6244 = vadd.f32 0.0, %v6243
      %v6245 = vpop.f32.mrb[0].mxu0
      %v6246 = vpop.f32.mrb[0].mxu0
      %v6247 = vadd.f32 0.0, %v6246
      %v6248 = vpop.f32.mrb[0].mxu0
      %6249 = vmatprep.mubr.bf16.mxu0 0
      %6250 = vmatmul.mubr.bf16.gmra.mrb[0].mxu0 %v6145
      %v6251 = vpop.f32.mrb[0].mxu0
      %v6252 = vadd.f32 0.0, %v6251
      %v6253 = vpop.f32.mrb[0].mxu0
      %v6254 = vpop.f32.mrb[0].mxu0
      %v6255 = vadd.f32 0.0, %v6254
      %v6256 = vpop.f32.mrb[0].mxu0
      %6257 = vmatprep.mubr.bf16.mxu0 0
      %6258 = vmatmul.mubr.bf16.gmra.mrb[0].mxu0 %v6148
      %v6259 = vpop.f32.mrb[0].mxu0
      %v6260 = vadd.f32 0.0, %v6259
      %v6261 = vpop.f32.mrb[0].mxu0
      %v6262 = vpop.f32.mrb[0].mxu0
      %v6263 = vadd.f32 0.0, %v6262
      %v6264 = vpop.f32.mrb[0].mxu0
      %6265 = vmatprep.mubr.bf16.mxu0 0
      %6266 = vmatmul.mubr.bf16.gmra.mrb[0].mxu0 %v6151
      %v6267 = vpop.f32.mrb[0].mxu0
      %v6268 = vadd.f32 0.0, %v6267
      %v6269 = vpop.f32.mrb[0].mxu0
      %v6270 = vpop.f32.mrb[0].mxu0
      %v6271 = vadd.f32 0.0, %v6270
      %v6272 = vpop.f32.mrb[0].mxu0
      %6273 = vmatprep.mubr.bf16.mxu0 0
      %6274 = vmatmul.mubr.bf16.gmra.mrb[0].mxu0 %v6154
      %v6275 = vpop.f32.mrb[0].mxu0
      %v6276 = vadd.f32 0.0, %v6275
      %v6277 = vpop.f32.mrb[0].mxu0
      %v6278 = vpop.f32.mrb[0].mxu0
      %v6279 = vadd.f32 0.0, %v6278
      %v6280 = vpop.f32.mrb[0].mxu0
      %6281 = vmatprep.mubr.bf16.mxu0 0
      %6282 = vmatmul.mubr.bf16.gmra.mrb[0].mxu0 %v6157
      %v6283 = vpop.f32.mrb[0].mxu0
      %v6284 = vadd.f32 0.0, %v6283
      %v6285 = vpop.f32.mrb[0].mxu0
      %v6286 = vpop.f32.mrb[0].mxu0
      %v6287 = vadd.f32 0.0, %v6286
      %v6288 = vpop.f32.mrb[0].mxu0
      %6289 = vmatprep.mubr.bf16.mxu0 0
      %6290 = vmatmul.mubr.bf16.gmra.mrb[0].mxu0 %v6160
      %v6291 = vpop.f32.mrb[0].mxu0
      %v6292 = vadd.f32 0.0, %v6291
      %v6293 = vpop.f32.mrb[0].mxu0
      %v6294 = vpop.f32.mrb[0].mxu0
      %v6295 = vadd.f32 0.0, %v6294
      %v6296 = vpop.f32.mrb[0].mxu0
      %6297 = vmatprep.mubr.bf16.mxu0 0
      %6298 = vmatmul.mubr.bf16.gmra.mrb[0].mxu0 %v6163
      %v6299 = vpop.f32.mrb[0].mxu0
      %v6300 = vadd.f32 0.0, %v6299
      %v6301 = vpop.f32.mrb[0].mxu0
      %v6302 = vpop.f32.mrb[0].mxu0
      %v6303 = vadd.f32 0.0, %v6302
      %v6304 = vpop.f32.mrb[0].mxu0
      %6305 = vmatprep.mubr.bf16.mxu0 0
      %6306 = vmatmul.mubr.bf16.gmra.mrb[0].mxu0 %v6166
      %v6307 = vpop.f32.mrb[0].mxu0
      %v6308 = vadd.f32 0.0, %v6307
      %v6309 = vpop.f32.mrb[0].mxu0
      %v6310 = vpop.f32.mrb[0].mxu0
      %v6311 = vadd.f32 0.0, %v6310
      %v6312 = vpop.f32.mrb[0].mxu0
      %6313 = vmatprep.mubr.bf16.mxu0 0
      %6314 = vmatmul.mubr.bf16.gmra.mrb[0].mxu0 %v6169
      %v6315 = vpop.f32.mrb[0].mxu0
      %v6316 = vadd.f32 0.0, %v6315
      %v6317 = vpop.f32.mrb[0].mxu0
      %v6318 = vpop.f32.mrb[0].mxu0
      %v6319 = vadd.f32 0.0, %v6318
      %v6320 = vpop.f32.mrb[0].mxu0
      %6321 = vmatprep.mubr.bf16.mxu0 0
      %6322 = vmatmul.mubr.bf16.gmra.mrb[0].mxu0 %v6172
      %v6323 = vpop.f32.mrb[0].mxu0
      %v6324 = vadd.f32 0.0, %v6323
      %v6325 = vpop.f32.mrb[0].mxu0
      %v6326 = vpop.f32.mrb[0].mxu0
      %v6327 = vadd.f32 0.0, %v6326
      %v6328 = vpop.f32.mrb[0].mxu0
      %6329 = vmatprep.mubr.bf16.mxu0 0
      %6330 = vmatmul.mubr.bf16.gmra.mrb[0].mxu0 %v6175
      %v6331 = vpop.f32.mrb[0].mxu0
      %v6332 = vadd.f32 0.0, %v6331
      %v6333 = vpop.f32.mrb[0].mxu0
      %v6334 = vpop.f32.mrb[0].mxu0
      %v6335 = vadd.f32 0.0, %v6334
      %v6336 = vpop.f32.mrb[0].mxu0
      %6337 = vmatprep.mubr.bf16.mxu0 0
      %6338 = vmatmul.mubr.bf16.gmra.mrb[0].mxu0 %v6178
      %v6339 = vpop.f32.mrb[0].mxu0
      %v6340 = vadd.f32 0.0, %v6339
      %v6341 = vpop.f32.mrb[0].mxu0
      %v6342 = vpop.f32.mrb[0].mxu0
      %v6343 = vadd.f32 0.0, %v6342
      %v6344 = vpop.f32.mrb[0].mxu0
      %6345 = vmatprep.mubr.bf16.mxu0 0
      %6346 = vmatmul.mubr.bf16.gmra.mrb[0].mxu0 %v6181
      %v6347 = vpop.f32.mrb[0].mxu0
      %v6348 = vadd.f32 0.0, %v6347
      %v6349 = vpop.f32.mrb[0].mxu0
      %v6350 = vpop.f32.mrb[0].mxu0
      %v6351 = vadd.f32 0.0, %v6350
      %v6352 = vpop.f32.mrb[0].mxu0
      %6353 = vmatprep.mubr.bf16.mxu0 0
      %6354 = vmatmul.mubr.bf16.gmra.mrb[0].mxu0 %v6184
      %v6355 = vpop.f32.mrb[0].mxu0
      %v6356 = vadd.f32 0.0, %v6355
      %v6357 = vpop.f32.mrb[0].mxu0
      %v6358 = vpop.f32.mrb[0].mxu0
      %v6359 = vadd.f32 0.0, %v6358
      %v6360 = vpop.f32.mrb[0].mxu0
      %6361 = vmatprep.mubr.bf16.mxu0 0
      %6362 = vmatmul.mubr.bf16.gmra.mrb[0].mxu0 %v6187
      %v6363 = vpop.f32.mrb[0].mxu0
      %v6364 = vadd.f32 0.0, %v6363
      %v6365 = vpop.f32.mrb[0].mxu0
      %v6366 = vpop.f32.mrb[0].mxu0
      %v6367 = vadd.f32 0.0, %v6366
      %v6368 = vpop.f32.mrb[0].mxu0
      %6369 = vmatprep.mubr.bf16.mxu0 0
      %6370 = vmatmul.mubr.bf16.gmra.mrb[0].mxu0 %v6190
      %v6371 = vpop.f32.mrb[0].mxu0
      %v6372 = vadd.f32 0.0, %v6371
      %v6373 = vpop.f32.mrb[0].mxu0
      %v6374 = vpop.f32.mrb[0].mxu0
      %v6375 = vadd.f32 0.0, %v6374
      %v6376 = vpop.f32.mrb[0].mxu0
      %6377 = vmatprep.mubr.bf16.mxu0 0
      %6378 = vmatmul.mubr.bf16.gmra.mrb[0].mxu0 %v6193
      %v6379 = vpop.f32.mrb[0].mxu0
      %v6380 = vadd.f32 0.0, %v6379
      %v6381 = vpop.f32.mrb[0].mxu0
      %v6382 = vpop.f32.mrb[0].mxu0
      %v6383 = vadd.f32 0.0, %v6382
      %v6384 = vpop.f32.mrb[0].mxu0
      %6385 = vmatprep.mubr.bf16.mxu0 0
      %6386 = vmatmul.mubr.bf16.gmra.mrb[0].mxu0 %v6196
      %v6387 = vpop.f32.mrb[0].mxu0
      %v6388 = vadd.f32 0.0, %v6387
      %v6389 = vpop.f32.mrb[0].mxu0
      %v6390 = vpop.f32.mrb[0].mxu0
      %v6391 = vadd.f32 0.0, %v6390
      %v6392 = vpop.f32.mrb[0].mxu0
      %6393 = vdwg.mxu0
      %v6394 = vadd.f32 %v6025, %v6236
      %v6395 = vadd.f32 %v6026, %v6239
      %v6396 = vadd.f32 %v6027, %v6244
      %v6397 = vadd.f32 %v6028, %v6247
      %v6398 = vadd.f32 %v6029, %v6252
      %v6399 = vadd.f32 %v6030, %v6255
      %v6400 = vadd.f32 %v6031, %v6260
      %v6401 = vadd.f32 %v6032, %v6263
      %v6402 = vadd.f32 %v6033, %v6268
      %v6403 = vadd.f32 %v6034, %v6271
      %v6404 = vadd.f32 %v6035, %v6276
      %v6405 = vadd.f32 %v6036, %v6279
      %v6406 = vadd.f32 %v6037, %v6284
      %v6407 = vadd.f32 %v6038, %v6287
      %v6408 = vadd.f32 %v6039, %v6292
      %v6409 = vadd.f32 %v6040, %v6295
      %v6410 = vadd.f32 %v6041, %v6300
      %v6411 = vadd.f32 %v6042, %v6303
      %v6412 = vadd.f32 %v6043, %v6308
      %v6413 = vadd.f32 %v6044, %v6311
      %v6414 = vadd.f32 %v6045, %v6316
      %v6415 = vadd.f32 %v6046, %v6319
      %v6416 = vadd.f32 %v6047, %v6324
      %v6417 = vadd.f32 %v6048, %v6327
      %v6418 = vadd.f32 %v6049, %v6332
      %v6419 = vadd.f32 %v6050, %v6335
      %v6420 = vadd.f32 %v6051, %v6340
      %v6421 = vadd.f32 %v6052, %v6343
      %v6422 = vadd.f32 %v6053, %v6348
      %v6423 = vadd.f32 %v6054, %v6351
      %v6424 = vadd.f32 %v6055, %v6356
      %v6425 = vadd.f32 %v6056, %v6359
      %v6426 = vadd.f32 %v6057, %v6364
      %v6427 = vadd.f32 %v6058, %v6367
      %v6428 = vadd.f32 %v6059, %v6372
      %v6429 = vadd.f32 %v6060, %v6375
      %v6430 = vadd.f32 %v6061, %v6380
      %v6431 = vadd.f32 %v6062, %v6383
      %v6432 = vadd.f32 %v6063, %v6388
      %v6433 = vadd.f32 %v6064, %v6391
      %v6434 = vld [vmem:[#allocation3 + $0x2b] sm:$0xff]
      %v6435 = vld [vmem:[#allocation3 + $0x33] sm:$0xff]
      %v6436 = vld [vmem:[#allocation3 + $0x3b] sm:$0xff]
      %v6437 = vld [vmem:[#allocation3 + $0x43] sm:$0xff]
      %v6438 = vld [vmem:[#allocation3 + $0x4b] sm:$0xff]
      %v6439 = vld [vmem:[#allocation3 + $0x53] sm:$0xff]
      %v6440 = vld [vmem:[#allocation3 + $0x5b] sm:$0xff]
      %v6441 = vld [vmem:[#allocation3 + $0x63] sm:$0xff]
      %v6442 = vld [vmem:[#allocation3 + $0x6b] sm:$0xff]
      %v6443 = vld [vmem:[#allocation3 + $0x73] sm:$0xff]
      %v6444 = vld [vmem:[#allocation3 + $0x7b] sm:$0xff]
      %v6445 = vld [vmem:[#allocation3 + $0x83] sm:$0xff]
      %v6446 = vld [vmem:[#allocation3 + $0x8b] sm:$0xff]
      %v6447 = vld [vmem:[#allocation3 + $0x93] sm:$0xff]
      %v6448 = vld [vmem:[#allocation3 + $0x9b] sm:$0xff]
      %v6449 = vld [vmem:[#allocation3 + $0xa3] sm:$0xff]
      %v6450 = vld [vmem:[#allocation3 + $0xab] sm:$0xff]
      %v6451 = vld [vmem:[#allocation3 + $0xb3] sm:$0xff]
      %v6452 = vld [vmem:[#allocation3 + $0xbb] sm:$0xff]
      %v6453 = vld [vmem:[#allocation3 + $0xc3] sm:$0xff]
      %v6454 = vld [vmem:[#allocation3 + $0xcb] sm:$0xff]
      %v6455 = vld [vmem:[#allocation3 + $0xd3] sm:$0xff]
      %v6456 = vld [vmem:[#allocation3 + $0xdb] sm:$0xff]
      %v6457 = vld [vmem:[#allocation3 + $0xe3] sm:$0xff]
      %v6458 = vld [vmem:[#allocation3 + $0xeb] sm:$0xff]
      %v6459 = vld [vmem:[#allocation3 + $0xf3] sm:$0xff]
      %v6460 = vld [vmem:[#allocation3 + $0xfb] sm:$0xff]
      %v6461 = vld [vmem:[#allocation3 + $0x103] sm:$0xff]
      %v6462 = vld [vmem:[#allocation3 + $0x10b] sm:$0xff]
      %v6463 = vld [vmem:[#allocation3 + $0x113] sm:$0xff]
      %v6464 = vld [vmem:[#allocation3 + $0x11b] sm:$0xff]
      %v6465 = vld [vmem:[#allocation3 + $0x123] sm:$0xff]
      %v6466 = vld [vmem:[#allocation3 + $0x12b] sm:$0xff]
      %v6467 = vld [vmem:[#allocation3 + $0x133] sm:$0xff]
      %v6468 = vld [vmem:[#allocation3 + $0x13b] sm:$0xff]
      %v6469 = vld [vmem:[#allocation3 + $0x143] sm:$0xff]
      %v6470 = vld [vmem:[#allocation3 + $0x14b] sm:$0xff]
      %v6471 = vld [vmem:[#allocation3 + $0x153] sm:$0xff]
      %v6472 = vld [vmem:[#allocation3 + $0x15b] sm:$0xff]
      %v6473 = vld [vmem:[#allocation3 + $0x163] sm:$0xf]
      %v6474 = vpack.c.bf16 %v6435, %v6434
      %v6475 = vpack.c.bf16 %v6437, %v6436
      %v6476 = vpack.c.bf16 %v6439, %v6438
      %v6477 = vpack.c.bf16 %v6441, %v6440
      %v6478 = vpack.c.bf16 %v6443, %v6442
      %v6479 = vpack.c.bf16 %v6445, %v6444
      %v6480 = vpack.c.bf16 %v6447, %v6446
      %v6481 = vpack.c.bf16 %v6449, %v6448
      %v6482 = vpack.c.bf16 %v6451, %v6450
      %v6483 = vpack.c.bf16 %v6453, %v6452
      %v6484 = vpack.c.bf16 %v6455, %v6454
      %v6485 = vpack.c.bf16 %v6457, %v6456
      %v6486 = vpack.c.bf16 %v6459, %v6458
      %v6487 = vpack.c.bf16 %v6461, %v6460
      %v6488 = vpack.c.bf16 %v6463, %v6462
      %v6489 = vpack.c.bf16 %v6465, %v6464
      %v6490 = vpack.c.bf16 %v6467, %v6466
      %v6491 = vpack.c.bf16 %v6469, %v6468
      %v6492 = vpack.c.bf16 %v6471, %v6470
      %v6493 = vpack.c.bf16 %v6473, %v6472
      %s6494 = scalar_lea.vmem %s4, 60
      %v6495 = vld [vmem:[%s6494] sm:$0xf]
      %v6496 = vld [vmem:[%s6494 + $0x4] sm:$0xf]
      %v6497 = vld [vmem:[%s6494 + $0x8] sm:$0xf]
      %v6501 = vunpack.c.l.b16 %v6495
      %v6502 = vunpack.c.l.b16 %v6496
      %v6503 = vunpack.c.l.b16 %v6497
      %v6504 = vpack.c.b16 %v6502, %v6501
      %v6505 = vpack.c.b16 %v6503, %v6503
      %v6508 = vsel %vm4805, %v6474, 0
      %v6511 = vsel %vm4805, %v6475, 0
      %v6514 = vsel %vm4805, %v6476, 0
      %v6517 = vsel %vm4805, %v6477, 0
      %v6520 = vsel %vm4805, %v6478, 0
      %v6523 = vsel %vm4805, %v6479, 0
      %v6526 = vsel %vm4805, %v6480, 0
      %v6529 = vsel %vm4805, %v6481, 0
      %v6532 = vsel %vm4805, %v6482, 0
      %v6535 = vsel %vm4805, %v6483, 0
      %v6538 = vsel %vm4805, %v6484, 0
      %v6541 = vsel %vm4805, %v6485, 0
      %v6544 = vsel %vm4805, %v6486, 0
      %v6547 = vsel %vm4805, %v6487, 0
      %v6550 = vsel %vm4805, %v6488, 0
      %v6553 = vsel %vm4805, %v6489, 0
      %v6556 = vsel %vm4805, %v6490, 0
      %v6559 = vsel %vm4805, %v6491, 0
      %v6562 = vsel %vm4805, %v6492, 0
      %v6565 = vsel %vm4805, %v6493, 0
      %v6568 = vsel %vm1395, %v6505, 0
      %6570 = vmatprep.subr.bf16.mxu0 0
      %6571 = vmatpush1.bf16.msra.mxu0 %v6504
      %6572 = vmatprep.subr.bf16.mxu0 0
      %6573 = vmatpush1.bf16.msra.mxu0 %v6568
      %6574 = vmatprep.subr.bf16.mxu0 0
      %6575 = vmatpush1.bf16.msra.mxu0 0
      %6576 = vmatprep.subr.bf16.mxu0 0
      %6577 = vmatpush1.bf16.msra.mxu0 0
      %6578 = vmatprep.subr.bf16.mxu0 0
      %6579 = vmatpush1.bf16.msra.mxu0 0
      %6580 = vmatprep.subr.bf16.mxu0 0
      %6581 = vmatpush1.bf16.msra.mxu0 0
      %6582 = vmatprep.subr.bf16.mxu0 0
      %6583 = vmatpush1.bf16.msra.mxu0 0
      %6584 = vmatprep.subr.bf16.mxu0 0
      %6585 = vmatpush1.bf16.msra.mxu0 0
      %6586 = vmatprep.subr.bf16.mxu0 0
      %6587 = vmatpush1.bf16.msra.mxu0 0
      %6588 = vmatprep.subr.bf16.mxu0 0
      %6589 = vmatpush1.bf16.msra.mxu0 0
      %6590 = vmatprep.subr.bf16.mxu0 0
      %6591 = vmatpush1.bf16.msra.mxu0 0
      %6592 = vmatprep.subr.bf16.mxu0 0
      %6593 = vmatpush1.bf16.msra.mxu0 0
      %6594 = vmatprep.subr.bf16.mxu0 0
      %6595 = vmatpush1.bf16.msra.mxu0 0
      %6596 = vmatprep.subr.bf16.mxu0 0
      %6597 = vmatpush1.bf16.msra.mxu0 0
      %6598 = vmatprep.subr.bf16.mxu0 0
      %6599 = vmatpush1.bf16.msra.mxu0 0
      %6600 = vmatprep.subr.bf16.mxu0 0
      %6601 = vmatpush1.bf16.msra.mxu0 0
      %6602 = vmatprep.mubr.bf16.mxu0 0
      %6603 = vmatmul.mubr.bf16.gmra.mrb[0].mxu0 %v6508
      %v6604 = vpop.f32.mrb[0].mxu0
      %v6605 = vadd.f32 0.0, %v6604
      %v6606 = vpop.f32.mrb[0].mxu0
      %v6607 = vpop.f32.mrb[0].mxu0
      %v6608 = vadd.f32 0.0, %v6607
      %v6609 = vpop.f32.mrb[0].mxu0
      %6610 = vmatprep.mubr.bf16.mxu0 0
      %6611 = vmatmul.mubr.bf16.gmra.mrb[0].mxu0 %v6511
      %v6612 = vpop.f32.mrb[0].mxu0
      %v6613 = vadd.f32 0.0, %v6612
      %v6614 = vpop.f32.mrb[0].mxu0
      %v6615 = vpop.f32.mrb[0].mxu0
      %v6616 = vadd.f32 0.0, %v6615
      %v6617 = vpop.f32.mrb[0].mxu0
      %6618 = vmatprep.mubr.bf16.mxu0 0
      %6619 = vmatmul.mubr.bf16.gmra.mrb[0].mxu0 %v6514
      %v6620 = vpop.f32.mrb[0].mxu0
      %v6621 = vadd.f32 0.0, %v6620
      %v6622 = vpop.f32.mrb[0].mxu0
      %v6623 = vpop.f32.mrb[0].mxu0
      %v6624 = vadd.f32 0.0, %v6623
      %v6625 = vpop.f32.mrb[0].mxu0
      %6626 = vmatprep.mubr.bf16.mxu0 0
      %6627 = vmatmul.mubr.bf16.gmra.mrb[0].mxu0 %v6517
      %v6628 = vpop.f32.mrb[0].mxu0
      %v6629 = vadd.f32 0.0, %v6628
      %v6630 = vpop.f32.mrb[0].mxu0
      %v6631 = vpop.f32.mrb[0].mxu0
      %v6632 = vadd.f32 0.0, %v6631
      %v6633 = vpop.f32.mrb[0].mxu0
      %6634 = vmatprep.mubr.bf16.mxu0 0
      %6635 = vmatmul.mubr.bf16.gmra.mrb[0].mxu0 %v6520
      %v6636 = vpop.f32.mrb[0].mxu0
      %v6637 = vadd.f32 0.0, %v6636
      %v6638 = vpop.f32.mrb[0].mxu0
      %v6639 = vpop.f32.mrb[0].mxu0
      %v6640 = vadd.f32 0.0, %v6639
      %v6641 = vpop.f32.mrb[0].mxu0
      %6642 = vmatprep.mubr.bf16.mxu0 0
      %6643 = vmatmul.mubr.bf16.gmra.mrb[0].mxu0 %v6523
      %v6644 = vpop.f32.mrb[0].mxu0
      %v6645 = vadd.f32 0.0, %v6644
      %v6646 = vpop.f32.mrb[0].mxu0
      %v6647 = vpop.f32.mrb[0].mxu0
      %v6648 = vadd.f32 0.0, %v6647
      %v6649 = vpop.f32.mrb[0].mxu0
      %6650 = vmatprep.mubr.bf16.mxu0 0
      %6651 = vmatmul.mubr.bf16.gmra.mrb[0].mxu0 %v6526
      %v6652 = vpop.f32.mrb[0].mxu0
      %v6653 = vadd.f32 0.0, %v6652
      %v6654 = vpop.f32.mrb[0].mxu0
      %v6655 = vpop.f32.mrb[0].mxu0
      %v6656 = vadd.f32 0.0, %v6655
      %v6657 = vpop.f32.mrb[0].mxu0
      %6658 = vmatprep.mubr.bf16.mxu0 0
      %6659 = vmatmul.mubr.bf16.gmra.mrb[0].mxu0 %v6529
      %v6660 = vpop.f32.mrb[0].mxu0
      %v6661 = vadd.f32 0.0, %v6660
      %v6662 = vpop.f32.mrb[0].mxu0
      %v6663 = vpop.f32.mrb[0].mxu0
      %v6664 = vadd.f32 0.0, %v6663
      %v6665 = vpop.f32.mrb[0].mxu0
      %6666 = vmatprep.mubr.bf16.mxu0 0
      %6667 = vmatmul.mubr.bf16.gmra.mrb[0].mxu0 %v6532
      %v6668 = vpop.f32.mrb[0].mxu0
      %v6669 = vadd.f32 0.0, %v6668
      %v6670 = vpop.f32.mrb[0].mxu0
      %v6671 = vpop.f32.mrb[0].mxu0
      %v6672 = vadd.f32 0.0, %v6671
      %v6673 = vpop.f32.mrb[0].mxu0
      %6674 = vmatprep.mubr.bf16.mxu0 0
      %6675 = vmatmul.mubr.bf16.gmra.mrb[0].mxu0 %v6535
      %v6676 = vpop.f32.mrb[0].mxu0
      %v6677 = vadd.f32 0.0, %v6676
      %v6678 = vpop.f32.mrb[0].mxu0
      %v6679 = vpop.f32.mrb[0].mxu0
      %v6680 = vadd.f32 0.0, %v6679
      %v6681 = vpop.f32.mrb[0].mxu0
      %6682 = vmatprep.mubr.bf16.mxu0 0
      %6683 = vmatmul.mubr.bf16.gmra.mrb[0].mxu0 %v6538
      %v6684 = vpop.f32.mrb[0].mxu0
      %v6685 = vadd.f32 0.0, %v6684
      %v6686 = vpop.f32.mrb[0].mxu0
      %v6687 = vpop.f32.mrb[0].mxu0
      %v6688 = vadd.f32 0.0, %v6687
      %v6689 = vpop.f32.mrb[0].mxu0
      %6690 = vmatprep.mubr.bf16.mxu0 0
      %6691 = vmatmul.mubr.bf16.gmra.mrb[0].mxu0 %v6541
      %v6692 = vpop.f32.mrb[0].mxu0
      %v6693 = vadd.f32 0.0, %v6692
      %v6694 = vpop.f32.mrb[0].mxu0
      %v6695 = vpop.f32.mrb[0].mxu0
      %v6696 = vadd.f32 0.0, %v6695
      %v6697 = vpop.f32.mrb[0].mxu0
      %6698 = vmatprep.mubr.bf16.mxu0 0
      %6699 = vmatmul.mubr.bf16.gmra.mrb[0].mxu0 %v6544
      %v6700 = vpop.f32.mrb[0].mxu0
      %v6701 = vadd.f32 0.0, %v6700
      %v6702 = vpop.f32.mrb[0].mxu0
      %v6703 = vpop.f32.mrb[0].mxu0
      %v6704 = vadd.f32 0.0, %v6703
      %v6705 = vpop.f32.mrb[0].mxu0
      %6706 = vmatprep.mubr.bf16.mxu0 0
      %6707 = vmatmul.mubr.bf16.gmra.mrb[0].mxu0 %v6547
      %v6708 = vpop.f32.mrb[0].mxu0
      %v6709 = vadd.f32 0.0, %v6708
      %v6710 = vpop.f32.mrb[0].mxu0
      %v6711 = vpop.f32.mrb[0].mxu0
      %v6712 = vadd.f32 0.0, %v6711
      %v6713 = vpop.f32.mrb[0].mxu0
      %6714 = vmatprep.mubr.bf16.mxu0 0
      %6715 = vmatmul.mubr.bf16.gmra.mrb[0].mxu0 %v6550
      %v6716 = vpop.f32.mrb[0].mxu0
      %v6717 = vadd.f32 0.0, %v6716
      %v6718 = vpop.f32.mrb[0].mxu0
      %v6719 = vpop.f32.mrb[0].mxu0
      %v6720 = vadd.f32 0.0, %v6719
      %v6721 = vpop.f32.mrb[0].mxu0
      %6722 = vmatprep.mubr.bf16.mxu0 0
      %6723 = vmatmul.mubr.bf16.gmra.mrb[0].mxu0 %v6553
      %v6724 = vpop.f32.mrb[0].mxu0
      %v6725 = vadd.f32 0.0, %v6724
      %v6726 = vpop.f32.mrb[0].mxu0
      %v6727 = vpop.f32.mrb[0].mxu0
      %v6728 = vadd.f32 0.0, %v6727
      %v6729 = vpop.f32.mrb[0].mxu0
      %6730 = vmatprep.mubr.bf16.mxu0 0
      %6731 = vmatmul.mubr.bf16.gmra.mrb[0].mxu0 %v6556
      %v6732 = vpop.f32.mrb[0].mxu0
      %v6733 = vadd.f32 0.0, %v6732
      %v6734 = vpop.f32.mrb[0].mxu0
      %v6735 = vpop.f32.mrb[0].mxu0
      %v6736 = vadd.f32 0.0, %v6735
      %v6737 = vpop.f32.mrb[0].mxu0
      %6738 = vmatprep.mubr.bf16.mxu0 0
      %6739 = vmatmul.mubr.bf16.gmra.mrb[0].mxu0 %v6559
      %v6740 = vpop.f32.mrb[0].mxu0
      %v6741 = vadd.f32 0.0, %v6740
      %v6742 = vpop.f32.mrb[0].mxu0
      %v6743 = vpop.f32.mrb[0].mxu0
      %v6744 = vadd.f32 0.0, %v6743
      %v6745 = vpop.f32.mrb[0].mxu0
      %6746 = vmatprep.mubr.bf16.mxu0 0
      %6747 = vmatmul.mubr.bf16.gmra.mrb[0].mxu0 %v6562
      %v6748 = vpop.f32.mrb[0].mxu0
      %v6749 = vadd.f32 0.0, %v6748
      %v6750 = vpop.f32.mrb[0].mxu0
      %v6751 = vpop.f32.mrb[0].mxu0
      %v6752 = vadd.f32 0.0, %v6751
      %v6753 = vpop.f32.mrb[0].mxu0
      %6754 = vmatprep.mubr.bf16.mxu0 0
      %6755 = vmatmul.mubr.bf16.gmra.mrb[0].mxu0 %v6565
      %v6756 = vpop.f32.mrb[0].mxu0
      %v6757 = vadd.f32 0.0, %v6756
      %v6758 = vpop.f32.mrb[0].mxu0
      %v6759 = vpop.f32.mrb[0].mxu0
      %v6760 = vadd.f32 0.0, %v6759
      %v6761 = vpop.f32.mrb[0].mxu0
      %6762 = vdwg.mxu0
      %v6763 = vadd.f32 %v6394, %v6605
      %v6764 = vadd.f32 %v6395, %v6608
      %v6765 = vadd.f32 %v6396, %v6613
      %v6766 = vadd.f32 %v6397, %v6616
      %v6767 = vadd.f32 %v6398, %v6621
      %v6768 = vadd.f32 %v6399, %v6624
      %v6769 = vadd.f32 %v6400, %v6629
      %v6770 = vadd.f32 %v6401, %v6632
      %v6771 = vadd.f32 %v6402, %v6637
      %v6772 = vadd.f32 %v6403, %v6640
      %v6773 = vadd.f32 %v6404, %v6645
      %v6774 = vadd.f32 %v6405, %v6648
      %v6775 = vadd.f32 %v6406, %v6653
      %v6776 = vadd.f32 %v6407, %v6656
      %v6777 = vadd.f32 %v6408, %v6661
      %v6778 = vadd.f32 %v6409, %v6664
      %v6779 = vadd.f32 %v6410, %v6669
      %v6780 = vadd.f32 %v6411, %v6672
      %v6781 = vadd.f32 %v6412, %v6677
      %v6782 = vadd.f32 %v6413, %v6680
      %v6783 = vadd.f32 %v6414, %v6685
      %v6784 = vadd.f32 %v6415, %v6688
      %v6785 = vadd.f32 %v6416, %v6693
      %v6786 = vadd.f32 %v6417, %v6696
      %v6787 = vadd.f32 %v6418, %v6701
      %v6788 = vadd.f32 %v6419, %v6704
      %v6789 = vadd.f32 %v6420, %v6709
      %v6790 = vadd.f32 %v6421, %v6712
      %v6791 = vadd.f32 %v6422, %v6717
      %v6792 = vadd.f32 %v6423, %v6720
      %v6793 = vadd.f32 %v6424, %v6725
      %v6794 = vadd.f32 %v6425, %v6728
      %v6795 = vadd.f32 %v6426, %v6733
      %v6796 = vadd.f32 %v6427, %v6736
      %v6797 = vadd.f32 %v6428, %v6741
      %v6798 = vadd.f32 %v6429, %v6744
      %v6799 = vadd.f32 %v6430, %v6749
      %v6800 = vadd.f32 %v6431, %v6752
      %v6801 = vadd.f32 %v6432, %v6757
      %v6802 = vadd.f32 %v6433, %v6760
      %v6803 = vld [vmem:[#allocation3 + $0x3d] sm:$0xff]
      %v6804 = vld [vmem:[#allocation3 + $0x45] sm:$0xff]
      %v6805 = vld [vmem:[#allocation3 + $0x4d] sm:$0xff]
      %v6806 = vld [vmem:[#allocation3 + $0x55] sm:$0xff]
      %v6807 = vld [vmem:[#allocation3 + $0x5d] sm:$0xff]
      %v6808 = vld [vmem:[#allocation3 + $0x65] sm:$0xff]
      %v6809 = vld [vmem:[#allocation3 + $0x6d] sm:$0xff]
      %v6810 = vld [vmem:[#allocation3 + $0x75] sm:$0xff]
      %v6811 = vld [vmem:[#allocation3 + $0x7d] sm:$0xff]
      %v6812 = vld [vmem:[#allocation3 + $0x85] sm:$0xff]
      %v6813 = vld [vmem:[#allocation3 + $0x8d] sm:$0xff]
      %v6814 = vld [vmem:[#allocation3 + $0x95] sm:$0xff]
      %v6815 = vld [vmem:[#allocation3 + $0x9d] sm:$0xff]
      %v6816 = vld [vmem:[#allocation3 + $0xa5] sm:$0xff]
      %v6817 = vld [vmem:[#allocation3 + $0xad] sm:$0xff]
      %v6818 = vld [vmem:[#allocation3 + $0xb5] sm:$0xff]
      %v6819 = vld [vmem:[#allocation3 + $0xbd] sm:$0xff]
      %v6820 = vld [vmem:[#allocation3 + $0xc5] sm:$0xff]
      %v6821 = vld [vmem:[#allocation3 + $0xcd] sm:$0xff]
      %v6822 = vld [vmem:[#allocation3 + $0xd5] sm:$0xff]
      %v6823 = vld [vmem:[#allocation3 + $0xdd] sm:$0xff]
      %v6824 = vld [vmem:[#allocation3 + $0xe5] sm:$0xff]
      %v6825 = vld [vmem:[#allocation3 + $0xed] sm:$0xff]
      %v6826 = vld [vmem:[#allocation3 + $0xf5] sm:$0xff]
      %v6827 = vld [vmem:[#allocation3 + $0xfd] sm:$0xff]
      %v6828 = vld [vmem:[#allocation3 + $0x105] sm:$0xff]
      %v6829 = vld [vmem:[#allocation3 + $0x10d] sm:$0xff]
      %v6830 = vld [vmem:[#allocation3 + $0x115] sm:$0xff]
      %v6831 = vld [vmem:[#allocation3 + $0x11d] sm:$0xff]
      %v6832 = vld [vmem:[#allocation3 + $0x125] sm:$0xff]
      %v6833 = vld [vmem:[#allocation3 + $0x12d] sm:$0xff]
      %v6834 = vld [vmem:[#allocation3 + $0x135] sm:$0xff]
      %v6835 = vld [vmem:[#allocation3 + $0x13d] sm:$0xff]
      %v6836 = vld [vmem:[#allocation3 + $0x145] sm:$0xff]
      %v6837 = vld [vmem:[#allocation3 + $0x14d] sm:$0xff]
      %v6838 = vld [vmem:[#allocation3 + $0x155] sm:$0xff]
      %v6839 = vld [vmem:[#allocation3 + $0x15d] sm:$0xff]
      %v6840 = vld [vmem:[#allocation3 + $0x165] sm:$0xff]
      %v6841 = vld [vmem:[#allocation3 + $0x16d] sm:$0xff]
      %v6842 = vld [vmem:[#allocation3 + $0x175] sm:$0xf]
      %v6843 = vpack.c.bf16 %v6804, %v6803
      %v6844 = vpack.c.bf16 %v6806, %v6805
      %v6845 = vpack.c.bf16 %v6808, %v6807
      %v6846 = vpack.c.bf16 %v6810, %v6809
      %v6847 = vpack.c.bf16 %v6812, %v6811
      %v6848 = vpack.c.bf16 %v6814, %v6813
      %v6849 = vpack.c.bf16 %v6816, %v6815
      %v6850 = vpack.c.bf16 %v6818, %v6817
      %v6851 = vpack.c.bf16 %v6820, %v6819
      %v6852 = vpack.c.bf16 %v6822, %v6821
      %v6853 = vpack.c.bf16 %v6824, %v6823
      %v6854 = vpack.c.bf16 %v6826, %v6825
      %v6855 = vpack.c.bf16 %v6828, %v6827
      %v6856 = vpack.c.bf16 %v6830, %v6829
      %v6857 = vpack.c.bf16 %v6832, %v6831
      %v6858 = vpack.c.bf16 %v6834, %v6833
      %v6859 = vpack.c.bf16 %v6836, %v6835
      %v6860 = vpack.c.bf16 %v6838, %v6837
      %v6861 = vpack.c.bf16 %v6840, %v6839
      %v6862 = vpack.c.bf16 %v6842, %v6841
      %s6863 = scalar_lea.vmem %s4, 72
      %v6864 = vld [vmem:[%s6863] sm:$0xf]
      %v6865 = vld [vmem:[%s6863 + $0x4] sm:$0xf]
      %v6866 = vld [vmem:[%s6863 + $0x8] sm:$0xf]
      %v6870 = vunpack.c.l.b16 %v6864
      %v6871 = vunpack.c.l.b16 %v6865
      %v6872 = vunpack.c.l.b16 %v6866
      %v6873 = vpack.c.b16 %v6871, %v6870
      %v6874 = vpack.c.b16 %v6872, %v6872
      %v6877 = vsel %vm4805, %v6843, 0
      %v6880 = vsel %vm4805, %v6844, 0
      %v6883 = vsel %vm4805, %v6845, 0
      %v6886 = vsel %vm4805, %v6846, 0
      %v6889 = vsel %vm4805, %v6847, 0
      %v6892 = vsel %vm4805, %v6848, 0
      %v6895 = vsel %vm4805, %v6849, 0
      %v6898 = vsel %vm4805, %v6850, 0
      %v6901 = vsel %vm4805, %v6851, 0
      %v6904 = vsel %vm4805, %v6852, 0
      %v6907 = vsel %vm4805, %v6853, 0
      %v6910 = vsel %vm4805, %v6854, 0
      %v6913 = vsel %vm4805, %v6855, 0
      %v6916 = vsel %vm4805, %v6856, 0
      %v6919 = vsel %vm4805, %v6857, 0
      %v6922 = vsel %vm4805, %v6858, 0
      %v6925 = vsel %vm4805, %v6859, 0
      %v6928 = vsel %vm4805, %v6860, 0
      %v6931 = vsel %vm4805, %v6861, 0
      %v6934 = vsel %vm4805, %v6862, 0
      %v6937 = vsel %vm1395, %v6874, 0
      %6939 = vmatprep.subr.bf16.mxu0 0
      %6940 = vmatpush1.bf16.msra.mxu0 %v6873
      %6941 = vmatprep.subr.bf16.mxu0 0
      %6942 = vmatpush1.bf16.msra.mxu0 %v6937
      %6943 = vmatprep.subr.bf16.mxu0 0
      %6944 = vmatpush1.bf16.msra.mxu0 0
      %6945 = vmatprep.subr.bf16.mxu0 0
      %6946 = vmatpush1.bf16.msra.mxu0 0
      %6947 = vmatprep.subr.bf16.mxu0 0
      %6948 = vmatpush1.bf16.msra.mxu0 0
      %6949 = vmatprep.subr.bf16.mxu0 0
      %6950 = vmatpush1.bf16.msra.mxu0 0
      %6951 = vmatprep.subr.bf16.mxu0 0
      %6952 = vmatpush1.bf16.msra.mxu0 0
      %6953 = vmatprep.subr.bf16.mxu0 0
      %6954 = vmatpush1.bf16.msra.mxu0 0
      %6955 = vmatprep.subr.bf16.mxu0 0
      %6956 = vmatpush1.bf16.msra.mxu0 0
      %6957 = vmatprep.subr.bf16.mxu0 0
      %6958 = vmatpush1.bf16.msra.mxu0 0
      %6959 = vmatprep.subr.bf16.mxu0 0
      %6960 = vmatpush1.bf16.msra.mxu0 0
      %6961 = vmatprep.subr.bf16.mxu0 0
      %6962 = vmatpush1.bf16.msra.mxu0 0
      %6963 = vmatprep.subr.bf16.mxu0 0
      %6964 = vmatpush1.bf16.msra.mxu0 0
      %6965 = vmatprep.subr.bf16.mxu0 0
      %6966 = vmatpush1.bf16.msra.mxu0 0
      %6967 = vmatprep.subr.bf16.mxu0 0
      %6968 = vmatpush1.bf16.msra.mxu0 0
      %6969 = vmatprep.subr.bf16.mxu0 0
      %6970 = vmatpush1.bf16.msra.mxu0 0
      %6971 = vmatprep.mubr.bf16.mxu0 0
      %6972 = vmatmul.mubr.bf16.gmra.mrb[0].mxu0 %v6877
      %v6973 = vpop.f32.mrb[0].mxu0
      %v6974 = vadd.f32 0.0, %v6973
      %v6975 = vpop.f32.mrb[0].mxu0
      %v6976 = vpop.f32.mrb[0].mxu0
      %v6977 = vadd.f32 0.0, %v6976
      %v6978 = vpop.f32.mrb[0].mxu0
      %6979 = vmatprep.mubr.bf16.mxu0 0
      %6980 = vmatmul.mubr.bf16.gmra.mrb[0].mxu0 %v6880
      %v6981 = vpop.f32.mrb[0].mxu0
      %v6982 = vadd.f32 0.0, %v6981
      %v6983 = vpop.f32.mrb[0].mxu0
      %v6984 = vpop.f32.mrb[0].mxu0
      %v6985 = vadd.f32 0.0, %v6984
      %v6986 = vpop.f32.mrb[0].mxu0
      %6987 = vmatprep.mubr.bf16.mxu0 0
      %6988 = vmatmul.mubr.bf16.gmra.mrb[0].mxu0 %v6883
      %v6989 = vpop.f32.mrb[0].mxu0
      %v6990 = vadd.f32 0.0, %v6989
      %v6991 = vpop.f32.mrb[0].mxu0
      %v6992 = vpop.f32.mrb[0].mxu0
      %v6993 = vadd.f32 0.0, %v6992
      %v6994 = vpop.f32.mrb[0].mxu0
      %6995 = vmatprep.mubr.bf16.mxu0 0
      %6996 = vmatmul.mubr.bf16.gmra.mrb[0].mxu0 %v6886
      %v6997 = vpop.f32.mrb[0].mxu0
      %v6998 = vadd.f32 0.0, %v6997
      %v6999 = vpop.f32.mrb[0].mxu0
      %v7000 = vpop.f32.mrb[0].mxu0
      %v7001 = vadd.f32 0.0, %v7000
      %v7002 = vpop.f32.mrb[0].mxu0
      %7003 = vmatprep.mubr.bf16.mxu0 0
      %7004 = vmatmul.mubr.bf16.gmra.mrb[0].mxu0 %v6889
      %v7005 = vpop.f32.mrb[0].mxu0
      %v7006 = vadd.f32 0.0, %v7005
      %v7007 = vpop.f32.mrb[0].mxu0
      %v7008 = vpop.f32.mrb[0].mxu0
      %v7009 = vadd.f32 0.0, %v7008
      %v7010 = vpop.f32.mrb[0].mxu0
      %7011 = vmatprep.mubr.bf16.mxu0 0
      %7012 = vmatmul.mubr.bf16.gmra.mrb[0].mxu0 %v6892
      %v7013 = vpop.f32.mrb[0].mxu0
      %v7014 = vadd.f32 0.0, %v7013
      %v7015 = vpop.f32.mrb[0].mxu0
      %v7016 = vpop.f32.mrb[0].mxu0
      %v7017 = vadd.f32 0.0, %v7016
      %v7018 = vpop.f32.mrb[0].mxu0
      %7019 = vmatprep.mubr.bf16.mxu0 0
      %7020 = vmatmul.mubr.bf16.gmra.mrb[0].mxu0 %v6895
      %v7021 = vpop.f32.mrb[0].mxu0
      %v7022 = vadd.f32 0.0, %v7021
      %v7023 = vpop.f32.mrb[0].mxu0
      %v7024 = vpop.f32.mrb[0].mxu0
      %v7025 = vadd.f32 0.0, %v7024
      %v7026 = vpop.f32.mrb[0].mxu0
      %7027 = vmatprep.mubr.bf16.mxu0 0
      %7028 = vmatmul.mubr.bf16.gmra.mrb[0].mxu0 %v6898
      %v7029 = vpop.f32.mrb[0].mxu0
      %v7030 = vadd.f32 0.0, %v7029
      %v7031 = vpop.f32.mrb[0].mxu0
      %v7032 = vpop.f32.mrb[0].mxu0
      %v7033 = vadd.f32 0.0, %v7032
      %v7034 = vpop.f32.mrb[0].mxu0
      %7035 = vmatprep.mubr.bf16.mxu0 0
      %7036 = vmatmul.mubr.bf16.gmra.mrb[0].mxu0 %v6901
      %v7037 = vpop.f32.mrb[0].mxu0
      %v7038 = vadd.f32 0.0, %v7037
      %v7039 = vpop.f32.mrb[0].mxu0
      %v7040 = vpop.f32.mrb[0].mxu0
      %v7041 = vadd.f32 0.0, %v7040
      %v7042 = vpop.f32.mrb[0].mxu0
      %7043 = vmatprep.mubr.bf16.mxu0 0
      %7044 = vmatmul.mubr.bf16.gmra.mrb[0].mxu0 %v6904
      %v7045 = vpop.f32.mrb[0].mxu0
      %v7046 = vadd.f32 0.0, %v7045
      %v7047 = vpop.f32.mrb[0].mxu0
      %v7048 = vpop.f32.mrb[0].mxu0
      %v7049 = vadd.f32 0.0, %v7048
      %v7050 = vpop.f32.mrb[0].mxu0
      %7051 = vmatprep.mubr.bf16.mxu0 0
      %7052 = vmatmul.mubr.bf16.gmra.mrb[0].mxu0 %v6907
      %v7053 = vpop.f32.mrb[0].mxu0
      %v7054 = vadd.f32 0.0, %v7053
      %v7055 = vpop.f32.mrb[0].mxu0
      %v7056 = vpop.f32.mrb[0].mxu0
      %v7057 = vadd.f32 0.0, %v7056
      %v7058 = vpop.f32.mrb[0].mxu0
      %7059 = vmatprep.mubr.bf16.mxu0 0
      %7060 = vmatmul.mubr.bf16.gmra.mrb[0].mxu0 %v6910
      %v7061 = vpop.f32.mrb[0].mxu0
      %v7062 = vadd.f32 0.0, %v7061
      %v7063 = vpop.f32.mrb[0].mxu0
      %v7064 = vpop.f32.mrb[0].mxu0
      %v7065 = vadd.f32 0.0, %v7064
      %v7066 = vpop.f32.mrb[0].mxu0
      %7067 = vmatprep.mubr.bf16.mxu0 0
      %7068 = vmatmul.mubr.bf16.gmra.mrb[0].mxu0 %v6913
      %v7069 = vpop.f32.mrb[0].mxu0
      %v7070 = vadd.f32 0.0, %v7069
      %v7071 = vpop.f32.mrb[0].mxu0
      %v7072 = vpop.f32.mrb[0].mxu0
      %v7073 = vadd.f32 0.0, %v7072
      %v7074 = vpop.f32.mrb[0].mxu0
      %7075 = vmatprep.mubr.bf16.mxu0 0
      %7076 = vmatmul.mubr.bf16.gmra.mrb[0].mxu0 %v6916
      %v7077 = vpop.f32.mrb[0].mxu0
      %v7078 = vadd.f32 0.0, %v7077
      %v7079 = vpop.f32.mrb[0].mxu0
      %v7080 = vpop.f32.mrb[0].mxu0
      %v7081 = vadd.f32 0.0, %v7080
      %v7082 = vpop.f32.mrb[0].mxu0
      %7083 = vmatprep.mubr.bf16.mxu0 0
      %7084 = vmatmul.mubr.bf16.gmra.mrb[0].mxu0 %v6919
      %v7085 = vpop.f32.mrb[0].mxu0
      %v7086 = vadd.f32 0.0, %v7085
      %v7087 = vpop.f32.mrb[0].mxu0
      %v7088 = vpop.f32.mrb[0].mxu0
      %v7089 = vadd.f32 0.0, %v7088
      %v7090 = vpop.f32.mrb[0].mxu0
      %7091 = vmatprep.mubr.bf16.mxu0 0
      %7092 = vmatmul.mubr.bf16.gmra.mrb[0].mxu0 %v6922
      %v7093 = vpop.f32.mrb[0].mxu0
      %v7094 = vadd.f32 0.0, %v7093
      %v7095 = vpop.f32.mrb[0].mxu0
      %v7096 = vpop.f32.mrb[0].mxu0
      %v7097 = vadd.f32 0.0, %v7096
      %v7098 = vpop.f32.mrb[0].mxu0
      %7099 = vmatprep.mubr.bf16.mxu0 0
      %7100 = vmatmul.mubr.bf16.gmra.mrb[0].mxu0 %v6925
      %v7101 = vpop.f32.mrb[0].mxu0
      %v7102 = vadd.f32 0.0, %v7101
      %v7103 = vpop.f32.mrb[0].mxu0
      %v7104 = vpop.f32.mrb[0].mxu0
      %v7105 = vadd.f32 0.0, %v7104
      %v7106 = vpop.f32.mrb[0].mxu0
      %7107 = vmatprep.mubr.bf16.mxu0 0
      %7108 = vmatmul.mubr.bf16.gmra.mrb[0].mxu0 %v6928
      %v7109 = vpop.f32.mrb[0].mxu0
      %v7110 = vadd.f32 0.0, %v7109
      %v7111 = vpop.f32.mrb[0].mxu0
      %v7112 = vpop.f32.mrb[0].mxu0
      %v7113 = vadd.f32 0.0, %v7112
      %v7114 = vpop.f32.mrb[0].mxu0
      %7115 = vmatprep.mubr.bf16.mxu0 0
      %7116 = vmatmul.mubr.bf16.gmra.mrb[0].mxu0 %v6931
      %v7117 = vpop.f32.mrb[0].mxu0
      %v7118 = vadd.f32 0.0, %v7117
      %v7119 = vpop.f32.mrb[0].mxu0
      %v7120 = vpop.f32.mrb[0].mxu0
      %v7121 = vadd.f32 0.0, %v7120
      %v7122 = vpop.f32.mrb[0].mxu0
      %7123 = vmatprep.mubr.bf16.mxu0 0
      %7124 = vmatmul.mubr.bf16.gmra.mrb[0].mxu0 %v6934
      %v7125 = vpop.f32.mrb[0].mxu0
      %v7126 = vadd.f32 0.0, %v7125
      %v7127 = vpop.f32.mrb[0].mxu0
      %v7128 = vpop.f32.mrb[0].mxu0
      %v7129 = vadd.f32 0.0, %v7128
      %v7130 = vpop.f32.mrb[0].mxu0
      %7131 = vdwg.mxu0
      %v7132 = vadd.f32 %v6763, %v6974
      %v7133 = vadd.f32 %v6764, %v6977
      %v7134 = vadd.f32 %v6765, %v6982
      %v7135 = vadd.f32 %v6766, %v6985
      %v7136 = vadd.f32 %v6767, %v6990
      %v7137 = vadd.f32 %v6768, %v6993
      %v7138 = vadd.f32 %v6769, %v6998
      %v7139 = vadd.f32 %v6770, %v7001
      %v7140 = vadd.f32 %v6771, %v7006
      %v7141 = vadd.f32 %v6772, %v7009
      %v7142 = vadd.f32 %v6773, %v7014
      %v7143 = vadd.f32 %v6774, %v7017
      %v7144 = vadd.f32 %v6775, %v7022
      %v7145 = vadd.f32 %v6776, %v7025
      %v7146 = vadd.f32 %v6777, %v7030
      %v7147 = vadd.f32 %v6778, %v7033
      %v7148 = vadd.f32 %v6779, %v7038
      %v7149 = vadd.f32 %v6780, %v7041
      %v7150 = vadd.f32 %v6781, %v7046
      %v7151 = vadd.f32 %v6782, %v7049
      %v7152 = vadd.f32 %v6783, %v7054
      %v7153 = vadd.f32 %v6784, %v7057
      %v7154 = vadd.f32 %v6785, %v7062
      %v7155 = vadd.f32 %v6786, %v7065
      %v7156 = vadd.f32 %v6787, %v7070
      %v7157 = vadd.f32 %v6788, %v7073
      %v7158 = vadd.f32 %v6789, %v7078
      %v7159 = vadd.f32 %v6790, %v7081
      %v7160 = vadd.f32 %v6791, %v7086
      %v7161 = vadd.f32 %v6792, %v7089
      %v7162 = vadd.f32 %v6793, %v7094
      %v7163 = vadd.f32 %v6794, %v7097
      %v7164 = vadd.f32 %v6795, %v7102
      %v7165 = vadd.f32 %v6796, %v7105
      %v7166 = vadd.f32 %v6797, %v7110
      %v7167 = vadd.f32 %v6798, %v7113
      %v7168 = vadd.f32 %v6799, %v7118
      %v7169 = vadd.f32 %v6800, %v7121
      %v7170 = vadd.f32 %v6801, %v7126
      %v7171 = vadd.f32 %v6802, %v7129
      %v7172 = vld [vmem:[#allocation3 + $0x3e] sm:$0xff]
      %v7173 = vld [vmem:[#allocation3 + $0x46] sm:$0xff]
      %v7174 = vld [vmem:[#allocation3 + $0x4e] sm:$0xff]
      %v7175 = vld [vmem:[#allocation3 + $0x56] sm:$0xff]
      %v7176 = vld [vmem:[#allocation3 + $0x5e] sm:$0xff]
      %v7177 = vld [vmem:[#allocation3 + $0x66] sm:$0xff]
      %v7178 = vld [vmem:[#allocation3 + $0x6e] sm:$0xff]
      %v7179 = vld [vmem:[#allocation3 + $0x76] sm:$0xff]
      %v7180 = vld [vmem:[#allocation3 + $0x7e] sm:$0xff]
      %v7181 = vld [vmem:[#allocation3 + $0x86] sm:$0xff]
      %v7182 = vld [vmem:[#allocation3 + $0x8e] sm:$0xff]
      %v7183 = vld [vmem:[#allocation3 + $0x96] sm:$0xff]
      %v7184 = vld [vmem:[#allocation3 + $0x9e] sm:$0xff]
      %v7185 = vld [vmem:[#allocation3 + $0xa6] sm:$0xff]
      %v7186 = vld [vmem:[#allocation3 + $0xae] sm:$0xff]
      %v7187 = vld [vmem:[#allocation3 + $0xb6] sm:$0xff]
      %v7188 = vld [vmem:[#allocation3 + $0xbe] sm:$0xff]
      %v7189 = vld [vmem:[#allocation3 + $0xc6] sm:$0xff]
      %v7190 = vld [vmem:[#allocation3 + $0xce] sm:$0xff]
      %v7191 = vld [vmem:[#allocation3 + $0xd6] sm:$0xff]
      %v7192 = vld [vmem:[#allocation3 + $0xde] sm:$0xff]
      %v7193 = vld [vmem:[#allocation3 + $0xe6] sm:$0xff]
      %v7194 = vld [vmem:[#allocation3 + $0xee] sm:$0xff]
      %v7195 = vld [vmem:[#allocation3 + $0xf6] sm:$0xff]
      %v7196 = vld [vmem:[#allocation3 + $0xfe] sm:$0xff]
      %v7197 = vld [vmem:[#allocation3 + $0x106] sm:$0xff]
      %v7198 = vld [vmem:[#allocation3 + $0x10e] sm:$0xff]
      %v7199 = vld [vmem:[#allocation3 + $0x116] sm:$0xff]
      %v7200 = vld [vmem:[#allocation3 + $0x11e] sm:$0xff]
      %v7201 = vld [vmem:[#allocation3 + $0x126] sm:$0xff]
      %v7202 = vld [vmem:[#allocation3 + $0x12e] sm:$0xff]
      %v7203 = vld [vmem:[#allocation3 + $0x136] sm:$0xff]
      %v7204 = vld [vmem:[#allocation3 + $0x13e] sm:$0xff]
      %v7205 = vld [vmem:[#allocation3 + $0x146] sm:$0xff]
      %v7206 = vld [vmem:[#allocation3 + $0x14e] sm:$0xff]
      %v7207 = vld [vmem:[#allocation3 + $0x156] sm:$0xff]
      %v7208 = vld [vmem:[#allocation3 + $0x15e] sm:$0xff]
      %v7209 = vld [vmem:[#allocation3 + $0x166] sm:$0xff]
      %v7210 = vld [vmem:[#allocation3 + $0x16e] sm:$0xff]
      %v7211 = vld [vmem:[#allocation3 + $0x176] sm:$0xf]
      %v7212 = vpack.c.bf16 %v7173, %v7172
      %v7213 = vpack.c.bf16 %v7175, %v7174
      %v7214 = vpack.c.bf16 %v7177, %v7176
      %v7215 = vpack.c.bf16 %v7179, %v7178
      %v7216 = vpack.c.bf16 %v7181, %v7180
      %v7217 = vpack.c.bf16 %v7183, %v7182
      %v7218 = vpack.c.bf16 %v7185, %v7184
      %v7219 = vpack.c.bf16 %v7187, %v7186
      %v7220 = vpack.c.bf16 %v7189, %v7188
      %v7221 = vpack.c.bf16 %v7191, %v7190
      %v7222 = vpack.c.bf16 %v7193, %v7192
      %v7223 = vpack.c.bf16 %v7195, %v7194
      %v7224 = vpack.c.bf16 %v7197, %v7196
      %v7225 = vpack.c.bf16 %v7199, %v7198
      %v7226 = vpack.c.bf16 %v7201, %v7200
      %v7227 = vpack.c.bf16 %v7203, %v7202
      %v7228 = vpack.c.bf16 %v7205, %v7204
      %v7229 = vpack.c.bf16 %v7207, %v7206
      %v7230 = vpack.c.bf16 %v7209, %v7208
      %v7231 = vpack.c.bf16 %v7211, %v7210
      %s7232 = scalar_lea.vmem %s4, 84
      %v7233 = vld [vmem:[%s7232] sm:$0xf]
      %v7234 = vld [vmem:[%s7232 + $0x4] sm:$0xf]
      %v7235 = vld [vmem:[%s7232 + $0x8] sm:$0xf]
      %v7239 = vunpack.c.l.b16 %v7233
      %v7240 = vunpack.c.l.b16 %v7234
      %v7241 = vunpack.c.l.b16 %v7235
      %v7242 = vpack.c.b16 %v7240, %v7239
      %v7243 = vpack.c.b16 %v7241, %v7241
      %v7246 = vsel %vm4805, %v7212, 0
      %v7249 = vsel %vm4805, %v7213, 0
      %v7252 = vsel %vm4805, %v7214, 0
      %v7255 = vsel %vm4805, %v7215, 0
      %v7258 = vsel %vm4805, %v7216, 0
      %v7261 = vsel %vm4805, %v7217, 0
      %v7264 = vsel %vm4805, %v7218, 0
      %v7267 = vsel %vm4805, %v7219, 0
      %v7270 = vsel %vm4805, %v7220, 0
      %v7273 = vsel %vm4805, %v7221, 0
      %v7276 = vsel %vm4805, %v7222, 0
      %v7279 = vsel %vm4805, %v7223, 0
      %v7282 = vsel %vm4805, %v7224, 0
      %v7285 = vsel %vm4805, %v7225, 0
      %v7288 = vsel %vm4805, %v7226, 0
      %v7291 = vsel %vm4805, %v7227, 0
      %v7294 = vsel %vm4805, %v7228, 0
      %v7297 = vsel %vm4805, %v7229, 0
      %v7300 = vsel %vm4805, %v7230, 0
      %v7303 = vsel %vm4805, %v7231, 0
      %v7306 = vsel %vm1395, %v7243, 0
      %7308 = vmatprep.subr.bf16.mxu0 0
      %7309 = vmatpush1.bf16.msra.mxu0 %v7242
      %7310 = vmatprep.subr.bf16.mxu0 0
      %7311 = vmatpush1.bf16.msra.mxu0 %v7306
      %7312 = vmatprep.subr.bf16.mxu0 0
      %7313 = vmatpush1.bf16.msra.mxu0 0
      %7314 = vmatprep.subr.bf16.mxu0 0
      %7315 = vmatpush1.bf16.msra.mxu0 0
      %7316 = vmatprep.subr.bf16.mxu0 0
      %7317 = vmatpush1.bf16.msra.mxu0 0
      %7318 = vmatprep.subr.bf16.mxu0 0
      %7319 = vmatpush1.bf16.msra.mxu0 0
      %7320 = vmatprep.subr.bf16.mxu0 0
      %7321 = vmatpush1.bf16.msra.mxu0 0
      %7322 = vmatprep.subr.bf16.mxu0 0
      %7323 = vmatpush1.bf16.msra.mxu0 0
      %7324 = vmatprep.subr.bf16.mxu0 0
      %7325 = vmatpush1.bf16.msra.mxu0 0
      %7326 = vmatprep.subr.bf16.mxu0 0
      %7327 = vmatpush1.bf16.msra.mxu0 0
      %7328 = vmatprep.subr.bf16.mxu0 0
      %7329 = vmatpush1.bf16.msra.mxu0 0
      %7330 = vmatprep.subr.bf16.mxu0 0
      %7331 = vmatpush1.bf16.msra.mxu0 0
      %7332 = vmatprep.subr.bf16.mxu0 0
      %7333 = vmatpush1.bf16.msra.mxu0 0
      %7334 = vmatprep.subr.bf16.mxu0 0
      %7335 = vmatpush1.bf16.msra.mxu0 0
      %7336 = vmatprep.subr.bf16.mxu0 0
      %7337 = vmatpush1.bf16.msra.mxu0 0
      %7338 = vmatprep.subr.bf16.mxu0 0
      %7339 = vmatpush1.bf16.msra.mxu0 0
      %7340 = vmatprep.mubr.bf16.mxu0 0
      %7341 = vmatmul.mubr.bf16.gmra.mrb[0].mxu0 %v7246
      %v7342 = vpop.f32.mrb[0].mxu0
      %v7343 = vadd.f32 0.0, %v7342
      %v7344 = vpop.f32.mrb[0].mxu0
      %v7345 = vpop.f32.mrb[0].mxu0
      %v7346 = vadd.f32 0.0, %v7345
      %v7347 = vpop.f32.mrb[0].mxu0
      %7348 = vmatprep.mubr.bf16.mxu0 0
      %7349 = vmatmul.mubr.bf16.gmra.mrb[0].mxu0 %v7249
      %v7350 = vpop.f32.mrb[0].mxu0
      %v7351 = vadd.f32 0.0, %v7350
      %v7352 = vpop.f32.mrb[0].mxu0
      %v7353 = vpop.f32.mrb[0].mxu0
      %v7354 = vadd.f32 0.0, %v7353
      %v7355 = vpop.f32.mrb[0].mxu0
      %7356 = vmatprep.mubr.bf16.mxu0 0
      %7357 = vmatmul.mubr.bf16.gmra.mrb[0].mxu0 %v7252
      %v7358 = vpop.f32.mrb[0].mxu0
      %v7359 = vadd.f32 0.0, %v7358
      %v7360 = vpop.f32.mrb[0].mxu0
      %v7361 = vpop.f32.mrb[0].mxu0
      %v7362 = vadd.f32 0.0, %v7361
      %v7363 = vpop.f32.mrb[0].mxu0
      %7364 = vmatprep.mubr.bf16.mxu0 0
      %7365 = vmatmul.mubr.bf16.gmra.mrb[0].mxu0 %v7255
      %v7366 = vpop.f32.mrb[0].mxu0
      %v7367 = vadd.f32 0.0, %v7366
      %v7368 = vpop.f32.mrb[0].mxu0
      %v7369 = vpop.f32.mrb[0].mxu0
      %v7370 = vadd.f32 0.0, %v7369
      %v7371 = vpop.f32.mrb[0].mxu0
      %7372 = vmatprep.mubr.bf16.mxu0 0
      %7373 = vmatmul.mubr.bf16.gmra.mrb[0].mxu0 %v7258
      %v7374 = vpop.f32.mrb[0].mxu0
      %v7375 = vadd.f32 0.0, %v7374
      %v7376 = vpop.f32.mrb[0].mxu0
      %v7377 = vpop.f32.mrb[0].mxu0
      %v7378 = vadd.f32 0.0, %v7377
      %v7379 = vpop.f32.mrb[0].mxu0
      %7380 = vmatprep.mubr.bf16.mxu0 0
      %7381 = vmatmul.mubr.bf16.gmra.mrb[0].mxu0 %v7261
      %v7382 = vpop.f32.mrb[0].mxu0
      %v7383 = vadd.f32 0.0, %v7382
      %v7384 = vpop.f32.mrb[0].mxu0
      %v7385 = vpop.f32.mrb[0].mxu0
      %v7386 = vadd.f32 0.0, %v7385
      %v7387 = vpop.f32.mrb[0].mxu0
      %7388 = vmatprep.mubr.bf16.mxu0 0
      %7389 = vmatmul.mubr.bf16.gmra.mrb[0].mxu0 %v7264
      %v7390 = vpop.f32.mrb[0].mxu0
      %v7391 = vadd.f32 0.0, %v7390
      %v7392 = vpop.f32.mrb[0].mxu0
      %v7393 = vpop.f32.mrb[0].mxu0
      %v7394 = vadd.f32 0.0, %v7393
      %v7395 = vpop.f32.mrb[0].mxu0
      %7396 = vmatprep.mubr.bf16.mxu0 0
      %7397 = vmatmul.mubr.bf16.gmra.mrb[0].mxu0 %v7267
      %v7398 = vpop.f32.mrb[0].mxu0
      %v7399 = vadd.f32 0.0, %v7398
      %v7400 = vpop.f32.mrb[0].mxu0
      %v7401 = vpop.f32.mrb[0].mxu0
      %v7402 = vadd.f32 0.0, %v7401
      %v7403 = vpop.f32.mrb[0].mxu0
      %7404 = vmatprep.mubr.bf16.mxu0 0
      %7405 = vmatmul.mubr.bf16.gmra.mrb[0].mxu0 %v7270
      %v7406 = vpop.f32.mrb[0].mxu0
      %v7407 = vadd.f32 0.0, %v7406
      %v7408 = vpop.f32.mrb[0].mxu0
      %v7409 = vpop.f32.mrb[0].mxu0
      %v7410 = vadd.f32 0.0, %v7409
      %v7411 = vpop.f32.mrb[0].mxu0
      %7412 = vmatprep.mubr.bf16.mxu0 0
      %7413 = vmatmul.mubr.bf16.gmra.mrb[0].mxu0 %v7273
      %v7414 = vpop.f32.mrb[0].mxu0
      %v7415 = vadd.f32 0.0, %v7414
      %v7416 = vpop.f32.mrb[0].mxu0
      %v7417 = vpop.f32.mrb[0].mxu0
      %v7418 = vadd.f32 0.0, %v7417
      %v7419 = vpop.f32.mrb[0].mxu0
      %7420 = vmatprep.mubr.bf16.mxu0 0
      %7421 = vmatmul.mubr.bf16.gmra.mrb[0].mxu0 %v7276
      %v7422 = vpop.f32.mrb[0].mxu0
      %v7423 = vadd.f32 0.0, %v7422
      %v7424 = vpop.f32.mrb[0].mxu0
      %v7425 = vpop.f32.mrb[0].mxu0
      %v7426 = vadd.f32 0.0, %v7425
      %v7427 = vpop.f32.mrb[0].mxu0
      %7428 = vmatprep.mubr.bf16.mxu0 0
      %7429 = vmatmul.mubr.bf16.gmra.mrb[0].mxu0 %v7279
      %v7430 = vpop.f32.mrb[0].mxu0
      %v7431 = vadd.f32 0.0, %v7430
      %v7432 = vpop.f32.mrb[0].mxu0
      %v7433 = vpop.f32.mrb[0].mxu0
      %v7434 = vadd.f32 0.0, %v7433
      %v7435 = vpop.f32.mrb[0].mxu0
      %7436 = vmatprep.mubr.bf16.mxu0 0
      %7437 = vmatmul.mubr.bf16.gmra.mrb[0].mxu0 %v7282
      %v7438 = vpop.f32.mrb[0].mxu0
      %v7439 = vadd.f32 0.0, %v7438
      %v7440 = vpop.f32.mrb[0].mxu0
      %v7441 = vpop.f32.mrb[0].mxu0
      %v7442 = vadd.f32 0.0, %v7441
      %v7443 = vpop.f32.mrb[0].mxu0
      %7444 = vmatprep.mubr.bf16.mxu0 0
      %7445 = vmatmul.mubr.bf16.gmra.mrb[0].mxu0 %v7285
      %v7446 = vpop.f32.mrb[0].mxu0
      %v7447 = vadd.f32 0.0, %v7446
      %v7448 = vpop.f32.mrb[0].mxu0
      %v7449 = vpop.f32.mrb[0].mxu0
      %v7450 = vadd.f32 0.0, %v7449
      %v7451 = vpop.f32.mrb[0].mxu0
      %7452 = vmatprep.mubr.bf16.mxu0 0
      %7453 = vmatmul.mubr.bf16.gmra.mrb[0].mxu0 %v7288
      %v7454 = vpop.f32.mrb[0].mxu0
      %v7455 = vadd.f32 0.0, %v7454
      %v7456 = vpop.f32.mrb[0].mxu0
      %v7457 = vpop.f32.mrb[0].mxu0
      %v7458 = vadd.f32 0.0, %v7457
      %v7459 = vpop.f32.mrb[0].mxu0
      %7460 = vmatprep.mubr.bf16.mxu0 0
      %7461 = vmatmul.mubr.bf16.gmra.mrb[0].mxu0 %v7291
      %v7462 = vpop.f32.mrb[0].mxu0
      %v7463 = vadd.f32 0.0, %v7462
      %v7464 = vpop.f32.mrb[0].mxu0
      %v7465 = vpop.f32.mrb[0].mxu0
      %v7466 = vadd.f32 0.0, %v7465
      %v7467 = vpop.f32.mrb[0].mxu0
      %7468 = vmatprep.mubr.bf16.mxu0 0
      %7469 = vmatmul.mubr.bf16.gmra.mrb[0].mxu0 %v7294
      %v7470 = vpop.f32.mrb[0].mxu0
      %v7471 = vadd.f32 0.0, %v7470
      %v7472 = vpop.f32.mrb[0].mxu0
      %v7473 = vpop.f32.mrb[0].mxu0
      %v7474 = vadd.f32 0.0, %v7473
      %v7475 = vpop.f32.mrb[0].mxu0
      %7476 = vmatprep.mubr.bf16.mxu0 0
      %7477 = vmatmul.mubr.bf16.gmra.mrb[0].mxu0 %v7297
      %v7478 = vpop.f32.mrb[0].mxu0
      %v7479 = vadd.f32 0.0, %v7478
      %v7480 = vpop.f32.mrb[0].mxu0
      %v7481 = vpop.f32.mrb[0].mxu0
      %v7482 = vadd.f32 0.0, %v7481
      %v7483 = vpop.f32.mrb[0].mxu0
      %7484 = vmatprep.mubr.bf16.mxu0 0
      %7485 = vmatmul.mubr.bf16.gmra.mrb[0].mxu0 %v7300
      %v7486 = vpop.f32.mrb[0].mxu0
      %v7487 = vadd.f32 0.0, %v7486
      %v7488 = vpop.f32.mrb[0].mxu0
      %v7489 = vpop.f32.mrb[0].mxu0
      %v7490 = vadd.f32 0.0, %v7489
      %v7491 = vpop.f32.mrb[0].mxu0
      %7492 = vmatprep.mubr.bf16.mxu0 0
      %7493 = vmatmul.mubr.bf16.gmra.mrb[0].mxu0 %v7303
      %v7494 = vpop.f32.mrb[0].mxu0
      %v7495 = vadd.f32 0.0, %v7494
      %v7496 = vpop.f32.mrb[0].mxu0
      %v7497 = vpop.f32.mrb[0].mxu0
      %v7498 = vadd.f32 0.0, %v7497
      %v7499 = vpop.f32.mrb[0].mxu0
      %7500 = vdwg.mxu0
      %v7501 = vadd.f32 %v7132, %v7343
      %v7502 = vadd.f32 %v7133, %v7346
      %v7503 = vadd.f32 %v7134, %v7351
      %v7504 = vadd.f32 %v7135, %v7354
      %v7505 = vadd.f32 %v7136, %v7359
      %v7506 = vadd.f32 %v7137, %v7362
      %v7507 = vadd.f32 %v7138, %v7367
      %v7508 = vadd.f32 %v7139, %v7370
      %v7509 = vadd.f32 %v7140, %v7375
      %v7510 = vadd.f32 %v7141, %v7378
      %v7511 = vadd.f32 %v7142, %v7383
      %v7512 = vadd.f32 %v7143, %v7386
      %v7513 = vadd.f32 %v7144, %v7391
      %v7514 = vadd.f32 %v7145, %v7394
      %v7515 = vadd.f32 %v7146, %v7399
      %v7516 = vadd.f32 %v7147, %v7402
      %v7517 = vadd.f32 %v7148, %v7407
      %v7518 = vadd.f32 %v7149, %v7410
      %v7519 = vadd.f32 %v7150, %v7415
      %v7520 = vadd.f32 %v7151, %v7418
      %v7521 = vadd.f32 %v7152, %v7423
      %v7522 = vadd.f32 %v7153, %v7426
      %v7523 = vadd.f32 %v7154, %v7431
      %v7524 = vadd.f32 %v7155, %v7434
      %v7525 = vadd.f32 %v7156, %v7439
      %v7526 = vadd.f32 %v7157, %v7442
      %v7527 = vadd.f32 %v7158, %v7447
      %v7528 = vadd.f32 %v7159, %v7450
      %v7529 = vadd.f32 %v7160, %v7455
      %v7530 = vadd.f32 %v7161, %v7458
      %v7531 = vadd.f32 %v7162, %v7463
      %v7532 = vadd.f32 %v7163, %v7466
      %v7533 = vadd.f32 %v7164, %v7471
      %v7534 = vadd.f32 %v7165, %v7474
      %v7535 = vadd.f32 %v7166, %v7479
      %v7536 = vadd.f32 %v7167, %v7482
      %v7537 = vadd.f32 %v7168, %v7487
      %v7538 = vadd.f32 %v7169, %v7490
      %v7539 = vadd.f32 %v7170, %v7495
      %v7540 = vadd.f32 %v7171, %v7498
      %v7541 = vld [vmem:[#allocation3 + $0x3f] sm:$0xff]
      %v7542 = vld [vmem:[#allocation3 + $0x47] sm:$0xff]
      %v7543 = vld [vmem:[#allocation3 + $0x4f] sm:$0xff]
      %v7544 = vld [vmem:[#allocation3 + $0x57] sm:$0xff]
      %v7545 = vld [vmem:[#allocation3 + $0x5f] sm:$0xff]
      %v7546 = vld [vmem:[#allocation3 + $0x67] sm:$0xff]
      %v7547 = vld [vmem:[#allocation3 + $0x6f] sm:$0xff]
      %v7548 = vld [vmem:[#allocation3 + $0x77] sm:$0xff]
      %v7549 = vld [vmem:[#allocation3 + $0x7f] sm:$0xff]
      %v7550 = vld [vmem:[#allocation3 + $0x87] sm:$0xff]
      %v7551 = vld [vmem:[#allocation3 + $0x8f] sm:$0xff]
      %v7552 = vld [vmem:[#allocation3 + $0x97] sm:$0xff]
      %v7553 = vld [vmem:[#allocation3 + $0x9f] sm:$0xff]
      %v7554 = vld [vmem:[#allocation3 + $0xa7] sm:$0xff]
      %v7555 = vld [vmem:[#allocation3 + $0xaf] sm:$0xff]
      %v7556 = vld [vmem:[#allocation3 + $0xb7] sm:$0xff]
      %v7557 = vld [vmem:[#allocation3 + $0xbf] sm:$0xff]
      %v7558 = vld [vmem:[#allocation3 + $0xc7] sm:$0xff]
      %v7559 = vld [vmem:[#allocation3 + $0xcf] sm:$0xff]
      %v7560 = vld [vmem:[#allocation3 + $0xd7] sm:$0xff]
      %v7561 = vld [vmem:[#allocation3 + $0xdf] sm:$0xff]
      %v7562 = vld [vmem:[#allocation3 + $0xe7] sm:$0xff]
      %v7563 = vld [vmem:[#allocation3 + $0xef] sm:$0xff]
      %v7564 = vld [vmem:[#allocation3 + $0xf7] sm:$0xff]
      %v7565 = vld [vmem:[#allocation3 + $0xff] sm:$0xff]
      %v7566 = vld [vmem:[#allocation3 + $0x107] sm:$0xff]
      %v7567 = vld [vmem:[#allocation3 + $0x10f] sm:$0xff]
      %v7568 = vld [vmem:[#allocation3 + $0x117] sm:$0xff]
      %v7569 = vld [vmem:[#allocation3 + $0x11f] sm:$0xff]
      %v7570 = vld [vmem:[#allocation3 + $0x127] sm:$0xff]
      %v7571 = vld [vmem:[#allocation3 + $0x12f] sm:$0xff]
      %v7572 = vld [vmem:[#allocation3 + $0x137] sm:$0xff]
      %v7573 = vld [vmem:[#allocation3 + $0x13f] sm:$0xff]
      %v7574 = vld [vmem:[#allocation3 + $0x147] sm:$0xff]
      %v7575 = vld [vmem:[#allocation3 + $0x14f] sm:$0xff]
      %v7576 = vld [vmem:[#allocation3 + $0x157] sm:$0xff]
      %v7577 = vld [vmem:[#allocation3 + $0x15f] sm:$0xff]
      %v7578 = vld [vmem:[#allocation3 + $0x167] sm:$0xff]
      %v7579 = vld [vmem:[#allocation3 + $0x16f] sm:$0xff]
      %v7580 = vld [vmem:[#allocation3 + $0x177] sm:$0xf]
      %v7581 = vpack.c.bf16 %v7542, %v7541
      %v7582 = vpack.c.bf16 %v7544, %v7543
      %v7583 = vpack.c.bf16 %v7546, %v7545
      %v7584 = vpack.c.bf16 %v7548, %v7547
      %v7585 = vpack.c.bf16 %v7550, %v7549
      %v7586 = vpack.c.bf16 %v7552, %v7551
      %v7587 = vpack.c.bf16 %v7554, %v7553
      %v7588 = vpack.c.bf16 %v7556, %v7555
      %v7589 = vpack.c.bf16 %v7558, %v7557
      %v7590 = vpack.c.bf16 %v7560, %v7559
      %v7591 = vpack.c.bf16 %v7562, %v7561
      %v7592 = vpack.c.bf16 %v7564, %v7563
      %v7593 = vpack.c.bf16 %v7566, %v7565
      %v7594 = vpack.c.bf16 %v7568, %v7567
      %v7595 = vpack.c.bf16 %v7570, %v7569
      %v7596 = vpack.c.bf16 %v7572, %v7571
      %v7597 = vpack.c.bf16 %v7574, %v7573
      %v7598 = vpack.c.bf16 %v7576, %v7575
      %v7599 = vpack.c.bf16 %v7578, %v7577
      %v7600 = vpack.c.bf16 %v7580, %v7579
      %s7601 = scalar_lea.vmem %s4, 96
      %v7602 = vld [vmem:[%s7601] sm:$0xf]
      %v7603 = vld [vmem:[%s7601 + $0x4] sm:$0xf]
      %v7604 = vld [vmem:[%s7601 + $0x8] sm:$0xf]
      %v7608 = vunpack.c.l.b16 %v7602
      %v7609 = vunpack.c.l.b16 %v7603
      %v7610 = vunpack.c.l.b16 %v7604
      %v7611 = vpack.c.b16 %v7609, %v7608
      %v7612 = vpack.c.b16 %v7610, %v7610
      %v7615 = vsel %vm4805, %v7581, 0
      %v7618 = vsel %vm4805, %v7582, 0
      %v7621 = vsel %vm4805, %v7583, 0
      %v7624 = vsel %vm4805, %v7584, 0
      %v7627 = vsel %vm4805, %v7585, 0
      %v7630 = vsel %vm4805, %v7586, 0
      %v7633 = vsel %vm4805, %v7587, 0
      %v7636 = vsel %vm4805, %v7588, 0
      %v7639 = vsel %vm4805, %v7589, 0
      %v7642 = vsel %vm4805, %v7590, 0
      %v7645 = vsel %vm4805, %v7591, 0
      %v7648 = vsel %vm4805, %v7592, 0
      %v7651 = vsel %vm4805, %v7593, 0
      %v7654 = vsel %vm4805, %v7594, 0
      %v7657 = vsel %vm4805, %v7595, 0
      %v7660 = vsel %vm4805, %v7596, 0
      %v7663 = vsel %vm4805, %v7597, 0
      %v7666 = vsel %vm4805, %v7598, 0
      %v7669 = vsel %vm4805, %v7599, 0
      %v7672 = vsel %vm4805, %v7600, 0
      %v7675 = vsel %vm1395, %v7612, 0
      %7677 = vmatprep.subr.bf16.mxu0 0
      %7678 = vmatpush1.bf16.msra.mxu0 %v7611
      %7679 = vmatprep.subr.bf16.mxu0 0
      %7680 = vmatpush1.bf16.msra.mxu0 %v7675
      %7681 = vmatprep.subr.bf16.mxu0 0
      %7682 = vmatpush1.bf16.msra.mxu0 0
      %7683 = vmatprep.subr.bf16.mxu0 0
      %7684 = vmatpush1.bf16.msra.mxu0 0
      %7685 = vmatprep.subr.bf16.mxu0 0
      %7686 = vmatpush1.bf16.msra.mxu0 0
      %7687 = vmatprep.subr.bf16.mxu0 0
      %7688 = vmatpush1.bf16.msra.mxu0 0
      %7689 = vmatprep.subr.bf16.mxu0 0
      %7690 = vmatpush1.bf16.msra.mxu0 0
      %7691 = vmatprep.subr.bf16.mxu0 0
      %7692 = vmatpush1.bf16.msra.mxu0 0
      %7693 = vmatprep.subr.bf16.mxu0 0
      %7694 = vmatpush1.bf16.msra.mxu0 0
      %7695 = vmatprep.subr.bf16.mxu0 0
      %7696 = vmatpush1.bf16.msra.mxu0 0
      %7697 = vmatprep.subr.bf16.mxu0 0
      %7698 = vmatpush1.bf16.msra.mxu0 0
      %7699 = vmatprep.subr.bf16.mxu0 0
      %7700 = vmatpush1.bf16.msra.mxu0 0
      %7701 = vmatprep.subr.bf16.mxu0 0
      %7702 = vmatpush1.bf16.msra.mxu0 0
      %7703 = vmatprep.subr.bf16.mxu0 0
      %7704 = vmatpush1.bf16.msra.mxu0 0
      %7705 = vmatprep.subr.bf16.mxu0 0
      %7706 = vmatpush1.bf16.msra.mxu0 0
      %7707 = vmatprep.subr.bf16.mxu0 0
      %7708 = vmatpush1.bf16.msra.mxu0 0
      %7709 = vmatprep.mubr.bf16.mxu0 0
      %7710 = vmatmul.mubr.bf16.gmra.mrb[0].mxu0 %v7615
      %v7711 = vpop.f32.mrb[0].mxu0
      %v7712 = vadd.f32 0.0, %v7711
      %v7713 = vpop.f32.mrb[0].mxu0
      %v7714 = vpop.f32.mrb[0].mxu0
      %v7715 = vadd.f32 0.0, %v7714
      %v7716 = vpop.f32.mrb[0].mxu0
      %7717 = vmatprep.mubr.bf16.mxu0 0
      %7718 = vmatmul.mubr.bf16.gmra.mrb[0].mxu0 %v7618
      %v7719 = vpop.f32.mrb[0].mxu0
      %v7720 = vadd.f32 0.0, %v7719
      %v7721 = vpop.f32.mrb[0].mxu0
      %v7722 = vpop.f32.mrb[0].mxu0
      %v7723 = vadd.f32 0.0, %v7722
      %v7724 = vpop.f32.mrb[0].mxu0
      %7725 = vmatprep.mubr.bf16.mxu0 0
      %7726 = vmatmul.mubr.bf16.gmra.mrb[0].mxu0 %v7621
      %v7727 = vpop.f32.mrb[0].mxu0
      %v7728 = vadd.f32 0.0, %v7727
      %v7729 = vpop.f32.mrb[0].mxu0
      %v7730 = vpop.f32.mrb[0].mxu0
      %v7731 = vadd.f32 0.0, %v7730
      %v7732 = vpop.f32.mrb[0].mxu0
      %7733 = vmatprep.mubr.bf16.mxu0 0
      %7734 = vmatmul.mubr.bf16.gmra.mrb[0].mxu0 %v7624
      %v7735 = vpop.f32.mrb[0].mxu0
      %v7736 = vadd.f32 0.0, %v7735
      %v7737 = vpop.f32.mrb[0].mxu0
      %v7738 = vpop.f32.mrb[0].mxu0
      %v7739 = vadd.f32 0.0, %v7738
      %v7740 = vpop.f32.mrb[0].mxu0
      %7741 = vmatprep.mubr.bf16.mxu0 0
      %7742 = vmatmul.mubr.bf16.gmra.mrb[0].mxu0 %v7627
      %v7743 = vpop.f32.mrb[0].mxu0
      %v7744 = vadd.f32 0.0, %v7743
      %v7745 = vpop.f32.mrb[0].mxu0
      %v7746 = vpop.f32.mrb[0].mxu0
      %v7747 = vadd.f32 0.0, %v7746
      %v7748 = vpop.f32.mrb[0].mxu0
      %7749 = vmatprep.mubr.bf16.mxu0 0
      %7750 = vmatmul.mubr.bf16.gmra.mrb[0].mxu0 %v7630
      %v7751 = vpop.f32.mrb[0].mxu0
      %v7752 = vadd.f32 0.0, %v7751
      %v7753 = vpop.f32.mrb[0].mxu0
      %v7754 = vpop.f32.mrb[0].mxu0
      %v7755 = vadd.f32 0.0, %v7754
      %v7756 = vpop.f32.mrb[0].mxu0
      %7757 = vmatprep.mubr.bf16.mxu0 0
      %7758 = vmatmul.mubr.bf16.gmra.mrb[0].mxu0 %v7633
      %v7759 = vpop.f32.mrb[0].mxu0
      %v7760 = vadd.f32 0.0, %v7759
      %v7761 = vpop.f32.mrb[0].mxu0
      %v7762 = vpop.f32.mrb[0].mxu0
      %v7763 = vadd.f32 0.0, %v7762
      %v7764 = vpop.f32.mrb[0].mxu0
      %7765 = vmatprep.mubr.bf16.mxu0 0
      %7766 = vmatmul.mubr.bf16.gmra.mrb[0].mxu0 %v7636
      %v7767 = vpop.f32.mrb[0].mxu0
      %v7768 = vadd.f32 0.0, %v7767
      %v7769 = vpop.f32.mrb[0].mxu0
      %v7770 = vpop.f32.mrb[0].mxu0
      %v7771 = vadd.f32 0.0, %v7770
      %v7772 = vpop.f32.mrb[0].mxu0
      %7773 = vmatprep.mubr.bf16.mxu0 0
      %7774 = vmatmul.mubr.bf16.gmra.mrb[0].mxu0 %v7639
      %v7775 = vpop.f32.mrb[0].mxu0
      %v7776 = vadd.f32 0.0, %v7775
      %v7777 = vpop.f32.mrb[0].mxu0
      %v7778 = vpop.f32.mrb[0].mxu0
      %v7779 = vadd.f32 0.0, %v7778
      %v7780 = vpop.f32.mrb[0].mxu0
      %7781 = vmatprep.mubr.bf16.mxu0 0
      %7782 = vmatmul.mubr.bf16.gmra.mrb[0].mxu0 %v7642
      %v7783 = vpop.f32.mrb[0].mxu0
      %v7784 = vadd.f32 0.0, %v7783
      %v7785 = vpop.f32.mrb[0].mxu0
      %v7786 = vpop.f32.mrb[0].mxu0
      %v7787 = vadd.f32 0.0, %v7786
      %v7788 = vpop.f32.mrb[0].mxu0
      %7789 = vmatprep.mubr.bf16.mxu0 0
      %7790 = vmatmul.mubr.bf16.gmra.mrb[0].mxu0 %v7645
      %v7791 = vpop.f32.mrb[0].mxu0
      %v7792 = vadd.f32 0.0, %v7791
      %v7793 = vpop.f32.mrb[0].mxu0
      %v7794 = vpop.f32.mrb[0].mxu0
      %v7795 = vadd.f32 0.0, %v7794
      %v7796 = vpop.f32.mrb[0].mxu0
      %7797 = vmatprep.mubr.bf16.mxu0 0
      %7798 = vmatmul.mubr.bf16.gmra.mrb[0].mxu0 %v7648
      %v7799 = vpop.f32.mrb[0].mxu0
      %v7800 = vadd.f32 0.0, %v7799
      %v7801 = vpop.f32.mrb[0].mxu0
      %v7802 = vpop.f32.mrb[0].mxu0
      %v7803 = vadd.f32 0.0, %v7802
      %v7804 = vpop.f32.mrb[0].mxu0
      %7805 = vmatprep.mubr.bf16.mxu0 0
      %7806 = vmatmul.mubr.bf16.gmra.mrb[0].mxu0 %v7651
      %v7807 = vpop.f32.mrb[0].mxu0
      %v7808 = vadd.f32 0.0, %v7807
      %v7809 = vpop.f32.mrb[0].mxu0
      %v7810 = vpop.f32.mrb[0].mxu0
      %v7811 = vadd.f32 0.0, %v7810
      %v7812 = vpop.f32.mrb[0].mxu0
      %7813 = vmatprep.mubr.bf16.mxu0 0
      %7814 = vmatmul.mubr.bf16.gmra.mrb[0].mxu0 %v7654
      %v7815 = vpop.f32.mrb[0].mxu0
      %v7816 = vadd.f32 0.0, %v7815
      %v7817 = vpop.f32.mrb[0].mxu0
      %v7818 = vpop.f32.mrb[0].mxu0
      %v7819 = vadd.f32 0.0, %v7818
      %v7820 = vpop.f32.mrb[0].mxu0
      %7821 = vmatprep.mubr.bf16.mxu0 0
      %7822 = vmatmul.mubr.bf16.gmra.mrb[0].mxu0 %v7657
      %v7823 = vpop.f32.mrb[0].mxu0
      %v7824 = vadd.f32 0.0, %v7823
      %v7825 = vpop.f32.mrb[0].mxu0
      %v7826 = vpop.f32.mrb[0].mxu0
      %v7827 = vadd.f32 0.0, %v7826
      %v7828 = vpop.f32.mrb[0].mxu0
      %7829 = vmatprep.mubr.bf16.mxu0 0
      %7830 = vmatmul.mubr.bf16.gmra.mrb[0].mxu0 %v7660
      %v7831 = vpop.f32.mrb[0].mxu0
      %v7832 = vadd.f32 0.0, %v7831
      %v7833 = vpop.f32.mrb[0].mxu0
      %v7834 = vpop.f32.mrb[0].mxu0
      %v7835 = vadd.f32 0.0, %v7834
      %v7836 = vpop.f32.mrb[0].mxu0
      %7837 = vmatprep.mubr.bf16.mxu0 0
      %7838 = vmatmul.mubr.bf16.gmra.mrb[0].mxu0 %v7663
      %v7839 = vpop.f32.mrb[0].mxu0
      %v7840 = vadd.f32 0.0, %v7839
      %v7841 = vpop.f32.mrb[0].mxu0
      %v7842 = vpop.f32.mrb[0].mxu0
      %v7843 = vadd.f32 0.0, %v7842
      %v7844 = vpop.f32.mrb[0].mxu0
      %7845 = vmatprep.mubr.bf16.mxu0 0
      %7846 = vmatmul.mubr.bf16.gmra.mrb[0].mxu0 %v7666
      %v7847 = vpop.f32.mrb[0].mxu0
      %v7848 = vadd.f32 0.0, %v7847
      %v7849 = vpop.f32.mrb[0].mxu0
      %v7850 = vpop.f32.mrb[0].mxu0
      %v7851 = vadd.f32 0.0, %v7850
      %v7852 = vpop.f32.mrb[0].mxu0
      %7853 = vmatprep.mubr.bf16.mxu0 0
      %7854 = vmatmul.mubr.bf16.gmra.mrb[0].mxu0 %v7669
      %v7855 = vpop.f32.mrb[0].mxu0
      %v7856 = vadd.f32 0.0, %v7855
      %v7857 = vpop.f32.mrb[0].mxu0
      %v7858 = vpop.f32.mrb[0].mxu0
      %v7859 = vadd.f32 0.0, %v7858
      %v7860 = vpop.f32.mrb[0].mxu0
      %7861 = vmatprep.mubr.bf16.mxu0 0
      %7862 = vmatmul.mubr.bf16.gmra.mrb[0].mxu0 %v7672
      %v7863 = vpop.f32.mrb[0].mxu0
      %v7864 = vadd.f32 0.0, %v7863
      %v7865 = vpop.f32.mrb[0].mxu0
      %v7866 = vpop.f32.mrb[0].mxu0
      %v7867 = vadd.f32 0.0, %v7866
      %v7868 = vpop.f32.mrb[0].mxu0
      %7869 = vdwg.mxu0
      %v7870 = vadd.f32 %v7501, %v7712
      %v7871 = vadd.f32 %v7502, %v7715
      %v7872 = vadd.f32 %v7503, %v7720
      %v7873 = vadd.f32 %v7504, %v7723
      %v7874 = vadd.f32 %v7505, %v7728
      %v7875 = vadd.f32 %v7506, %v7731
      %v7876 = vadd.f32 %v7507, %v7736
      %v7877 = vadd.f32 %v7508, %v7739
      %v7878 = vadd.f32 %v7509, %v7744
      %v7879 = vadd.f32 %v7510, %v7747
      %v7880 = vadd.f32 %v7511, %v7752
      %v7881 = vadd.f32 %v7512, %v7755
      %v7882 = vadd.f32 %v7513, %v7760
      %v7883 = vadd.f32 %v7514, %v7763
      %v7884 = vadd.f32 %v7515, %v7768
      %v7885 = vadd.f32 %v7516, %v7771
      %v7886 = vadd.f32 %v7517, %v7776
      %v7887 = vadd.f32 %v7518, %v7779
      %v7888 = vadd.f32 %v7519, %v7784
      %v7889 = vadd.f32 %v7520, %v7787
      %v7890 = vadd.f32 %v7521, %v7792
      %v7891 = vadd.f32 %v7522, %v7795
      %v7892 = vadd.f32 %v7523, %v7800
      %v7893 = vadd.f32 %v7524, %v7803
      %v7894 = vadd.f32 %v7525, %v7808
      %v7895 = vadd.f32 %v7526, %v7811
      %v7896 = vadd.f32 %v7527, %v7816
      %v7897 = vadd.f32 %v7528, %v7819
      %v7898 = vadd.f32 %v7529, %v7824
      %v7899 = vadd.f32 %v7530, %v7827
      %v7900 = vadd.f32 %v7531, %v7832
      %v7901 = vadd.f32 %v7532, %v7835
      %v7902 = vadd.f32 %v7533, %v7840
      %v7903 = vadd.f32 %v7534, %v7843
      %v7904 = vadd.f32 %v7535, %v7848
      %v7905 = vadd.f32 %v7536, %v7851
      %v7906 = vadd.f32 %v7537, %v7856
      %v7907 = vadd.f32 %v7538, %v7859
      %v7908 = vadd.f32 %v7539, %v7864
      %v7909 = vadd.f32 %v7540, %v7867
      %v7910 = vld [vmem:[%s7] sm:$0x1]
      %v7912 = vlaneseq
      %v7913 = vshrl.u32 %v7912, 7
      %v7914 = vsub.s32 0, %v7913
      %v7915 = vrot.slane %v7910, %v7914
      %v7917 = vadd.f32 %v7870, %v7915
      %v7918 = vadd.f32 %v7871, %v7915
      %v7919 = vadd.f32 %v7872, %v7915
      %v7920 = vadd.f32 %v7873, %v7915
      %v7921 = vadd.f32 %v7874, %v7915
      %v7922 = vadd.f32 %v7875, %v7915
      %v7923 = vadd.f32 %v7876, %v7915
      %v7924 = vadd.f32 %v7877, %v7915
      %v7925 = vadd.f32 %v7878, %v7915
      %v7926 = vadd.f32 %v7879, %v7915
      %v7927 = vadd.f32 %v7880, %v7915
      %v7928 = vadd.f32 %v7881, %v7915
      %v7929 = vadd.f32 %v7882, %v7915
      %v7930 = vadd.f32 %v7883, %v7915
      %v7931 = vadd.f32 %v7884, %v7915
      %v7932 = vadd.f32 %v7885, %v7915
      %v7933 = vadd.f32 %v7886, %v7915
      %v7934 = vadd.f32 %v7887, %v7915
      %v7935 = vadd.f32 %v7888, %v7915
      %v7936 = vadd.f32 %v7889, %v7915
      %v7937 = vadd.f32 %v7890, %v7915
      %v7938 = vadd.f32 %v7891, %v7915
      %v7939 = vadd.f32 %v7892, %v7915
      %v7940 = vadd.f32 %v7893, %v7915
      %v7941 = vadd.f32 %v7894, %v7915
      %v7942 = vadd.f32 %v7895, %v7915
      %v7943 = vadd.f32 %v7896, %v7915
      %v7944 = vadd.f32 %v7897, %v7915
      %v7945 = vadd.f32 %v7898, %v7915
      %v7946 = vadd.f32 %v7899, %v7915
      %v7947 = vadd.f32 %v7900, %v7915
      %v7948 = vadd.f32 %v7901, %v7915
      %v7949 = vadd.f32 %v7902, %v7915
      %v7950 = vadd.f32 %v7903, %v7915
      %v7951 = vadd.f32 %v7904, %v7915
      %v7952 = vadd.f32 %v7905, %v7915
      %v7953 = vadd.f32 %v7906, %v7915
      %v7954 = vadd.f32 %v7907, %v7915
      %v7955 = vadd.f32 %v7908, %v7915
      %v7956 = vadd.f32 %v7909, %v7915
      %v7957 = vxor.u32 %v7917, 2147483648
      %v7958 = vxor.u32 %v7918, 2147483648
      %v7959 = vxor.u32 %v7919, 2147483648
      %v7960 = vxor.u32 %v7920, 2147483648
      %v7961 = vxor.u32 %v7921, 2147483648
      %v7962 = vxor.u32 %v7922, 2147483648
      %v7963 = vxor.u32 %v7923, 2147483648
      %v7964 = vxor.u32 %v7924, 2147483648
      %v7965 = vxor.u32 %v7925, 2147483648
      %v7966 = vxor.u32 %v7926, 2147483648
      %v7967 = vxor.u32 %v7927, 2147483648
      %v7968 = vxor.u32 %v7928, 2147483648
      %v7969 = vxor.u32 %v7929, 2147483648
      %v7970 = vxor.u32 %v7930, 2147483648
      %v7971 = vxor.u32 %v7931, 2147483648
      %v7972 = vxor.u32 %v7932, 2147483648
      %v7973 = vxor.u32 %v7933, 2147483648
      %v7974 = vxor.u32 %v7934, 2147483648
      %v7975 = vxor.u32 %v7935, 2147483648
      %v7976 = vxor.u32 %v7936, 2147483648
      %v7977 = vxor.u32 %v7937, 2147483648
      %v7978 = vxor.u32 %v7938, 2147483648
      %v7979 = vxor.u32 %v7939, 2147483648
      %v7980 = vxor.u32 %v7940, 2147483648
      %v7981 = vxor.u32 %v7941, 2147483648
      %v7982 = vxor.u32 %v7942, 2147483648
      %v7983 = vxor.u32 %v7943, 2147483648
      %v7984 = vxor.u32 %v7944, 2147483648
      %v7985 = vxor.u32 %v7945, 2147483648
      %v7986 = vxor.u32 %v7946, 2147483648
      %v7987 = vxor.u32 %v7947, 2147483648
      %v7988 = vxor.u32 %v7948, 2147483648
      %v7989 = vxor.u32 %v7949, 2147483648
      %v7990 = vxor.u32 %v7950, 2147483648
      %v7991 = vxor.u32 %v7951, 2147483648
      %v7992 = vxor.u32 %v7952, 2147483648
      %v7993 = vxor.u32 %v7953, 2147483648
      %v7994 = vxor.u32 %v7954, 2147483648
      %v7995 = vxor.u32 %v7955, 2147483648
      %v7996 = vxor.u32 %v7956, 2147483648
      %v7997 = vmul.f32 %v7957, 1.442695
      %v7998 = vpow.pop %v7997
      %v7999 = vmul.f32 %v7958, 1.442695
      %v8000 = vpow.pop %v7999
      %v8001 = vmul.f32 %v7959, 1.442695
      %v8002 = vpow.pop %v8001
      %v8003 = vmul.f32 %v7960, 1.442695
      %v8004 = vpow.pop %v8003
      %v8005 = vmul.f32 %v7961, 1.442695
      %v8006 = vpow.pop %v8005
      %v8007 = vmul.f32 %v7962, 1.442695
      %v8008 = vpow.pop %v8007
      %v8009 = vmul.f32 %v7963, 1.442695
      %v8010 = vpow.pop %v8009
      %v8011 = vmul.f32 %v7964, 1.442695
      %v8012 = vpow.pop %v8011
      %v8013 = vmul.f32 %v7965, 1.442695
      %v8014 = vpow.pop %v8013
      %v8015 = vmul.f32 %v7966, 1.442695
      %v8016 = vpow.pop %v8015
      %v8017 = vmul.f32 %v7967, 1.442695
      %v8018 = vpow.pop %v8017
      %v8019 = vmul.f32 %v7968, 1.442695
      %v8020 = vpow.pop %v8019
      %v8021 = vmul.f32 %v7969, 1.442695
      %v8022 = vpow.pop %v8021
      %v8023 = vmul.f32 %v7970, 1.442695
      %v8024 = vpow.pop %v8023
      %v8025 = vmul.f32 %v7971, 1.442695
      %v8026 = vpow.pop %v8025
      %v8027 = vmul.f32 %v7972, 1.442695
      %v8028 = vpow.pop %v8027
      %v8029 = vmul.f32 %v7973, 1.442695
      %v8030 = vpow.pop %v8029
      %v8031 = vmul.f32 %v7974, 1.442695
      %v8032 = vpow.pop %v8031
      %v8033 = vmul.f32 %v7975, 1.442695
      %v8034 = vpow.pop %v8033
      %v8035 = vmul.f32 %v7976, 1.442695
      %v8036 = vpow.pop %v8035
      %v8037 = vmul.f32 %v7977, 1.442695
      %v8038 = vpow.pop %v8037
      %v8039 = vmul.f32 %v7978, 1.442695
      %v8040 = vpow.pop %v8039
      %v8041 = vmul.f32 %v7979, 1.442695
      %v8042 = vpow.pop %v8041
      %v8043 = vmul.f32 %v7980, 1.442695
      %v8044 = vpow.pop %v8043
      %v8045 = vmul.f32 %v7981, 1.442695
      %v8046 = vpow.pop %v8045
      %v8047 = vmul.f32 %v7982, 1.442695
      %v8048 = vpow.pop %v8047
      %v8049 = vmul.f32 %v7983, 1.442695
      %v8050 = vpow.pop %v8049
      %v8051 = vmul.f32 %v7984, 1.442695
      %v8052 = vpow.pop %v8051
      %v8053 = vmul.f32 %v7985, 1.442695
      %v8054 = vpow.pop %v8053
      %v8055 = vmul.f32 %v7986, 1.442695
      %v8056 = vpow.pop %v8055
      %v8057 = vmul.f32 %v7987, 1.442695
      %v8058 = vpow.pop %v8057
      %v8059 = vmul.f32 %v7988, 1.442695
      %v8060 = vpow.pop %v8059
      %v8061 = vmul.f32 %v7989, 1.442695
      %v8062 = vpow.pop %v8061
      %v8063 = vmul.f32 %v7990, 1.442695
      %v8064 = vpow.pop %v8063
      %v8065 = vmul.f32 %v7991, 1.442695
      %v8066 = vpow.pop %v8065
      %v8067 = vmul.f32 %v7992, 1.442695
      %v8068 = vpow.pop %v8067
      %v8069 = vmul.f32 %v7993, 1.442695
      %v8070 = vpow.pop %v8069
      %v8071 = vmul.f32 %v7994, 1.442695
      %v8072 = vpow.pop %v8071
      %v8073 = vmul.f32 %v7995, 1.442695
      %v8074 = vpow.pop %v8073
      %v8075 = vmul.f32 %v7996, 1.442695
      %v8076 = vpow.pop %v8075
      %v8077 = vadd.f32 %v7998, 1.0
      %v8078 = vadd.f32 %v8000, 1.0
      %v8079 = vadd.f32 %v8002, 1.0
      %v8080 = vadd.f32 %v8004, 1.0
      %v8081 = vadd.f32 %v8006, 1.0
      %v8082 = vadd.f32 %v8008, 1.0
      %v8083 = vadd.f32 %v8010, 1.0
      %v8084 = vadd.f32 %v8012, 1.0
      %v8085 = vadd.f32 %v8014, 1.0
      %v8086 = vadd.f32 %v8016, 1.0
      %v8087 = vadd.f32 %v8018, 1.0
      %v8088 = vadd.f32 %v8020, 1.0
      %v8089 = vadd.f32 %v8022, 1.0
      %v8090 = vadd.f32 %v8024, 1.0
      %v8091 = vadd.f32 %v8026, 1.0
      %v8092 = vadd.f32 %v8028, 1.0
      %v8093 = vadd.f32 %v8030, 1.0
      %v8094 = vadd.f32 %v8032, 1.0
      %v8095 = vadd.f32 %v8034, 1.0
      %v8096 = vadd.f32 %v8036, 1.0
      %v8097 = vadd.f32 %v8038, 1.0
      %v8098 = vadd.f32 %v8040, 1.0
      %v8099 = vadd.f32 %v8042, 1.0
      %v8100 = vadd.f32 %v8044, 1.0
      %v8101 = vadd.f32 %v8046, 1.0
      %v8102 = vadd.f32 %v8048, 1.0
      %v8103 = vadd.f32 %v8050, 1.0
      %v8104 = vadd.f32 %v8052, 1.0
      %v8105 = vadd.f32 %v8054, 1.0
      %v8106 = vadd.f32 %v8056, 1.0
      %v8107 = vadd.f32 %v8058, 1.0
      %v8108 = vadd.f32 %v8060, 1.0
      %v8109 = vadd.f32 %v8062, 1.0
      %v8110 = vadd.f32 %v8064, 1.0
      %v8111 = vadd.f32 %v8066, 1.0
      %v8112 = vadd.f32 %v8068, 1.0
      %v8113 = vadd.f32 %v8070, 1.0
      %v8114 = vadd.f32 %v8072, 1.0
      %v8115 = vadd.f32 %v8074, 1.0
      %v8116 = vadd.f32 %v8076, 1.0
      %v8117 = vrcp.pop %v8077
      %v8118 = vmul.f32 1.0, %v8117
      %v8119 = vrcp.pop %v8078
      %v8120 = vmul.f32 1.0, %v8119
      %v8121 = vrcp.pop %v8079
      %v8122 = vmul.f32 1.0, %v8121
      %v8123 = vrcp.pop %v8080
      %v8124 = vmul.f32 1.0, %v8123
      %v8125 = vrcp.pop %v8081
      %v8126 = vmul.f32 1.0, %v8125
      %v8127 = vrcp.pop %v8082
      %v8128 = vmul.f32 1.0, %v8127
      %v8129 = vrcp.pop %v8083
      %v8130 = vmul.f32 1.0, %v8129
      %v8131 = vrcp.pop %v8084
      %v8132 = vmul.f32 1.0, %v8131
      %v8133 = vrcp.pop %v8085
      %v8134 = vmul.f32 1.0, %v8133
      %v8135 = vrcp.pop %v8086
      %v8136 = vmul.f32 1.0, %v8135
      %v8137 = vrcp.pop %v8087
      %v8138 = vmul.f32 1.0, %v8137
      %v8139 = vrcp.pop %v8088
      %v8140 = vmul.f32 1.0, %v8139
      %v8141 = vrcp.pop %v8089
      %v8142 = vmul.f32 1.0, %v8141
      %v8143 = vrcp.pop %v8090
      %v8144 = vmul.f32 1.0, %v8143
      %v8145 = vrcp.pop %v8091
      %v8146 = vmul.f32 1.0, %v8145
      %v8147 = vrcp.pop %v8092
      %v8148 = vmul.f32 1.0, %v8147
      %v8149 = vrcp.pop %v8093
      %v8150 = vmul.f32 1.0, %v8149
      %v8151 = vrcp.pop %v8094
      %v8152 = vmul.f32 1.0, %v8151
      %v8153 = vrcp.pop %v8095
      %v8154 = vmul.f32 1.0, %v8153
      %v8155 = vrcp.pop %v8096
      %v8156 = vmul.f32 1.0, %v8155
      %v8157 = vrcp.pop %v8097
      %v8158 = vmul.f32 1.0, %v8157
      %v8159 = vrcp.pop %v8098
      %v8160 = vmul.f32 1.0, %v8159
      %v8161 = vrcp.pop %v8099
      %v8162 = vmul.f32 1.0, %v8161
      %v8163 = vrcp.pop %v8100
      %v8164 = vmul.f32 1.0, %v8163
      %v8165 = vrcp.pop %v8101
      %v8166 = vmul.f32 1.0, %v8165
      %v8167 = vrcp.pop %v8102
      %v8168 = vmul.f32 1.0, %v8167
      %v8169 = vrcp.pop %v8103
      %v8170 = vmul.f32 1.0, %v8169
      %v8171 = vrcp.pop %v8104
      %v8172 = vmul.f32 1.0, %v8171
      %v8173 = vrcp.pop %v8105
      %v8174 = vmul.f32 1.0, %v8173
      %v8175 = vrcp.pop %v8106
      %v8176 = vmul.f32 1.0, %v8175
      %v8177 = vrcp.pop %v8107
      %v8178 = vmul.f32 1.0, %v8177
      %v8179 = vrcp.pop %v8108
      %v8180 = vmul.f32 1.0, %v8179
      %v8181 = vrcp.pop %v8109
      %v8182 = vmul.f32 1.0, %v8181
      %v8183 = vrcp.pop %v8110
      %v8184 = vmul.f32 1.0, %v8183
      %v8185 = vrcp.pop %v8111
      %v8186 = vmul.f32 1.0, %v8185
      %v8187 = vrcp.pop %v8112
      %v8188 = vmul.f32 1.0, %v8187
      %v8189 = vrcp.pop %v8113
      %v8190 = vmul.f32 1.0, %v8189
      %v8191 = vrcp.pop %v8114
      %v8192 = vmul.f32 1.0, %v8191
      %v8193 = vrcp.pop %v8115
      %v8194 = vmul.f32 1.0, %v8193
      %v8195 = vrcp.pop %v8116
      %v8196 = vmul.f32 1.0, %v8195
      %v8197 = vpack.c.bf16 %v8120, %v8118
      %v8198 = vpack.c.bf16 %v8124, %v8122
      %v8199 = vpack.c.bf16 %v8128, %v8126
      %v8200 = vpack.c.bf16 %v8132, %v8130
      %v8201 = vpack.c.bf16 %v8136, %v8134
      %v8202 = vpack.c.bf16 %v8140, %v8138
      %v8203 = vpack.c.bf16 %v8144, %v8142
      %v8204 = vpack.c.bf16 %v8148, %v8146
      %v8205 = vpack.c.bf16 %v8152, %v8150
      %v8206 = vpack.c.bf16 %v8156, %v8154
      %v8207 = vpack.c.bf16 %v8160, %v8158
      %v8208 = vpack.c.bf16 %v8164, %v8162
      %v8209 = vpack.c.bf16 %v8168, %v8166
      %v8210 = vpack.c.bf16 %v8172, %v8170
      %v8211 = vpack.c.bf16 %v8176, %v8174
      %v8212 = vpack.c.bf16 %v8180, %v8178
      %v8213 = vpack.c.bf16 %v8184, %v8182
      %v8214 = vpack.c.bf16 %v8188, %v8186
      %v8215 = vpack.c.bf16 %v8192, %v8190
      %v8216 = vpack.c.bf16 %v8196, %v8194
      %v8237 = vunpack.c.l.b16 %v8197
      %v8238 = vunpack.c.h.b16 %v8197
      %v8239 = vunpack.c.l.b16 %v8198
      %v8240 = vunpack.c.h.b16 %v8198
      %v8241 = vunpack.c.l.b16 %v8199
      %v8242 = vunpack.c.h.b16 %v8199
      %v8243 = vunpack.c.l.b16 %v8200
      %v8244 = vunpack.c.h.b16 %v8200
      %v8245 = vunpack.c.l.b16 %v8201
      %v8246 = vunpack.c.h.b16 %v8201
      %v8247 = vunpack.c.l.b16 %v8202
      %v8248 = vunpack.c.h.b16 %v8202
      %v8249 = vunpack.c.l.b16 %v8203
      %v8250 = vunpack.c.h.b16 %v8203
      %v8251 = vunpack.c.l.b16 %v8204
      %v8252 = vunpack.c.h.b16 %v8204
      %v8253 = vunpack.c.l.b16 %v8205
      %v8254 = vunpack.c.h.b16 %v8205
      %v8255 = vunpack.c.l.b16 %v8206
      %v8256 = vunpack.c.h.b16 %v8206
      %v8257 = vunpack.c.l.b16 %v8207
      %v8258 = vunpack.c.h.b16 %v8207
      %v8259 = vunpack.c.l.b16 %v8208
      %v8260 = vunpack.c.h.b16 %v8208
      %v8261 = vunpack.c.l.b16 %v8209
      %v8262 = vunpack.c.h.b16 %v8209
      %v8263 = vunpack.c.l.b16 %v8210
      %v8264 = vunpack.c.h.b16 %v8210
      %v8265 = vunpack.c.l.b16 %v8211
      %v8266 = vunpack.c.h.b16 %v8211
      %v8267 = vunpack.c.l.b16 %v8212
      %v8268 = vunpack.c.h.b16 %v8212
      %v8269 = vunpack.c.l.b16 %v8213
      %v8270 = vunpack.c.h.b16 %v8213
      %v8271 = vunpack.c.l.b16 %v8214
      %v8272 = vunpack.c.h.b16 %v8214
      %v8273 = vunpack.c.l.b16 %v8215
      %v8274 = vunpack.c.h.b16 %v8215
      %v8275 = vunpack.c.l.b16 %v8216
      %v8276 = vunpack.c.h.b16 %v8216
      %v8277 = vpack.c.b16 %v8237, %v8237
      %v8278 = vpack.c.b16 %v8238, %v8238
      %v8279 = vpack.c.b16 %v8239, %v8239
      %v8280 = vpack.c.b16 %v8240, %v8240
      %v8281 = vpack.c.b16 %v8241, %v8241
      %v8282 = vpack.c.b16 %v8242, %v8242
      %v8283 = vpack.c.b16 %v8243, %v8243
      %v8284 = vpack.c.b16 %v8244, %v8244
      %v8285 = vpack.c.b16 %v8245, %v8245
      %v8286 = vpack.c.b16 %v8246, %v8246
      %v8287 = vpack.c.b16 %v8247, %v8247
      %v8288 = vpack.c.b16 %v8248, %v8248
      %v8289 = vpack.c.b16 %v8249, %v8249
      %v8290 = vpack.c.b16 %v8250, %v8250
      %v8291 = vpack.c.b16 %v8251, %v8251
      %v8292 = vpack.c.b16 %v8252, %v8252
      %v8293 = vpack.c.b16 %v8253, %v8253
      %v8294 = vpack.c.b16 %v8254, %v8254
      %v8295 = vpack.c.b16 %v8255, %v8255
      %v8296 = vpack.c.b16 %v8256, %v8256
      %v8297 = vpack.c.b16 %v8257, %v8257
      %v8298 = vpack.c.b16 %v8258, %v8258
      %v8299 = vpack.c.b16 %v8259, %v8259
      %v8300 = vpack.c.b16 %v8260, %v8260
      %v8301 = vpack.c.b16 %v8261, %v8261
      %v8302 = vpack.c.b16 %v8262, %v8262
      %v8303 = vpack.c.b16 %v8263, %v8263
      %v8304 = vpack.c.b16 %v8264, %v8264
      %v8305 = vpack.c.b16 %v8265, %v8265
      %v8306 = vpack.c.b16 %v8266, %v8266
      %v8307 = vpack.c.b16 %v8267, %v8267
      %v8308 = vpack.c.b16 %v8268, %v8268
      %v8309 = vpack.c.b16 %v8269, %v8269
      %v8310 = vpack.c.b16 %v8270, %v8270
      %v8311 = vpack.c.b16 %v8271, %v8271
      %v8312 = vpack.c.b16 %v8272, %v8272
      %v8313 = vpack.c.b16 %v8273, %v8273
      %v8314 = vpack.c.b16 %v8274, %v8274
      %v8315 = vpack.c.b16 %v8275, %v8275
      %v8316 = vpack.c.b16 %v8276, %v8276
      %vm8357 = vcmask 125952
      %8358 = vst.msk [vmem:[%s305] sm:$0xf] %vm8357, %v8277
      %8359 = vst.msk [vmem:[%s305 + $0x4] sm:$0xf] %vm8357, %v8278
      %8360 = vst.msk [vmem:[%s305 + $0x8] sm:$0xf] %vm8357, %v8279
      %8361 = vst.msk [vmem:[%s305 + $0xc] sm:$0xf] %vm8357, %v8280
      %8362 = vst.msk [vmem:[%s305 + $0x10] sm:$0xf] %vm8357, %v8281
      %8363 = vst.msk [vmem:[%s305 + $0x14] sm:$0xf] %vm8357, %v8282
      %8364 = vst.msk [vmem:[%s305 + $0x18] sm:$0xf] %vm8357, %v8283
      %8365 = vst.msk [vmem:[%s305 + $0x1c] sm:$0xf] %vm8357, %v8284
      %8366 = vst.msk [vmem:[%s305 + $0x20] sm:$0xf] %vm8357, %v8285
      %8367 = vst.msk [vmem:[%s305 + $0x24] sm:$0xf] %vm8357, %v8286
      %8368 = vst.msk [vmem:[%s305 + $0x28] sm:$0xf] %vm8357, %v8287
      %8369 = vst.msk [vmem:[%s305 + $0x2c] sm:$0xf] %vm8357, %v8288
      %8370 = vst.msk [vmem:[%s305 + $0x30] sm:$0xf] %vm8357, %v8289
      %8371 = vst.msk [vmem:[%s305 + $0x34] sm:$0xf] %vm8357, %v8290
      %8372 = vst.msk [vmem:[%s305 + $0x38] sm:$0xf] %vm8357, %v8291
      %8373 = vst.msk [vmem:[%s305 + $0x3c] sm:$0xf] %vm8357, %v8292
      %8374 = vst.msk [vmem:[%s305 + $0x40] sm:$0xf] %vm8357, %v8293
      %8375 = vst.msk [vmem:[%s305 + $0x44] sm:$0xf] %vm8357, %v8294
      %8376 = vst.msk [vmem:[%s305 + $0x48] sm:$0xf] %vm8357, %v8295
      %8377 = vst.msk [vmem:[%s305 + $0x4c] sm:$0xf] %vm8357, %v8296
      %8378 = vst.msk [vmem:[%s305 + $0x50] sm:$0xf] %vm8357, %v8297
      %8379 = vst.msk [vmem:[%s305 + $0x54] sm:$0xf] %vm8357, %v8298
      %8380 = vst.msk [vmem:[%s305 + $0x58] sm:$0xf] %vm8357, %v8299
      %8381 = vst.msk [vmem:[%s305 + $0x5c] sm:$0xf] %vm8357, %v8300
      %8382 = vst.msk [vmem:[%s305 + $0x60] sm:$0xf] %vm8357, %v8301
      %8383 = vst.msk [vmem:[%s305 + $0x64] sm:$0xf] %vm8357, %v8302
      %8384 = vst.msk [vmem:[%s305 + $0x68] sm:$0xf] %vm8357, %v8303
      %8385 = vst.msk [vmem:[%s305 + $0x6c] sm:$0xf] %vm8357, %v8304
      %8386 = vst.msk [vmem:[%s305 + $0x70] sm:$0xf] %vm8357, %v8305
      %8387 = vst.msk [vmem:[%s305 + $0x74] sm:$0xf] %vm8357, %v8306
      %8388 = vst.msk [vmem:[%s305 + $0x78] sm:$0xf] %vm8357, %v8307
      %8389 = vst.msk [vmem:[%s305 + $0x7c] sm:$0xf] %vm8357, %v8308
      %8390 = vst.msk [vmem:[%s305 + $0x80] sm:$0xf] %vm8357, %v8309
      %8391 = vst.msk [vmem:[%s305 + $0x84] sm:$0xf] %vm8357, %v8310
      %8392 = vst.msk [vmem:[%s305 + $0x88] sm:$0xf] %vm8357, %v8311
      %8393 = vst.msk [vmem:[%s305 + $0x8c] sm:$0xf] %vm8357, %v8312
      %8394 = vst.msk [vmem:[%s305 + $0x90] sm:$0xf] %vm8357, %v8313
      %8395 = vst.msk [vmem:[%s305 + $0x94] sm:$0xf] %vm8357, %v8314
      %8396 = vst.msk [vmem:[%s305 + $0x98] sm:$0xf] %vm8357, %v8315
      %vm8397 = vcmask 123904
      %8398 = vst.msk [vmem:[%s305 + $0x9c] sm:$0x3] %vm8397, %v8316
      %p8399 = scmp.lt.s32.totalorder %s19, 1
      %s8400 = scalar_select %p8399, %s19, 1
      %s8401 = smul.addr %s8400, 40
      %s8402 = smul.addr %s8401, 4
      %s8403 = scalar_lea.vmem %s8, %s8402
      // Predicated region
      $region57: #{optimized_net_forward.1} parent=51 // pred_check
        %p8404 = pneg %p210
      $region58: #{optimized_net_forward.1} parent=51 // pred_check_branch
        %8406 = sbr.rel (%p8404) target = $region60
      $region59: #{optimized_net_forward.1} parent=51 // pred_region
        _
      $region60: #{optimized_net_forward.1} parent=51 // pred_fallthru
        _
    $region52: #{optimized_net_forward.1} parent=5 // pred_fallthru
      _
    %p8407 = scmp.le.s32.totalorder 2, %s14
    // Predicated region
    $region61: #{optimized_net_forward.1} parent=5 // pred_check
      %p8408 = pneg %p8407
    $region62: #{optimized_net_forward.1} parent=5 // pred_check_branch
      %8410 = sbr.rel (%p8408) target = $region64
    $region63: #{optimized_net_forward.1} parent=5 // pred_region
      %s8411 = ssub.s32 %s14, 2
      // Predicated region
      $region65: #{optimized_net_forward.1} parent=63 // pred_check
        %p8412 = pneg %p216
      $region66: #{optimized_net_forward.1} parent=63 // pred_check_branch
        %8414 = sbr.rel (%p8412) target = $region68
      $region67: #{optimized_net_forward.1} parent=63 // pred_region
        %p8415 = scmp.lt.s32.totalorder %s20, 1
        %s8416 = scalar_select %p8415, %s20, 1
        %s8417 = smul.addr %s8416, 40
        %s8418 = smul.addr %s8417, 4
        %s8419 = scalar_lea.vmem %s8, %s8418
      $region68: #{optimized_net_forward.1} parent=63 // pred_fallthru
        _
    $region64: #{optimized_net_forward.1} parent=5 // pred_fallthru
      _
  $region6: #{optimized_net_forward.1} parent=0 // loop_footer
    %s18 = sadd.s32 1, %s14
  $region7: #{optimized_net_forward.1} parent=0 // loop_footer_branch
    %13 = sbr.rel target = $region3
  $region8: #{optimized_net_forward.1} parent=0 // loop_exit
    _

</llo_original>
